<compile_context>
chip_gen: v7x
topology: tpu7x:2x2x1
jax: 0.10.0
libtpu: 0.0.40
codegen_flags: <defaults>
</compile_context>

<pallas_src>
import functools
import math

import jax
import jax.numpy as jnp
from jax import lax
from jax.experimental import pallas as pl
from jax.experimental.pallas import tpu as pltpu

# DeepCNN architecture: (Cin, Cout) per conv layer; max-pool after layers 1, 2.
CONV_DIMS = ((3, 32), (32, 32), (32, 64), (64, 64), (64, 128), (128, 128))
POOL_AFTER = (True, True, False, False, False, False)
NUM_CLASSES = 10
K1PAD = 32          # layer-1 im2col K (9*3 = 27) zero-padded to 32 lanes


def _layer_spatial_sizes(H, W):
    """Spatial size of each conv layer's input, plus the final spatial size."""
    sizes = []
    h, w = H, W
    for pool in POOL_AFTER:
        sizes.append((h, w))
        if pool:
            h, w = h // 2, w // 2
    return sizes, (h, w)


def _pool2x2(y):
    """2x2/2 max-pool on (B, h, w, c) f32 via two elementwise maxima."""
    b, h, w, c = y.shape
    y = y.reshape(b, h, w // 2, 2, c)
    y = jnp.maximum(y[:, :, :, 0, :], y[:, :, :, 1, :])        # pool along W
    y = y.reshape(b, h // 2, 2, w // 2, c)
    y = jnp.maximum(y[:, :, 0, :, :], y[:, :, 1, :, :])        # pool along H
    return y


@functools.lru_cache(maxsize=None)
def _build_fused_forward(steps, bt, H, W, num_classes):
    sizes, (hf, wf) = _layer_spatial_sizes(H, W)
    c_last = CONV_DIMS[-1][1]
    n_layers = len(CONV_DIMS)

    def kernel(*args):
        x_ref = args[0]                                 # (bt, H*W, K1PAD) bf16
        w1_ref = args[1]                                # (K1PAD, 32)      bf16
        w_refs = args[2:2 + (n_layers - 1)]             # (9, cin, cout)   bf16
        b_refs = args[1 + n_layers:1 + 2 * n_layers]    # (1, cout)        f32
        fcw_ref = args[1 + 2 * n_layers]                # (c_last, nc)     f32
        fcb_ref = args[2 + 2 * n_layers]                # (1, nc)          f32
        o_ref = args[3 + 2 * n_layers]                  # (1, bt, nc)      f32
        pad_refs = args[4 + 2 * n_layers:]              # (bt,h+2,w+2,cin) bf16

        # ---- layer 1: pre-im2col'd bf16 input, one dense MXU matmul ----
        h, w = sizes[0]
        cout = CONV_DIMS[0][1]
        patches = x_ref[...].reshape(bt * h * w, K1PAD)
        acc = jnp.dot(patches, w1_ref[...], preferred_element_type=jnp.float32)
        y = jnp.maximum(acc + b_refs[0][...], 0.0).reshape(bt, h, w, cout)
        if POOL_AFTER[0]:
            y = _pool2x2(y)
        act = y.astype(jnp.bfloat16)                    # cast once, post-pool

        # ---- layers 2..6: per-tap accumulating matmuls from bf16 halo scratch
        for li in range(1, n_layers):
            cin, cout = CONV_DIMS[li]
            h, w = sizes[li]
            pad = pad_refs[li - 1]
            # Zero only the 1-px halo ring; interior is fully overwritten.
            zr = jnp.zeros((bt, 1, w + 2, cin), dtype=pad.dtype)
            zc = jnp.zeros((bt, h, 1, cin), dtype=pad.dtype)
            pad[:, 0:1, :, :] = zr
            pad[:, h + 1:h + 2, :, :] = zr
            pad[:, 1:h + 1, 0:1, :] = zc
            pad[:, 1:h + 1, w + 1:w + 2, :] = zc
            pad[:, 1:h + 1, 1:w + 1, :] = act
            m = bt * h * w
            acc = jnp.zeros((m, cout), jnp.float32)
            wref = w_refs[li - 1]
            for kh in range(3):                          # 9 taps, no lane concat
                for kw in range(3):
                    patch = pad[:, kh:kh + h, kw:kw + w, :].reshape(m, cin)
                    acc = acc + jnp.dot(patch, wref[kh * 3 + kw],
                                        preferred_element_type=jnp.float32)
            y = jnp.maximum(acc + b_refs[li][...], 0.0).reshape(bt, h, w, cout)
            if POOL_AFTER[li]:
                y = _pool2x2(y)
            act = y.astype(jnp.bfloat16) if li < n_layers - 1 else y

        # ---- AdaptiveAvgPool2d((1,1)) + flatten + FC (f32 epilogue) ----
        feat = jnp.mean(act.reshape(bt, hf * wf, c_last), axis=1)   # (bt, c)
        logits = jnp.dot(feat, fcw_ref[...],
                         preferred_element_type=jnp.float32) + fcb_ref[...]
        o_ref[0] = logits.astype(o_ref.dtype)

    in_specs = [pl.BlockSpec((bt, H * W, K1PAD), lambda i: (i, 0, 0))]
    in_specs.append(pl.BlockSpec((K1PAD, CONV_DIMS[0][1]), lambda i: (0, 0)))
    for cin, cout in CONV_DIMS[1:]:
        in_specs.append(pl.BlockSpec((9, cin, cout), lambda i: (0, 0, 0)))
    for _, cout in CONV_DIMS:
        in_specs.append(pl.BlockSpec((1, cout), lambda i: (0, 0)))
    in_specs.append(pl.BlockSpec((c_last, num_classes), lambda i: (0, 0)))
    in_specs.append(pl.BlockSpec((1, num_classes), lambda i: (0, 0)))

    # bf16 halo scratch for layers 2..6 (layer 1 is hoisted to the wrapper).
    scratch_shapes = [
        pltpu.VMEM((bt, sizes[i][0] + 2, sizes[i][1] + 2, CONV_DIMS[i][0]),
                   jnp.bfloat16)
        for i in range(1, n_layers)
    ]

    return pl.pallas_call(
        kernel,
        out_shape=jax.ShapeDtypeStruct((steps, bt, num_classes), jnp.float32),
        grid=(steps,),
        in_specs=in_specs,
        out_specs=pl.BlockSpec((1, bt, num_classes), lambda i: (i, 0, 0)),
        scratch_shapes=scratch_shapes,
        compiler_params=pltpu.CompilerParams(
            dimension_semantics=("parallel",),
            vmem_limit_bytes=32 * 1024 * 1024),
    )


def deepcnn_forward(x_nchw, params):
    """Forward pass matching DeepCNN.forward: NCHW in, (B, num_classes) out."""
    B, C, H, W = x_nchw.shape
    assert C == CONV_DIMS[0][0]
    assert H % 4 == 0 and W % 4 == 0, "spatial must survive two 2x2 pools"
    num_classes = params["fc_w"].shape[1]

    # Layer-1 im2col in XLA: (B,H,W,3) bf16 -> halo pad -> 9 taps -> K 27->32.
    x = jnp.transpose(x_nchw, (0, 2, 3, 1)).astype(jnp.bfloat16)
    xp = jnp.pad(x, ((0, 0), (1, 1), (1, 1), (0, 0)))
    taps = [xp[:, kh:kh + H, kw:kw + W, :]
            for kh in range(3) for kw in range(3)]
    patches = jnp.concatenate(taps, axis=-1)                    # (B, H, W, 27)
    k1 = patches.shape[-1]
    patches = jnp.pad(patches, ((0, 0), (0, 0), (0, 0), (0, K1PAD - k1)))
    patches = patches.reshape(B, H * W, K1PAD)

    # Keep the grid a multiple of 2 when possible (v7x: 2 TensorCores); the
    # rest of the batch is folded into the matmul M dimension.
    bt = B // 2 if B % 2 == 0 else 1
    steps = B // bt

    w1 = params["conv1_w"].reshape(9 * CONV_DIMS[0][0], CONV_DIMS[0][1])
    w1 = jnp.pad(w1, ((0, K1PAD - k1), (0, 0)))                 # (32, 32) bf16
    w_rest = [params[f"conv{i + 1}_w"].reshape(9, cin, cout)
              for i, (cin, cout) in enumerate(CONV_DIMS) if i >= 1]
    conv_bs = [params[f"conv{i + 1}_b"] for i in range(len(CONV_DIMS))]

    fused = _build_fused_forward(steps, bt, H, W, num_classes)
    out = fused(patches, w1, *w_rest, *conv_bs,
                params["fc_w"], params["fc_b"])
    return out.reshape(B, num_classes)


def init_params(key, num_classes=NUM_CLASSES):
    """Deterministic PyTorch-default-style init. Conv weights HWIO, bf16."""
    params = {}
    for idx, (cin, cout) in enumerate(CONV_DIMS, start=1):
        key, kw_, kb_ = jax.random.split(key, 3)
        bound = 1.0 / math.sqrt(cin * 9)
        w = jax.random.uniform(kw_, (3, 3, cin, cout), jnp.float32, -bound, bound)
        params[f"conv{idx}_w"] = w.astype(jnp.bfloat16)   # MXU operand dtype
        params[f"conv{idx}_b"] = jax.random.uniform(
            kb_, (1, cout), jnp.float32, -bound, bound)
    key, kw_, kb_ = jax.random.split(key, 3)
    d_in = CONV_DIMS[-1][1]
    bound = 1.0 / math.sqrt(d_in)
    params["fc_w"] = jax.random.uniform(
        kw_, (d_in, num_classes), jnp.float32, -bound, bound)
    params["fc_b"] = jax.random.uniform(
        kb_, (1, num_classes), jnp.float32, -bound, bound)
    return params


def reference_forward(x_nchw, params):
    """Pure-JAX reference mirroring the kernel's bf16-MXU / f32-epilogue math."""
    act = jnp.transpose(x_nchw, (0, 2, 3, 1))            # f32 NHWC
    for li in range(len(CONV_DIMS)):
        w = params[f"conv{li + 1}_w"]                    # (3,3,cin,cout) bf16
        b = params[f"conv{li + 1}_b"]                    # (1,cout) f32
        y = lax.conv_general_dilated(
            act.astype(jnp.bfloat16), w, window_strides=(1, 1), padding="SAME",
            dimension_numbers=("NHWC", "HWIO", "NHWC"),
            preferred_element_type=jnp.float32)
        y = jnp.maximum(y + b.reshape(1, 1, 1, -1), 0.0)
        if POOL_AFTER[li]:
            y = lax.reduce_window(y, -jnp.inf, lax.max,
                                  (1, 2, 2, 1), (1, 2, 2, 1), "VALID")
        act = y
    feat = jnp.mean(act, axis=(1, 2))                    # global avg pool
    return feat @ params["fc_w"] + params["fc_b"]


if __name__ == "__main__":
    key = jax.random.PRNGKey(0)
    key, kx = jax.random.split(key)
    # Small CIFAR-like input: batch=2, 3 channels, 16x16 spatial
    # (two 2x2 pools -> 4x4 for conv3..conv6; global avg pool then FC).
    x = jax.random.normal(kx, (2, 3, 16, 16), jnp.float32)   # NCHW like torch
    params = init_params(key, num_classes=NUM_CLASSES)

    fwd = jax.jit(deepcnn_forward)
    out = jax.block_until_ready(fwd(x, params))

    ref = jax.block_until_ready(jax.jit(reference_forward)(x, params))
    rel_err = float(jnp.max(jnp.abs(out - ref)) /
                    (jnp.max(jnp.abs(ref)) + 1e-6))
    assert out.shape == (2, NUM_CLASSES), out.shape
    assert rel_err < 1e-2, f"relative error too large: {rel_err}"

    print("KERNEL_OK")
</pallas_src>

<mosaic_0001>
module attributes {stable_mosaic.version = 11 : i64} {
  func.func @kernel(%arg0: i32, %arg1: memref<1x256x32xbf16, #tpu.memory_space<vmem>>, %arg2: memref<32x32xbf16, #tpu.memory_space<vmem>>, %arg3: memref<9x32x32xbf16, #tpu.memory_space<vmem>>, %arg4: memref<9x32x64xbf16, #tpu.memory_space<vmem>>, %arg5: memref<9x64x64xbf16, #tpu.memory_space<vmem>>, %arg6: memref<9x64x128xbf16, #tpu.memory_space<vmem>>, %arg7: memref<9x128x128xbf16, #tpu.memory_space<vmem>>, %arg8: memref<1x32xf32, #tpu.memory_space<vmem>>, %arg9: memref<1x32xf32, #tpu.memory_space<vmem>>, %arg10: memref<1x64xf32, #tpu.memory_space<vmem>>, %arg11: memref<1x64xf32, #tpu.memory_space<vmem>>, %arg12: memref<1x128xf32, #tpu.memory_space<vmem>>, %arg13: memref<1x128xf32, #tpu.memory_space<vmem>>, %arg14: memref<128x10xf32, #tpu.memory_space<vmem>>, %arg15: memref<1x10xf32, #tpu.memory_space<vmem>>, %arg16: memref<1x1x10xf32, #tpu.memory_space<vmem>>, %arg17: memref<1x10x10x32xbf16, #tpu.memory_space<vmem>>, %arg18: memref<1x6x6x32xbf16, #tpu.memory_space<vmem>>, %arg19: memref<1x6x6x64xbf16, #tpu.memory_space<vmem>>, %arg20: memref<1x6x6x64xbf16, #tpu.memory_space<vmem>>, %arg21: memref<1x6x6x128xbf16, #tpu.memory_space<vmem>>) attributes {dimension_semantics = [#tpu.dimension_semantics<parallel>], iteration_bounds = array<i64: 2>, scalar_prefetch = 0 : i64, scratch_operands = 5 : i64, tpu.core_type = #tpu.core_type<tc>, window_params = [{transform_indices = @transform_0, window_bounds = array<i64: 1, 256, 32>}, {pipeline_mode = #tpu.pipeline_mode<synchronous>, transform_indices = @transform_1, window_bounds = array<i64: 32, 32>}, {pipeline_mode = #tpu.pipeline_mode<synchronous>, transform_indices = @transform_2, window_bounds = array<i64: 9, 32, 32>}, {pipeline_mode = #tpu.pipeline_mode<synchronous>, transform_indices = @transform_3, window_bounds = array<i64: 9, 32, 64>}, {pipeline_mode = #tpu.pipeline_mode<synchronous>, transform_indices = @transform_4, window_bounds = array<i64: 9, 64, 64>}, {pipeline_mode = #tpu.pipeline_mode<synchronous>, transform_indices = @transform_5, window_bounds = array<i64: 9, 64, 128>}, {pipeline_mode = #tpu.pipeline_mode<synchronous>, transform_indices = @transform_6, window_bounds = array<i64: 9, 128, 128>}, {pipeline_mode = #tpu.pipeline_mode<synchronous>, transform_indices = @transform_7, window_bounds = array<i64: 1, 32>}, {pipeline_mode = #tpu.pipeline_mode<synchronous>, transform_indices = @transform_8, window_bounds = array<i64: 1, 32>}, {pipeline_mode = #tpu.pipeline_mode<synchronous>, transform_indices = @transform_9, window_bounds = array<i64: 1, 64>}, {pipeline_mode = #tpu.pipeline_mode<synchronous>, transform_indices = @transform_10, window_bounds = array<i64: 1, 64>}, {pipeline_mode = #tpu.pipeline_mode<synchronous>, transform_indices = @transform_11, window_bounds = array<i64: 1, 128>}, {pipeline_mode = #tpu.pipeline_mode<synchronous>, transform_indices = @transform_12, window_bounds = array<i64: 1, 128>}, {pipeline_mode = #tpu.pipeline_mode<synchronous>, transform_indices = @transform_13, window_bounds = array<i64: 128, 10>}, {pipeline_mode = #tpu.pipeline_mode<synchronous>, transform_indices = @transform_14, window_bounds = array<i64: 1, 10>}, {transform_indices = @transform_15, window_bounds = array<i64: 1, 1, 10>}]} {
    %c0 = arith.constant 0 : index
    %c0_0 = arith.constant 0 : index
    %c0_1 = arith.constant 0 : index
    %0 = vector.load %arg1[%c0, %c0_0, %c0_1] : memref<1x256x32xbf16, #tpu.memory_space<vmem>>, vector<1x256x32xbf16>
    %1 = vector.shape_cast %0 : vector<1x256x32xbf16> to vector<256x32xbf16>
    %c0_2 = arith.constant 0 : index
    %c0_3 = arith.constant 0 : index
    %2 = vector.load %arg2[%c0_2, %c0_3] : memref<32x32xbf16, #tpu.memory_space<vmem>>, vector<32x32xbf16>
    %cst = arith.constant dense<0.000000e+00> : vector<256x32xf32>
    %3 = tpu.matmul %1, %2, %cst {dimension_numbers = #tpu.dot_dimension_numbers<[1], [0], [0], [1], [0, 0, 1, 1], [], []>} : vector<256x32xbf16>, vector<32x32xbf16>, vector<256x32xf32> -> vector<256x32xf32>
    %c0_4 = arith.constant 0 : index
    %c0_5 = arith.constant 0 : index
    %4 = vector.load %arg8[%c0_4, %c0_5] : memref<1x32xf32, #tpu.memory_space<vmem>>, vector<1x32xf32>
    %5 = vector.broadcast %4 : vector<1x32xf32> to vector<256x32xf32>
    %6 = arith.addf %3, %5 : vector<256x32xf32>
    %cst_6 = arith.constant 0.000000e+00 : f32
    %7 = vector.broadcast %cst_6 : f32 to vector<256x32xf32>
    %8 = arith.maximumf %6, %7 : vector<256x32xf32>
    %9 = vector.shape_cast %8 : vector<256x32xf32> to vector<1x16x16x32xf32>
    %10 = vector.shape_cast %9 : vector<1x16x16x32xf32> to vector<1x16x8x2x32xf32>
    %11 = vector.extract_strided_slice %10 {offsets = [0, 0, 0, 0, 0], sizes = [1, 16, 8, 1, 32], strides = [1, 1, 1, 1, 1]} : vector<1x16x8x2x32xf32> to vector<1x16x8x1x32xf32>
    %12 = vector.shape_cast %11 : vector<1x16x8x1x32xf32> to vector<1x16x8x32xf32>
    %13 = vector.extract_strided_slice %10 {offsets = [0, 0, 0, 1, 0], sizes = [1, 16, 8, 1, 32], strides = [1, 1, 1, 1, 1]} : vector<1x16x8x2x32xf32> to vector<1x16x8x1x32xf32>
    %14 = vector.shape_cast %13 : vector<1x16x8x1x32xf32> to vector<1x16x8x32xf32>
    %15 = arith.maximumf %12, %14 : vector<1x16x8x32xf32>
    %16 = vector.shape_cast %15 : vector<1x16x8x32xf32> to vector<1x8x2x8x32xf32>
    %17 = vector.extract_strided_slice %16 {offsets = [0, 0, 0, 0, 0], sizes = [1, 8, 1, 8, 32], strides = [1, 1, 1, 1, 1]} : vector<1x8x2x8x32xf32> to vector<1x8x1x8x32xf32>
    %18 = vector.shape_cast %17 : vector<1x8x1x8x32xf32> to vector<1x8x8x32xf32>
    %19 = vector.extract_strided_slice %16 {offsets = [0, 0, 1, 0, 0], sizes = [1, 8, 1, 8, 32], strides = [1, 1, 1, 1, 1]} : vector<1x8x2x8x32xf32> to vector<1x8x1x8x32xf32>
    %20 = vector.shape_cast %19 : vector<1x8x1x8x32xf32> to vector<1x8x8x32xf32>
    %21 = arith.maximumf %18, %20 : vector<1x8x8x32xf32>
    %22 = arith.truncf %21 : vector<1x8x8x32xf32> to vector<1x8x8x32xbf16>
    %cst_7 = arith.constant 0.000000e+00 : bf16
    %23 = vector.broadcast %cst_7 : bf16 to vector<1x1x10x32xbf16>
    %cst_8 = arith.constant 0.000000e+00 : bf16
    %24 = vector.broadcast %cst_8 : bf16 to vector<1x8x1x32xbf16>
    %c0_9 = arith.constant 0 : index
    %c0_10 = arith.constant 0 : index
    %c0_11 = arith.constant 0 : index
    %c0_12 = arith.constant 0 : index
    %25 = vector.load %arg17[%c0_9, %c0_10, %c0_11, %c0_12] : memref<1x10x10x32xbf16, #tpu.memory_space<vmem>>, vector<1x1x10x32xbf16>
    tpu.vector_store %arg17[%c0_9, %c0_10, %c0_11, %c0_12], %23 {strides = array<i32>} : memref<1x10x10x32xbf16, #tpu.memory_space<vmem>>, vector<1x1x10x32xbf16>,
    %c0_13 = arith.constant 0 : index
    %c9 = arith.constant 9 : index
    %c0_14 = arith.constant 0 : index
    %c0_15 = arith.constant 0 : index
    %26 = vector.load %arg17[%c0_13, %c9, %c0_14, %c0_15] : memref<1x10x10x32xbf16, #tpu.memory_space<vmem>>, vector<1x1x10x32xbf16>
    tpu.vector_store %arg17[%c0_13, %c9, %c0_14, %c0_15], %23 {strides = array<i32>} : memref<1x10x10x32xbf16, #tpu.memory_space<vmem>>, vector<1x1x10x32xbf16>,
    %c0_16 = arith.constant 0 : index
    %c1 = arith.constant 1 : index
    %c0_17 = arith.constant 0 : index
    %c0_18 = arith.constant 0 : index
    %27 = vector.load %arg17[%c0_16, %c1, %c0_17, %c0_18] : memref<1x10x10x32xbf16, #tpu.memory_space<vmem>>, vector<1x8x1x32xbf16>
    tpu.vector_store %arg17[%c0_16, %c1, %c0_17, %c0_18], %24 {strides = array<i32>} : memref<1x10x10x32xbf16, #tpu.memory_space<vmem>>, vector<1x8x1x32xbf16>,
    %c0_19 = arith.constant 0 : index
    %c1_20 = arith.constant 1 : index
    %c9_21 = arith.constant 9 : index
    %c0_22 = arith.constant 0 : index
    %28 = vector.load %arg17[%c0_19, %c1_20, %c9_21, %c0_22] : memref<1x10x10x32xbf16, #tpu.memory_space<vmem>>, vector<1x8x1x32xbf16>
    tpu.vector_store %arg17[%c0_19, %c1_20, %c9_21, %c0_22], %24 {strides = array<i32>} : memref<1x10x10x32xbf16, #tpu.memory_space<vmem>>, vector<1x8x1x32xbf16>,
    %c0_23 = arith.constant 0 : index
    %c1_24 = arith.constant 1 : index
    %c1_25 = arith.constant 1 : index
    %c0_26 = arith.constant 0 : index
    %29 = vector.load %arg17[%c0_23, %c1_24, %c1_25, %c0_26] : memref<1x10x10x32xbf16, #tpu.memory_space<vmem>>, vector<1x8x8x32xbf16>
    tpu.vector_store %arg17[%c0_23, %c1_24, %c1_25, %c0_26], %22 {strides = array<i32>} : memref<1x10x10x32xbf16, #tpu.memory_space<vmem>>, vector<1x8x8x32xbf16>,
    %cst_27 = arith.constant 0.000000e+00 : f32
    %30 = vector.broadcast %cst_27 : f32 to vector<64x32xf32>
    %c0_28 = arith.constant 0 : index
    %c0_29 = arith.constant 0 : index
    %c0_30 = arith.constant 0 : index
    %c0_31 = arith.constant 0 : index
    %31 = vector.load %arg17[%c0_28, %c0_29, %c0_30, %c0_31] : memref<1x10x10x32xbf16, #tpu.memory_space<vmem>>, vector<1x8x8x32xbf16>
    %32 = vector.shape_cast %31 : vector<1x8x8x32xbf16> to vector<64x32xbf16>
    %c0_32 = arith.constant 0 : index
    %c0_33 = arith.constant 0 : index
    %c0_34 = arith.constant 0 : index
    %33 = vector.load %arg3[%c0_32, %c0_33, %c0_34] : memref<9x32x32xbf16, #tpu.memory_space<vmem>>, vector<1x32x32xbf16>
    %34 = vector.shape_cast %33 : vector<1x32x32xbf16> to vector<32x32xbf16>
    %cst_35 = arith.constant dense<0.000000e+00> : vector<64x32xf32>
    %35 = tpu.matmul %32, %34, %cst_35 {dimension_numbers = #tpu.dot_dimension_numbers<[1], [0], [0], [1], [0, 0, 1, 1], [], []>} : vector<64x32xbf16>, vector<32x32xbf16>, vector<64x32xf32> -> vector<64x32xf32>
    %36 = arith.addf %30, %35 : vector<64x32xf32>
    %c0_36 = arith.constant 0 : index
    %c0_37 = arith.constant 0 : index
    %c1_38 = arith.constant 1 : index
    %c0_39 = arith.constant 0 : index
    %37 = vector.load %arg17[%c0_36, %c0_37, %c1_38, %c0_39] : memref<1x10x10x32xbf16, #tpu.memory_space<vmem>>, vector<1x8x8x32xbf16>
    %38 = vector.shape_cast %37 : vector<1x8x8x32xbf16> to vector<64x32xbf16>
    %c1_40 = arith.constant 1 : index
    %c0_41 = arith.constant 0 : index
    %c0_42 = arith.constant 0 : index
    %39 = vector.load %arg3[%c1_40, %c0_41, %c0_42] : memref<9x32x32xbf16, #tpu.memory_space<vmem>>, vector<1x32x32xbf16>
    %40 = vector.shape_cast %39 : vector<1x32x32xbf16> to vector<32x32xbf16>
    %cst_43 = arith.constant dense<0.000000e+00> : vector<64x32xf32>
    %41 = tpu.matmul %38, %40, %cst_43 {dimension_numbers = #tpu.dot_dimension_numbers<[1], [0], [0], [1], [0, 0, 1, 1], [], []>} : vector<64x32xbf16>, vector<32x32xbf16>, vector<64x32xf32> -> vector<64x32xf32>
    %42 = arith.addf %36, %41 : vector<64x32xf32>
    %c0_44 = arith.constant 0 : index
    %c0_45 = arith.constant 0 : index
    %c2 = arith.constant 2 : index
    %c0_46 = arith.constant 0 : index
    %43 = vector.load %arg17[%c0_44, %c0_45, %c2, %c0_46] : memref<1x10x10x32xbf16, #tpu.memory_space<vmem>>, vector<1x8x8x32xbf16>
    %44 = vector.shape_cast %43 : vector<1x8x8x32xbf16> to vector<64x32xbf16>
    %c2_47 = arith.constant 2 : index
    %c0_48 = arith.constant 0 : index
    %c0_49 = arith.constant 0 : index
    %45 = vector.load %arg3[%c2_47, %c0_48, %c0_49] : memref<9x32x32xbf16, #tpu.memory_space<vmem>>, vector<1x32x32xbf16>
    %46 = vector.shape_cast %45 : vector<1x32x32xbf16> to vector<32x32xbf16>
    %cst_50 = arith.constant dense<0.000000e+00> : vector<64x32xf32>
    %47 = tpu.matmul %44, %46, %cst_50 {dimension_numbers = #tpu.dot_dimension_numbers<[1], [0], [0], [1], [0, 0, 1, 1], [], []>} : vector<64x32xbf16>, vector<32x32xbf16>, vector<64x32xf32> -> vector<64x32xf32>
    %48 = arith.addf %42, %47 : vector<64x32xf32>
    %c0_51 = arith.constant 0 : index
    %c1_52 = arith.constant 1 : index
    %c0_53 = arith.constant 0 : index
    %c0_54 = arith.constant 0 : index
    %49 = vector.load %arg17[%c0_51, %c1_52, %c0_53, %c0_54] : memref<1x10x10x32xbf16, #tpu.memory_space<vmem>>, vector<1x8x8x32xbf16>
    %50 = vector.shape_cast %49 : vector<1x8x8x32xbf16> to vector<64x32xbf16>
    %c3 = arith.constant 3 : index
    %c0_55 = arith.constant 0 : index
    %c0_56 = arith.constant 0 : index
    %51 = vector.load %arg3[%c3, %c0_55, %c0_56] : memref<9x32x32xbf16, #tpu.memory_space<vmem>>, vector<1x32x32xbf16>
    %52 = vector.shape_cast %51 : vector<1x32x32xbf16> to vector<32x32xbf16>
    %cst_57 = arith.constant dense<0.000000e+00> : vector<64x32xf32>
    %53 = tpu.matmul %50, %52, %cst_57 {dimension_numbers = #tpu.dot_dimension_numbers<[1], [0], [0], [1], [0, 0, 1, 1], [], []>} : vector<64x32xbf16>, vector<32x32xbf16>, vector<64x32xf32> -> vector<64x32xf32>
    %54 = arith.addf %48, %53 : vector<64x32xf32>
    %c0_58 = arith.constant 0 : index
    %c1_59 = arith.constant 1 : index
    %c1_60 = arith.constant 1 : index
    %c0_61 = arith.constant 0 : index
    %55 = vector.load %arg17[%c0_58, %c1_59, %c1_60, %c0_61] : memref<1x10x10x32xbf16, #tpu.memory_space<vmem>>, vector<1x8x8x32xbf16>
    %56 = vector.shape_cast %55 : vector<1x8x8x32xbf16> to vector<64x32xbf16>
    %c4 = arith.constant 4 : index
    %c0_62 = arith.constant 0 : index
    %c0_63 = arith.constant 0 : index
    %57 = vector.load %arg3[%c4, %c0_62, %c0_63] : memref<9x32x32xbf16, #tpu.memory_space<vmem>>, vector<1x32x32xbf16>
    %58 = vector.shape_cast %57 : vector<1x32x32xbf16> to vector<32x32xbf16>
    %cst_64 = arith.constant dense<0.000000e+00> : vector<64x32xf32>
    %59 = tpu.matmul %56, %58, %cst_64 {dimension_numbers = #tpu.dot_dimension_numbers<[1], [0], [0], [1], [0, 0, 1, 1], [], []>} : vector<64x32xbf16>, vector<32x32xbf16>, vector<64x32xf32> -> vector<64x32xf32>
    %60 = arith.addf %54, %59 : vector<64x32xf32>
    %c0_65 = arith.constant 0 : index
    %c1_66 = arith.constant 1 : index
    %c2_67 = arith.constant 2 : index
    %c0_68 = arith.constant 0 : index
    %61 = vector.load %arg17[%c0_65, %c1_66, %c2_67, %c0_68] : memref<1x10x10x32xbf16, #tpu.memory_space<vmem>>, vector<1x8x8x32xbf16>
    %62 = vector.shape_cast %61 : vector<1x8x8x32xbf16> to vector<64x32xbf16>
    %c5 = arith.constant 5 : index
    %c0_69 = arith.constant 0 : index
    %c0_70 = arith.constant 0 : index
    %63 = vector.load %arg3[%c5, %c0_69, %c0_70] : memref<9x32x32xbf16, #tpu.memory_space<vmem>>, vector<1x32x32xbf16>
    %64 = vector.shape_cast %63 : vector<1x32x32xbf16> to vector<32x32xbf16>
    %cst_71 = arith.constant dense<0.000000e+00> : vector<64x32xf32>
    %65 = tpu.matmul %62, %64, %cst_71 {dimension_numbers = #tpu.dot_dimension_numbers<[1], [0], [0], [1], [0, 0, 1, 1], [], []>} : vector<64x32xbf16>, vector<32x32xbf16>, vector<64x32xf32> -> vector<64x32xf32>
    %66 = arith.addf %60, %65 : vector<64x32xf32>
    %c0_72 = arith.constant 0 : index
    %c2_73 = arith.constant 2 : index
    %c0_74 = arith.constant 0 : index
    %c0_75 = arith.constant 0 : index
    %67 = vector.load %arg17[%c0_72, %c2_73, %c0_74, %c0_75] : memref<1x10x10x32xbf16, #tpu.memory_space<vmem>>, vector<1x8x8x32xbf16>
    %68 = vector.shape_cast %67 : vector<1x8x8x32xbf16> to vector<64x32xbf16>
    %c6 = arith.constant 6 : index
    %c0_76 = arith.constant 0 : index
    %c0_77 = arith.constant 0 : index
    %69 = vector.load %arg3[%c6, %c0_76, %c0_77] : memref<9x32x32xbf16, #tpu.memory_space<vmem>>, vector<1x32x32xbf16>
    %70 = vector.shape_cast %69 : vector<1x32x32xbf16> to vector<32x32xbf16>
    %cst_78 = arith.constant dense<0.000000e+00> : vector<64x32xf32>
    %71 = tpu.matmul %68, %70, %cst_78 {dimension_numbers = #tpu.dot_dimension_numbers<[1], [0], [0], [1], [0, 0, 1, 1], [], []>} : vector<64x32xbf16>, vector<32x32xbf16>, vector<64x32xf32> -> vector<64x32xf32>
    %72 = arith.addf %66, %71 : vector<64x32xf32>
    %c0_79 = arith.constant 0 : index
    %c2_80 = arith.constant 2 : index
    %c1_81 = arith.constant 1 : index
    %c0_82 = arith.constant 0 : index
    %73 = vector.load %arg17[%c0_79, %c2_80, %c1_81, %c0_82] : memref<1x10x10x32xbf16, #tpu.memory_space<vmem>>, vector<1x8x8x32xbf16>
    %74 = vector.shape_cast %73 : vector<1x8x8x32xbf16> to vector<64x32xbf16>
    %c7 = arith.constant 7 : index
    %c0_83 = arith.constant 0 : index
    %c0_84 = arith.constant 0 : index
    %75 = vector.load %arg3[%c7, %c0_83, %c0_84] : memref<9x32x32xbf16, #tpu.memory_space<vmem>>, vector<1x32x32xbf16>
    %76 = vector.shape_cast %75 : vector<1x32x32xbf16> to vector<32x32xbf16>
    %cst_85 = arith.constant dense<0.000000e+00> : vector<64x32xf32>
    %77 = tpu.matmul %74, %76, %cst_85 {dimension_numbers = #tpu.dot_dimension_numbers<[1], [0], [0], [1], [0, 0, 1, 1], [], []>} : vector<64x32xbf16>, vector<32x32xbf16>, vector<64x32xf32> -> vector<64x32xf32>
    %78 = arith.addf %72, %77 : vector<64x32xf32>
    %c0_86 = arith.constant 0 : index
    %c2_87 = arith.constant 2 : index
    %c2_88 = arith.constant 2 : index
    %c0_89 = arith.constant 0 : index
    %79 = vector.load %arg17[%c0_86, %c2_87, %c2_88, %c0_89] : memref<1x10x10x32xbf16, #tpu.memory_space<vmem>>, vector<1x8x8x32xbf16>
    %80 = vector.shape_cast %79 : vector<1x8x8x32xbf16> to vector<64x32xbf16>
    %c8 = arith.constant 8 : index
    %c0_90 = arith.constant 0 : index
    %c0_91 = arith.constant 0 : index
    %81 = vector.load %arg3[%c8, %c0_90, %c0_91] : memref<9x32x32xbf16, #tpu.memory_space<vmem>>, vector<1x32x32xbf16>
    %82 = vector.shape_cast %81 : vector<1x32x32xbf16> to vector<32x32xbf16>
    %cst_92 = arith.constant dense<0.000000e+00> : vector<64x32xf32>
    %83 = tpu.matmul %80, %82, %cst_92 {dimension_numbers = #tpu.dot_dimension_numbers<[1], [0], [0], [1], [0, 0, 1, 1], [], []>} : vector<64x32xbf16>, vector<32x32xbf16>, vector<64x32xf32> -> vector<64x32xf32>
    %84 = arith.addf %78, %83 : vector<64x32xf32>
    %c0_93 = arith.constant 0 : index
    %c0_94 = arith.constant 0 : index
    %85 = vector.load %arg9[%c0_93, %c0_94] : memref<1x32xf32, #tpu.memory_space<vmem>>, vector<1x32xf32>
    %86 = vector.broadcast %85 : vector<1x32xf32> to vector<64x32xf32>
    %87 = arith.addf %84, %86 : vector<64x32xf32>
    %cst_95 = arith.constant 0.000000e+00 : f32
    %88 = vector.broadcast %cst_95 : f32 to vector<64x32xf32>
    %89 = arith.maximumf %87, %88 : vector<64x32xf32>
    %90 = vector.shape_cast %89 : vector<64x32xf32> to vector<1x8x8x32xf32>
    %91 = vector.shape_cast %90 : vector<1x8x8x32xf32> to vector<1x8x4x2x32xf32>
    %92 = vector.extract_strided_slice %91 {offsets = [0, 0, 0, 0, 0], sizes = [1, 8, 4, 1, 32], strides = [1, 1, 1, 1, 1]} : vector<1x8x4x2x32xf32> to vector<1x8x4x1x32xf32>
    %93 = vector.shape_cast %92 : vector<1x8x4x1x32xf32> to vector<1x8x4x32xf32>
    %94 = vector.extract_strided_slice %91 {offsets = [0, 0, 0, 1, 0], sizes = [1, 8, 4, 1, 32], strides = [1, 1, 1, 1, 1]} : vector<1x8x4x2x32xf32> to vector<1x8x4x1x32xf32>
    %95 = vector.shape_cast %94 : vector<1x8x4x1x32xf32> to vector<1x8x4x32xf32>
    %96 = arith.maximumf %93, %95 : vector<1x8x4x32xf32>
    %97 = vector.shape_cast %96 : vector<1x8x4x32xf32> to vector<1x4x2x4x32xf32>
    %98 = vector.extract_strided_slice %97 {offsets = [0, 0, 0, 0, 0], sizes = [1, 4, 1, 4, 32], strides = [1, 1, 1, 1, 1]} : vector<1x4x2x4x32xf32> to vector<1x4x1x4x32xf32>
    %99 = vector.shape_cast %98 : vector<1x4x1x4x32xf32> to vector<1x4x4x32xf32>
    %100 = vector.extract_strided_slice %97 {offsets = [0, 0, 1, 0, 0], sizes = [1, 4, 1, 4, 32], strides = [1, 1, 1, 1, 1]} : vector<1x4x2x4x32xf32> to vector<1x4x1x4x32xf32>
    %101 = vector.shape_cast %100 : vector<1x4x1x4x32xf32> to vector<1x4x4x32xf32>
    %102 = arith.maximumf %99, %101 : vector<1x4x4x32xf32>
    %103 = arith.truncf %102 : vector<1x4x4x32xf32> to vector<1x4x4x32xbf16>
    %cst_96 = arith.constant 0.000000e+00 : bf16
    %104 = vector.broadcast %cst_96 : bf16 to vector<1x1x6x32xbf16>
    %cst_97 = arith.constant 0.000000e+00 : bf16
    %105 = vector.broadcast %cst_97 : bf16 to vector<1x4x1x32xbf16>
    %c0_98 = arith.constant 0 : index
    %c0_99 = arith.constant 0 : index
    %c0_100 = arith.constant 0 : index
    %c0_101 = arith.constant 0 : index
    %106 = vector.load %arg18[%c0_98, %c0_99, %c0_100, %c0_101] : memref<1x6x6x32xbf16, #tpu.memory_space<vmem>>, vector<1x1x6x32xbf16>
    tpu.vector_store %arg18[%c0_98, %c0_99, %c0_100, %c0_101], %104 {strides = array<i32>} : memref<1x6x6x32xbf16, #tpu.memory_space<vmem>>, vector<1x1x6x32xbf16>,
    %c0_102 = arith.constant 0 : index
    %c5_103 = arith.constant 5 : index
    %c0_104 = arith.constant 0 : index
    %c0_105 = arith.constant 0 : index
    %107 = vector.load %arg18[%c0_102, %c5_103, %c0_104, %c0_105] : memref<1x6x6x32xbf16, #tpu.memory_space<vmem>>, vector<1x1x6x32xbf16>
    tpu.vector_store %arg18[%c0_102, %c5_103, %c0_104, %c0_105], %104 {strides = array<i32>} : memref<1x6x6x32xbf16, #tpu.memory_space<vmem>>, vector<1x1x6x32xbf16>,
    %c0_106 = arith.constant 0 : index
    %c1_107 = arith.constant 1 : index
    %c0_108 = arith.constant 0 : index
    %c0_109 = arith.constant 0 : index
    %108 = vector.load %arg18[%c0_106, %c1_107, %c0_108, %c0_109] : memref<1x6x6x32xbf16, #tpu.memory_space<vmem>>, vector<1x4x1x32xbf16>
    tpu.vector_store %arg18[%c0_106, %c1_107, %c0_108, %c0_109], %105 {strides = array<i32>} : memref<1x6x6x32xbf16, #tpu.memory_space<vmem>>, vector<1x4x1x32xbf16>,
    %c0_110 = arith.constant 0 : index
    %c1_111 = arith.constant 1 : index
    %c5_112 = arith.constant 5 : index
    %c0_113 = arith.constant 0 : index
    %109 = vector.load %arg18[%c0_110, %c1_111, %c5_112, %c0_113] : memref<1x6x6x32xbf16, #tpu.memory_space<vmem>>, vector<1x4x1x32xbf16>
    tpu.vector_store %arg18[%c0_110, %c1_111, %c5_112, %c0_113], %105 {strides = array<i32>} : memref<1x6x6x32xbf16, #tpu.memory_space<vmem>>, vector<1x4x1x32xbf16>,
    %c0_114 = arith.constant 0 : index
    %c1_115 = arith.constant 1 : index
    %c1_116 = arith.constant 1 : index
    %c0_117 = arith.constant 0 : index
    %110 = vector.load %arg18[%c0_114, %c1_115, %c1_116, %c0_117] : memref<1x6x6x32xbf16, #tpu.memory_space<vmem>>, vector<1x4x4x32xbf16>
    tpu.vector_store %arg18[%c0_114, %c1_115, %c1_116, %c0_117], %103 {strides = array<i32>} : memref<1x6x6x32xbf16, #tpu.memory_space<vmem>>, vector<1x4x4x32xbf16>,
    %cst_118 = arith.constant 0.000000e+00 : f32
    %111 = vector.broadcast %cst_118 : f32 to vector<16x64xf32>
    %c0_119 = arith.constant 0 : index
    %c0_120 = arith.constant 0 : index
    %c0_121 = arith.constant 0 : index
    %c0_122 = arith.constant 0 : index
    %112 = vector.load %arg18[%c0_119, %c0_120, %c0_121, %c0_122] : memref<1x6x6x32xbf16, #tpu.memory_space<vmem>>, vector<1x4x4x32xbf16>
    %113 = vector.shape_cast %112 : vector<1x4x4x32xbf16> to vector<16x32xbf16>
    %c0_123 = arith.constant 0 : index
    %c0_124 = arith.constant 0 : index
    %c0_125 = arith.constant 0 : index
    %114 = vector.load %arg4[%c0_123, %c0_124, %c0_125] : memref<9x32x64xbf16, #tpu.memory_space<vmem>>, vector<1x32x64xbf16>
    %115 = vector.shape_cast %114 : vector<1x32x64xbf16> to vector<32x64xbf16>
    %cst_126 = arith.constant dense<0.000000e+00> : vector<16x64xf32>
    %116 = tpu.matmul %113, %115, %cst_126 {dimension_numbers = #tpu.dot_dimension_numbers<[1], [0], [0], [1], [0, 0, 1, 1], [], []>} : vector<16x32xbf16>, vector<32x64xbf16>, vector<16x64xf32> -> vector<16x64xf32>
    %117 = arith.addf %111, %116 : vector<16x64xf32>
    %c0_127 = arith.constant 0 : index
    %c0_128 = arith.constant 0 : index
    %c1_129 = arith.constant 1 : index
    %c0_130 = arith.constant 0 : index
    %118 = vector.load %arg18[%c0_127, %c0_128, %c1_129, %c0_130] : memref<1x6x6x32xbf16, #tpu.memory_space<vmem>>, vector<1x4x4x32xbf16>
    %119 = vector.shape_cast %118 : vector<1x4x4x32xbf16> to vector<16x32xbf16>
    %c1_131 = arith.constant 1 : index
    %c0_132 = arith.constant 0 : index
    %c0_133 = arith.constant 0 : index
    %120 = vector.load %arg4[%c1_131, %c0_132, %c0_133] : memref<9x32x64xbf16, #tpu.memory_space<vmem>>, vector<1x32x64xbf16>
    %121 = vector.shape_cast %120 : vector<1x32x64xbf16> to vector<32x64xbf16>
    %cst_134 = arith.constant dense<0.000000e+00> : vector<16x64xf32>
    %122 = tpu.matmul %119, %121, %cst_134 {dimension_numbers = #tpu.dot_dimension_numbers<[1], [0], [0], [1], [0, 0, 1, 1], [], []>} : vector<16x32xbf16>, vector<32x64xbf16>, vector<16x64xf32> -> vector<16x64xf32>
    %123 = arith.addf %117, %122 : vector<16x64xf32>
    %c0_135 = arith.constant 0 : index
    %c0_136 = arith.constant 0 : index
    %c2_137 = arith.constant 2 : index
    %c0_138 = arith.constant 0 : index
    %124 = vector.load %arg18[%c0_135, %c0_136, %c2_137, %c0_138] : memref<1x6x6x32xbf16, #tpu.memory_space<vmem>>, vector<1x4x4x32xbf16>
    %125 = vector.shape_cast %124 : vector<1x4x4x32xbf16> to vector<16x32xbf16>
    %c2_139 = arith.constant 2 : index
    %c0_140 = arith.constant 0 : index
    %c0_141 = arith.constant 0 : index
    %126 = vector.load %arg4[%c2_139, %c0_140, %c0_141] : memref<9x32x64xbf16, #tpu.memory_space<vmem>>, vector<1x32x64xbf16>
    %127 = vector.shape_cast %126 : vector<1x32x64xbf16> to vector<32x64xbf16>
    %cst_142 = arith.constant dense<0.000000e+00> : vector<16x64xf32>
    %128 = tpu.matmul %125, %127, %cst_142 {dimension_numbers = #tpu.dot_dimension_numbers<[1], [0], [0], [1], [0, 0, 1, 1], [], []>} : vector<16x32xbf16>, vector<32x64xbf16>, vector<16x64xf32> -> vector<16x64xf32>
    %129 = arith.addf %123, %128 : vector<16x64xf32>
    %c0_143 = arith.constant 0 : index
    %c1_144 = arith.constant 1 : index
    %c0_145 = arith.constant 0 : index
    %c0_146 = arith.constant 0 : index
    %130 = vector.load %arg18[%c0_143, %c1_144, %c0_145, %c0_146] : memref<1x6x6x32xbf16, #tpu.memory_space<vmem>>, vector<1x4x4x32xbf16>
    %131 = vector.shape_cast %130 : vector<1x4x4x32xbf16> to vector<16x32xbf16>
    %c3_147 = arith.constant 3 : index
    %c0_148 = arith.constant 0 : index
    %c0_149 = arith.constant 0 : index
    %132 = vector.load %arg4[%c3_147, %c0_148, %c0_149] : memref<9x32x64xbf16, #tpu.memory_space<vmem>>, vector<1x32x64xbf16>
    %133 = vector.shape_cast %132 : vector<1x32x64xbf16> to vector<32x64xbf16>
    %cst_150 = arith.constant dense<0.000000e+00> : vector<16x64xf32>
    %134 = tpu.matmul %131, %133, %cst_150 {dimension_numbers = #tpu.dot_dimension_numbers<[1], [0], [0], [1], [0, 0, 1, 1], [], []>} : vector<16x32xbf16>, vector<32x64xbf16>, vector<16x64xf32> -> vector<16x64xf32>
    %135 = arith.addf %129, %134 : vector<16x64xf32>
    %c0_151 = arith.constant 0 : index
    %c1_152 = arith.constant 1 : index
    %c1_153 = arith.constant 1 : index
    %c0_154 = arith.constant 0 : index
    %136 = vector.load %arg18[%c0_151, %c1_152, %c1_153, %c0_154] : memref<1x6x6x32xbf16, #tpu.memory_space<vmem>>, vector<1x4x4x32xbf16>
    %137 = vector.shape_cast %136 : vector<1x4x4x32xbf16> to vector<16x32xbf16>
    %c4_155 = arith.constant 4 : index
    %c0_156 = arith.constant 0 : index
    %c0_157 = arith.constant 0 : index
    %138 = vector.load %arg4[%c4_155, %c0_156, %c0_157] : memref<9x32x64xbf16, #tpu.memory_space<vmem>>, vector<1x32x64xbf16>
    %139 = vector.shape_cast %138 : vector<1x32x64xbf16> to vector<32x64xbf16>
    %cst_158 = arith.constant dense<0.000000e+00> : vector<16x64xf32>
    %140 = tpu.matmul %137, %139, %cst_158 {dimension_numbers = #tpu.dot_dimension_numbers<[1], [0], [0], [1], [0, 0, 1, 1], [], []>} : vector<16x32xbf16>, vector<32x64xbf16>, vector<16x64xf32> -> vector<16x64xf32>
    %141 = arith.addf %135, %140 : vector<16x64xf32>
    %c0_159 = arith.constant 0 : index
    %c1_160 = arith.constant 1 : index
    %c2_161 = arith.constant 2 : index
    %c0_162 = arith.constant 0 : index
    %142 = vector.load %arg18[%c0_159, %c1_160, %c2_161, %c0_162] : memref<1x6x6x32xbf16, #tpu.memory_space<vmem>>, vector<1x4x4x32xbf16>
    %143 = vector.shape_cast %142 : vector<1x4x4x32xbf16> to vector<16x32xbf16>
    %c5_163 = arith.constant 5 : index
    %c0_164 = arith.constant 0 : index
    %c0_165 = arith.constant 0 : index
    %144 = vector.load %arg4[%c5_163, %c0_164, %c0_165] : memref<9x32x64xbf16, #tpu.memory_space<vmem>>, vector<1x32x64xbf16>
    %145 = vector.shape_cast %144 : vector<1x32x64xbf16> to vector<32x64xbf16>
    %cst_166 = arith.constant dense<0.000000e+00> : vector<16x64xf32>
    %146 = tpu.matmul %143, %145, %cst_166 {dimension_numbers = #tpu.dot_dimension_numbers<[1], [0], [0], [1], [0, 0, 1, 1], [], []>} : vector<16x32xbf16>, vector<32x64xbf16>, vector<16x64xf32> -> vector<16x64xf32>
    %147 = arith.addf %141, %146 : vector<16x64xf32>
    %c0_167 = arith.constant 0 : index
    %c2_168 = arith.constant 2 : index
    %c0_169 = arith.constant 0 : index
    %c0_170 = arith.constant 0 : index
    %148 = vector.load %arg18[%c0_167, %c2_168, %c0_169, %c0_170] : memref<1x6x6x32xbf16, #tpu.memory_space<vmem>>, vector<1x4x4x32xbf16>
    %149 = vector.shape_cast %148 : vector<1x4x4x32xbf16> to vector<16x32xbf16>
    %c6_171 = arith.constant 6 : index
    %c0_172 = arith.constant 0 : index
    %c0_173 = arith.constant 0 : index
    %150 = vector.load %arg4[%c6_171, %c0_172, %c0_173] : memref<9x32x64xbf16, #tpu.memory_space<vmem>>, vector<1x32x64xbf16>
    %151 = vector.shape_cast %150 : vector<1x32x64xbf16> to vector<32x64xbf16>
    %cst_174 = arith.constant dense<0.000000e+00> : vector<16x64xf32>
    %152 = tpu.matmul %149, %151, %cst_174 {dimension_numbers = #tpu.dot_dimension_numbers<[1], [0], [0], [1], [0, 0, 1, 1], [], []>} : vector<16x32xbf16>, vector<32x64xbf16>, vector<16x64xf32> -> vector<16x64xf32>
    %153 = arith.addf %147, %152 : vector<16x64xf32>
    %c0_175 = arith.constant 0 : index
    %c2_176 = arith.constant 2 : index
    %c1_177 = arith.constant 1 : index
    %c0_178 = arith.constant 0 : index
    %154 = vector.load %arg18[%c0_175, %c2_176, %c1_177, %c0_178] : memref<1x6x6x32xbf16, #tpu.memory_space<vmem>>, vector<1x4x4x32xbf16>
    %155 = vector.shape_cast %154 : vector<1x4x4x32xbf16> to vector<16x32xbf16>
    %c7_179 = arith.constant 7 : index
    %c0_180 = arith.constant 0 : index
    %c0_181 = arith.constant 0 : index
    %156 = vector.load %arg4[%c7_179, %c0_180, %c0_181] : memref<9x32x64xbf16, #tpu.memory_space<vmem>>, vector<1x32x64xbf16>
    %157 = vector.shape_cast %156 : vector<1x32x64xbf16> to vector<32x64xbf16>
    %cst_182 = arith.constant dense<0.000000e+00> : vector<16x64xf32>
    %158 = tpu.matmul %155, %157, %cst_182 {dimension_numbers = #tpu.dot_dimension_numbers<[1], [0], [0], [1], [0, 0, 1, 1], [], []>} : vector<16x32xbf16>, vector<32x64xbf16>, vector<16x64xf32> -> vector<16x64xf32>
    %159 = arith.addf %153, %158 : vector<16x64xf32>
    %c0_183 = arith.constant 0 : index
    %c2_184 = arith.constant 2 : index
    %c2_185 = arith.constant 2 : index
    %c0_186 = arith.constant 0 : index
    %160 = vector.load %arg18[%c0_183, %c2_184, %c2_185, %c0_186] : memref<1x6x6x32xbf16, #tpu.memory_space<vmem>>, vector<1x4x4x32xbf16>
    %161 = vector.shape_cast %160 : vector<1x4x4x32xbf16> to vector<16x32xbf16>
    %c8_187 = arith.constant 8 : index
    %c0_188 = arith.constant 0 : index
    %c0_189 = arith.constant 0 : index
    %162 = vector.load %arg4[%c8_187, %c0_188, %c0_189] : memref<9x32x64xbf16, #tpu.memory_space<vmem>>, vector<1x32x64xbf16>
    %163 = vector.shape_cast %162 : vector<1x32x64xbf16> to vector<32x64xbf16>
    %cst_190 = arith.constant dense<0.000000e+00> : vector<16x64xf32>
    %164 = tpu.matmul %161, %163, %cst_190 {dimension_numbers = #tpu.dot_dimension_numbers<[1], [0], [0], [1], [0, 0, 1, 1], [], []>} : vector<16x32xbf16>, vector<32x64xbf16>, vector<16x64xf32> -> vector<16x64xf32>
    %165 = arith.addf %159, %164 : vector<16x64xf32>
    %c0_191 = arith.constant 0 : index
    %c0_192 = arith.constant 0 : index
    %166 = vector.load %arg10[%c0_191, %c0_192] : memref<1x64xf32, #tpu.memory_space<vmem>>, vector<1x64xf32>
    %167 = vector.broadcast %166 : vector<1x64xf32> to vector<16x64xf32>
    %168 = arith.addf %165, %167 : vector<16x64xf32>
    %cst_193 = arith.constant 0.000000e+00 : f32
    %169 = vector.broadcast %cst_193 : f32 to vector<16x64xf32>
    %170 = arith.maximumf %168, %169 : vector<16x64xf32>
    %171 = vector.shape_cast %170 : vector<16x64xf32> to vector<1x4x4x64xf32>
    %172 = arith.truncf %171 : vector<1x4x4x64xf32> to vector<1x4x4x64xbf16>
    %cst_194 = arith.constant 0.000000e+00 : bf16
    %173 = vector.broadcast %cst_194 : bf16 to vector<1x1x6x64xbf16>
    %cst_195 = arith.constant 0.000000e+00 : bf16
    %174 = vector.broadcast %cst_195 : bf16 to vector<1x4x1x64xbf16>
    %c0_196 = arith.constant 0 : index
    %c0_197 = arith.constant 0 : index
    %c0_198 = arith.constant 0 : index
    %c0_199 = arith.constant 0 : index
    %175 = vector.load %arg19[%c0_196, %c0_197, %c0_198, %c0_199] : memref<1x6x6x64xbf16, #tpu.memory_space<vmem>>, vector<1x1x6x64xbf16>
    tpu.vector_store %arg19[%c0_196, %c0_197, %c0_198, %c0_199], %173 {strides = array<i32>} : memref<1x6x6x64xbf16, #tpu.memory_space<vmem>>, vector<1x1x6x64xbf16>,
    %c0_200 = arith.constant 0 : index
    %c5_201 = arith.constant 5 : index
    %c0_202 = arith.constant 0 : index
    %c0_203 = arith.constant 0 : index
    %176 = vector.load %arg19[%c0_200, %c5_201, %c0_202, %c0_203] : memref<1x6x6x64xbf16, #tpu.memory_space<vmem>>, vector<1x1x6x64xbf16>
    tpu.vector_store %arg19[%c0_200, %c5_201, %c0_202, %c0_203], %173 {strides = array<i32>} : memref<1x6x6x64xbf16, #tpu.memory_space<vmem>>, vector<1x1x6x64xbf16>,
    %c0_204 = arith.constant 0 : index
    %c1_205 = arith.constant 1 : index
    %c0_206 = arith.constant 0 : index
    %c0_207 = arith.constant 0 : index
    %177 = vector.load %arg19[%c0_204, %c1_205, %c0_206, %c0_207] : memref<1x6x6x64xbf16, #tpu.memory_space<vmem>>, vector<1x4x1x64xbf16>
    tpu.vector_store %arg19[%c0_204, %c1_205, %c0_206, %c0_207], %174 {strides = array<i32>} : memref<1x6x6x64xbf16, #tpu.memory_space<vmem>>, vector<1x4x1x64xbf16>,
    %c0_208 = arith.constant 0 : index
    %c1_209 = arith.constant 1 : index
    %c5_210 = arith.constant 5 : index
    %c0_211 = arith.constant 0 : index
    %178 = vector.load %arg19[%c0_208, %c1_209, %c5_210, %c0_211] : memref<1x6x6x64xbf16, #tpu.memory_space<vmem>>, vector<1x4x1x64xbf16>
    tpu.vector_store %arg19[%c0_208, %c1_209, %c5_210, %c0_211], %174 {strides = array<i32>} : memref<1x6x6x64xbf16, #tpu.memory_space<vmem>>, vector<1x4x1x64xbf16>,
    %c0_212 = arith.constant 0 : index
    %c1_213 = arith.constant 1 : index
    %c1_214 = arith.constant 1 : index
    %c0_215 = arith.constant 0 : index
    %179 = vector.load %arg19[%c0_212, %c1_213, %c1_214, %c0_215] : memref<1x6x6x64xbf16, #tpu.memory_space<vmem>>, vector<1x4x4x64xbf16>
    tpu.vector_store %arg19[%c0_212, %c1_213, %c1_214, %c0_215], %172 {strides = array<i32>} : memref<1x6x6x64xbf16, #tpu.memory_space<vmem>>, vector<1x4x4x64xbf16>,
    %cst_216 = arith.constant 0.000000e+00 : f32
    %180 = vector.broadcast %cst_216 : f32 to vector<16x64xf32>
    %c0_217 = arith.constant 0 : index
    %c0_218 = arith.constant 0 : index
    %c0_219 = arith.constant 0 : index
    %c0_220 = arith.constant 0 : index
    %181 = vector.load %arg19[%c0_217, %c0_218, %c0_219, %c0_220] : memref<1x6x6x64xbf16, #tpu.memory_space<vmem>>, vector<1x4x4x64xbf16>
    %182 = vector.shape_cast %181 : vector<1x4x4x64xbf16> to vector<16x64xbf16>
    %c0_221 = arith.constant 0 : index
    %c0_222 = arith.constant 0 : index
    %c0_223 = arith.constant 0 : index
    %183 = vector.load %arg5[%c0_221, %c0_222, %c0_223] : memref<9x64x64xbf16, #tpu.memory_space<vmem>>, vector<1x64x64xbf16>
    %184 = vector.shape_cast %183 : vector<1x64x64xbf16> to vector<64x64xbf16>
    %cst_224 = arith.constant dense<0.000000e+00> : vector<16x64xf32>
    %185 = tpu.matmul %182, %184, %cst_224 {dimension_numbers = #tpu.dot_dimension_numbers<[1], [0], [0], [1], [0, 0, 1, 1], [], []>} : vector<16x64xbf16>, vector<64x64xbf16>, vector<16x64xf32> -> vector<16x64xf32>
    %186 = arith.addf %180, %185 : vector<16x64xf32>
    %c0_225 = arith.constant 0 : index
    %c0_226 = arith.constant 0 : index
    %c1_227 = arith.constant 1 : index
    %c0_228 = arith.constant 0 : index
    %187 = vector.load %arg19[%c0_225, %c0_226, %c1_227, %c0_228] : memref<1x6x6x64xbf16, #tpu.memory_space<vmem>>, vector<1x4x4x64xbf16>
    %188 = vector.shape_cast %187 : vector<1x4x4x64xbf16> to vector<16x64xbf16>
    %c1_229 = arith.constant 1 : index
    %c0_230 = arith.constant 0 : index
    %c0_231 = arith.constant 0 : index
    %189 = vector.load %arg5[%c1_229, %c0_230, %c0_231] : memref<9x64x64xbf16, #tpu.memory_space<vmem>>, vector<1x64x64xbf16>
    %190 = vector.shape_cast %189 : vector<1x64x64xbf16> to vector<64x64xbf16>
    %cst_232 = arith.constant dense<0.000000e+00> : vector<16x64xf32>
    %191 = tpu.matmul %188, %190, %cst_232 {dimension_numbers = #tpu.dot_dimension_numbers<[1], [0], [0], [1], [0, 0, 1, 1], [], []>} : vector<16x64xbf16>, vector<64x64xbf16>, vector<16x64xf32> -> vector<16x64xf32>
    %192 = arith.addf %186, %191 : vector<16x64xf32>
    %c0_233 = arith.constant 0 : index
    %c0_234 = arith.constant 0 : index
    %c2_235 = arith.constant 2 : index
    %c0_236 = arith.constant 0 : index
    %193 = vector.load %arg19[%c0_233, %c0_234, %c2_235, %c0_236] : memref<1x6x6x64xbf16, #tpu.memory_space<vmem>>, vector<1x4x4x64xbf16>
    %194 = vector.shape_cast %193 : vector<1x4x4x64xbf16> to vector<16x64xbf16>
    %c2_237 = arith.constant 2 : index
    %c0_238 = arith.constant 0 : index
    %c0_239 = arith.constant 0 : index
    %195 = vector.load %arg5[%c2_237, %c0_238, %c0_239] : memref<9x64x64xbf16, #tpu.memory_space<vmem>>, vector<1x64x64xbf16>
    %196 = vector.shape_cast %195 : vector<1x64x64xbf16> to vector<64x64xbf16>
    %cst_240 = arith.constant dense<0.000000e+00> : vector<16x64xf32>
    %197 = tpu.matmul %194, %196, %cst_240 {dimension_numbers = #tpu.dot_dimension_numbers<[1], [0], [0], [1], [0, 0, 1, 1], [], []>} : vector<16x64xbf16>, vector<64x64xbf16>, vector<16x64xf32> -> vector<16x64xf32>
    %198 = arith.addf %192, %197 : vector<16x64xf32>
    %c0_241 = arith.constant 0 : index
    %c1_242 = arith.constant 1 : index
    %c0_243 = arith.constant 0 : index
    %c0_244 = arith.constant 0 : index
    %199 = vector.load %arg19[%c0_241, %c1_242, %c0_243, %c0_244] : memref<1x6x6x64xbf16, #tpu.memory_space<vmem>>, vector<1x4x4x64xbf16>
    %200 = vector.shape_cast %199 : vector<1x4x4x64xbf16> to vector<16x64xbf16>
    %c3_245 = arith.constant 3 : index
    %c0_246 = arith.constant 0 : index
    %c0_247 = arith.constant 0 : index
    %201 = vector.load %arg5[%c3_245, %c0_246, %c0_247] : memref<9x64x64xbf16, #tpu.memory_space<vmem>>, vector<1x64x64xbf16>
    %202 = vector.shape_cast %201 : vector<1x64x64xbf16> to vector<64x64xbf16>
    %cst_248 = arith.constant dense<0.000000e+00> : vector<16x64xf32>
    %203 = tpu.matmul %200, %202, %cst_248 {dimension_numbers = #tpu.dot_dimension_numbers<[1], [0], [0], [1], [0, 0, 1, 1], [], []>} : vector<16x64xbf16>, vector<64x64xbf16>, vector<16x64xf32> -> vector<16x64xf32>
    %204 = arith.addf %198, %203 : vector<16x64xf32>
    %c0_249 = arith.constant 0 : index
    %c1_250 = arith.constant 1 : index
    %c1_251 = arith.constant 1 : index
    %c0_252 = arith.constant 0 : index
    %205 = vector.load %arg19[%c0_249, %c1_250, %c1_251, %c0_252] : memref<1x6x6x64xbf16, #tpu.memory_space<vmem>>, vector<1x4x4x64xbf16>
    %206 = vector.shape_cast %205 : vector<1x4x4x64xbf16> to vector<16x64xbf16>
    %c4_253 = arith.constant 4 : index
    %c0_254 = arith.constant 0 : index
    %c0_255 = arith.constant 0 : index
    %207 = vector.load %arg5[%c4_253, %c0_254, %c0_255] : memref<9x64x64xbf16, #tpu.memory_space<vmem>>, vector<1x64x64xbf16>
    %208 = vector.shape_cast %207 : vector<1x64x64xbf16> to vector<64x64xbf16>
    %cst_256 = arith.constant dense<0.000000e+00> : vector<16x64xf32>
    %209 = tpu.matmul %206, %208, %cst_256 {dimension_numbers = #tpu.dot_dimension_numbers<[1], [0], [0], [1], [0, 0, 1, 1], [], []>} : vector<16x64xbf16>, vector<64x64xbf16>, vector<16x64xf32> -> vector<16x64xf32>
    %210 = arith.addf %204, %209 : vector<16x64xf32>
    %c0_257 = arith.constant 0 : index
    %c1_258 = arith.constant 1 : index
    %c2_259 = arith.constant 2 : index
    %c0_260 = arith.constant 0 : index
    %211 = vector.load %arg19[%c0_257, %c1_258, %c2_259, %c0_260] : memref<1x6x6x64xbf16, #tpu.memory_space<vmem>>, vector<1x4x4x64xbf16>
    %212 = vector.shape_cast %211 : vector<1x4x4x64xbf16> to vector<16x64xbf16>
    %c5_261 = arith.constant 5 : index
    %c0_262 = arith.constant 0 : index
    %c0_263 = arith.constant 0 : index
    %213 = vector.load %arg5[%c5_261, %c0_262, %c0_263] : memref<9x64x64xbf16, #tpu.memory_space<vmem>>, vector<1x64x64xbf16>
    %214 = vector.shape_cast %213 : vector<1x64x64xbf16> to vector<64x64xbf16>
    %cst_264 = arith.constant dense<0.000000e+00> : vector<16x64xf32>
    %215 = tpu.matmul %212, %214, %cst_264 {dimension_numbers = #tpu.dot_dimension_numbers<[1], [0], [0], [1], [0, 0, 1, 1], [], []>} : vector<16x64xbf16>, vector<64x64xbf16>, vector<16x64xf32> -> vector<16x64xf32>
    %216 = arith.addf %210, %215 : vector<16x64xf32>
    %c0_265 = arith.constant 0 : index
    %c2_266 = arith.constant 2 : index
    %c0_267 = arith.constant 0 : index
    %c0_268 = arith.constant 0 : index
    %217 = vector.load %arg19[%c0_265, %c2_266, %c0_267, %c0_268] : memref<1x6x6x64xbf16, #tpu.memory_space<vmem>>, vector<1x4x4x64xbf16>
    %218 = vector.shape_cast %217 : vector<1x4x4x64xbf16> to vector<16x64xbf16>
    %c6_269 = arith.constant 6 : index
    %c0_270 = arith.constant 0 : index
    %c0_271 = arith.constant 0 : index
    %219 = vector.load %arg5[%c6_269, %c0_270, %c0_271] : memref<9x64x64xbf16, #tpu.memory_space<vmem>>, vector<1x64x64xbf16>
    %220 = vector.shape_cast %219 : vector<1x64x64xbf16> to vector<64x64xbf16>
    %cst_272 = arith.constant dense<0.000000e+00> : vector<16x64xf32>
    %221 = tpu.matmul %218, %220, %cst_272 {dimension_numbers = #tpu.dot_dimension_numbers<[1], [0], [0], [1], [0, 0, 1, 1], [], []>} : vector<16x64xbf16>, vector<64x64xbf16>, vector<16x64xf32> -> vector<16x64xf32>
    %222 = arith.addf %216, %221 : vector<16x64xf32>
    %c0_273 = arith.constant 0 : index
    %c2_274 = arith.constant 2 : index
    %c1_275 = arith.constant 1 : index
    %c0_276 = arith.constant 0 : index
    %223 = vector.load %arg19[%c0_273, %c2_274, %c1_275, %c0_276] : memref<1x6x6x64xbf16, #tpu.memory_space<vmem>>, vector<1x4x4x64xbf16>
    %224 = vector.shape_cast %223 : vector<1x4x4x64xbf16> to vector<16x64xbf16>
    %c7_277 = arith.constant 7 : index
    %c0_278 = arith.constant 0 : index
    %c0_279 = arith.constant 0 : index
    %225 = vector.load %arg5[%c7_277, %c0_278, %c0_279] : memref<9x64x64xbf16, #tpu.memory_space<vmem>>, vector<1x64x64xbf16>
    %226 = vector.shape_cast %225 : vector<1x64x64xbf16> to vector<64x64xbf16>
    %cst_280 = arith.constant dense<0.000000e+00> : vector<16x64xf32>
    %227 = tpu.matmul %224, %226, %cst_280 {dimension_numbers = #tpu.dot_dimension_numbers<[1], [0], [0], [1], [0, 0, 1, 1], [], []>} : vector<16x64xbf16>, vector<64x64xbf16>, vector<16x64xf32> -> vector<16x64xf32>
    %228 = arith.addf %222, %227 : vector<16x64xf32>
    %c0_281 = arith.constant 0 : index
    %c2_282 = arith.constant 2 : index
    %c2_283 = arith.constant 2 : index
    %c0_284 = arith.constant 0 : index
    %229 = vector.load %arg19[%c0_281, %c2_282, %c2_283, %c0_284] : memref<1x6x6x64xbf16, #tpu.memory_space<vmem>>, vector<1x4x4x64xbf16>
    %230 = vector.shape_cast %229 : vector<1x4x4x64xbf16> to vector<16x64xbf16>
    %c8_285 = arith.constant 8 : index
    %c0_286 = arith.constant 0 : index
    %c0_287 = arith.constant 0 : index
    %231 = vector.load %arg5[%c8_285, %c0_286, %c0_287] : memref<9x64x64xbf16, #tpu.memory_space<vmem>>, vector<1x64x64xbf16>
    %232 = vector.shape_cast %231 : vector<1x64x64xbf16> to vector<64x64xbf16>
    %cst_288 = arith.constant dense<0.000000e+00> : vector<16x64xf32>
    %233 = tpu.matmul %230, %232, %cst_288 {dimension_numbers = #tpu.dot_dimension_numbers<[1], [0], [0], [1], [0, 0, 1, 1], [], []>} : vector<16x64xbf16>, vector<64x64xbf16>, vector<16x64xf32> -> vector<16x64xf32>
    %234 = arith.addf %228, %233 : vector<16x64xf32>
    %c0_289 = arith.constant 0 : index
    %c0_290 = arith.constant 0 : index
    %235 = vector.load %arg11[%c0_289, %c0_290] : memref<1x64xf32, #tpu.memory_space<vmem>>, vector<1x64xf32>
    %236 = vector.broadcast %235 : vector<1x64xf32> to vector<16x64xf32>
    %237 = arith.addf %234, %236 : vector<16x64xf32>
    %cst_291 = arith.constant 0.000000e+00 : f32
    %238 = vector.broadcast %cst_291 : f32 to vector<16x64xf32>
    %239 = arith.maximumf %237, %238 : vector<16x64xf32>
    %240 = vector.shape_cast %239 : vector<16x64xf32> to vector<1x4x4x64xf32>
    %241 = arith.truncf %240 : vector<1x4x4x64xf32> to vector<1x4x4x64xbf16>
    %cst_292 = arith.constant 0.000000e+00 : bf16
    %242 = vector.broadcast %cst_292 : bf16 to vector<1x1x6x64xbf16>
    %cst_293 = arith.constant 0.000000e+00 : bf16
    %243 = vector.broadcast %cst_293 : bf16 to vector<1x4x1x64xbf16>
    %c0_294 = arith.constant 0 : index
    %c0_295 = arith.constant 0 : index
    %c0_296 = arith.constant 0 : index
    %c0_297 = arith.constant 0 : index
    %244 = vector.load %arg20[%c0_294, %c0_295, %c0_296, %c0_297] : memref<1x6x6x64xbf16, #tpu.memory_space<vmem>>, vector<1x1x6x64xbf16>
    tpu.vector_store %arg20[%c0_294, %c0_295, %c0_296, %c0_297], %242 {strides = array<i32>} : memref<1x6x6x64xbf16, #tpu.memory_space<vmem>>, vector<1x1x6x64xbf16>,
    %c0_298 = arith.constant 0 : index
    %c5_299 = arith.constant 5 : index
    %c0_300 = arith.constant 0 : index
    %c0_301 = arith.constant 0 : index
    %245 = vector.load %arg20[%c0_298, %c5_299, %c0_300, %c0_301] : memref<1x6x6x64xbf16, #tpu.memory_space<vmem>>, vector<1x1x6x64xbf16>
    tpu.vector_store %arg20[%c0_298, %c5_299, %c0_300, %c0_301], %242 {strides = array<i32>} : memref<1x6x6x64xbf16, #tpu.memory_space<vmem>>, vector<1x1x6x64xbf16>,
    %c0_302 = arith.constant 0 : index
    %c1_303 = arith.constant 1 : index
    %c0_304 = arith.constant 0 : index
    %c0_305 = arith.constant 0 : index
    %246 = vector.load %arg20[%c0_302, %c1_303, %c0_304, %c0_305] : memref<1x6x6x64xbf16, #tpu.memory_space<vmem>>, vector<1x4x1x64xbf16>
    tpu.vector_store %arg20[%c0_302, %c1_303, %c0_304, %c0_305], %243 {strides = array<i32>} : memref<1x6x6x64xbf16, #tpu.memory_space<vmem>>, vector<1x4x1x64xbf16>,
    %c0_306 = arith.constant 0 : index
    %c1_307 = arith.constant 1 : index
    %c5_308 = arith.constant 5 : index
    %c0_309 = arith.constant 0 : index
    %247 = vector.load %arg20[%c0_306, %c1_307, %c5_308, %c0_309] : memref<1x6x6x64xbf16, #tpu.memory_space<vmem>>, vector<1x4x1x64xbf16>
    tpu.vector_store %arg20[%c0_306, %c1_307, %c5_308, %c0_309], %243 {strides = array<i32>} : memref<1x6x6x64xbf16, #tpu.memory_space<vmem>>, vector<1x4x1x64xbf16>,
    %c0_310 = arith.constant 0 : index
    %c1_311 = arith.constant 1 : index
    %c1_312 = arith.constant 1 : index
    %c0_313 = arith.constant 0 : index
    %248 = vector.load %arg20[%c0_310, %c1_311, %c1_312, %c0_313] : memref<1x6x6x64xbf16, #tpu.memory_space<vmem>>, vector<1x4x4x64xbf16>
    tpu.vector_store %arg20[%c0_310, %c1_311, %c1_312, %c0_313], %241 {strides = array<i32>} : memref<1x6x6x64xbf16, #tpu.memory_space<vmem>>, vector<1x4x4x64xbf16>,
    %cst_314 = arith.constant 0.000000e+00 : f32
    %249 = vector.broadcast %cst_314 : f32 to vector<16x128xf32>
    %c0_315 = arith.constant 0 : index
    %c0_316 = arith.constant 0 : index
    %c0_317 = arith.constant 0 : index
    %c0_318 = arith.constant 0 : index
    %250 = vector.load %arg20[%c0_315, %c0_316, %c0_317, %c0_318] : memref<1x6x6x64xbf16, #tpu.memory_space<vmem>>, vector<1x4x4x64xbf16>
    %251 = vector.shape_cast %250 : vector<1x4x4x64xbf16> to vector<16x64xbf16>
    %c0_319 = arith.constant 0 : index
    %c0_320 = arith.constant 0 : index
    %c0_321 = arith.constant 0 : index
    %252 = vector.load %arg6[%c0_319, %c0_320, %c0_321] : memref<9x64x128xbf16, #tpu.memory_space<vmem>>, vector<1x64x128xbf16>
    %253 = vector.shape_cast %252 : vector<1x64x128xbf16> to vector<64x128xbf16>
    %cst_322 = arith.constant dense<0.000000e+00> : vector<16x128xf32>
    %254 = tpu.matmul %251, %253, %cst_322 {dimension_numbers = #tpu.dot_dimension_numbers<[1], [0], [0], [1], [0, 0, 1, 1], [], []>} : vector<16x64xbf16>, vector<64x128xbf16>, vector<16x128xf32> -> vector<16x128xf32>
    %255 = arith.addf %249, %254 : vector<16x128xf32>
    %c0_323 = arith.constant 0 : index
    %c0_324 = arith.constant 0 : index
    %c1_325 = arith.constant 1 : index
    %c0_326 = arith.constant 0 : index
    %256 = vector.load %arg20[%c0_323, %c0_324, %c1_325, %c0_326] : memref<1x6x6x64xbf16, #tpu.memory_space<vmem>>, vector<1x4x4x64xbf16>
    %257 = vector.shape_cast %256 : vector<1x4x4x64xbf16> to vector<16x64xbf16>
    %c1_327 = arith.constant 1 : index
    %c0_328 = arith.constant 0 : index
    %c0_329 = arith.constant 0 : index
    %258 = vector.load %arg6[%c1_327, %c0_328, %c0_329] : memref<9x64x128xbf16, #tpu.memory_space<vmem>>, vector<1x64x128xbf16>
    %259 = vector.shape_cast %258 : vector<1x64x128xbf16> to vector<64x128xbf16>
    %cst_330 = arith.constant dense<0.000000e+00> : vector<16x128xf32>
    %260 = tpu.matmul %257, %259, %cst_330 {dimension_numbers = #tpu.dot_dimension_numbers<[1], [0], [0], [1], [0, 0, 1, 1], [], []>} : vector<16x64xbf16>, vector<64x128xbf16>, vector<16x128xf32> -> vector<16x128xf32>
    %261 = arith.addf %255, %260 : vector<16x128xf32>
    %c0_331 = arith.constant 0 : index
    %c0_332 = arith.constant 0 : index
    %c2_333 = arith.constant 2 : index
    %c0_334 = arith.constant 0 : index
    %262 = vector.load %arg20[%c0_331, %c0_332, %c2_333, %c0_334] : memref<1x6x6x64xbf16, #tpu.memory_space<vmem>>, vector<1x4x4x64xbf16>
    %263 = vector.shape_cast %262 : vector<1x4x4x64xbf16> to vector<16x64xbf16>
    %c2_335 = arith.constant 2 : index
    %c0_336 = arith.constant 0 : index
    %c0_337 = arith.constant 0 : index
    %264 = vector.load %arg6[%c2_335, %c0_336, %c0_337] : memref<9x64x128xbf16, #tpu.memory_space<vmem>>, vector<1x64x128xbf16>
    %265 = vector.shape_cast %264 : vector<1x64x128xbf16> to vector<64x128xbf16>
    %cst_338 = arith.constant dense<0.000000e+00> : vector<16x128xf32>
    %266 = tpu.matmul %263, %265, %cst_338 {dimension_numbers = #tpu.dot_dimension_numbers<[1], [0], [0], [1], [0, 0, 1, 1], [], []>} : vector<16x64xbf16>, vector<64x128xbf16>, vector<16x128xf32> -> vector<16x128xf32>
    %267 = arith.addf %261, %266 : vector<16x128xf32>
    %c0_339 = arith.constant 0 : index
    %c1_340 = arith.constant 1 : index
    %c0_341 = arith.constant 0 : index
    %c0_342 = arith.constant 0 : index
    %268 = vector.load %arg20[%c0_339, %c1_340, %c0_341, %c0_342] : memref<1x6x6x64xbf16, #tpu.memory_space<vmem>>, vector<1x4x4x64xbf16>
    %269 = vector.shape_cast %268 : vector<1x4x4x64xbf16> to vector<16x64xbf16>
    %c3_343 = arith.constant 3 : index
    %c0_344 = arith.constant 0 : index
    %c0_345 = arith.constant 0 : index
    %270 = vector.load %arg6[%c3_343, %c0_344, %c0_345] : memref<9x64x128xbf16, #tpu.memory_space<vmem>>, vector<1x64x128xbf16>
    %271 = vector.shape_cast %270 : vector<1x64x128xbf16> to vector<64x128xbf16>
    %cst_346 = arith.constant dense<0.000000e+00> : vector<16x128xf32>
    %272 = tpu.matmul %269, %271, %cst_346 {dimension_numbers = #tpu.dot_dimension_numbers<[1], [0], [0], [1], [0, 0, 1, 1], [], []>} : vector<16x64xbf16>, vector<64x128xbf16>, vector<16x128xf32> -> vector<16x128xf32>
    %273 = arith.addf %267, %272 : vector<16x128xf32>
    %c0_347 = arith.constant 0 : index
    %c1_348 = arith.constant 1 : index
    %c1_349 = arith.constant 1 : index
    %c0_350 = arith.constant 0 : index
    %274 = vector.load %arg20[%c0_347, %c1_348, %c1_349, %c0_350] : memref<1x6x6x64xbf16, #tpu.memory_space<vmem>>, vector<1x4x4x64xbf16>
    %275 = vector.shape_cast %274 : vector<1x4x4x64xbf16> to vector<16x64xbf16>
    %c4_351 = arith.constant 4 : index
    %c0_352 = arith.constant 0 : index
    %c0_353 = arith.constant 0 : index
    %276 = vector.load %arg6[%c4_351, %c0_352, %c0_353] : memref<9x64x128xbf16, #tpu.memory_space<vmem>>, vector<1x64x128xbf16>
    %277 = vector.shape_cast %276 : vector<1x64x128xbf16> to vector<64x128xbf16>
    %cst_354 = arith.constant dense<0.000000e+00> : vector<16x128xf32>
    %278 = tpu.matmul %275, %277, %cst_354 {dimension_numbers = #tpu.dot_dimension_numbers<[1], [0], [0], [1], [0, 0, 1, 1], [], []>} : vector<16x64xbf16>, vector<64x128xbf16>, vector<16x128xf32> -> vector<16x128xf32>
    %279 = arith.addf %273, %278 : vector<16x128xf32>
    %c0_355 = arith.constant 0 : index
    %c1_356 = arith.constant 1 : index
    %c2_357 = arith.constant 2 : index
    %c0_358 = arith.constant 0 : index
    %280 = vector.load %arg20[%c0_355, %c1_356, %c2_357, %c0_358] : memref<1x6x6x64xbf16, #tpu.memory_space<vmem>>, vector<1x4x4x64xbf16>
    %281 = vector.shape_cast %280 : vector<1x4x4x64xbf16> to vector<16x64xbf16>
    %c5_359 = arith.constant 5 : index
    %c0_360 = arith.constant 0 : index
    %c0_361 = arith.constant 0 : index
    %282 = vector.load %arg6[%c5_359, %c0_360, %c0_361] : memref<9x64x128xbf16, #tpu.memory_space<vmem>>, vector<1x64x128xbf16>
    %283 = vector.shape_cast %282 : vector<1x64x128xbf16> to vector<64x128xbf16>
    %cst_362 = arith.constant dense<0.000000e+00> : vector<16x128xf32>
    %284 = tpu.matmul %281, %283, %cst_362 {dimension_numbers = #tpu.dot_dimension_numbers<[1], [0], [0], [1], [0, 0, 1, 1], [], []>} : vector<16x64xbf16>, vector<64x128xbf16>, vector<16x128xf32> -> vector<16x128xf32>
    %285 = arith.addf %279, %284 : vector<16x128xf32>
    %c0_363 = arith.constant 0 : index
    %c2_364 = arith.constant 2 : index
    %c0_365 = arith.constant 0 : index
    %c0_366 = arith.constant 0 : index
    %286 = vector.load %arg20[%c0_363, %c2_364, %c0_365, %c0_366] : memref<1x6x6x64xbf16, #tpu.memory_space<vmem>>, vector<1x4x4x64xbf16>
    %287 = vector.shape_cast %286 : vector<1x4x4x64xbf16> to vector<16x64xbf16>
    %c6_367 = arith.constant 6 : index
    %c0_368 = arith.constant 0 : index
    %c0_369 = arith.constant 0 : index
    %288 = vector.load %arg6[%c6_367, %c0_368, %c0_369] : memref<9x64x128xbf16, #tpu.memory_space<vmem>>, vector<1x64x128xbf16>
    %289 = vector.shape_cast %288 : vector<1x64x128xbf16> to vector<64x128xbf16>
    %cst_370 = arith.constant dense<0.000000e+00> : vector<16x128xf32>
    %290 = tpu.matmul %287, %289, %cst_370 {dimension_numbers = #tpu.dot_dimension_numbers<[1], [0], [0], [1], [0, 0, 1, 1], [], []>} : vector<16x64xbf16>, vector<64x128xbf16>, vector<16x128xf32> -> vector<16x128xf32>
    %291 = arith.addf %285, %290 : vector<16x128xf32>
    %c0_371 = arith.constant 0 : index
    %c2_372 = arith.constant 2 : index
    %c1_373 = arith.constant 1 : index
    %c0_374 = arith.constant 0 : index
    %292 = vector.load %arg20[%c0_371, %c2_372, %c1_373, %c0_374] : memref<1x6x6x64xbf16, #tpu.memory_space<vmem>>, vector<1x4x4x64xbf16>
    %293 = vector.shape_cast %292 : vector<1x4x4x64xbf16> to vector<16x64xbf16>
    %c7_375 = arith.constant 7 : index
    %c0_376 = arith.constant 0 : index
    %c0_377 = arith.constant 0 : index
    %294 = vector.load %arg6[%c7_375, %c0_376, %c0_377] : memref<9x64x128xbf16, #tpu.memory_space<vmem>>, vector<1x64x128xbf16>
    %295 = vector.shape_cast %294 : vector<1x64x128xbf16> to vector<64x128xbf16>
    %cst_378 = arith.constant dense<0.000000e+00> : vector<16x128xf32>
    %296 = tpu.matmul %293, %295, %cst_378 {dimension_numbers = #tpu.dot_dimension_numbers<[1], [0], [0], [1], [0, 0, 1, 1], [], []>} : vector<16x64xbf16>, vector<64x128xbf16>, vector<16x128xf32> -> vector<16x128xf32>
    %297 = arith.addf %291, %296 : vector<16x128xf32>
    %c0_379 = arith.constant 0 : index
    %c2_380 = arith.constant 2 : index
    %c2_381 = arith.constant 2 : index
    %c0_382 = arith.constant 0 : index
    %298 = vector.load %arg20[%c0_379, %c2_380, %c2_381, %c0_382] : memref<1x6x6x64xbf16, #tpu.memory_space<vmem>>, vector<1x4x4x64xbf16>
    %299 = vector.shape_cast %298 : vector<1x4x4x64xbf16> to vector<16x64xbf16>
    %c8_383 = arith.constant 8 : index
    %c0_384 = arith.constant 0 : index
    %c0_385 = arith.constant 0 : index
    %300 = vector.load %arg6[%c8_383, %c0_384, %c0_385] : memref<9x64x128xbf16, #tpu.memory_space<vmem>>, vector<1x64x128xbf16>
    %301 = vector.shape_cast %300 : vector<1x64x128xbf16> to vector<64x128xbf16>
    %cst_386 = arith.constant dense<0.000000e+00> : vector<16x128xf32>
    %302 = tpu.matmul %299, %301, %cst_386 {dimension_numbers = #tpu.dot_dimension_numbers<[1], [0], [0], [1], [0, 0, 1, 1], [], []>} : vector<16x64xbf16>, vector<64x128xbf16>, vector<16x128xf32> -> vector<16x128xf32>
    %303 = arith.addf %297, %302 : vector<16x128xf32>
    %c0_387 = arith.constant 0 : index
    %c0_388 = arith.constant 0 : index
    %304 = vector.load %arg12[%c0_387, %c0_388] : memref<1x128xf32, #tpu.memory_space<vmem>>, vector<1x128xf32>
    %305 = vector.broadcast %304 : vector<1x128xf32> to vector<16x128xf32>
    %306 = arith.addf %303, %305 : vector<16x128xf32>
    %cst_389 = arith.constant 0.000000e+00 : f32
    %307 = vector.broadcast %cst_389 : f32 to vector<16x128xf32>
    %308 = arith.maximumf %306, %307 : vector<16x128xf32>
    %309 = vector.shape_cast %308 : vector<16x128xf32> to vector<1x4x4x128xf32>
    %310 = arith.truncf %309 : vector<1x4x4x128xf32> to vector<1x4x4x128xbf16>
    %cst_390 = arith.constant 0.000000e+00 : bf16
    %311 = vector.broadcast %cst_390 : bf16 to vector<1x1x6x128xbf16>
    %cst_391 = arith.constant 0.000000e+00 : bf16
    %312 = vector.broadcast %cst_391 : bf16 to vector<1x4x1x128xbf16>
    %c0_392 = arith.constant 0 : index
    %c0_393 = arith.constant 0 : index
    %c0_394 = arith.constant 0 : index
    %c0_395 = arith.constant 0 : index
    %313 = vector.load %arg21[%c0_392, %c0_393, %c0_394, %c0_395] : memref<1x6x6x128xbf16, #tpu.memory_space<vmem>>, vector<1x1x6x128xbf16>
    tpu.vector_store %arg21[%c0_392, %c0_393, %c0_394, %c0_395], %311 {strides = array<i32>} : memref<1x6x6x128xbf16, #tpu.memory_space<vmem>>, vector<1x1x6x128xbf16>,
    %c0_396 = arith.constant 0 : index
    %c5_397 = arith.constant 5 : index
    %c0_398 = arith.constant 0 : index
    %c0_399 = arith.constant 0 : index
    %314 = vector.load %arg21[%c0_396, %c5_397, %c0_398, %c0_399] : memref<1x6x6x128xbf16, #tpu.memory_space<vmem>>, vector<1x1x6x128xbf16>
    tpu.vector_store %arg21[%c0_396, %c5_397, %c0_398, %c0_399], %311 {strides = array<i32>} : memref<1x6x6x128xbf16, #tpu.memory_space<vmem>>, vector<1x1x6x128xbf16>,
    %c0_400 = arith.constant 0 : index
    %c1_401 = arith.constant 1 : index
    %c0_402 = arith.constant 0 : index
    %c0_403 = arith.constant 0 : index
    %315 = vector.load %arg21[%c0_400, %c1_401, %c0_402, %c0_403] : memref<1x6x6x128xbf16, #tpu.memory_space<vmem>>, vector<1x4x1x128xbf16>
    tpu.vector_store %arg21[%c0_400, %c1_401, %c0_402, %c0_403], %312 {strides = array<i32>} : memref<1x6x6x128xbf16, #tpu.memory_space<vmem>>, vector<1x4x1x128xbf16>,
    %c0_404 = arith.constant 0 : index
    %c1_405 = arith.constant 1 : index
    %c5_406 = arith.constant 5 : index
    %c0_407 = arith.constant 0 : index
    %316 = vector.load %arg21[%c0_404, %c1_405, %c5_406, %c0_407] : memref<1x6x6x128xbf16, #tpu.memory_space<vmem>>, vector<1x4x1x128xbf16>
    tpu.vector_store %arg21[%c0_404, %c1_405, %c5_406, %c0_407], %312 {strides = array<i32>} : memref<1x6x6x128xbf16, #tpu.memory_space<vmem>>, vector<1x4x1x128xbf16>,
    %c0_408 = arith.constant 0 : index
    %c1_409 = arith.constant 1 : index
    %c1_410 = arith.constant 1 : index
    %c0_411 = arith.constant 0 : index
    %317 = vector.load %arg21[%c0_408, %c1_409, %c1_410, %c0_411] : memref<1x6x6x128xbf16, #tpu.memory_space<vmem>>, vector<1x4x4x128xbf16>
    tpu.vector_store %arg21[%c0_408, %c1_409, %c1_410, %c0_411], %310 {strides = array<i32>} : memref<1x6x6x128xbf16, #tpu.memory_space<vmem>>, vector<1x4x4x128xbf16>,
    %cst_412 = arith.constant 0.000000e+00 : f32
    %318 = vector.broadcast %cst_412 : f32 to vector<16x128xf32>
    %c0_413 = arith.constant 0 : index
    %c0_414 = arith.constant 0 : index
    %c0_415 = arith.constant 0 : index
    %c0_416 = arith.constant 0 : index
    %319 = vector.load %arg21[%c0_413, %c0_414, %c0_415, %c0_416] : memref<1x6x6x128xbf16, #tpu.memory_space<vmem>>, vector<1x4x4x128xbf16>
    %320 = vector.shape_cast %319 : vector<1x4x4x128xbf16> to vector<16x128xbf16>
    %c0_417 = arith.constant 0 : index
    %c0_418 = arith.constant 0 : index
    %c0_419 = arith.constant 0 : index
    %321 = vector.load %arg7[%c0_417, %c0_418, %c0_419] : memref<9x128x128xbf16, #tpu.memory_space<vmem>>, vector<1x128x128xbf16>
    %322 = vector.shape_cast %321 : vector<1x128x128xbf16> to vector<128x128xbf16>
    %cst_420 = arith.constant dense<0.000000e+00> : vector<16x128xf32>
    %323 = tpu.matmul %320, %322, %cst_420 {dimension_numbers = #tpu.dot_dimension_numbers<[1], [0], [0], [1], [0, 0, 1, 1], [], []>} : vector<16x128xbf16>, vector<128x128xbf16>, vector<16x128xf32> -> vector<16x128xf32>
    %324 = arith.addf %318, %323 : vector<16x128xf32>
    %c0_421 = arith.constant 0 : index
    %c0_422 = arith.constant 0 : index
    %c1_423 = arith.constant 1 : index
    %c0_424 = arith.constant 0 : index
    %325 = vector.load %arg21[%c0_421, %c0_422, %c1_423, %c0_424] : memref<1x6x6x128xbf16, #tpu.memory_space<vmem>>, vector<1x4x4x128xbf16>
    %326 = vector.shape_cast %325 : vector<1x4x4x128xbf16> to vector<16x128xbf16>
    %c1_425 = arith.constant 1 : index
    %c0_426 = arith.constant 0 : index
    %c0_427 = arith.constant 0 : index
    %327 = vector.load %arg7[%c1_425, %c0_426, %c0_427] : memref<9x128x128xbf16, #tpu.memory_space<vmem>>, vector<1x128x128xbf16>
    %328 = vector.shape_cast %327 : vector<1x128x128xbf16> to vector<128x128xbf16>
    %cst_428 = arith.constant dense<0.000000e+00> : vector<16x128xf32>
    %329 = tpu.matmul %326, %328, %cst_428 {dimension_numbers = #tpu.dot_dimension_numbers<[1], [0], [0], [1], [0, 0, 1, 1], [], []>} : vector<16x128xbf16>, vector<128x128xbf16>, vector<16x128xf32> -> vector<16x128xf32>
    %330 = arith.addf %324, %329 : vector<16x128xf32>
    %c0_429 = arith.constant 0 : index
    %c0_430 = arith.constant 0 : index
    %c2_431 = arith.constant 2 : index
    %c0_432 = arith.constant 0 : index
    %331 = vector.load %arg21[%c0_429, %c0_430, %c2_431, %c0_432] : memref<1x6x6x128xbf16, #tpu.memory_space<vmem>>, vector<1x4x4x128xbf16>
    %332 = vector.shape_cast %331 : vector<1x4x4x128xbf16> to vector<16x128xbf16>
    %c2_433 = arith.constant 2 : index
    %c0_434 = arith.constant 0 : index
    %c0_435 = arith.constant 0 : index
    %333 = vector.load %arg7[%c2_433, %c0_434, %c0_435] : memref<9x128x128xbf16, #tpu.memory_space<vmem>>, vector<1x128x128xbf16>
    %334 = vector.shape_cast %333 : vector<1x128x128xbf16> to vector<128x128xbf16>
    %cst_436 = arith.constant dense<0.000000e+00> : vector<16x128xf32>
    %335 = tpu.matmul %332, %334, %cst_436 {dimension_numbers = #tpu.dot_dimension_numbers<[1], [0], [0], [1], [0, 0, 1, 1], [], []>} : vector<16x128xbf16>, vector<128x128xbf16>, vector<16x128xf32> -> vector<16x128xf32>
    %336 = arith.addf %330, %335 : vector<16x128xf32>
    %c0_437 = arith.constant 0 : index
    %c1_438 = arith.constant 1 : index
    %c0_439 = arith.constant 0 : index
    %c0_440 = arith.constant 0 : index
    %337 = vector.load %arg21[%c0_437, %c1_438, %c0_439, %c0_440] : memref<1x6x6x128xbf16, #tpu.memory_space<vmem>>, vector<1x4x4x128xbf16>
    %338 = vector.shape_cast %337 : vector<1x4x4x128xbf16> to vector<16x128xbf16>
    %c3_441 = arith.constant 3 : index
    %c0_442 = arith.constant 0 : index
    %c0_443 = arith.constant 0 : index
    %339 = vector.load %arg7[%c3_441, %c0_442, %c0_443] : memref<9x128x128xbf16, #tpu.memory_space<vmem>>, vector<1x128x128xbf16>
    %340 = vector.shape_cast %339 : vector<1x128x128xbf16> to vector<128x128xbf16>
    %cst_444 = arith.constant dense<0.000000e+00> : vector<16x128xf32>
    %341 = tpu.matmul %338, %340, %cst_444 {dimension_numbers = #tpu.dot_dimension_numbers<[1], [0], [0], [1], [0, 0, 1, 1], [], []>} : vector<16x128xbf16>, vector<128x128xbf16>, vector<16x128xf32> -> vector<16x128xf32>
    %342 = arith.addf %336, %341 : vector<16x128xf32>
    %c0_445 = arith.constant 0 : index
    %c1_446 = arith.constant 1 : index
    %c1_447 = arith.constant 1 : index
    %c0_448 = arith.constant 0 : index
    %343 = vector.load %arg21[%c0_445, %c1_446, %c1_447, %c0_448] : memref<1x6x6x128xbf16, #tpu.memory_space<vmem>>, vector<1x4x4x128xbf16>
    %344 = vector.shape_cast %343 : vector<1x4x4x128xbf16> to vector<16x128xbf16>
    %c4_449 = arith.constant 4 : index
    %c0_450 = arith.constant 0 : index
    %c0_451 = arith.constant 0 : index
    %345 = vector.load %arg7[%c4_449, %c0_450, %c0_451] : memref<9x128x128xbf16, #tpu.memory_space<vmem>>, vector<1x128x128xbf16>
    %346 = vector.shape_cast %345 : vector<1x128x128xbf16> to vector<128x128xbf16>
    %cst_452 = arith.constant dense<0.000000e+00> : vector<16x128xf32>
    %347 = tpu.matmul %344, %346, %cst_452 {dimension_numbers = #tpu.dot_dimension_numbers<[1], [0], [0], [1], [0, 0, 1, 1], [], []>} : vector<16x128xbf16>, vector<128x128xbf16>, vector<16x128xf32> -> vector<16x128xf32>
    %348 = arith.addf %342, %347 : vector<16x128xf32>
    %c0_453 = arith.constant 0 : index
    %c1_454 = arith.constant 1 : index
    %c2_455 = arith.constant 2 : index
    %c0_456 = arith.constant 0 : index
    %349 = vector.load %arg21[%c0_453, %c1_454, %c2_455, %c0_456] : memref<1x6x6x128xbf16, #tpu.memory_space<vmem>>, vector<1x4x4x128xbf16>
    %350 = vector.shape_cast %349 : vector<1x4x4x128xbf16> to vector<16x128xbf16>
    %c5_457 = arith.constant 5 : index
    %c0_458 = arith.constant 0 : index
    %c0_459 = arith.constant 0 : index
    %351 = vector.load %arg7[%c5_457, %c0_458, %c0_459] : memref<9x128x128xbf16, #tpu.memory_space<vmem>>, vector<1x128x128xbf16>
    %352 = vector.shape_cast %351 : vector<1x128x128xbf16> to vector<128x128xbf16>
    %cst_460 = arith.constant dense<0.000000e+00> : vector<16x128xf32>
    %353 = tpu.matmul %350, %352, %cst_460 {dimension_numbers = #tpu.dot_dimension_numbers<[1], [0], [0], [1], [0, 0, 1, 1], [], []>} : vector<16x128xbf16>, vector<128x128xbf16>, vector<16x128xf32> -> vector<16x128xf32>
    %354 = arith.addf %348, %353 : vector<16x128xf32>
    %c0_461 = arith.constant 0 : index
    %c2_462 = arith.constant 2 : index
    %c0_463 = arith.constant 0 : index
    %c0_464 = arith.constant 0 : index
    %355 = vector.load %arg21[%c0_461, %c2_462, %c0_463, %c0_464] : memref<1x6x6x128xbf16, #tpu.memory_space<vmem>>, vector<1x4x4x128xbf16>
    %356 = vector.shape_cast %355 : vector<1x4x4x128xbf16> to vector<16x128xbf16>
    %c6_465 = arith.constant 6 : index
    %c0_466 = arith.constant 0 : index
    %c0_467 = arith.constant 0 : index
    %357 = vector.load %arg7[%c6_465, %c0_466, %c0_467] : memref<9x128x128xbf16, #tpu.memory_space<vmem>>, vector<1x128x128xbf16>
    %358 = vector.shape_cast %357 : vector<1x128x128xbf16> to vector<128x128xbf16>
    %cst_468 = arith.constant dense<0.000000e+00> : vector<16x128xf32>
    %359 = tpu.matmul %356, %358, %cst_468 {dimension_numbers = #tpu.dot_dimension_numbers<[1], [0], [0], [1], [0, 0, 1, 1], [], []>} : vector<16x128xbf16>, vector<128x128xbf16>, vector<16x128xf32> -> vector<16x128xf32>
    %360 = arith.addf %354, %359 : vector<16x128xf32>
    %c0_469 = arith.constant 0 : index
    %c2_470 = arith.constant 2 : index
    %c1_471 = arith.constant 1 : index
    %c0_472 = arith.constant 0 : index
    %361 = vector.load %arg21[%c0_469, %c2_470, %c1_471, %c0_472] : memref<1x6x6x128xbf16, #tpu.memory_space<vmem>>, vector<1x4x4x128xbf16>
    %362 = vector.shape_cast %361 : vector<1x4x4x128xbf16> to vector<16x128xbf16>
    %c7_473 = arith.constant 7 : index
    %c0_474 = arith.constant 0 : index
    %c0_475 = arith.constant 0 : index
    %363 = vector.load %arg7[%c7_473, %c0_474, %c0_475] : memref<9x128x128xbf16, #tpu.memory_space<vmem>>, vector<1x128x128xbf16>
    %364 = vector.shape_cast %363 : vector<1x128x128xbf16> to vector<128x128xbf16>
    %cst_476 = arith.constant dense<0.000000e+00> : vector<16x128xf32>
    %365 = tpu.matmul %362, %364, %cst_476 {dimension_numbers = #tpu.dot_dimension_numbers<[1], [0], [0], [1], [0, 0, 1, 1], [], []>} : vector<16x128xbf16>, vector<128x128xbf16>, vector<16x128xf32> -> vector<16x128xf32>
    %366 = arith.addf %360, %365 : vector<16x128xf32>
    %c0_477 = arith.constant 0 : index
    %c2_478 = arith.constant 2 : index
    %c2_479 = arith.constant 2 : index
    %c0_480 = arith.constant 0 : index
    %367 = vector.load %arg21[%c0_477, %c2_478, %c2_479, %c0_480] : memref<1x6x6x128xbf16, #tpu.memory_space<vmem>>, vector<1x4x4x128xbf16>
    %368 = vector.shape_cast %367 : vector<1x4x4x128xbf16> to vector<16x128xbf16>
    %c8_481 = arith.constant 8 : index
    %c0_482 = arith.constant 0 : index
    %c0_483 = arith.constant 0 : index
    %369 = vector.load %arg7[%c8_481, %c0_482, %c0_483] : memref<9x128x128xbf16, #tpu.memory_space<vmem>>, vector<1x128x128xbf16>
    %370 = vector.shape_cast %369 : vector<1x128x128xbf16> to vector<128x128xbf16>
    %cst_484 = arith.constant dense<0.000000e+00> : vector<16x128xf32>
    %371 = tpu.matmul %368, %370, %cst_484 {dimension_numbers = #tpu.dot_dimension_numbers<[1], [0], [0], [1], [0, 0, 1, 1], [], []>} : vector<16x128xbf16>, vector<128x128xbf16>, vector<16x128xf32> -> vector<16x128xf32>
    %372 = arith.addf %366, %371 : vector<16x128xf32>
    %c0_485 = arith.constant 0 : index
    %c0_486 = arith.constant 0 : index
    %373 = vector.load %arg13[%c0_485, %c0_486] : memref<1x128xf32, #tpu.memory_space<vmem>>, vector<1x128xf32>
    %374 = vector.broadcast %373 : vector<1x128xf32> to vector<16x128xf32>
    %375 = arith.addf %372, %374 : vector<16x128xf32>
    %cst_487 = arith.constant 0.000000e+00 : f32
    %376 = vector.broadcast %cst_487 : f32 to vector<16x128xf32>
    %377 = arith.maximumf %375, %376 : vector<16x128xf32>
    %378 = vector.shape_cast %377 : vector<16x128xf32> to vector<1x4x4x128xf32>
    %379 = vector.shape_cast %378 : vector<1x4x4x128xf32> to vector<1x16x128xf32>
    %cst_488 = arith.constant dense<0.000000e+00> : vector<1x128xf32>
    %380 = vector.multi_reduction <add>, %379, %cst_488 [1] : vector<1x16x128xf32> to vector<1x128xf32>
    %cst_489 = arith.constant 1.600000e+01 : f32
    %381 = vector.broadcast %cst_489 : f32 to vector<1x128xf32>
    %382 = arith.divf %380, %381 : vector<1x128xf32>
    %c0_490 = arith.constant 0 : index
    %c0_491 = arith.constant 0 : index
    %383 = vector.load %arg14[%c0_490, %c0_491] : memref<128x10xf32, #tpu.memory_space<vmem>>, vector<128x10xf32>
    %cst_492 = arith.constant dense<0.000000e+00> : vector<1x10xf32>
    %384 = tpu.matmul %382, %383, %cst_492 {dimension_numbers = #tpu.dot_dimension_numbers<[1], [0], [0], [1], [0, 0, 1, 1], [], []>} : vector<1x128xf32>, vector<128x10xf32>, vector<1x10xf32> -> vector<1x10xf32>
    %c0_493 = arith.constant 0 : index
    %c0_494 = arith.constant 0 : index
    %385 = vector.load %arg15[%c0_493, %c0_494] : memref<1x10xf32, #tpu.memory_space<vmem>>, vector<1x10xf32>
    %386 = arith.addf %384, %385 : vector<1x10xf32>
    %c0_495 = arith.constant 0 : index
    %c0_496 = arith.constant 0 : index
    %c0_497 = arith.constant 0 : index
    %387 = vector.load %arg16[%c0_495, %c0_496, %c0_497] : memref<1x1x10xf32, #tpu.memory_space<vmem>>, vector<1x1x10xf32>
    %388 = vector.shape_cast %387 : vector<1x1x10xf32> to vector<1x10xf32>
    %389 = vector.shape_cast %386 : vector<1x10xf32> to vector<1x1x10xf32>
    tpu.vector_store %arg16[%c0_495, %c0_496, %c0_497], %389 {strides = array<i32>} : memref<1x1x10xf32, #tpu.memory_space<vmem>>, vector<1x1x10xf32>,
    return
  }
  func.func @transform_0(%arg0: i32) -> (i32, i32, i32) {
    %c0_i32 = arith.constant 0 : i32
    %c0_i32_0 = arith.constant 0 : i32
    %c0_i32_1 = arith.constant 0 : i32
    return %arg0, %c0_i32, %c0_i32_0 : i32, i32, i32
  }
  func.func @transform_1(%arg0: i32) -> (i32, i32) {
    %c0_i32 = arith.constant 0 : i32
    %c0_i32_0 = arith.constant 0 : i32
    %c0_i32_1 = arith.constant 0 : i32
    return %c0_i32, %c0_i32_0 : i32, i32
  }
  func.func @transform_2(%arg0: i32) -> (i32, i32, i32) {
    %c0_i32 = arith.constant 0 : i32
    %c0_i32_0 = arith.constant 0 : i32
    %c0_i32_1 = arith.constant 0 : i32
    %c0_i32_2 = arith.constant 0 : i32
    return %c0_i32, %c0_i32_0, %c0_i32_1 : i32, i32, i32
  }
  func.func @transform_3(%arg0: i32) -> (i32, i32, i32) {
    %c0_i32 = arith.constant 0 : i32
    %c0_i32_0 = arith.constant 0 : i32
    %c0_i32_1 = arith.constant 0 : i32
    %c0_i32_2 = arith.constant 0 : i32
    return %c0_i32, %c0_i32_0, %c0_i32_1 : i32, i32, i32
  }
  func.func @transform_4(%arg0: i32) -> (i32, i32, i32) {
    %c0_i32 = arith.constant 0 : i32
    %c0_i32_0 = arith.constant 0 : i32
    %c0_i32_1 = arith.constant 0 : i32
    %c0_i32_2 = arith.constant 0 : i32
    return %c0_i32, %c0_i32_0, %c0_i32_1 : i32, i32, i32
  }
  func.func @transform_5(%arg0: i32) -> (i32, i32, i32) {
    %c0_i32 = arith.constant 0 : i32
    %c0_i32_0 = arith.constant 0 : i32
    %c0_i32_1 = arith.constant 0 : i32
    %c0_i32_2 = arith.constant 0 : i32
    return %c0_i32, %c0_i32_0, %c0_i32_1 : i32, i32, i32
  }
  func.func @transform_6(%arg0: i32) -> (i32, i32, i32) {
    %c0_i32 = arith.constant 0 : i32
    %c0_i32_0 = arith.constant 0 : i32
    %c0_i32_1 = arith.constant 0 : i32
    %c0_i32_2 = arith.constant 0 : i32
    return %c0_i32, %c0_i32_0, %c0_i32_1 : i32, i32, i32
  }
  func.func @transform_7(%arg0: i32) -> (i32, i32) {
    %c0_i32 = arith.constant 0 : i32
    %c0_i32_0 = arith.constant 0 : i32
    %c0_i32_1 = arith.constant 0 : i32
    return %c0_i32, %c0_i32_0 : i32, i32
  }
  func.func @transform_8(%arg0: i32) -> (i32, i32) {
    %c0_i32 = arith.constant 0 : i32
    %c0_i32_0 = arith.constant 0 : i32
    %c0_i32_1 = arith.constant 0 : i32
    return %c0_i32, %c0_i32_0 : i32, i32
  }
  func.func @transform_9(%arg0: i32) -> (i32, i32) {
    %c0_i32 = arith.constant 0 : i32
    %c0_i32_0 = arith.constant 0 : i32
    %c0_i32_1 = arith.constant 0 : i32
    return %c0_i32, %c0_i32_0 : i32, i32
  }
  func.func @transform_10(%arg0: i32) -> (i32, i32) {
    %c0_i32 = arith.constant 0 : i32
    %c0_i32_0 = arith.constant 0 : i32
    %c0_i32_1 = arith.constant 0 : i32
    return %c0_i32, %c0_i32_0 : i32, i32
  }
  func.func @transform_11(%arg0: i32) -> (i32, i32) {
    %c0_i32 = arith.constant 0 : i32
    %c0_i32_0 = arith.constant 0 : i32
    %c0_i32_1 = arith.constant 0 : i32
    return %c0_i32, %c0_i32_0 : i32, i32
  }
  func.func @transform_12(%arg0: i32) -> (i32, i32) {
    %c0_i32 = arith.constant 0 : i32
    %c0_i32_0 = arith.constant 0 : i32
    %c0_i32_1 = arith.constant 0 : i32
    return %c0_i32, %c0_i32_0 : i32, i32
  }
  func.func @transform_13(%arg0: i32) -> (i32, i32) {
    %c0_i32 = arith.constant 0 : i32
    %c0_i32_0 = arith.constant 0 : i32
    %c0_i32_1 = arith.constant 0 : i32
    return %c0_i32, %c0_i32_0 : i32, i32
  }
  func.func @transform_14(%arg0: i32) -> (i32, i32) {
    %c0_i32 = arith.constant 0 : i32
    %c0_i32_0 = arith.constant 0 : i32
    %c0_i32_1 = arith.constant 0 : i32
    return %c0_i32, %c0_i32_0 : i32, i32
  }
  func.func @transform_15(%arg0: i32) -> (i32, i32, i32) {
    %c0_i32 = arith.constant 0 : i32
    %c0_i32_0 = arith.constant 0 : i32
    %c0_i32_1 = arith.constant 0 : i32
    return %arg0, %c0_i32, %c0_i32_0 : i32, i32, i32
  }
}

</mosaic_0001>

<llo_original>
// kernel: deepcnn_forward.1
$region0: #{deepcnn_forward.1}
  #allocation0 [shape = 'u32[]', space=smem, size = 0x4, offset = 0x4, fixed_abs, tag = 'smem constant byte address 0x4 - core index']
  #allocation1 [shape = 'u32[144,128]{1,0:T(1,128)}', space=vmem, size = 0x12000, scoped, tag = 'internal scratch']
  #allocation2 [shape = 'bf16[1,10,10,32]{3,2,1,0:T(8,128)(2,1)}', space=vmem, size = 0xa000, scoped, tag = 'scratch operand']
  #allocation3 [shape = 'bf16[1,6,6,32]{3,2,1,0:T(8,128)(2,1)}', space=vmem, size = 0x3000, scoped, tag = 'scratch operand']
  #allocation4 [shape = 'bf16[1,6,6,64]{3,2,1,0:T(8,128)(2,1)}', space=vmem, size = 0x3000, scoped, tag = 'scratch operand']
  #allocation5 [shape = 'bf16[1,6,6,64]{3,2,1,0:T(8,128)(2,1)}', space=vmem, size = 0x3000, scoped, tag = 'scratch operand']
  #allocation6 [shape = 'bf16[1,6,6,128]{3,2,1,0:T(8,128)(2,1)}', space=vmem, size = 0x3000, scoped, tag = 'scratch operand']
  %s0 = inlined_call_operand.vmem [shape: bf16[2,256,32], index: 0, kind: input, shape index: {}]
  %s1 = inlined_call_operand.vmem [shape: bf16[32,32], index: 1, kind: input, shape index: {}]
  %s2 = inlined_call_operand.vmem [shape: bf16[9,32,32], index: 2, kind: input, shape index: {}]
  %s3 = inlined_call_operand.vmem [shape: bf16[9,32,64], index: 3, kind: input, shape index: {}]
  %s4 = inlined_call_operand.vmem [shape: bf16[9,64,64], index: 4, kind: input, shape index: {}]
  %s5 = inlined_call_operand.vmem [shape: bf16[9,64,128], index: 5, kind: input, shape index: {}]
  %s6 = inlined_call_operand.vmem [shape: bf16[9,128,128], index: 6, kind: input, shape index: {}]
  %s7 = inlined_call_operand.vmem [shape: f32[1,32], index: 7, kind: input, shape index: {}]
  %s8 = inlined_call_operand.vmem [shape: f32[1,32], index: 8, kind: input, shape index: {}]
  %s9 = inlined_call_operand.vmem [shape: f32[1,64], index: 9, kind: input, shape index: {}]
  %s10 = inlined_call_operand.vmem [shape: f32[1,64], index: 10, kind: input, shape index: {}]
  %s11 = inlined_call_operand.vmem [shape: f32[1,128], index: 11, kind: input, shape index: {}]
  %s12 = inlined_call_operand.vmem [shape: f32[1,128], index: 12, kind: input, shape index: {}]
  %s13 = inlined_call_operand.vmem [shape: f32[128,10], index: 13, kind: input, shape index: {}]
  %s14 = inlined_call_operand.vmem [shape: f32[1,10], index: 14, kind: input, shape index: {}]
  %s15 = inlined_call_operand.hbm [shape: f32[2,1,10], index: 15, kind: output, shape index: {}]
  %s16 = sld [smem:[#allocation0]]
  $region93: #{deepcnn_forward.1} parent=0
    _
  %s18 = ssub.s32 1, %s16
  %s19 = scalar_select 0, %s18, %s16
  $region1: #{deepcnn_forward.1} parent=0
    #allocation7 [shape = 'u8[1024]{0}', space=vmem, size = 0x400, scoped, tag = 'output window, operand 0']
    #allocation8 [shape = 's32[2]{0}', space=sflag, size = 0x8, scoped, tag = 'scoped memory for deepcnn_forward.1']
    %20 = vsyncpa [#allocation8], 0
    %s21 = scalar_lea.sflag [#allocation8], 1
    %22 = vsyncpa %s21, 0
    loop: start=0, step=1, limit=4
    $region2: #{deepcnn_forward.1} parent=1 // loop_pre_header
      _
    $region3: #{deepcnn_forward.1} parent=1 // loop_header
      %s24 = sphi 0, %s28
      %p25 = scmp.ge.s32.totalorder %s24, 4
      %s34 = sphi 0, %s36
      %s37 = sphi 0, %s34
      %s38 = sphi 0, %s37
      %s54 = sphi 0, %s38
      %s58 = sphi 0, %s58
      %s60 = sphi 0, %s58
      %s61 = sphi 0, %s60
      %s75 = sphi 0, %s61
      %s79 = sphi 0, %s79
      %s81 = sphi 0, %s79
      %s82 = sphi 0, %s81
      %s96 = sphi 0, %s82
      %s100 = sphi 0, %s100
      %s102 = sphi 0, %s100
      %s103 = sphi 0, %s102
      %s117 = sphi 0, %s103
      %s121 = sphi 0, %s121
      %s123 = sphi 0, %s121
      %s124 = sphi 0, %s123
      %s138 = sphi 0, %s124
      %s142 = sphi 0, %s142
      %s144 = sphi 0, %s142
      %s145 = sphi 0, %s144
      %s159 = sphi 0, %s145
      %s163 = sphi 0, %s163
      %s165 = sphi 0, %s163
      %s166 = sphi 0, %s165
      %s180 = sphi 0, %s166
      %s184 = sphi 0, %s184
      %s186 = sphi 0, %s184
      %s187 = sphi 0, %s186
      %s201 = sphi 0, %s187
      %s205 = sphi 0, %s205
      %s207 = sphi 0, %s205
      %s208 = sphi 0, %s207
      %s222 = sphi 0, %s208
      %s226 = sphi 0, %s226
      %s228 = sphi 0, %s226
      %s229 = sphi 0, %s228
      %s243 = sphi 0, %s229
      %s247 = sphi 0, %s247
      %s249 = sphi 0, %s247
      %s250 = sphi 0, %s249
      %s264 = sphi 0, %s250
      %s268 = sphi 0, %s268
      %s270 = sphi 0, %s268
      %s271 = sphi 0, %s270
      %s285 = sphi 0, %s271
      %s289 = sphi 0, %s289
      %s291 = sphi 0, %s289
      %s292 = sphi 0, %s291
      %s306 = sphi 0, %s292
      %s310 = sphi 0, %s310
      %s312 = sphi 0, %s310
      %s313 = sphi 0, %s312
      %s327 = sphi 0, %s313
      %s331 = sphi 0, %s331
      %s333 = sphi 0, %s331
      %s334 = sphi 0, %s333
      %s348 = sphi 0, %s334
      %s354 = sphi 0, %s356
      %s357 = sphi 0, %s354
      %s358 = sphi 0, %s357
      %s374 = sphi 0, %s358
    $region4: #{deepcnn_forward.1} parent=1 // loop_header_branch
      %27 = sbr.rel (%p25) target = $region8
    $region5: #{deepcnn_forward.1} parent=1 // loop_body
      %s29 = ssub.s32 %s24, 1
      %s30 = ssub.s32 %s24, 2
      %s31 = sadd.s32 %s24, 1
      %s32 = ssub.s32 %s24, %s31
      %p33 = scmp.eq.s32.totalorder %s32, 0
      %s35 = sadd.s32 %s34, 1
      %s36 = scalar_select %p33, %s34, %s35
      %p39 = pneg %p33
      %p40 = scmp.eq.s32.totalorder %s24, 1
      %p41 = por %p39, %p40
      %p42 = scmp.ne.s32.totalorder %s34, %s37
      %p43 = scmp.eq.s32.totalorder %s24, 0
      %p44 = por %p42, %p43
      %p45 = scmp.ne.s32.totalorder %s34, %s37
      %p46 = scmp.eq.s32.totalorder %s29, 1
      %p47 = por %p45, %p46
      %p48 = scmp.ne.s32.totalorder %s37, %s38
      %p49 = scmp.eq.s32.totalorder %s29, 0
      %p50 = por %p48, %p49
      %p51 = scmp.ne.s32.totalorder %s37, %s38
      %p52 = scmp.eq.s32.totalorder %s30, 1
      %p53 = por %p51, %p52
      %p55 = scmp.ne.s32.totalorder %s38, %s54
      %p56 = scmp.eq.s32.totalorder %s30, 0
      %p57 = por %p55, %p56
      %s59 = sadd.s32 %s58, 1
      %p62 = scmp.eq.s32.totalorder %s24, 1
      %p63 = scmp.ne.s32.totalorder %s58, %s60
      %p64 = scmp.eq.s32.totalorder %s24, 0
      %p65 = por %p63, %p64
      %p66 = scmp.ne.s32.totalorder %s58, %s60
      %p67 = scmp.eq.s32.totalorder %s29, 1
      %p68 = por %p66, %p67
      %p69 = scmp.ne.s32.totalorder %s60, %s61
      %p70 = scmp.eq.s32.totalorder %s29, 0
      %p71 = por %p69, %p70
      %p72 = scmp.ne.s32.totalorder %s60, %s61
      %p73 = scmp.eq.s32.totalorder %s30, 1
      %p74 = por %p72, %p73
      %p76 = scmp.ne.s32.totalorder %s61, %s75
      %p77 = scmp.eq.s32.totalorder %s30, 0
      %p78 = por %p76, %p77
      %s80 = sadd.s32 %s79, 1
      %p83 = scmp.eq.s32.totalorder %s24, 1
      %p84 = scmp.ne.s32.totalorder %s79, %s81
      %p85 = scmp.eq.s32.totalorder %s24, 0
      %p86 = por %p84, %p85
      %p87 = scmp.ne.s32.totalorder %s79, %s81
      %p88 = scmp.eq.s32.totalorder %s29, 1
      %p89 = por %p87, %p88
      %p90 = scmp.ne.s32.totalorder %s81, %s82
      %p91 = scmp.eq.s32.totalorder %s29, 0
      %p92 = por %p90, %p91
      %p93 = scmp.ne.s32.totalorder %s81, %s82
      %p94 = scmp.eq.s32.totalorder %s30, 1
      %p95 = por %p93, %p94
      %p97 = scmp.ne.s32.totalorder %s82, %s96
      %p98 = scmp.eq.s32.totalorder %s30, 0
      %p99 = por %p97, %p98
      %s101 = sadd.s32 %s100, 1
      %p104 = scmp.eq.s32.totalorder %s24, 1
      %p105 = scmp.ne.s32.totalorder %s100, %s102
      %p106 = scmp.eq.s32.totalorder %s24, 0
      %p107 = por %p105, %p106
      %p108 = scmp.ne.s32.totalorder %s100, %s102
      %p109 = scmp.eq.s32.totalorder %s29, 1
      %p110 = por %p108, %p109
      %p111 = scmp.ne.s32.totalorder %s102, %s103
      %p112 = scmp.eq.s32.totalorder %s29, 0
      %p113 = por %p111, %p112
      %p114 = scmp.ne.s32.totalorder %s102, %s103
      %p115 = scmp.eq.s32.totalorder %s30, 1
      %p116 = por %p114, %p115
      %p118 = scmp.ne.s32.totalorder %s103, %s117
      %p119 = scmp.eq.s32.totalorder %s30, 0
      %p120 = por %p118, %p119
      %s122 = sadd.s32 %s121, 1
      %p125 = scmp.eq.s32.totalorder %s24, 1
      %p126 = scmp.ne.s32.totalorder %s121, %s123
      %p127 = scmp.eq.s32.totalorder %s24, 0
      %p128 = por %p126, %p127
      %p129 = scmp.ne.s32.totalorder %s121, %s123
      %p130 = scmp.eq.s32.totalorder %s29, 1
      %p131 = por %p129, %p130
      %p132 = scmp.ne.s32.totalorder %s123, %s124
      %p133 = scmp.eq.s32.totalorder %s29, 0
      %p134 = por %p132, %p133
      %p135 = scmp.ne.s32.totalorder %s123, %s124
      %p136 = scmp.eq.s32.totalorder %s30, 1
      %p137 = por %p135, %p136
      %p139 = scmp.ne.s32.totalorder %s124, %s138
      %p140 = scmp.eq.s32.totalorder %s30, 0
      %p141 = por %p139, %p140
      %s143 = sadd.s32 %s142, 1
      %p146 = scmp.eq.s32.totalorder %s24, 1
      %p147 = scmp.ne.s32.totalorder %s142, %s144
      %p148 = scmp.eq.s32.totalorder %s24, 0
      %p149 = por %p147, %p148
      %p150 = scmp.ne.s32.totalorder %s142, %s144
      %p151 = scmp.eq.s32.totalorder %s29, 1
      %p152 = por %p150, %p151
      %p153 = scmp.ne.s32.totalorder %s144, %s145
      %p154 = scmp.eq.s32.totalorder %s29, 0
      %p155 = por %p153, %p154
      %p156 = scmp.ne.s32.totalorder %s144, %s145
      %p157 = scmp.eq.s32.totalorder %s30, 1
      %p158 = por %p156, %p157
      %p160 = scmp.ne.s32.totalorder %s145, %s159
      %p161 = scmp.eq.s32.totalorder %s30, 0
      %p162 = por %p160, %p161
      %s164 = sadd.s32 %s163, 1
      %p167 = scmp.eq.s32.totalorder %s24, 1
      %p168 = scmp.ne.s32.totalorder %s163, %s165
      %p169 = scmp.eq.s32.totalorder %s24, 0
      %p170 = por %p168, %p169
      %p171 = scmp.ne.s32.totalorder %s163, %s165
      %p172 = scmp.eq.s32.totalorder %s29, 1
      %p173 = por %p171, %p172
      %p174 = scmp.ne.s32.totalorder %s165, %s166
      %p175 = scmp.eq.s32.totalorder %s29, 0
      %p176 = por %p174, %p175
      %p177 = scmp.ne.s32.totalorder %s165, %s166
      %p178 = scmp.eq.s32.totalorder %s30, 1
      %p179 = por %p177, %p178
      %p181 = scmp.ne.s32.totalorder %s166, %s180
      %p182 = scmp.eq.s32.totalorder %s30, 0
      %p183 = por %p181, %p182
      %s185 = sadd.s32 %s184, 1
      %p188 = scmp.eq.s32.totalorder %s24, 1
      %p189 = scmp.ne.s32.totalorder %s184, %s186
      %p190 = scmp.eq.s32.totalorder %s24, 0
      %p191 = por %p189, %p190
      %p192 = scmp.ne.s32.totalorder %s184, %s186
      %p193 = scmp.eq.s32.totalorder %s29, 1
      %p194 = por %p192, %p193
      %p195 = scmp.ne.s32.totalorder %s186, %s187
      %p196 = scmp.eq.s32.totalorder %s29, 0
      %p197 = por %p195, %p196
      %p198 = scmp.ne.s32.totalorder %s186, %s187
      %p199 = scmp.eq.s32.totalorder %s30, 1
      %p200 = por %p198, %p199
      %p202 = scmp.ne.s32.totalorder %s187, %s201
      %p203 = scmp.eq.s32.totalorder %s30, 0
      %p204 = por %p202, %p203
      %s206 = sadd.s32 %s205, 1
      %p209 = scmp.eq.s32.totalorder %s24, 1
      %p210 = scmp.ne.s32.totalorder %s205, %s207
      %p211 = scmp.eq.s32.totalorder %s24, 0
      %p212 = por %p210, %p211
      %p213 = scmp.ne.s32.totalorder %s205, %s207
      %p214 = scmp.eq.s32.totalorder %s29, 1
      %p215 = por %p213, %p214
      %p216 = scmp.ne.s32.totalorder %s207, %s208
      %p217 = scmp.eq.s32.totalorder %s29, 0
      %p218 = por %p216, %p217
      %p219 = scmp.ne.s32.totalorder %s207, %s208
      %p220 = scmp.eq.s32.totalorder %s30, 1
      %p221 = por %p219, %p220
      %p223 = scmp.ne.s32.totalorder %s208, %s222
      %p224 = scmp.eq.s32.totalorder %s30, 0
      %p225 = por %p223, %p224
      %s227 = sadd.s32 %s226, 1
      %p230 = scmp.eq.s32.totalorder %s24, 1
      %p231 = scmp.ne.s32.totalorder %s226, %s228
      %p232 = scmp.eq.s32.totalorder %s24, 0
      %p233 = por %p231, %p232
      %p234 = scmp.ne.s32.totalorder %s226, %s228
      %p235 = scmp.eq.s32.totalorder %s29, 1
      %p236 = por %p234, %p235
      %p237 = scmp.ne.s32.totalorder %s228, %s229
      %p238 = scmp.eq.s32.totalorder %s29, 0
      %p239 = por %p237, %p238
      %p240 = scmp.ne.s32.totalorder %s228, %s229
      %p241 = scmp.eq.s32.totalorder %s30, 1
      %p242 = por %p240, %p241
      %p244 = scmp.ne.s32.totalorder %s229, %s243
      %p245 = scmp.eq.s32.totalorder %s30, 0
      %p246 = por %p244, %p245
      %s248 = sadd.s32 %s247, 1
      %p251 = scmp.eq.s32.totalorder %s24, 1
      %p252 = scmp.ne.s32.totalorder %s247, %s249
      %p253 = scmp.eq.s32.totalorder %s24, 0
      %p254 = por %p252, %p253
      %p255 = scmp.ne.s32.totalorder %s247, %s249
      %p256 = scmp.eq.s32.totalorder %s29, 1
      %p257 = por %p255, %p256
      %p258 = scmp.ne.s32.totalorder %s249, %s250
      %p259 = scmp.eq.s32.totalorder %s29, 0
      %p260 = por %p258, %p259
      %p261 = scmp.ne.s32.totalorder %s249, %s250
      %p262 = scmp.eq.s32.totalorder %s30, 1
      %p263 = por %p261, %p262
      %p265 = scmp.ne.s32.totalorder %s250, %s264
      %p266 = scmp.eq.s32.totalorder %s30, 0
      %p267 = por %p265, %p266
      %s269 = sadd.s32 %s268, 1
      %p272 = scmp.eq.s32.totalorder %s24, 1
      %p273 = scmp.ne.s32.totalorder %s268, %s270
      %p274 = scmp.eq.s32.totalorder %s24, 0
      %p275 = por %p273, %p274
      %p276 = scmp.ne.s32.totalorder %s268, %s270
      %p277 = scmp.eq.s32.totalorder %s29, 1
      %p278 = por %p276, %p277
      %p279 = scmp.ne.s32.totalorder %s270, %s271
      %p280 = scmp.eq.s32.totalorder %s29, 0
      %p281 = por %p279, %p280
      %p282 = scmp.ne.s32.totalorder %s270, %s271
      %p283 = scmp.eq.s32.totalorder %s30, 1
      %p284 = por %p282, %p283
      %p286 = scmp.ne.s32.totalorder %s271, %s285
      %p287 = scmp.eq.s32.totalorder %s30, 0
      %p288 = por %p286, %p287
      %s290 = sadd.s32 %s289, 1
      %p293 = scmp.eq.s32.totalorder %s24, 1
      %p294 = scmp.ne.s32.totalorder %s289, %s291
      %p295 = scmp.eq.s32.totalorder %s24, 0
      %p296 = por %p294, %p295
      %p297 = scmp.ne.s32.totalorder %s289, %s291
      %p298 = scmp.eq.s32.totalorder %s29, 1
      %p299 = por %p297, %p298
      %p300 = scmp.ne.s32.totalorder %s291, %s292
      %p301 = scmp.eq.s32.totalorder %s29, 0
      %p302 = por %p300, %p301
      %p303 = scmp.ne.s32.totalorder %s291, %s292
      %p304 = scmp.eq.s32.totalorder %s30, 1
      %p305 = por %p303, %p304
      %p307 = scmp.ne.s32.totalorder %s292, %s306
      %p308 = scmp.eq.s32.totalorder %s30, 0
      %p309 = por %p307, %p308
      %s311 = sadd.s32 %s310, 1
      %p314 = scmp.eq.s32.totalorder %s24, 1
      %p315 = scmp.ne.s32.totalorder %s310, %s312
      %p316 = scmp.eq.s32.totalorder %s24, 0
      %p317 = por %p315, %p316
      %p318 = scmp.ne.s32.totalorder %s310, %s312
      %p319 = scmp.eq.s32.totalorder %s29, 1
      %p320 = por %p318, %p319
      %p321 = scmp.ne.s32.totalorder %s312, %s313
      %p322 = scmp.eq.s32.totalorder %s29, 0
      %p323 = por %p321, %p322
      %p324 = scmp.ne.s32.totalorder %s312, %s313
      %p325 = scmp.eq.s32.totalorder %s30, 1
      %p326 = por %p324, %p325
      %p328 = scmp.ne.s32.totalorder %s313, %s327
      %p329 = scmp.eq.s32.totalorder %s30, 0
      %p330 = por %p328, %p329
      %s332 = sadd.s32 %s331, 1
      %p335 = scmp.eq.s32.totalorder %s24, 1
      %p336 = scmp.ne.s32.totalorder %s331, %s333
      %p337 = scmp.eq.s32.totalorder %s24, 0
      %p338 = por %p336, %p337
      %p339 = scmp.ne.s32.totalorder %s331, %s333
      %p340 = scmp.eq.s32.totalorder %s29, 1
      %p341 = por %p339, %p340
      %p342 = scmp.ne.s32.totalorder %s333, %s334
      %p343 = scmp.eq.s32.totalorder %s29, 0
      %p344 = por %p342, %p343
      %p345 = scmp.ne.s32.totalorder %s333, %s334
      %p346 = scmp.eq.s32.totalorder %s30, 1
      %p347 = por %p345, %p346
      %p349 = scmp.ne.s32.totalorder %s334, %s348
      %p350 = scmp.eq.s32.totalorder %s30, 0
      %p351 = por %p349, %p350
      %s352 = ssub.s32 %s24, %s31
      %p353 = scmp.eq.s32.totalorder %s352, 0
      %s355 = sadd.s32 %s354, 1
      %s356 = scalar_select %p353, %s354, %s355
      %p359 = pneg %p353
      %p360 = scmp.eq.s32.totalorder %s24, 1
      %p361 = por %p359, %p360
      %p362 = scmp.ne.s32.totalorder %s354, %s357
      %p363 = scmp.eq.s32.totalorder %s24, 0
      %p364 = por %p362, %p363
      %p365 = scmp.ne.s32.totalorder %s354, %s357
      %p366 = scmp.eq.s32.totalorder %s29, 1
      %p367 = por %p365, %p366
      %p368 = scmp.ne.s32.totalorder %s357, %s358
      %p369 = scmp.eq.s32.totalorder %s29, 0
      %p370 = por %p368, %p369
      %p371 = scmp.ne.s32.totalorder %s357, %s358
      %p372 = scmp.eq.s32.totalorder %s30, 1
      %p373 = por %p371, %p372
      %p375 = scmp.ne.s32.totalorder %s358, %s374
      %p376 = scmp.eq.s32.totalorder %s30, 0
      %p377 = por %p375, %p376
      %p378 = scmp.le.s32.totalorder 1, %s24
      %p379 = scmp.lt.s32.totalorder %s24, 3
      %p380 = pnand %p378, %p379
      %p381 = pneg %p380
      // Predicated region
      $region9: #{deepcnn_forward.1} parent=5 // pred_check
        _
      $region10: #{deepcnn_forward.1} parent=5 // pred_check_branch
        %383 = sbr.rel (%p380) target = $region12
      $region11: #{deepcnn_forward.1} parent=5 // pred_region
        %s384 = ssub.s32 %s24, 1
        // Predicated region
        $region13: #{deepcnn_forward.1} parent=11 // pred_check
          %p385 = pneg %p71
        $region14: #{deepcnn_forward.1} parent=11 // pred_check_branch
          %387 = sbr.rel (%p385) target = $region16
        $region15: #{deepcnn_forward.1} parent=11 // pred_region
          _
        $region16: #{deepcnn_forward.1} parent=11 // pred_fallthru
          _
        // Predicated region
        $region17: #{deepcnn_forward.1} parent=11 // pred_check
          %p388 = pneg %p92
        $region18: #{deepcnn_forward.1} parent=11 // pred_check_branch
          %390 = sbr.rel (%p388) target = $region20
        $region19: #{deepcnn_forward.1} parent=11 // pred_region
          _
        $region20: #{deepcnn_forward.1} parent=11 // pred_fallthru
          _
        // Predicated region
        $region21: #{deepcnn_forward.1} parent=11 // pred_check
          %p391 = pneg %p113
        $region22: #{deepcnn_forward.1} parent=11 // pred_check_branch
          %393 = sbr.rel (%p391) target = $region24
        $region23: #{deepcnn_forward.1} parent=11 // pred_region
          _
        $region24: #{deepcnn_forward.1} parent=11 // pred_fallthru
          _
        // Predicated region
        $region25: #{deepcnn_forward.1} parent=11 // pred_check
          %p394 = pneg %p134
        $region26: #{deepcnn_forward.1} parent=11 // pred_check_branch
          %396 = sbr.rel (%p394) target = $region28
        $region27: #{deepcnn_forward.1} parent=11 // pred_region
          _
        $region28: #{deepcnn_forward.1} parent=11 // pred_fallthru
          _
        // Predicated region
        $region29: #{deepcnn_forward.1} parent=11 // pred_check
          %p397 = pneg %p155
        $region30: #{deepcnn_forward.1} parent=11 // pred_check_branch
          %399 = sbr.rel (%p397) target = $region32
        $region31: #{deepcnn_forward.1} parent=11 // pred_region
          _
        $region32: #{deepcnn_forward.1} parent=11 // pred_fallthru
          _
        // Predicated region
        $region33: #{deepcnn_forward.1} parent=11 // pred_check
          %p400 = pneg %p176
        $region34: #{deepcnn_forward.1} parent=11 // pred_check_branch
          %402 = sbr.rel (%p400) target = $region36
        $region35: #{deepcnn_forward.1} parent=11 // pred_region
          _
        $region36: #{deepcnn_forward.1} parent=11 // pred_fallthru
          _
        // Predicated region
        $region37: #{deepcnn_forward.1} parent=11 // pred_check
          %p403 = pneg %p197
        $region38: #{deepcnn_forward.1} parent=11 // pred_check_branch
          %405 = sbr.rel (%p403) target = $region40
        $region39: #{deepcnn_forward.1} parent=11 // pred_region
          _
        $region40: #{deepcnn_forward.1} parent=11 // pred_fallthru
          _
        // Predicated region
        $region41: #{deepcnn_forward.1} parent=11 // pred_check
          %p406 = pneg %p218
        $region42: #{deepcnn_forward.1} parent=11 // pred_check_branch
          %408 = sbr.rel (%p406) target = $region44
        $region43: #{deepcnn_forward.1} parent=11 // pred_region
          _
        $region44: #{deepcnn_forward.1} parent=11 // pred_fallthru
          _
        // Predicated region
        $region45: #{deepcnn_forward.1} parent=11 // pred_check
          %p409 = pneg %p239
        $region46: #{deepcnn_forward.1} parent=11 // pred_check_branch
          %411 = sbr.rel (%p409) target = $region48
        $region47: #{deepcnn_forward.1} parent=11 // pred_region
          _
        $region48: #{deepcnn_forward.1} parent=11 // pred_fallthru
          _
        // Predicated region
        $region49: #{deepcnn_forward.1} parent=11 // pred_check
          %p412 = pneg %p260
        $region50: #{deepcnn_forward.1} parent=11 // pred_check_branch
          %414 = sbr.rel (%p412) target = $region52
        $region51: #{deepcnn_forward.1} parent=11 // pred_region
          _
        $region52: #{deepcnn_forward.1} parent=11 // pred_fallthru
          _
        // Predicated region
        $region53: #{deepcnn_forward.1} parent=11 // pred_check
          %p415 = pneg %p281
        $region54: #{deepcnn_forward.1} parent=11 // pred_check_branch
          %417 = sbr.rel (%p415) target = $region56
        $region55: #{deepcnn_forward.1} parent=11 // pred_region
          _
        $region56: #{deepcnn_forward.1} parent=11 // pred_fallthru
          _
        // Predicated region
        $region57: #{deepcnn_forward.1} parent=11 // pred_check
          %p418 = pneg %p302
        $region58: #{deepcnn_forward.1} parent=11 // pred_check_branch
          %420 = sbr.rel (%p418) target = $region60
        $region59: #{deepcnn_forward.1} parent=11 // pred_region
          _
        $region60: #{deepcnn_forward.1} parent=11 // pred_fallthru
          _
        // Predicated region
        $region61: #{deepcnn_forward.1} parent=11 // pred_check
          %p421 = pneg %p323
        $region62: #{deepcnn_forward.1} parent=11 // pred_check_branch
          %423 = sbr.rel (%p421) target = $region64
        $region63: #{deepcnn_forward.1} parent=11 // pred_region
          _
        $region64: #{deepcnn_forward.1} parent=11 // pred_fallthru
          _
        // Predicated region
        $region65: #{deepcnn_forward.1} parent=11 // pred_check
          %p424 = pneg %p344
        $region66: #{deepcnn_forward.1} parent=11 // pred_check_branch
          %426 = sbr.rel (%p424) target = $region68
        $region67: #{deepcnn_forward.1} parent=11 // pred_region
          _
        $region68: #{deepcnn_forward.1} parent=11 // pred_fallthru
          _
      $region12: #{deepcnn_forward.1} parent=5 // pred_fallthru
        _
      %p427 = scmp.lt.s32.totalorder %s24, 2
      // Predicated region
      $region69: #{deepcnn_forward.1} parent=5 // pred_check
        %p428 = pneg %p427
      $region70: #{deepcnn_forward.1} parent=5 // pred_check_branch
        %430 = sbr.rel (%p428) target = $region72
      $region71: #{deepcnn_forward.1} parent=5 // pred_region
        // Predicated region
        $region73: #{deepcnn_forward.1} parent=71 // pred_check
          %p431 = pneg %p44
        $region74: #{deepcnn_forward.1} parent=71 // pred_check_branch
          %433 = sbr.rel (%p431) target = $region76
        $region75: #{deepcnn_forward.1} parent=71 // pred_region
          %p434 = scmp.lt.s32.totalorder %s24, 1
          %s435 = scalar_select %p434, %s24, 1
          %s436 = smul.addr %s435, 32
          %s437 = smul.addr %s436, 4
          %s438 = scalar_lea.vmem %s0, %s437
        $region76: #{deepcnn_forward.1} parent=71 // pred_fallthru
          _
      $region72: #{deepcnn_forward.1} parent=5 // pred_fallthru
        _
      %p439 = scmp.le.s32.totalorder 1, %s24
      %p440 = scmp.lt.s32.totalorder %s24, 3
      %p441 = pnand %p439, %p440
      %p442 = pneg %p441
      // Predicated region
      $region77: #{deepcnn_forward.1} parent=5 // pred_check
        _
      $region78: #{deepcnn_forward.1} parent=5 // pred_check_branch
        %444 = sbr.rel (%p441) target = $region80
      $region79: #{deepcnn_forward.1} parent=5 // pred_region
        %s445 = ssub.s32 %s24, 1
        %p446 = scmp.lt.s32.totalorder %s29, 1
        %s447 = scalar_select %p446, %s29, 1
        %s448 = smul.addr %s447, 32
        %s449 = smul.addr %s448, 4
        %s450 = scalar_lea.vmem %s0, %s449
        %p451 = pneg %p50
        %p452 = pneg %p47
        %p453 = pneg %p71
        %p454 = pneg %p68
        %p455 = pneg %p92
        %p456 = pneg %p89
        %p457 = pneg %p113
        %p458 = pneg %p110
        %p459 = pneg %p134
        %p460 = pneg %p131
        %p461 = pneg %p155
        %p462 = pneg %p152
        %p463 = pneg %p176
        %p464 = pneg %p173
        %p465 = pneg %p197
        %p466 = pneg %p194
        %p467 = pneg %p218
        %p468 = pneg %p215
        %p469 = pneg %p239
        %p470 = pneg %p236
        %p471 = pneg %p260
        %p472 = pneg %p257
        %p473 = pneg %p281
        %p474 = pneg %p278
        %p475 = pneg %p302
        %p476 = pneg %p299
        %p477 = pneg %p323
        %p478 = pneg %p320
        %p479 = pneg %p344
        %p480 = pneg %p341
        %p481 = pneg %p370
        %p482 = pneg %p367
        %s483 = sand.u32 %s357, 1
        %s484 = scalar_lea.sflag [#allocation8], %s483
        %s485 = sand.u32 %s357, 1
        %s486 = scalar_lea.vmem [#allocation7], %s485
        %p487 = scmp.lt.s32.totalorder %s29, 1
        %s488 = scalar_select %p487, %s29, 1
        %s489 = smul.addr %s488, 32
        %s490 = smul.addr %s489, 4
        %s491 = scalar_lea.vmem %s0, %s490
        %v493 = vld [vmem:[%s491] sm:$0xf]
        %v494 = vld [vmem:[%s491 + $0x4] sm:$0xf]
        %v495 = vld [vmem:[%s491 + $0x8] sm:$0xf]
        %v496 = vld [vmem:[%s491 + $0xc] sm:$0xf]
        %v497 = vld [vmem:[%s491 + $0x10] sm:$0xf]
        %v498 = vld [vmem:[%s491 + $0x14] sm:$0xf]
        %v499 = vld [vmem:[%s491 + $0x18] sm:$0xf]
        %v500 = vld [vmem:[%s491 + $0x1c] sm:$0xf]
        %v501 = vld [vmem:[%s491 + $0x20] sm:$0xf]
        %v502 = vld [vmem:[%s491 + $0x24] sm:$0xf]
        %v503 = vld [vmem:[%s491 + $0x28] sm:$0xf]
        %v504 = vld [vmem:[%s491 + $0x2c] sm:$0xf]
        %v505 = vld [vmem:[%s491 + $0x30] sm:$0xf]
        %v506 = vld [vmem:[%s491 + $0x34] sm:$0xf]
        %v507 = vld [vmem:[%s491 + $0x38] sm:$0xf]
        %v508 = vld [vmem:[%s491 + $0x3c] sm:$0xf]
        %v509 = vld [vmem:[%s491 + $0x40] sm:$0xf]
        %v510 = vld [vmem:[%s491 + $0x44] sm:$0xf]
        %v511 = vld [vmem:[%s491 + $0x48] sm:$0xf]
        %v512 = vld [vmem:[%s491 + $0x4c] sm:$0xf]
        %v513 = vld [vmem:[%s491 + $0x50] sm:$0xf]
        %v514 = vld [vmem:[%s491 + $0x54] sm:$0xf]
        %v515 = vld [vmem:[%s491 + $0x58] sm:$0xf]
        %v516 = vld [vmem:[%s491 + $0x5c] sm:$0xf]
        %v517 = vld [vmem:[%s491 + $0x60] sm:$0xf]
        %v518 = vld [vmem:[%s491 + $0x64] sm:$0xf]
        %v519 = vld [vmem:[%s491 + $0x68] sm:$0xf]
        %v520 = vld [vmem:[%s491 + $0x6c] sm:$0xf]
        %v521 = vld [vmem:[%s491 + $0x70] sm:$0xf]
        %v522 = vld [vmem:[%s491 + $0x74] sm:$0xf]
        %v523 = vld [vmem:[%s491 + $0x78] sm:$0xf]
        %v524 = vld [vmem:[%s491 + $0x7c] sm:$0xf]
        %v525 = vld [vmem:[%s1] sm:$0xf]
        %v526 = vld [vmem:[%s1 + $0x4] sm:$0xf]
        %v527 = vld [vmem:[%s1 + $0x8] sm:$0xf]
        %v528 = vld [vmem:[%s1 + $0xc] sm:$0xf]
        %v529 = vld [vmem:[%s7] sm:$0x1]
        %v531 = vlaneseq
        %v532 = vshrl.u32 %v531, 7
        %v533 = vsub.s32 0, %v532
        %v534 = vrot.slane %v529, %v533
        %v568 = vunpack.c.l.b16 %v493
        %v569 = vunpack.c.l.b16 %v494
        %v570 = vunpack.c.l.b16 %v495
        %v571 = vunpack.c.l.b16 %v496
        %v572 = vunpack.c.l.b16 %v497
        %v573 = vunpack.c.l.b16 %v498
        %v574 = vunpack.c.l.b16 %v499
        %v575 = vunpack.c.l.b16 %v500
        %v576 = vunpack.c.l.b16 %v501
        %v577 = vunpack.c.l.b16 %v502
        %v578 = vunpack.c.l.b16 %v503
        %v579 = vunpack.c.l.b16 %v504
        %v580 = vunpack.c.l.b16 %v505
        %v581 = vunpack.c.l.b16 %v506
        %v582 = vunpack.c.l.b16 %v507
        %v583 = vunpack.c.l.b16 %v508
        %v584 = vunpack.c.l.b16 %v509
        %v585 = vunpack.c.l.b16 %v510
        %v586 = vunpack.c.l.b16 %v511
        %v587 = vunpack.c.l.b16 %v512
        %v588 = vunpack.c.l.b16 %v513
        %v589 = vunpack.c.l.b16 %v514
        %v590 = vunpack.c.l.b16 %v515
        %v591 = vunpack.c.l.b16 %v516
        %v592 = vunpack.c.l.b16 %v517
        %v593 = vunpack.c.l.b16 %v518
        %v594 = vunpack.c.l.b16 %v519
        %v595 = vunpack.c.l.b16 %v520
        %v596 = vunpack.c.l.b16 %v521
        %v597 = vunpack.c.l.b16 %v522
        %v598 = vunpack.c.l.b16 %v523
        %v599 = vunpack.c.l.b16 %v524
        %v600 = vpack.c.b16 %v569, %v568
        %v601 = vpack.c.b16 %v571, %v570
        %v602 = vpack.c.b16 %v573, %v572
        %v603 = vpack.c.b16 %v575, %v574
        %v604 = vpack.c.b16 %v577, %v576
        %v605 = vpack.c.b16 %v579, %v578
        %v606 = vpack.c.b16 %v581, %v580
        %v607 = vpack.c.b16 %v583, %v582
        %v608 = vpack.c.b16 %v585, %v584
        %v609 = vpack.c.b16 %v587, %v586
        %v610 = vpack.c.b16 %v589, %v588
        %v611 = vpack.c.b16 %v591, %v590
        %v612 = vpack.c.b16 %v593, %v592
        %v613 = vpack.c.b16 %v595, %v594
        %v614 = vpack.c.b16 %v597, %v596
        %v615 = vpack.c.b16 %v599, %v598
        %v620 = vunpack.c.l.b16 %v525
        %v621 = vunpack.c.l.b16 %v526
        %v622 = vunpack.c.l.b16 %v527
        %v623 = vunpack.c.l.b16 %v528
        %v624 = vpack.c.b16 %v621, %v620
        %v625 = vpack.c.b16 %v623, %v622
        %vm628 = vcmask 261120
        %v630 = vsel %vm628, %v600, 0
        %v633 = vsel %vm628, %v601, 0
        %v636 = vsel %vm628, %v602, 0
        %v639 = vsel %vm628, %v603, 0
        %v642 = vsel %vm628, %v604, 0
        %v645 = vsel %vm628, %v605, 0
        %v648 = vsel %vm628, %v606, 0
        %v651 = vsel %vm628, %v607, 0
        %v654 = vsel %vm628, %v608, 0
        %v657 = vsel %vm628, %v609, 0
        %v660 = vsel %vm628, %v610, 0
        %v663 = vsel %vm628, %v611, 0
        %v666 = vsel %vm628, %v612, 0
        %v669 = vsel %vm628, %v613, 0
        %v672 = vsel %vm628, %v614, 0
        %v675 = vsel %vm628, %v615, 0
        %677 = vmatprep.subr.bf16.mxu0 0
        %678 = vmatpush1.bf16.msra.mxu0 %v624
        %679 = vmatprep.subr.bf16.mxu0 0
        %680 = vmatpush1.bf16.msra.mxu0 %v625
        %681 = vmatprep.subr.bf16.mxu0 0
        %682 = vmatpush1.bf16.msra.mxu0 0
        %683 = vmatprep.subr.bf16.mxu0 0
        %684 = vmatpush1.bf16.msra.mxu0 0
        %685 = vmatprep.subr.bf16.mxu0 0
        %686 = vmatpush1.bf16.msra.mxu0 0
        %687 = vmatprep.subr.bf16.mxu0 0
        %688 = vmatpush1.bf16.msra.mxu0 0
        %689 = vmatprep.subr.bf16.mxu0 0
        %690 = vmatpush1.bf16.msra.mxu0 0
        %691 = vmatprep.subr.bf16.mxu0 0
        %692 = vmatpush1.bf16.msra.mxu0 0
        %693 = vmatprep.subr.bf16.mxu0 0
        %694 = vmatpush1.bf16.msra.mxu0 0
        %695 = vmatprep.subr.bf16.mxu0 0
        %696 = vmatpush1.bf16.msra.mxu0 0
        %697 = vmatprep.subr.bf16.mxu0 0
        %698 = vmatpush1.bf16.msra.mxu0 0
        %699 = vmatprep.subr.bf16.mxu0 0
        %700 = vmatpush1.bf16.msra.mxu0 0
        %701 = vmatprep.subr.bf16.mxu0 0
        %702 = vmatpush1.bf16.msra.mxu0 0
        %703 = vmatprep.subr.bf16.mxu0 0
        %704 = vmatpush1.bf16.msra.mxu0 0
        %705 = vmatprep.subr.bf16.mxu0 0
        %706 = vmatpush1.bf16.msra.mxu0 0
        %707 = vmatprep.subr.bf16.mxu0 0
        %708 = vmatpush1.bf16.msra.mxu0 0
        %709 = vmatprep.mubr.bf16.mxu0 0
        %710 = vmatmul.mubr.bf16.gmra.mrb[0].mxu0 %v630
        %v711 = vpop.f32.mrb[0].mxu0
        %v712 = vadd.f32 %v534, %v711
        %v713 = vpop.f32.mrb[0].mxu0
        %v714 = vpop.f32.mrb[0].mxu0
        %v715 = vadd.f32 %v534, %v714
        %v716 = vpop.f32.mrb[0].mxu0
        %717 = vmatprep.mubr.bf16.mxu0 0
        %718 = vmatmul.mubr.bf16.gmra.mrb[0].mxu0 %v633
        %v719 = vpop.f32.mrb[0].mxu0
        %v720 = vadd.f32 %v534, %v719
        %v721 = vpop.f32.mrb[0].mxu0
        %v722 = vpop.f32.mrb[0].mxu0
        %v723 = vadd.f32 %v534, %v722
        %v724 = vpop.f32.mrb[0].mxu0
        %725 = vmatprep.mubr.bf16.mxu0 0
        %726 = vmatmul.mubr.bf16.gmra.mrb[0].mxu0 %v636
        %v727 = vpop.f32.mrb[0].mxu0
        %v728 = vadd.f32 %v534, %v727
        %v729 = vpop.f32.mrb[0].mxu0
        %v730 = vpop.f32.mrb[0].mxu0
        %v731 = vadd.f32 %v534, %v730
        %v732 = vpop.f32.mrb[0].mxu0
        %733 = vmatprep.mubr.bf16.mxu0 0
        %734 = vmatmul.mubr.bf16.gmra.mrb[0].mxu0 %v639
        %v735 = vpop.f32.mrb[0].mxu0
        %v736 = vadd.f32 %v534, %v735
        %v737 = vpop.f32.mrb[0].mxu0
        %v738 = vpop.f32.mrb[0].mxu0
        %v739 = vadd.f32 %v534, %v738
        %v740 = vpop.f32.mrb[0].mxu0
        %741 = vmatprep.mubr.bf16.mxu0 0
        %742 = vmatmul.mubr.bf16.gmra.mrb[0].mxu0 %v642
        %v743 = vpop.f32.mrb[0].mxu0
        %v744 = vadd.f32 %v534, %v743
        %v745 = vpop.f32.mrb[0].mxu0
        %v746 = vpop.f32.mrb[0].mxu0
        %v747 = vadd.f32 %v534, %v746
        %v748 = vpop.f32.mrb[0].mxu0
        %749 = vmatprep.mubr.bf16.mxu0 0
        %750 = vmatmul.mubr.bf16.gmra.mrb[0].mxu0 %v645
        %v751 = vpop.f32.mrb[0].mxu0
        %v752 = vadd.f32 %v534, %v751
        %v753 = vpop.f32.mrb[0].mxu0
        %v754 = vpop.f32.mrb[0].mxu0
        %v755 = vadd.f32 %v534, %v754
        %v756 = vpop.f32.mrb[0].mxu0
        %757 = vmatprep.mubr.bf16.mxu0 0
        %758 = vmatmul.mubr.bf16.gmra.mrb[0].mxu0 %v648
        %v759 = vpop.f32.mrb[0].mxu0
        %v760 = vadd.f32 %v534, %v759
        %v761 = vpop.f32.mrb[0].mxu0
        %v762 = vpop.f32.mrb[0].mxu0
        %v763 = vadd.f32 %v534, %v762
        %v764 = vpop.f32.mrb[0].mxu0
        %765 = vmatprep.mubr.bf16.mxu0 0
        %766 = vmatmul.mubr.bf16.gmra.mrb[0].mxu0 %v651
        %v767 = vpop.f32.mrb[0].mxu0
        %v768 = vadd.f32 %v534, %v767
        %v769 = vpop.f32.mrb[0].mxu0
        %v770 = vpop.f32.mrb[0].mxu0
        %v771 = vadd.f32 %v534, %v770
        %v772 = vpop.f32.mrb[0].mxu0
        %773 = vmatprep.mubr.bf16.mxu0 0
        %774 = vmatmul.mubr.bf16.gmra.mrb[0].mxu0 %v654
        %v775 = vpop.f32.mrb[0].mxu0
        %v776 = vadd.f32 %v534, %v775
        %v777 = vpop.f32.mrb[0].mxu0
        %v778 = vpop.f32.mrb[0].mxu0
        %v779 = vadd.f32 %v534, %v778
        %v780 = vpop.f32.mrb[0].mxu0
        %781 = vmatprep.mubr.bf16.mxu0 0
        %782 = vmatmul.mubr.bf16.gmra.mrb[0].mxu0 %v657
        %v783 = vpop.f32.mrb[0].mxu0
        %v784 = vadd.f32 %v534, %v783
        %v785 = vpop.f32.mrb[0].mxu0
        %v786 = vpop.f32.mrb[0].mxu0
        %v787 = vadd.f32 %v534, %v786
        %v788 = vpop.f32.mrb[0].mxu0
        %789 = vmatprep.mubr.bf16.mxu0 0
        %790 = vmatmul.mubr.bf16.gmra.mrb[0].mxu0 %v660
        %v791 = vpop.f32.mrb[0].mxu0
        %v792 = vadd.f32 %v534, %v791
        %v793 = vpop.f32.mrb[0].mxu0
        %v794 = vpop.f32.mrb[0].mxu0
        %v795 = vadd.f32 %v534, %v794
        %v796 = vpop.f32.mrb[0].mxu0
        %797 = vmatprep.mubr.bf16.mxu0 0
        %798 = vmatmul.mubr.bf16.gmra.mrb[0].mxu0 %v663
        %v799 = vpop.f32.mrb[0].mxu0
        %v800 = vadd.f32 %v534, %v799
        %v801 = vpop.f32.mrb[0].mxu0
        %v802 = vpop.f32.mrb[0].mxu0
        %v803 = vadd.f32 %v534, %v802
        %v804 = vpop.f32.mrb[0].mxu0
        %805 = vmatprep.mubr.bf16.mxu0 0
        %806 = vmatmul.mubr.bf16.gmra.mrb[0].mxu0 %v666
        %v807 = vpop.f32.mrb[0].mxu0
        %v808 = vadd.f32 %v534, %v807
        %v809 = vpop.f32.mrb[0].mxu0
        %v810 = vpop.f32.mrb[0].mxu0
        %v811 = vadd.f32 %v534, %v810
        %v812 = vpop.f32.mrb[0].mxu0
        %813 = vmatprep.mubr.bf16.mxu0 0
        %814 = vmatmul.mubr.bf16.gmra.mrb[0].mxu0 %v669
        %v815 = vpop.f32.mrb[0].mxu0
        %v816 = vadd.f32 %v534, %v815
        %v817 = vpop.f32.mrb[0].mxu0
        %v818 = vpop.f32.mrb[0].mxu0
        %v819 = vadd.f32 %v534, %v818
        %v820 = vpop.f32.mrb[0].mxu0
        %821 = vmatprep.mubr.bf16.mxu0 0
        %822 = vmatmul.mubr.bf16.gmra.mrb[0].mxu0 %v672
        %v823 = vpop.f32.mrb[0].mxu0
        %v824 = vadd.f32 %v534, %v823
        %v825 = vpop.f32.mrb[0].mxu0
        %v826 = vpop.f32.mrb[0].mxu0
        %v827 = vadd.f32 %v534, %v826
        %v828 = vpop.f32.mrb[0].mxu0
        %829 = vmatprep.mubr.bf16.mxu0 0
        %830 = vmatmul.mubr.bf16.gmra.mrb[0].mxu0 %v675
        %v831 = vpop.f32.mrb[0].mxu0
        %v832 = vadd.f32 %v534, %v831
        %v833 = vpop.f32.mrb[0].mxu0
        %v834 = vpop.f32.mrb[0].mxu0
        %v835 = vadd.f32 %v534, %v834
        %v836 = vpop.f32.mrb[0].mxu0
        %837 = vdwg.mxu0
        %v838 = vmax.f32 %v712, 0.0
        %v839 = vmax.f32 %v715, 0.0
        %v840 = vmax.f32 %v720, 0.0
        %v841 = vmax.f32 %v723, 0.0
        %v842 = vmax.f32 %v728, 0.0
        %v843 = vmax.f32 %v731, 0.0
        %v844 = vmax.f32 %v736, 0.0
        %v845 = vmax.f32 %v739, 0.0
        %v846 = vmax.f32 %v744, 0.0
        %v847 = vmax.f32 %v747, 0.0
        %v848 = vmax.f32 %v752, 0.0
        %v849 = vmax.f32 %v755, 0.0
        %v850 = vmax.f32 %v760, 0.0
        %v851 = vmax.f32 %v763, 0.0
        %v852 = vmax.f32 %v768, 0.0
        %v853 = vmax.f32 %v771, 0.0
        %v854 = vmax.f32 %v776, 0.0
        %v855 = vmax.f32 %v779, 0.0
        %v856 = vmax.f32 %v784, 0.0
        %v857 = vmax.f32 %v787, 0.0
        %v858 = vmax.f32 %v792, 0.0
        %v859 = vmax.f32 %v795, 0.0
        %v860 = vmax.f32 %v800, 0.0
        %v861 = vmax.f32 %v803, 0.0
        %v862 = vmax.f32 %v808, 0.0
        %v863 = vmax.f32 %v811, 0.0
        %v864 = vmax.f32 %v816, 0.0
        %v865 = vmax.f32 %v819, 0.0
        %v866 = vmax.f32 %v824, 0.0
        %v867 = vmax.f32 %v827, 0.0
        %v868 = vmax.f32 %v832, 0.0
        %v869 = vmax.f32 %v835, 0.0
        %v902 = vcombine.high %v838, %v838
        %v904 = vunpack.c.l.s4 1983009808
        %v905 = vunpack.c.0.s8 %v904
        %v906 = vlaneseq
        %v907 = vshrl.u32 %v906, 7
        %v908 = vsub.s32 %v905, %v907
        %v909 = vrot.slane %v838, %v908
        %v911 = vunpack.c.l.s4 1983009808
        %v912 = vunpack.c.0.s8 %v911
        %v913 = vlaneseq
        %v914 = vshrl.u32 %v913, 7
        %v915 = vsub.s32 %v912, %v914
        %v916 = vrot.slane %v902, %v915
        %v917 = vcombine.high %v909, %v909
        %v918 = vcombine.high %v916, %v916
        %v919 = vcombine.high %v839, %v839
        %v921 = vunpack.c.l.s4 1983009808
        %v922 = vunpack.c.0.s8 %v921
        %v923 = vlaneseq
        %v924 = vshrl.u32 %v923, 7
        %v925 = vsub.s32 %v922, %v924
        %v926 = vrot.slane %v839, %v925
        %v928 = vunpack.c.l.s4 1983009808
        %v929 = vunpack.c.0.s8 %v928
        %v930 = vlaneseq
        %v931 = vshrl.u32 %v930, 7
        %v932 = vsub.s32 %v929, %v931
        %v933 = vrot.slane %v919, %v932
        %v934 = vcombine.high %v926, %v926
        %v935 = vcombine.high %v933, %v933
        %v936 = vcombine.high %v840, %v840
        %v938 = vunpack.c.l.s4 1983009808
        %v939 = vunpack.c.0.s8 %v938
        %v940 = vlaneseq
        %v941 = vshrl.u32 %v940, 7
        %v942 = vsub.s32 %v939, %v941
        %v943 = vrot.slane %v840, %v942
        %v945 = vunpack.c.l.s4 1983009808
        %v946 = vunpack.c.0.s8 %v945
        %v947 = vlaneseq
        %v948 = vshrl.u32 %v947, 7
        %v949 = vsub.s32 %v946, %v948
        %v950 = vrot.slane %v936, %v949
        %v951 = vcombine.high %v943, %v943
        %v952 = vcombine.high %v950, %v950
        %v953 = vcombine.high %v841, %v841
        %v955 = vunpack.c.l.s4 1983009808
        %v956 = vunpack.c.0.s8 %v955
        %v957 = vlaneseq
        %v958 = vshrl.u32 %v957, 7
        %v959 = vsub.s32 %v956, %v958
        %v960 = vrot.slane %v841, %v959
        %v962 = vunpack.c.l.s4 1983009808
        %v963 = vunpack.c.0.s8 %v962
        %v964 = vlaneseq
        %v965 = vshrl.u32 %v964, 7
        %v966 = vsub.s32 %v963, %v965
        %v967 = vrot.slane %v953, %v966
        %v968 = vcombine.high %v960, %v960
        %v969 = vcombine.high %v967, %v967
        %v970 = vcombine.high %v842, %v842
        %v972 = vunpack.c.l.s4 1983009808
        %v973 = vunpack.c.0.s8 %v972
        %v974 = vlaneseq
        %v975 = vshrl.u32 %v974, 7
        %v976 = vsub.s32 %v973, %v975
        %v977 = vrot.slane %v842, %v976
        %v979 = vunpack.c.l.s4 1983009808
        %v980 = vunpack.c.0.s8 %v979
        %v981 = vlaneseq
        %v982 = vshrl.u32 %v981, 7
        %v983 = vsub.s32 %v980, %v982
        %v984 = vrot.slane %v970, %v983
        %v985 = vcombine.high %v977, %v977
        %v986 = vcombine.high %v984, %v984
        %v987 = vcombine.high %v843, %v843
        %v989 = vunpack.c.l.s4 1983009808
        %v990 = vunpack.c.0.s8 %v989
        %v991 = vlaneseq
        %v992 = vshrl.u32 %v991, 7
        %v993 = vsub.s32 %v990, %v992
        %v994 = vrot.slane %v843, %v993
        %v996 = vunpack.c.l.s4 1983009808
        %v997 = vunpack.c.0.s8 %v996
        %v998 = vlaneseq
        %v999 = vshrl.u32 %v998, 7
        %v1000 = vsub.s32 %v997, %v999
        %v1001 = vrot.slane %v987, %v1000
        %v1002 = vcombine.high %v994, %v994
        %v1003 = vcombine.high %v1001, %v1001
        %v1004 = vcombine.high %v844, %v844
        %v1006 = vunpack.c.l.s4 1983009808
        %v1007 = vunpack.c.0.s8 %v1006
        %v1008 = vlaneseq
        %v1009 = vshrl.u32 %v1008, 7
        %v1010 = vsub.s32 %v1007, %v1009
        %v1011 = vrot.slane %v844, %v1010
        %v1013 = vunpack.c.l.s4 1983009808
        %v1014 = vunpack.c.0.s8 %v1013
        %v1015 = vlaneseq
        %v1016 = vshrl.u32 %v1015, 7
        %v1017 = vsub.s32 %v1014, %v1016
        %v1018 = vrot.slane %v1004, %v1017
        %v1019 = vcombine.high %v1011, %v1011
        %v1020 = vcombine.high %v1018, %v1018
        %v1021 = vcombine.high %v845, %v845
        %v1023 = vunpack.c.l.s4 1983009808
        %v1024 = vunpack.c.0.s8 %v1023
        %v1025 = vlaneseq
        %v1026 = vshrl.u32 %v1025, 7
        %v1027 = vsub.s32 %v1024, %v1026
        %v1028 = vrot.slane %v845, %v1027
        %v1030 = vunpack.c.l.s4 1983009808
        %v1031 = vunpack.c.0.s8 %v1030
        %v1032 = vlaneseq
        %v1033 = vshrl.u32 %v1032, 7
        %v1034 = vsub.s32 %v1031, %v1033
        %v1035 = vrot.slane %v1021, %v1034
        %v1036 = vcombine.high %v1028, %v1028
        %v1037 = vcombine.high %v1035, %v1035
        %v1038 = vcombine.high %v846, %v846
        %v1040 = vunpack.c.l.s4 1983009808
        %v1041 = vunpack.c.0.s8 %v1040
        %v1042 = vlaneseq
        %v1043 = vshrl.u32 %v1042, 7
        %v1044 = vsub.s32 %v1041, %v1043
        %v1045 = vrot.slane %v846, %v1044
        %v1047 = vunpack.c.l.s4 1983009808
        %v1048 = vunpack.c.0.s8 %v1047
        %v1049 = vlaneseq
        %v1050 = vshrl.u32 %v1049, 7
        %v1051 = vsub.s32 %v1048, %v1050
        %v1052 = vrot.slane %v1038, %v1051
        %v1053 = vcombine.high %v1045, %v1045
        %v1054 = vcombine.high %v1052, %v1052
        %v1055 = vcombine.high %v847, %v847
        %v1057 = vunpack.c.l.s4 1983009808
        %v1058 = vunpack.c.0.s8 %v1057
        %v1059 = vlaneseq
        %v1060 = vshrl.u32 %v1059, 7
        %v1061 = vsub.s32 %v1058, %v1060
        %v1062 = vrot.slane %v847, %v1061
        %v1064 = vunpack.c.l.s4 1983009808
        %v1065 = vunpack.c.0.s8 %v1064
        %v1066 = vlaneseq
        %v1067 = vshrl.u32 %v1066, 7
        %v1068 = vsub.s32 %v1065, %v1067
        %v1069 = vrot.slane %v1055, %v1068
        %v1070 = vcombine.high %v1062, %v1062
        %v1071 = vcombine.high %v1069, %v1069
        %v1072 = vcombine.high %v848, %v848
        %v1074 = vunpack.c.l.s4 1983009808
        %v1075 = vunpack.c.0.s8 %v1074
        %v1076 = vlaneseq
        %v1077 = vshrl.u32 %v1076, 7
        %v1078 = vsub.s32 %v1075, %v1077
        %v1079 = vrot.slane %v848, %v1078
        %v1081 = vunpack.c.l.s4 1983009808
        %v1082 = vunpack.c.0.s8 %v1081
        %v1083 = vlaneseq
        %v1084 = vshrl.u32 %v1083, 7
        %v1085 = vsub.s32 %v1082, %v1084
        %v1086 = vrot.slane %v1072, %v1085
        %v1087 = vcombine.high %v1079, %v1079
        %v1088 = vcombine.high %v1086, %v1086
        %v1089 = vcombine.high %v849, %v849
        %v1091 = vunpack.c.l.s4 1983009808
        %v1092 = vunpack.c.0.s8 %v1091
        %v1093 = vlaneseq
        %v1094 = vshrl.u32 %v1093, 7
        %v1095 = vsub.s32 %v1092, %v1094
        %v1096 = vrot.slane %v849, %v1095
        %v1098 = vunpack.c.l.s4 1983009808
        %v1099 = vunpack.c.0.s8 %v1098
        %v1100 = vlaneseq
        %v1101 = vshrl.u32 %v1100, 7
        %v1102 = vsub.s32 %v1099, %v1101
        %v1103 = vrot.slane %v1089, %v1102
        %v1104 = vcombine.high %v1096, %v1096
        %v1105 = vcombine.high %v1103, %v1103
        %v1106 = vcombine.high %v850, %v850
        %v1108 = vunpack.c.l.s4 1983009808
        %v1109 = vunpack.c.0.s8 %v1108
        %v1110 = vlaneseq
        %v1111 = vshrl.u32 %v1110, 7
        %v1112 = vsub.s32 %v1109, %v1111
        %v1113 = vrot.slane %v850, %v1112
        %v1115 = vunpack.c.l.s4 1983009808
        %v1116 = vunpack.c.0.s8 %v1115
        %v1117 = vlaneseq
        %v1118 = vshrl.u32 %v1117, 7
        %v1119 = vsub.s32 %v1116, %v1118
        %v1120 = vrot.slane %v1106, %v1119
        %v1121 = vcombine.high %v1113, %v1113
        %v1122 = vcombine.high %v1120, %v1120
        %v1123 = vcombine.high %v851, %v851
        %v1125 = vunpack.c.l.s4 1983009808
        %v1126 = vunpack.c.0.s8 %v1125
        %v1127 = vlaneseq
        %v1128 = vshrl.u32 %v1127, 7
        %v1129 = vsub.s32 %v1126, %v1128
        %v1130 = vrot.slane %v851, %v1129
        %v1132 = vunpack.c.l.s4 1983009808
        %v1133 = vunpack.c.0.s8 %v1132
        %v1134 = vlaneseq
        %v1135 = vshrl.u32 %v1134, 7
        %v1136 = vsub.s32 %v1133, %v1135
        %v1137 = vrot.slane %v1123, %v1136
        %v1138 = vcombine.high %v1130, %v1130
        %v1139 = vcombine.high %v1137, %v1137
        %v1140 = vcombine.high %v852, %v852
        %v1142 = vunpack.c.l.s4 1983009808
        %v1143 = vunpack.c.0.s8 %v1142
        %v1144 = vlaneseq
        %v1145 = vshrl.u32 %v1144, 7
        %v1146 = vsub.s32 %v1143, %v1145
        %v1147 = vrot.slane %v852, %v1146
        %v1149 = vunpack.c.l.s4 1983009808
        %v1150 = vunpack.c.0.s8 %v1149
        %v1151 = vlaneseq
        %v1152 = vshrl.u32 %v1151, 7
        %v1153 = vsub.s32 %v1150, %v1152
        %v1154 = vrot.slane %v1140, %v1153
        %v1155 = vcombine.high %v1147, %v1147
        %v1156 = vcombine.high %v1154, %v1154
        %v1157 = vcombine.high %v853, %v853
        %v1159 = vunpack.c.l.s4 1983009808
        %v1160 = vunpack.c.0.s8 %v1159
        %v1161 = vlaneseq
        %v1162 = vshrl.u32 %v1161, 7
        %v1163 = vsub.s32 %v1160, %v1162
        %v1164 = vrot.slane %v853, %v1163
        %v1166 = vunpack.c.l.s4 1983009808
        %v1167 = vunpack.c.0.s8 %v1166
        %v1168 = vlaneseq
        %v1169 = vshrl.u32 %v1168, 7
        %v1170 = vsub.s32 %v1167, %v1169
        %v1171 = vrot.slane %v1157, %v1170
        %v1172 = vcombine.high %v1164, %v1164
        %v1173 = vcombine.high %v1171, %v1171
        %v1174 = vcombine.high %v854, %v854
        %v1176 = vunpack.c.l.s4 1983009808
        %v1177 = vunpack.c.0.s8 %v1176
        %v1178 = vlaneseq
        %v1179 = vshrl.u32 %v1178, 7
        %v1180 = vsub.s32 %v1177, %v1179
        %v1181 = vrot.slane %v854, %v1180
        %v1183 = vunpack.c.l.s4 1983009808
        %v1184 = vunpack.c.0.s8 %v1183
        %v1185 = vlaneseq
        %v1186 = vshrl.u32 %v1185, 7
        %v1187 = vsub.s32 %v1184, %v1186
        %v1188 = vrot.slane %v1174, %v1187
        %v1189 = vcombine.high %v1181, %v1181
        %v1190 = vcombine.high %v1188, %v1188
        %v1191 = vcombine.high %v855, %v855
        %v1193 = vunpack.c.l.s4 1983009808
        %v1194 = vunpack.c.0.s8 %v1193
        %v1195 = vlaneseq
        %v1196 = vshrl.u32 %v1195, 7
        %v1197 = vsub.s32 %v1194, %v1196
        %v1198 = vrot.slane %v855, %v1197
        %v1200 = vunpack.c.l.s4 1983009808
        %v1201 = vunpack.c.0.s8 %v1200
        %v1202 = vlaneseq
        %v1203 = vshrl.u32 %v1202, 7
        %v1204 = vsub.s32 %v1201, %v1203
        %v1205 = vrot.slane %v1191, %v1204
        %v1206 = vcombine.high %v1198, %v1198
        %v1207 = vcombine.high %v1205, %v1205
        %v1208 = vcombine.high %v856, %v856
        %v1210 = vunpack.c.l.s4 1983009808
        %v1211 = vunpack.c.0.s8 %v1210
        %v1212 = vlaneseq
        %v1213 = vshrl.u32 %v1212, 7
        %v1214 = vsub.s32 %v1211, %v1213
        %v1215 = vrot.slane %v856, %v1214
        %v1217 = vunpack.c.l.s4 1983009808
        %v1218 = vunpack.c.0.s8 %v1217
        %v1219 = vlaneseq
        %v1220 = vshrl.u32 %v1219, 7
        %v1221 = vsub.s32 %v1218, %v1220
        %v1222 = vrot.slane %v1208, %v1221
        %v1223 = vcombine.high %v1215, %v1215
        %v1224 = vcombine.high %v1222, %v1222
        %v1225 = vcombine.high %v857, %v857
        %v1227 = vunpack.c.l.s4 1983009808
        %v1228 = vunpack.c.0.s8 %v1227
        %v1229 = vlaneseq
        %v1230 = vshrl.u32 %v1229, 7
        %v1231 = vsub.s32 %v1228, %v1230
        %v1232 = vrot.slane %v857, %v1231
        %v1234 = vunpack.c.l.s4 1983009808
        %v1235 = vunpack.c.0.s8 %v1234
        %v1236 = vlaneseq
        %v1237 = vshrl.u32 %v1236, 7
        %v1238 = vsub.s32 %v1235, %v1237
        %v1239 = vrot.slane %v1225, %v1238
        %v1240 = vcombine.high %v1232, %v1232
        %v1241 = vcombine.high %v1239, %v1239
        %v1242 = vcombine.high %v858, %v858
        %v1244 = vunpack.c.l.s4 1983009808
        %v1245 = vunpack.c.0.s8 %v1244
        %v1246 = vlaneseq
        %v1247 = vshrl.u32 %v1246, 7
        %v1248 = vsub.s32 %v1245, %v1247
        %v1249 = vrot.slane %v858, %v1248
        %v1251 = vunpack.c.l.s4 1983009808
        %v1252 = vunpack.c.0.s8 %v1251
        %v1253 = vlaneseq
        %v1254 = vshrl.u32 %v1253, 7
        %v1255 = vsub.s32 %v1252, %v1254
        %v1256 = vrot.slane %v1242, %v1255
        %v1257 = vcombine.high %v1249, %v1249
        %v1258 = vcombine.high %v1256, %v1256
        %v1259 = vcombine.high %v859, %v859
        %v1261 = vunpack.c.l.s4 1983009808
        %v1262 = vunpack.c.0.s8 %v1261
        %v1263 = vlaneseq
        %v1264 = vshrl.u32 %v1263, 7
        %v1265 = vsub.s32 %v1262, %v1264
        %v1266 = vrot.slane %v859, %v1265
        %v1268 = vunpack.c.l.s4 1983009808
        %v1269 = vunpack.c.0.s8 %v1268
        %v1270 = vlaneseq
        %v1271 = vshrl.u32 %v1270, 7
        %v1272 = vsub.s32 %v1269, %v1271
        %v1273 = vrot.slane %v1259, %v1272
        %v1274 = vcombine.high %v1266, %v1266
        %v1275 = vcombine.high %v1273, %v1273
        %v1276 = vcombine.high %v860, %v860
        %v1278 = vunpack.c.l.s4 1983009808
        %v1279 = vunpack.c.0.s8 %v1278
        %v1280 = vlaneseq
        %v1281 = vshrl.u32 %v1280, 7
        %v1282 = vsub.s32 %v1279, %v1281
        %v1283 = vrot.slane %v860, %v1282
        %v1285 = vunpack.c.l.s4 1983009808
        %v1286 = vunpack.c.0.s8 %v1285
        %v1287 = vlaneseq
        %v1288 = vshrl.u32 %v1287, 7
        %v1289 = vsub.s32 %v1286, %v1288
        %v1290 = vrot.slane %v1276, %v1289
        %v1291 = vcombine.high %v1283, %v1283
        %v1292 = vcombine.high %v1290, %v1290
        %v1293 = vcombine.high %v861, %v861
        %v1295 = vunpack.c.l.s4 1983009808
        %v1296 = vunpack.c.0.s8 %v1295
        %v1297 = vlaneseq
        %v1298 = vshrl.u32 %v1297, 7
        %v1299 = vsub.s32 %v1296, %v1298
        %v1300 = vrot.slane %v861, %v1299
        %v1302 = vunpack.c.l.s4 1983009808
        %v1303 = vunpack.c.0.s8 %v1302
        %v1304 = vlaneseq
        %v1305 = vshrl.u32 %v1304, 7
        %v1306 = vsub.s32 %v1303, %v1305
        %v1307 = vrot.slane %v1293, %v1306
        %v1308 = vcombine.high %v1300, %v1300
        %v1309 = vcombine.high %v1307, %v1307
        %v1310 = vcombine.high %v862, %v862
        %v1312 = vunpack.c.l.s4 1983009808
        %v1313 = vunpack.c.0.s8 %v1312
        %v1314 = vlaneseq
        %v1315 = vshrl.u32 %v1314, 7
        %v1316 = vsub.s32 %v1313, %v1315
        %v1317 = vrot.slane %v862, %v1316
        %v1319 = vunpack.c.l.s4 1983009808
        %v1320 = vunpack.c.0.s8 %v1319
        %v1321 = vlaneseq
        %v1322 = vshrl.u32 %v1321, 7
        %v1323 = vsub.s32 %v1320, %v1322
        %v1324 = vrot.slane %v1310, %v1323
        %v1325 = vcombine.high %v1317, %v1317
        %v1326 = vcombine.high %v1324, %v1324
        %v1327 = vcombine.high %v863, %v863
        %v1329 = vunpack.c.l.s4 1983009808
        %v1330 = vunpack.c.0.s8 %v1329
        %v1331 = vlaneseq
        %v1332 = vshrl.u32 %v1331, 7
        %v1333 = vsub.s32 %v1330, %v1332
        %v1334 = vrot.slane %v863, %v1333
        %v1336 = vunpack.c.l.s4 1983009808
        %v1337 = vunpack.c.0.s8 %v1336
        %v1338 = vlaneseq
        %v1339 = vshrl.u32 %v1338, 7
        %v1340 = vsub.s32 %v1337, %v1339
        %v1341 = vrot.slane %v1327, %v1340
        %v1342 = vcombine.high %v1334, %v1334
        %v1343 = vcombine.high %v1341, %v1341
        %v1344 = vcombine.high %v864, %v864
        %v1346 = vunpack.c.l.s4 1983009808
        %v1347 = vunpack.c.0.s8 %v1346
        %v1348 = vlaneseq
        %v1349 = vshrl.u32 %v1348, 7
        %v1350 = vsub.s32 %v1347, %v1349
        %v1351 = vrot.slane %v864, %v1350
        %v1353 = vunpack.c.l.s4 1983009808
        %v1354 = vunpack.c.0.s8 %v1353
        %v1355 = vlaneseq
        %v1356 = vshrl.u32 %v1355, 7
        %v1357 = vsub.s32 %v1354, %v1356
        %v1358 = vrot.slane %v1344, %v1357
        %v1359 = vcombine.high %v1351, %v1351
        %v1360 = vcombine.high %v1358, %v1358
        %v1361 = vcombine.high %v865, %v865
        %v1363 = vunpack.c.l.s4 1983009808
        %v1364 = vunpack.c.0.s8 %v1363
        %v1365 = vlaneseq
        %v1366 = vshrl.u32 %v1365, 7
        %v1367 = vsub.s32 %v1364, %v1366
        %v1368 = vrot.slane %v865, %v1367
        %v1370 = vunpack.c.l.s4 1983009808
        %v1371 = vunpack.c.0.s8 %v1370
        %v1372 = vlaneseq
        %v1373 = vshrl.u32 %v1372, 7
        %v1374 = vsub.s32 %v1371, %v1373
        %v1375 = vrot.slane %v1361, %v1374
        %v1376 = vcombine.high %v1368, %v1368
        %v1377 = vcombine.high %v1375, %v1375
        %v1378 = vcombine.high %v866, %v866
        %v1380 = vunpack.c.l.s4 1983009808
        %v1381 = vunpack.c.0.s8 %v1380
        %v1382 = vlaneseq
        %v1383 = vshrl.u32 %v1382, 7
        %v1384 = vsub.s32 %v1381, %v1383
        %v1385 = vrot.slane %v866, %v1384
        %v1387 = vunpack.c.l.s4 1983009808
        %v1388 = vunpack.c.0.s8 %v1387
        %v1389 = vlaneseq
        %v1390 = vshrl.u32 %v1389, 7
        %v1391 = vsub.s32 %v1388, %v1390
        %v1392 = vrot.slane %v1378, %v1391
        %v1393 = vcombine.high %v1385, %v1385
        %v1394 = vcombine.high %v1392, %v1392
        %v1395 = vcombine.high %v867, %v867
        %v1397 = vunpack.c.l.s4 1983009808
        %v1398 = vunpack.c.0.s8 %v1397
        %v1399 = vlaneseq
        %v1400 = vshrl.u32 %v1399, 7
        %v1401 = vsub.s32 %v1398, %v1400
        %v1402 = vrot.slane %v867, %v1401
        %v1404 = vunpack.c.l.s4 1983009808
        %v1405 = vunpack.c.0.s8 %v1404
        %v1406 = vlaneseq
        %v1407 = vshrl.u32 %v1406, 7
        %v1408 = vsub.s32 %v1405, %v1407
        %v1409 = vrot.slane %v1395, %v1408
        %v1410 = vcombine.high %v1402, %v1402
        %v1411 = vcombine.high %v1409, %v1409
        %v1412 = vcombine.high %v868, %v868
        %v1414 = vunpack.c.l.s4 1983009808
        %v1415 = vunpack.c.0.s8 %v1414
        %v1416 = vlaneseq
        %v1417 = vshrl.u32 %v1416, 7
        %v1418 = vsub.s32 %v1415, %v1417
        %v1419 = vrot.slane %v868, %v1418
        %v1421 = vunpack.c.l.s4 1983009808
        %v1422 = vunpack.c.0.s8 %v1421
        %v1423 = vlaneseq
        %v1424 = vshrl.u32 %v1423, 7
        %v1425 = vsub.s32 %v1422, %v1424
        %v1426 = vrot.slane %v1412, %v1425
        %v1427 = vcombine.high %v1419, %v1419
        %v1428 = vcombine.high %v1426, %v1426
        %v1429 = vcombine.high %v869, %v869
        %v1431 = vunpack.c.l.s4 1983009808
        %v1432 = vunpack.c.0.s8 %v1431
        %v1433 = vlaneseq
        %v1434 = vshrl.u32 %v1433, 7
        %v1435 = vsub.s32 %v1432, %v1434
        %v1436 = vrot.slane %v869, %v1435
        %v1438 = vunpack.c.l.s4 1983009808
        %v1439 = vunpack.c.0.s8 %v1438
        %v1440 = vlaneseq
        %v1441 = vshrl.u32 %v1440, 7
        %v1442 = vsub.s32 %v1439, %v1441
        %v1443 = vrot.slane %v1429, %v1442
        %v1444 = vcombine.high %v1436, %v1436
        %v1445 = vcombine.high %v1443, %v1443
        %v1574 = vrot.slane %v909, 7
        %v1575 = vrot.slane %v1574, 2
        %v1576 = vrot.slane %v917, 7
        %v1577 = vrot.slane %v1576, 2
        %v1578 = vrot.slane %v916, 7
        %v1579 = vrot.slane %v1578, 2
        %v1580 = vrot.slane %v918, 7
        %v1581 = vrot.slane %v1580, 2
        %v1582 = vrot.slane %v926, 7
        %v1583 = vrot.slane %v1582, 2
        %v1584 = vrot.slane %v934, 7
        %v1585 = vrot.slane %v1584, 2
        %v1586 = vrot.slane %v933, 7
        %v1587 = vrot.slane %v1586, 2
        %v1588 = vrot.slane %v935, 7
        %v1589 = vrot.slane %v1588, 2
        %v1590 = vrot.slane %v943, 7
        %v1591 = vrot.slane %v1590, 2
        %v1592 = vrot.slane %v951, 7
        %v1593 = vrot.slane %v1592, 2
        %v1594 = vrot.slane %v950, 7
        %v1595 = vrot.slane %v1594, 2
        %v1596 = vrot.slane %v952, 7
        %v1597 = vrot.slane %v1596, 2
        %v1598 = vrot.slane %v960, 7
        %v1599 = vrot.slane %v1598, 2
        %v1600 = vrot.slane %v968, 7
        %v1601 = vrot.slane %v1600, 2
        %v1602 = vrot.slane %v967, 7
        %v1603 = vrot.slane %v1602, 2
        %v1604 = vrot.slane %v969, 7
        %v1605 = vrot.slane %v1604, 2
        %v1606 = vrot.slane %v977, 7
        %v1607 = vrot.slane %v1606, 2
        %v1608 = vrot.slane %v985, 7
        %v1609 = vrot.slane %v1608, 2
        %v1610 = vrot.slane %v984, 7
        %v1611 = vrot.slane %v1610, 2
        %v1612 = vrot.slane %v986, 7
        %v1613 = vrot.slane %v1612, 2
        %v1614 = vrot.slane %v994, 7
        %v1615 = vrot.slane %v1614, 2
        %v1616 = vrot.slane %v1002, 7
        %v1617 = vrot.slane %v1616, 2
        %v1618 = vrot.slane %v1001, 7
        %v1619 = vrot.slane %v1618, 2
        %v1620 = vrot.slane %v1003, 7
        %v1621 = vrot.slane %v1620, 2
        %v1622 = vrot.slane %v1011, 7
        %v1623 = vrot.slane %v1622, 2
        %v1624 = vrot.slane %v1019, 7
        %v1625 = vrot.slane %v1624, 2
        %v1626 = vrot.slane %v1018, 7
        %v1627 = vrot.slane %v1626, 2
        %v1628 = vrot.slane %v1020, 7
        %v1629 = vrot.slane %v1628, 2
        %v1630 = vrot.slane %v1028, 7
        %v1631 = vrot.slane %v1630, 2
        %v1632 = vrot.slane %v1036, 7
        %v1633 = vrot.slane %v1632, 2
        %v1634 = vrot.slane %v1035, 7
        %v1635 = vrot.slane %v1634, 2
        %v1636 = vrot.slane %v1037, 7
        %v1637 = vrot.slane %v1636, 2
        %v1638 = vrot.slane %v1045, 7
        %v1639 = vrot.slane %v1638, 2
        %v1640 = vrot.slane %v1053, 7
        %v1641 = vrot.slane %v1640, 2
        %v1642 = vrot.slane %v1052, 7
        %v1643 = vrot.slane %v1642, 2
        %v1644 = vrot.slane %v1054, 7
        %v1645 = vrot.slane %v1644, 2
        %v1646 = vrot.slane %v1062, 7
        %v1647 = vrot.slane %v1646, 2
        %v1648 = vrot.slane %v1070, 7
        %v1649 = vrot.slane %v1648, 2
        %v1650 = vrot.slane %v1069, 7
        %v1651 = vrot.slane %v1650, 2
        %v1652 = vrot.slane %v1071, 7
        %v1653 = vrot.slane %v1652, 2
        %v1654 = vrot.slane %v1079, 7
        %v1655 = vrot.slane %v1654, 2
        %v1656 = vrot.slane %v1087, 7
        %v1657 = vrot.slane %v1656, 2
        %v1658 = vrot.slane %v1086, 7
        %v1659 = vrot.slane %v1658, 2
        %v1660 = vrot.slane %v1088, 7
        %v1661 = vrot.slane %v1660, 2
        %v1662 = vrot.slane %v1096, 7
        %v1663 = vrot.slane %v1662, 2
        %v1664 = vrot.slane %v1104, 7
        %v1665 = vrot.slane %v1664, 2
        %v1666 = vrot.slane %v1103, 7
        %v1667 = vrot.slane %v1666, 2
        %v1668 = vrot.slane %v1105, 7
        %v1669 = vrot.slane %v1668, 2
        %v1670 = vrot.slane %v1113, 7
        %v1671 = vrot.slane %v1670, 2
        %v1672 = vrot.slane %v1121, 7
        %v1673 = vrot.slane %v1672, 2
        %v1674 = vrot.slane %v1120, 7
        %v1675 = vrot.slane %v1674, 2
        %v1676 = vrot.slane %v1122, 7
        %v1677 = vrot.slane %v1676, 2
        %v1678 = vrot.slane %v1130, 7
        %v1679 = vrot.slane %v1678, 2
        %v1680 = vrot.slane %v1138, 7
        %v1681 = vrot.slane %v1680, 2
        %v1682 = vrot.slane %v1137, 7
        %v1683 = vrot.slane %v1682, 2
        %v1684 = vrot.slane %v1139, 7
        %v1685 = vrot.slane %v1684, 2
        %v1686 = vrot.slane %v1147, 7
        %v1687 = vrot.slane %v1686, 2
        %v1688 = vrot.slane %v1155, 7
        %v1689 = vrot.slane %v1688, 2
        %v1690 = vrot.slane %v1154, 7
        %v1691 = vrot.slane %v1690, 2
        %v1692 = vrot.slane %v1156, 7
        %v1693 = vrot.slane %v1692, 2
        %v1694 = vrot.slane %v1164, 7
        %v1695 = vrot.slane %v1694, 2
        %v1696 = vrot.slane %v1172, 7
        %v1697 = vrot.slane %v1696, 2
        %v1698 = vrot.slane %v1171, 7
        %v1699 = vrot.slane %v1698, 2
        %v1700 = vrot.slane %v1173, 7
        %v1701 = vrot.slane %v1700, 2
        %v1702 = vrot.slane %v1181, 7
        %v1703 = vrot.slane %v1702, 2
        %v1704 = vrot.slane %v1189, 7
        %v1705 = vrot.slane %v1704, 2
        %v1706 = vrot.slane %v1188, 7
        %v1707 = vrot.slane %v1706, 2
        %v1708 = vrot.slane %v1190, 7
        %v1709 = vrot.slane %v1708, 2
        %v1710 = vrot.slane %v1198, 7
        %v1711 = vrot.slane %v1710, 2
        %v1712 = vrot.slane %v1206, 7
        %v1713 = vrot.slane %v1712, 2
        %v1714 = vrot.slane %v1205, 7
        %v1715 = vrot.slane %v1714, 2
        %v1716 = vrot.slane %v1207, 7
        %v1717 = vrot.slane %v1716, 2
        %v1718 = vrot.slane %v1215, 7
        %v1719 = vrot.slane %v1718, 2
        %v1720 = vrot.slane %v1223, 7
        %v1721 = vrot.slane %v1720, 2
        %v1722 = vrot.slane %v1222, 7
        %v1723 = vrot.slane %v1722, 2
        %v1724 = vrot.slane %v1224, 7
        %v1725 = vrot.slane %v1724, 2
        %v1726 = vrot.slane %v1232, 7
        %v1727 = vrot.slane %v1726, 2
        %v1728 = vrot.slane %v1240, 7
        %v1729 = vrot.slane %v1728, 2
        %v1730 = vrot.slane %v1239, 7
        %v1731 = vrot.slane %v1730, 2
        %v1732 = vrot.slane %v1241, 7
        %v1733 = vrot.slane %v1732, 2
        %v1734 = vrot.slane %v1249, 7
        %v1735 = vrot.slane %v1734, 2
        %v1736 = vrot.slane %v1257, 7
        %v1737 = vrot.slane %v1736, 2
        %v1738 = vrot.slane %v1256, 7
        %v1739 = vrot.slane %v1738, 2
        %v1740 = vrot.slane %v1258, 7
        %v1741 = vrot.slane %v1740, 2
        %v1742 = vrot.slane %v1266, 7
        %v1743 = vrot.slane %v1742, 2
        %v1744 = vrot.slane %v1274, 7
        %v1745 = vrot.slane %v1744, 2
        %v1746 = vrot.slane %v1273, 7
        %v1747 = vrot.slane %v1746, 2
        %v1748 = vrot.slane %v1275, 7
        %v1749 = vrot.slane %v1748, 2
        %v1750 = vrot.slane %v1283, 7
        %v1751 = vrot.slane %v1750, 2
        %v1752 = vrot.slane %v1291, 7
        %v1753 = vrot.slane %v1752, 2
        %v1754 = vrot.slane %v1290, 7
        %v1755 = vrot.slane %v1754, 2
        %v1756 = vrot.slane %v1292, 7
        %v1757 = vrot.slane %v1756, 2
        %v1758 = vrot.slane %v1300, 7
        %v1759 = vrot.slane %v1758, 2
        %v1760 = vrot.slane %v1308, 7
        %v1761 = vrot.slane %v1760, 2
        %v1762 = vrot.slane %v1307, 7
        %v1763 = vrot.slane %v1762, 2
        %v1764 = vrot.slane %v1309, 7
        %v1765 = vrot.slane %v1764, 2
        %v1766 = vrot.slane %v1317, 7
        %v1767 = vrot.slane %v1766, 2
        %v1768 = vrot.slane %v1325, 7
        %v1769 = vrot.slane %v1768, 2
        %v1770 = vrot.slane %v1324, 7
        %v1771 = vrot.slane %v1770, 2
        %v1772 = vrot.slane %v1326, 7
        %v1773 = vrot.slane %v1772, 2
        %v1774 = vrot.slane %v1334, 7
        %v1775 = vrot.slane %v1774, 2
        %v1776 = vrot.slane %v1342, 7
        %v1777 = vrot.slane %v1776, 2
        %v1778 = vrot.slane %v1341, 7
        %v1779 = vrot.slane %v1778, 2
        %v1780 = vrot.slane %v1343, 7
        %v1781 = vrot.slane %v1780, 2
        %v1782 = vrot.slane %v1351, 7
        %v1783 = vrot.slane %v1782, 2
        %v1784 = vrot.slane %v1359, 7
        %v1785 = vrot.slane %v1784, 2
        %v1786 = vrot.slane %v1358, 7
        %v1787 = vrot.slane %v1786, 2
        %v1788 = vrot.slane %v1360, 7
        %v1789 = vrot.slane %v1788, 2
        %v1790 = vrot.slane %v1368, 7
        %v1791 = vrot.slane %v1790, 2
        %v1792 = vrot.slane %v1376, 7
        %v1793 = vrot.slane %v1792, 2
        %v1794 = vrot.slane %v1375, 7
        %v1795 = vrot.slane %v1794, 2
        %v1796 = vrot.slane %v1377, 7
        %v1797 = vrot.slane %v1796, 2
        %v1798 = vrot.slane %v1385, 7
        %v1799 = vrot.slane %v1798, 2
        %v1800 = vrot.slane %v1393, 7
        %v1801 = vrot.slane %v1800, 2
        %v1802 = vrot.slane %v1392, 7
        %v1803 = vrot.slane %v1802, 2
        %v1804 = vrot.slane %v1394, 7
        %v1805 = vrot.slane %v1804, 2
        %v1806 = vrot.slane %v1402, 7
        %v1807 = vrot.slane %v1806, 2
        %v1808 = vrot.slane %v1410, 7
        %v1809 = vrot.slane %v1808, 2
        %v1810 = vrot.slane %v1409, 7
        %v1811 = vrot.slane %v1810, 2
        %v1812 = vrot.slane %v1411, 7
        %v1813 = vrot.slane %v1812, 2
        %v1814 = vrot.slane %v1419, 7
        %v1815 = vrot.slane %v1814, 2
        %v1816 = vrot.slane %v1427, 7
        %v1817 = vrot.slane %v1816, 2
        %v1818 = vrot.slane %v1426, 7
        %v1819 = vrot.slane %v1818, 2
        %v1820 = vrot.slane %v1428, 7
        %v1821 = vrot.slane %v1820, 2
        %v1822 = vrot.slane %v1436, 7
        %v1823 = vrot.slane %v1822, 2
        %v1824 = vrot.slane %v1444, 7
        %v1825 = vrot.slane %v1824, 2
        %v1826 = vrot.slane %v1443, 7
        %v1827 = vrot.slane %v1826, 2
        %v1828 = vrot.slane %v1445, 7
        %v1829 = vrot.slane %v1828, 2
        %v1958 = vmax.f32 %v909, %v1575
        %v1959 = vmax.f32 %v917, %v1577
        %v1960 = vmax.f32 %v916, %v1579
        %v1961 = vmax.f32 %v918, %v1581
        %v1962 = vmax.f32 %v926, %v1583
        %v1963 = vmax.f32 %v934, %v1585
        %v1964 = vmax.f32 %v933, %v1587
        %v1965 = vmax.f32 %v935, %v1589
        %v1966 = vmax.f32 %v943, %v1591
        %v1967 = vmax.f32 %v951, %v1593
        %v1968 = vmax.f32 %v950, %v1595
        %v1969 = vmax.f32 %v952, %v1597
        %v1970 = vmax.f32 %v960, %v1599
        %v1971 = vmax.f32 %v968, %v1601
        %v1972 = vmax.f32 %v967, %v1603
        %v1973 = vmax.f32 %v969, %v1605
        %v1974 = vmax.f32 %v977, %v1607
        %v1975 = vmax.f32 %v985, %v1609
        %v1976 = vmax.f32 %v984, %v1611
        %v1977 = vmax.f32 %v986, %v1613
        %v1978 = vmax.f32 %v994, %v1615
        %v1979 = vmax.f32 %v1002, %v1617
        %v1980 = vmax.f32 %v1001, %v1619
        %v1981 = vmax.f32 %v1003, %v1621
        %v1982 = vmax.f32 %v1011, %v1623
        %v1983 = vmax.f32 %v1019, %v1625
        %v1984 = vmax.f32 %v1018, %v1627
        %v1985 = vmax.f32 %v1020, %v1629
        %v1986 = vmax.f32 %v1028, %v1631
        %v1987 = vmax.f32 %v1036, %v1633
        %v1988 = vmax.f32 %v1035, %v1635
        %v1989 = vmax.f32 %v1037, %v1637
        %v1990 = vmax.f32 %v1045, %v1639
        %v1991 = vmax.f32 %v1053, %v1641
        %v1992 = vmax.f32 %v1052, %v1643
        %v1993 = vmax.f32 %v1054, %v1645
        %v1994 = vmax.f32 %v1062, %v1647
        %v1995 = vmax.f32 %v1070, %v1649
        %v1996 = vmax.f32 %v1069, %v1651
        %v1997 = vmax.f32 %v1071, %v1653
        %v1998 = vmax.f32 %v1079, %v1655
        %v1999 = vmax.f32 %v1087, %v1657
        %v2000 = vmax.f32 %v1086, %v1659
        %v2001 = vmax.f32 %v1088, %v1661
        %v2002 = vmax.f32 %v1096, %v1663
        %v2003 = vmax.f32 %v1104, %v1665
        %v2004 = vmax.f32 %v1103, %v1667
        %v2005 = vmax.f32 %v1105, %v1669
        %v2006 = vmax.f32 %v1113, %v1671
        %v2007 = vmax.f32 %v1121, %v1673
        %v2008 = vmax.f32 %v1120, %v1675
        %v2009 = vmax.f32 %v1122, %v1677
        %v2010 = vmax.f32 %v1130, %v1679
        %v2011 = vmax.f32 %v1138, %v1681
        %v2012 = vmax.f32 %v1137, %v1683
        %v2013 = vmax.f32 %v1139, %v1685
        %v2014 = vmax.f32 %v1147, %v1687
        %v2015 = vmax.f32 %v1155, %v1689
        %v2016 = vmax.f32 %v1154, %v1691
        %v2017 = vmax.f32 %v1156, %v1693
        %v2018 = vmax.f32 %v1164, %v1695
        %v2019 = vmax.f32 %v1172, %v1697
        %v2020 = vmax.f32 %v1171, %v1699
        %v2021 = vmax.f32 %v1173, %v1701
        %v2022 = vmax.f32 %v1181, %v1703
        %v2023 = vmax.f32 %v1189, %v1705
        %v2024 = vmax.f32 %v1188, %v1707
        %v2025 = vmax.f32 %v1190, %v1709
        %v2026 = vmax.f32 %v1198, %v1711
        %v2027 = vmax.f32 %v1206, %v1713
        %v2028 = vmax.f32 %v1205, %v1715
        %v2029 = vmax.f32 %v1207, %v1717
        %v2030 = vmax.f32 %v1215, %v1719
        %v2031 = vmax.f32 %v1223, %v1721
        %v2032 = vmax.f32 %v1222, %v1723
        %v2033 = vmax.f32 %v1224, %v1725
        %v2034 = vmax.f32 %v1232, %v1727
        %v2035 = vmax.f32 %v1240, %v1729
        %v2036 = vmax.f32 %v1239, %v1731
        %v2037 = vmax.f32 %v1241, %v1733
        %v2038 = vmax.f32 %v1249, %v1735
        %v2039 = vmax.f32 %v1257, %v1737
        %v2040 = vmax.f32 %v1256, %v1739
        %v2041 = vmax.f32 %v1258, %v1741
        %v2042 = vmax.f32 %v1266, %v1743
        %v2043 = vmax.f32 %v1274, %v1745
        %v2044 = vmax.f32 %v1273, %v1747
        %v2045 = vmax.f32 %v1275, %v1749
        %v2046 = vmax.f32 %v1283, %v1751
        %v2047 = vmax.f32 %v1291, %v1753
        %v2048 = vmax.f32 %v1290, %v1755
        %v2049 = vmax.f32 %v1292, %v1757
        %v2050 = vmax.f32 %v1300, %v1759
        %v2051 = vmax.f32 %v1308, %v1761
        %v2052 = vmax.f32 %v1307, %v1763
        %v2053 = vmax.f32 %v1309, %v1765
        %v2054 = vmax.f32 %v1317, %v1767
        %v2055 = vmax.f32 %v1325, %v1769
        %v2056 = vmax.f32 %v1324, %v1771
        %v2057 = vmax.f32 %v1326, %v1773
        %v2058 = vmax.f32 %v1334, %v1775
        %v2059 = vmax.f32 %v1342, %v1777
        %v2060 = vmax.f32 %v1341, %v1779
        %v2061 = vmax.f32 %v1343, %v1781
        %v2062 = vmax.f32 %v1351, %v1783
        %v2063 = vmax.f32 %v1359, %v1785
        %v2064 = vmax.f32 %v1358, %v1787
        %v2065 = vmax.f32 %v1360, %v1789
        %v2066 = vmax.f32 %v1368, %v1791
        %v2067 = vmax.f32 %v1376, %v1793
        %v2068 = vmax.f32 %v1375, %v1795
        %v2069 = vmax.f32 %v1377, %v1797
        %v2070 = vmax.f32 %v1385, %v1799
        %v2071 = vmax.f32 %v1393, %v1801
        %v2072 = vmax.f32 %v1392, %v1803
        %v2073 = vmax.f32 %v1394, %v1805
        %v2074 = vmax.f32 %v1402, %v1807
        %v2075 = vmax.f32 %v1410, %v1809
        %v2076 = vmax.f32 %v1409, %v1811
        %v2077 = vmax.f32 %v1411, %v1813
        %v2078 = vmax.f32 %v1419, %v1815
        %v2079 = vmax.f32 %v1427, %v1817
        %v2080 = vmax.f32 %v1426, %v1819
        %v2081 = vmax.f32 %v1428, %v1821
        %v2082 = vmax.f32 %v1436, %v1823
        %v2083 = vmax.f32 %v1444, %v1825
        %v2084 = vmax.f32 %v1443, %v1827
        %v2085 = vmax.f32 %v1445, %v1829
        %v2086 = vmax.f32 %v1958, %v1966
        %v2087 = vmax.f32 %v1959, %v1967
        %v2088 = vmax.f32 %v1960, %v1968
        %v2089 = vmax.f32 %v1961, %v1969
        %v2090 = vmax.f32 %v1962, %v1970
        %v2091 = vmax.f32 %v1963, %v1971
        %v2092 = vmax.f32 %v1964, %v1972
        %v2093 = vmax.f32 %v1965, %v1973
        %v2094 = vmax.f32 %v1974, %v1982
        %v2095 = vmax.f32 %v1975, %v1983
        %v2096 = vmax.f32 %v1976, %v1984
        %v2097 = vmax.f32 %v1977, %v1985
        %v2098 = vmax.f32 %v1978, %v1986
        %v2099 = vmax.f32 %v1979, %v1987
        %v2100 = vmax.f32 %v1980, %v1988
        %v2101 = vmax.f32 %v1981, %v1989
        %v2102 = vmax.f32 %v1990, %v1998
        %v2103 = vmax.f32 %v1991, %v1999
        %v2104 = vmax.f32 %v1992, %v2000
        %v2105 = vmax.f32 %v1993, %v2001
        %v2106 = vmax.f32 %v1994, %v2002
        %v2107 = vmax.f32 %v1995, %v2003
        %v2108 = vmax.f32 %v1996, %v2004
        %v2109 = vmax.f32 %v1997, %v2005
        %v2110 = vmax.f32 %v2006, %v2014
        %v2111 = vmax.f32 %v2007, %v2015
        %v2112 = vmax.f32 %v2008, %v2016
        %v2113 = vmax.f32 %v2009, %v2017
        %v2114 = vmax.f32 %v2010, %v2018
        %v2115 = vmax.f32 %v2011, %v2019
        %v2116 = vmax.f32 %v2012, %v2020
        %v2117 = vmax.f32 %v2013, %v2021
        %v2118 = vmax.f32 %v2022, %v2030
        %v2119 = vmax.f32 %v2023, %v2031
        %v2120 = vmax.f32 %v2024, %v2032
        %v2121 = vmax.f32 %v2025, %v2033
        %v2122 = vmax.f32 %v2026, %v2034
        %v2123 = vmax.f32 %v2027, %v2035
        %v2124 = vmax.f32 %v2028, %v2036
        %v2125 = vmax.f32 %v2029, %v2037
        %v2126 = vmax.f32 %v2038, %v2046
        %v2127 = vmax.f32 %v2039, %v2047
        %v2128 = vmax.f32 %v2040, %v2048
        %v2129 = vmax.f32 %v2041, %v2049
        %v2130 = vmax.f32 %v2042, %v2050
        %v2131 = vmax.f32 %v2043, %v2051
        %v2132 = vmax.f32 %v2044, %v2052
        %v2133 = vmax.f32 %v2045, %v2053
        %v2134 = vmax.f32 %v2054, %v2062
        %v2135 = vmax.f32 %v2055, %v2063
        %v2136 = vmax.f32 %v2056, %v2064
        %v2137 = vmax.f32 %v2057, %v2065
        %v2138 = vmax.f32 %v2058, %v2066
        %v2139 = vmax.f32 %v2059, %v2067
        %v2140 = vmax.f32 %v2060, %v2068
        %v2141 = vmax.f32 %v2061, %v2069
        %v2142 = vmax.f32 %v2070, %v2078
        %v2143 = vmax.f32 %v2071, %v2079
        %v2144 = vmax.f32 %v2072, %v2080
        %v2145 = vmax.f32 %v2073, %v2081
        %v2146 = vmax.f32 %v2074, %v2082
        %v2147 = vmax.f32 %v2075, %v2083
        %v2148 = vmax.f32 %v2076, %v2084
        %v2149 = vmax.f32 %v2077, %v2085
        %v2150 = vpack.c.bf16 %v2086, %v2086
        %v2151 = vpack.c.bf16 %v2087, %v2087
        %v2152 = vpack.c.bf16 %v2088, %v2088
        %v2153 = vpack.c.bf16 %v2089, %v2089
        %v2154 = vpack.c.bf16 %v2090, %v2090
        %v2155 = vpack.c.bf16 %v2091, %v2091
        %v2156 = vpack.c.bf16 %v2092, %v2092
        %v2157 = vpack.c.bf16 %v2093, %v2093
        %v2158 = vpack.c.bf16 %v2094, %v2094
        %v2159 = vpack.c.bf16 %v2095, %v2095
        %v2160 = vpack.c.bf16 %v2096, %v2096
        %v2161 = vpack.c.bf16 %v2097, %v2097
        %v2162 = vpack.c.bf16 %v2098, %v2098
        %v2163 = vpack.c.bf16 %v2099, %v2099
        %v2164 = vpack.c.bf16 %v2100, %v2100
        %v2165 = vpack.c.bf16 %v2101, %v2101
        %v2166 = vpack.c.bf16 %v2102, %v2102
        %v2167 = vpack.c.bf16 %v2103, %v2103
        %v2168 = vpack.c.bf16 %v2104, %v2104
        %v2169 = vpack.c.bf16 %v2105, %v2105
        %v2170 = vpack.c.bf16 %v2106, %v2106
        %v2171 = vpack.c.bf16 %v2107, %v2107
        %v2172 = vpack.c.bf16 %v2108, %v2108
        %v2173 = vpack.c.bf16 %v2109, %v2109
        %v2174 = vpack.c.bf16 %v2110, %v2110
        %v2175 = vpack.c.bf16 %v2111, %v2111
        %v2176 = vpack.c.bf16 %v2112, %v2112
        %v2177 = vpack.c.bf16 %v2113, %v2113
        %v2178 = vpack.c.bf16 %v2114, %v2114
        %v2179 = vpack.c.bf16 %v2115, %v2115
        %v2180 = vpack.c.bf16 %v2116, %v2116
        %v2181 = vpack.c.bf16 %v2117, %v2117
        %v2182 = vpack.c.bf16 %v2118, %v2118
        %v2183 = vpack.c.bf16 %v2119, %v2119
        %v2184 = vpack.c.bf16 %v2120, %v2120
        %v2185 = vpack.c.bf16 %v2121, %v2121
        %v2186 = vpack.c.bf16 %v2122, %v2122
        %v2187 = vpack.c.bf16 %v2123, %v2123
        %v2188 = vpack.c.bf16 %v2124, %v2124
        %v2189 = vpack.c.bf16 %v2125, %v2125
        %v2190 = vpack.c.bf16 %v2126, %v2126
        %v2191 = vpack.c.bf16 %v2127, %v2127
        %v2192 = vpack.c.bf16 %v2128, %v2128
        %v2193 = vpack.c.bf16 %v2129, %v2129
        %v2194 = vpack.c.bf16 %v2130, %v2130
        %v2195 = vpack.c.bf16 %v2131, %v2131
        %v2196 = vpack.c.bf16 %v2132, %v2132
        %v2197 = vpack.c.bf16 %v2133, %v2133
        %v2198 = vpack.c.bf16 %v2134, %v2134
        %v2199 = vpack.c.bf16 %v2135, %v2135
        %v2200 = vpack.c.bf16 %v2136, %v2136
        %v2201 = vpack.c.bf16 %v2137, %v2137
        %v2202 = vpack.c.bf16 %v2138, %v2138
        %v2203 = vpack.c.bf16 %v2139, %v2139
        %v2204 = vpack.c.bf16 %v2140, %v2140
        %v2205 = vpack.c.bf16 %v2141, %v2141
        %v2206 = vpack.c.bf16 %v2142, %v2142
        %v2207 = vpack.c.bf16 %v2143, %v2143
        %v2208 = vpack.c.bf16 %v2144, %v2144
        %v2209 = vpack.c.bf16 %v2145, %v2145
        %v2210 = vpack.c.bf16 %v2146, %v2146
        %v2211 = vpack.c.bf16 %v2147, %v2147
        %v2212 = vpack.c.bf16 %v2148, %v2148
        %v2213 = vpack.c.bf16 %v2149, %v2149
        %vm2214 = vcmask 257024
        %2215 = vst.msk [vmem:[#allocation2] sm:$0xf] %vm2214, 0
        %vm2216 = vcmask 253952
        %2217 = vst.msk [vmem:[#allocation2 + $0x4] sm:$0x1] %vm2216, 0
        %s2218 = scalar_lea.vmem [#allocation2], 72
        %2219 = vst.msk [vmem:[%s2218] sm:$0xf] %vm2214, 0
        %2220 = vst.msk [vmem:[%s2218 + $0x4] sm:$0x1] %vm2216, 0
        %s2221 = scalar_lea.vmem [#allocation2], 8
        %vm2222 = vcmask 253952
        %vm2223 = vsmask.f32 256
        %vm2224 = vmand %vm2222, %vm2223
        %v2225 = vld [vmem:[%s2221] sm:$0x1]
        %v2226 = vsel %vm2224, 0, %v2225
        %2227 = vst [vmem:[%s2221] sm:$0x1] %v2226
        %v2228 = vld [vmem:[%s2221 + $0x8] sm:$0x1]
        %v2229 = vsel %vm2224, 0, %v2228
        %2230 = vst [vmem:[%s2221 + $0x8] sm:$0x1] %v2229
        %v2231 = vld [vmem:[%s2221 + $0x10] sm:$0x1]
        %v2232 = vsel %vm2224, 0, %v2231
        %2233 = vst [vmem:[%s2221 + $0x10] sm:$0x1] %v2232
        %v2234 = vld [vmem:[%s2221 + $0x18] sm:$0x1]
        %v2235 = vsel %vm2224, 0, %v2234
        %2236 = vst [vmem:[%s2221 + $0x18] sm:$0x1] %v2235
        %v2237 = vld [vmem:[%s2221 + $0x20] sm:$0x1]
        %v2238 = vsel %vm2224, 0, %v2237
        %2239 = vst [vmem:[%s2221 + $0x20] sm:$0x1] %v2238
        %v2240 = vld [vmem:[%s2221 + $0x28] sm:$0x1]
        %v2241 = vsel %vm2224, 0, %v2240
        %2242 = vst [vmem:[%s2221 + $0x28] sm:$0x1] %v2241
        %v2243 = vld [vmem:[%s2221 + $0x30] sm:$0x1]
        %v2244 = vsel %vm2224, 0, %v2243
        %2245 = vst [vmem:[%s2221 + $0x30] sm:$0x1] %v2244
        %v2246 = vld [vmem:[%s2221 + $0x38] sm:$0x1]
        %v2247 = vsel %vm2224, 0, %v2246
        %2248 = vst [vmem:[%s2221 + $0x38] sm:$0x1] %v2247
        %vm2249 = vsmask.f32 7938
        %vm2250 = vmand %vm2222, %vm2249
        %v2251 = vld [vmem:[%s2221 + $0x4] sm:$0x1]
        %v2252 = vsel %vm2250, 0, %v2251
        %2253 = vst [vmem:[%s2221 + $0x4] sm:$0x1] %v2252
        %v2254 = vld [vmem:[%s2221 + $0xc] sm:$0x1]
        %v2255 = vsel %vm2250, 0, %v2254
        %2256 = vst [vmem:[%s2221 + $0xc] sm:$0x1] %v2255
        %v2257 = vld [vmem:[%s2221 + $0x14] sm:$0x1]
        %v2258 = vsel %vm2250, 0, %v2257
        %2259 = vst [vmem:[%s2221 + $0x14] sm:$0x1] %v2258
        %v2260 = vld [vmem:[%s2221 + $0x1c] sm:$0x1]
        %v2261 = vsel %vm2250, 0, %v2260
        %2262 = vst [vmem:[%s2221 + $0x1c] sm:$0x1] %v2261
        %v2263 = vld [vmem:[%s2221 + $0x24] sm:$0x1]
        %v2264 = vsel %vm2250, 0, %v2263
        %2265 = vst [vmem:[%s2221 + $0x24] sm:$0x1] %v2264
        %v2266 = vld [vmem:[%s2221 + $0x2c] sm:$0x1]
        %v2267 = vsel %vm2250, 0, %v2266
        %2268 = vst [vmem:[%s2221 + $0x2c] sm:$0x1] %v2267
        %v2269 = vld [vmem:[%s2221 + $0x34] sm:$0x1]
        %v2270 = vsel %vm2250, 0, %v2269
        %2271 = vst [vmem:[%s2221 + $0x34] sm:$0x1] %v2270
        %v2272 = vld [vmem:[%s2221 + $0x3c] sm:$0x1]
        %v2273 = vsel %vm2250, 0, %v2272
        %2274 = vst [vmem:[%s2221 + $0x3c] sm:$0x1] %v2273
        %v2339 = vunpack.c.l.b16 %v2150
        %v2340 = vunpack.c.l.b16 %v2151
        %v2341 = vunpack.c.l.b16 %v2152
        %v2342 = vunpack.c.l.b16 %v2153
        %v2343 = vunpack.c.l.b16 %v2154
        %v2344 = vunpack.c.l.b16 %v2155
        %v2345 = vunpack.c.l.b16 %v2156
        %v2346 = vunpack.c.l.b16 %v2157
        %v2347 = vunpack.c.l.b16 %v2158
        %v2348 = vunpack.c.l.b16 %v2159
        %v2349 = vunpack.c.l.b16 %v2160
        %v2350 = vunpack.c.l.b16 %v2161
        %v2351 = vunpack.c.l.b16 %v2162
        %v2352 = vunpack.c.l.b16 %v2163
        %v2353 = vunpack.c.l.b16 %v2164
        %v2354 = vunpack.c.l.b16 %v2165
        %v2355 = vunpack.c.l.b16 %v2166
        %v2356 = vunpack.c.l.b16 %v2167
        %v2357 = vunpack.c.l.b16 %v2168
        %v2358 = vunpack.c.l.b16 %v2169
        %v2359 = vunpack.c.l.b16 %v2170
        %v2360 = vunpack.c.l.b16 %v2171
        %v2361 = vunpack.c.l.b16 %v2172
        %v2362 = vunpack.c.l.b16 %v2173
        %v2363 = vunpack.c.l.b16 %v2174
        %v2364 = vunpack.c.l.b16 %v2175
        %v2365 = vunpack.c.l.b16 %v2176
        %v2366 = vunpack.c.l.b16 %v2177
        %v2367 = vunpack.c.l.b16 %v2178
        %v2368 = vunpack.c.l.b16 %v2179
        %v2369 = vunpack.c.l.b16 %v2180
        %v2370 = vunpack.c.l.b16 %v2181
        %v2371 = vunpack.c.l.b16 %v2182
        %v2372 = vunpack.c.l.b16 %v2183
        %v2373 = vunpack.c.l.b16 %v2184
        %v2374 = vunpack.c.l.b16 %v2185
        %v2375 = vunpack.c.l.b16 %v2186
        %v2376 = vunpack.c.l.b16 %v2187
        %v2377 = vunpack.c.l.b16 %v2188
        %v2378 = vunpack.c.l.b16 %v2189
        %v2379 = vunpack.c.l.b16 %v2190
        %v2380 = vunpack.c.l.b16 %v2191
        %v2381 = vunpack.c.l.b16 %v2192
        %v2382 = vunpack.c.l.b16 %v2193
        %v2383 = vunpack.c.l.b16 %v2194
        %v2384 = vunpack.c.l.b16 %v2195
        %v2385 = vunpack.c.l.b16 %v2196
        %v2386 = vunpack.c.l.b16 %v2197
        %v2387 = vunpack.c.l.b16 %v2198
        %v2388 = vunpack.c.l.b16 %v2199
        %v2389 = vunpack.c.l.b16 %v2200
        %v2390 = vunpack.c.l.b16 %v2201
        %v2391 = vunpack.c.l.b16 %v2202
        %v2392 = vunpack.c.l.b16 %v2203
        %v2393 = vunpack.c.l.b16 %v2204
        %v2394 = vunpack.c.l.b16 %v2205
        %v2395 = vunpack.c.l.b16 %v2206
        %v2396 = vunpack.c.l.b16 %v2207
        %v2397 = vunpack.c.l.b16 %v2208
        %v2398 = vunpack.c.l.b16 %v2209
        %v2399 = vunpack.c.l.b16 %v2210
        %v2400 = vunpack.c.l.b16 %v2211
        %v2401 = vunpack.c.l.b16 %v2212
        %v2402 = vunpack.c.l.b16 %v2213
        %v2403 = vpack.c.b16 %v2339, %v2339
        %v2404 = vpack.c.b16 %v2340, %v2340
        %v2405 = vpack.c.b16 %v2341, %v2341
        %v2406 = vpack.c.b16 %v2342, %v2342
        %v2407 = vpack.c.b16 %v2343, %v2343
        %v2408 = vpack.c.b16 %v2344, %v2344
        %v2409 = vpack.c.b16 %v2345, %v2345
        %v2410 = vpack.c.b16 %v2346, %v2346
        %v2411 = vpack.c.b16 %v2347, %v2347
        %v2412 = vpack.c.b16 %v2348, %v2348
        %v2413 = vpack.c.b16 %v2349, %v2349
        %v2414 = vpack.c.b16 %v2350, %v2350
        %v2415 = vpack.c.b16 %v2351, %v2351
        %v2416 = vpack.c.b16 %v2352, %v2352
        %v2417 = vpack.c.b16 %v2353, %v2353
        %v2418 = vpack.c.b16 %v2354, %v2354
        %v2419 = vpack.c.b16 %v2355, %v2355
        %v2420 = vpack.c.b16 %v2356, %v2356
        %v2421 = vpack.c.b16 %v2357, %v2357
        %v2422 = vpack.c.b16 %v2358, %v2358
        %v2423 = vpack.c.b16 %v2359, %v2359
        %v2424 = vpack.c.b16 %v2360, %v2360
        %v2425 = vpack.c.b16 %v2361, %v2361
        %v2426 = vpack.c.b16 %v2362, %v2362
        %v2427 = vpack.c.b16 %v2363, %v2363
        %v2428 = vpack.c.b16 %v2364, %v2364
        %v2429 = vpack.c.b16 %v2365, %v2365
        %v2430 = vpack.c.b16 %v2366, %v2366
        %v2431 = vpack.c.b16 %v2367, %v2367
        %v2432 = vpack.c.b16 %v2368, %v2368
        %v2433 = vpack.c.b16 %v2369, %v2369
        %v2434 = vpack.c.b16 %v2370, %v2370
        %v2435 = vpack.c.b16 %v2371, %v2371
        %v2436 = vpack.c.b16 %v2372, %v2372
        %v2437 = vpack.c.b16 %v2373, %v2373
        %v2438 = vpack.c.b16 %v2374, %v2374
        %v2439 = vpack.c.b16 %v2375, %v2375
        %v2440 = vpack.c.b16 %v2376, %v2376
        %v2441 = vpack.c.b16 %v2377, %v2377
        %v2442 = vpack.c.b16 %v2378, %v2378
        %v2443 = vpack.c.b16 %v2379, %v2379
        %v2444 = vpack.c.b16 %v2380, %v2380
        %v2445 = vpack.c.b16 %v2381, %v2381
        %v2446 = vpack.c.b16 %v2382, %v2382
        %v2447 = vpack.c.b16 %v2383, %v2383
        %v2448 = vpack.c.b16 %v2384, %v2384
        %v2449 = vpack.c.b16 %v2385, %v2385
        %v2450 = vpack.c.b16 %v2386, %v2386
        %v2451 = vpack.c.b16 %v2387, %v2387
        %v2452 = vpack.c.b16 %v2388, %v2388
        %v2453 = vpack.c.b16 %v2389, %v2389
        %v2454 = vpack.c.b16 %v2390, %v2390
        %v2455 = vpack.c.b16 %v2391, %v2391
        %v2456 = vpack.c.b16 %v2392, %v2392
        %v2457 = vpack.c.b16 %v2393, %v2393
        %v2458 = vpack.c.b16 %v2394, %v2394
        %v2459 = vpack.c.b16 %v2395, %v2395
        %v2460 = vpack.c.b16 %v2396, %v2396
        %v2461 = vpack.c.b16 %v2397, %v2397
        %v2462 = vpack.c.b16 %v2398, %v2398
        %v2463 = vpack.c.b16 %v2399, %v2399
        %v2464 = vpack.c.b16 %v2400, %v2400
        %v2465 = vpack.c.b16 %v2401, %v2401
        %v2466 = vpack.c.b16 %v2402, %v2402
        %v2467 = vunpack.c.l.b16 %v2403
        %v2468 = vunpack.c.l.b16 %v2404
        %v2469 = vunpack.c.l.b16 %v2405
        %v2470 = vunpack.c.l.b16 %v2406
        %v2471 = vunpack.c.l.b16 %v2407
        %v2472 = vunpack.c.l.b16 %v2408
        %v2473 = vunpack.c.l.b16 %v2409
        %v2474 = vunpack.c.l.b16 %v2410
        %v2475 = vunpack.c.l.b16 %v2411
        %v2476 = vunpack.c.l.b16 %v2412
        %v2477 = vunpack.c.l.b16 %v2413
        %v2478 = vunpack.c.l.b16 %v2414
        %v2479 = vunpack.c.l.b16 %v2415
        %v2480 = vunpack.c.l.b16 %v2416
        %v2481 = vunpack.c.l.b16 %v2417
        %v2482 = vunpack.c.l.b16 %v2418
        %v2483 = vunpack.c.l.b16 %v2419
        %v2484 = vunpack.c.l.b16 %v2420
        %v2485 = vunpack.c.l.b16 %v2421
        %v2486 = vunpack.c.l.b16 %v2422
        %v2487 = vunpack.c.l.b16 %v2423
        %v2488 = vunpack.c.l.b16 %v2424
        %v2489 = vunpack.c.l.b16 %v2425
        %v2490 = vunpack.c.l.b16 %v2426
        %v2491 = vunpack.c.l.b16 %v2427
        %v2492 = vunpack.c.l.b16 %v2428
        %v2493 = vunpack.c.l.b16 %v2429
        %v2494 = vunpack.c.l.b16 %v2430
        %v2495 = vunpack.c.l.b16 %v2431
        %v2496 = vunpack.c.l.b16 %v2432
        %v2497 = vunpack.c.l.b16 %v2433
        %v2498 = vunpack.c.l.b16 %v2434
        %v2499 = vunpack.c.l.b16 %v2435
        %v2500 = vunpack.c.l.b16 %v2436
        %v2501 = vunpack.c.l.b16 %v2437
        %v2502 = vunpack.c.l.b16 %v2438
        %v2503 = vunpack.c.l.b16 %v2439
        %v2504 = vunpack.c.l.b16 %v2440
        %v2505 = vunpack.c.l.b16 %v2441
        %v2506 = vunpack.c.l.b16 %v2442
        %v2507 = vunpack.c.l.b16 %v2443
        %v2508 = vunpack.c.l.b16 %v2444
        %v2509 = vunpack.c.l.b16 %v2445
        %v2510 = vunpack.c.l.b16 %v2446
        %v2511 = vunpack.c.l.b16 %v2447
        %v2512 = vunpack.c.l.b16 %v2448
        %v2513 = vunpack.c.l.b16 %v2449
        %v2514 = vunpack.c.l.b16 %v2450
        %v2515 = vunpack.c.l.b16 %v2451
        %v2516 = vunpack.c.l.b16 %v2452
        %v2517 = vunpack.c.l.b16 %v2453
        %v2518 = vunpack.c.l.b16 %v2454
        %v2519 = vunpack.c.l.b16 %v2455
        %v2520 = vunpack.c.l.b16 %v2456
        %v2521 = vunpack.c.l.b16 %v2457
        %v2522 = vunpack.c.l.b16 %v2458
        %v2523 = vunpack.c.l.b16 %v2459
        %v2524 = vunpack.c.l.b16 %v2460
        %v2525 = vunpack.c.l.b16 %v2461
        %v2526 = vunpack.c.l.b16 %v2462
        %v2527 = vunpack.c.l.b16 %v2463
        %v2528 = vunpack.c.l.b16 %v2464
        %v2529 = vunpack.c.l.b16 %v2465
        %v2530 = vunpack.c.l.b16 %v2466
        %v2531 = vrot.slane %v2467, 7
        %v2532 = vrot.slane %v2468, 6
        %vm2533 = vcmask 1042434
        %v2534 = vsel %vm2533, %v2532, %v2531
        %v2535 = vrot.slane %v2469, 5
        %vm2536 = vcmask 1043459
        %v2537 = vsel %vm2536, %v2535, %v2534
        %v2538 = vrot.slane %v2470, 4
        %vm2539 = vcmask 1044484
        %v2540 = vsel %vm2539, %v2538, %v2537
        %v2541 = vrot.slane %v2471, 3
        %vm2542 = vcmask 1045509
        %v2543 = vsel %vm2542, %v2541, %v2540
        %v2544 = vrot.slane %v2472, 2
        %vm2545 = vcmask 1046534
        %v2546 = vsel %vm2545, %v2544, %v2543
        %v2547 = vrot.slane %v2473, 1
        %vm2548 = vcmask 1047559
        %v2549 = vsel %vm2548, %v2547, %v2546
        %v2550 = vrot.slane %v2475, 7
        %v2551 = vrot.slane %v2476, 6
        %v2552 = vsel %vm2533, %v2551, %v2550
        %v2553 = vrot.slane %v2477, 5
        %v2554 = vsel %vm2536, %v2553, %v2552
        %v2555 = vrot.slane %v2478, 4
        %v2556 = vsel %vm2539, %v2555, %v2554
        %v2557 = vrot.slane %v2479, 3
        %v2558 = vsel %vm2542, %v2557, %v2556
        %v2559 = vrot.slane %v2480, 2
        %v2560 = vsel %vm2545, %v2559, %v2558
        %v2561 = vrot.slane %v2481, 1
        %v2562 = vsel %vm2548, %v2561, %v2560
        %v2563 = vrot.slane %v2483, 7
        %v2564 = vrot.slane %v2484, 6
        %v2565 = vsel %vm2533, %v2564, %v2563
        %v2566 = vrot.slane %v2485, 5
        %v2567 = vsel %vm2536, %v2566, %v2565
        %v2568 = vrot.slane %v2486, 4
        %v2569 = vsel %vm2539, %v2568, %v2567
        %v2570 = vrot.slane %v2487, 3
        %v2571 = vsel %vm2542, %v2570, %v2569
        %v2572 = vrot.slane %v2488, 2
        %v2573 = vsel %vm2545, %v2572, %v2571
        %v2574 = vrot.slane %v2489, 1
        %v2575 = vsel %vm2548, %v2574, %v2573
        %v2576 = vrot.slane %v2491, 7
        %v2577 = vrot.slane %v2492, 6
        %v2578 = vsel %vm2533, %v2577, %v2576
        %v2579 = vrot.slane %v2493, 5
        %v2580 = vsel %vm2536, %v2579, %v2578
        %v2581 = vrot.slane %v2494, 4
        %v2582 = vsel %vm2539, %v2581, %v2580
        %v2583 = vrot.slane %v2495, 3
        %v2584 = vsel %vm2542, %v2583, %v2582
        %v2585 = vrot.slane %v2496, 2
        %v2586 = vsel %vm2545, %v2585, %v2584
        %v2587 = vrot.slane %v2497, 1
        %v2588 = vsel %vm2548, %v2587, %v2586
        %v2589 = vrot.slane %v2499, 7
        %v2590 = vrot.slane %v2500, 6
        %v2591 = vsel %vm2533, %v2590, %v2589
        %v2592 = vrot.slane %v2501, 5
        %v2593 = vsel %vm2536, %v2592, %v2591
        %v2594 = vrot.slane %v2502, 4
        %v2595 = vsel %vm2539, %v2594, %v2593
        %v2596 = vrot.slane %v2503, 3
        %v2597 = vsel %vm2542, %v2596, %v2595
        %v2598 = vrot.slane %v2504, 2
        %v2599 = vsel %vm2545, %v2598, %v2597
        %v2600 = vrot.slane %v2505, 1
        %v2601 = vsel %vm2548, %v2600, %v2599
        %v2602 = vrot.slane %v2507, 7
        %v2603 = vrot.slane %v2508, 6
        %v2604 = vsel %vm2533, %v2603, %v2602
        %v2605 = vrot.slane %v2509, 5
        %v2606 = vsel %vm2536, %v2605, %v2604
        %v2607 = vrot.slane %v2510, 4
        %v2608 = vsel %vm2539, %v2607, %v2606
        %v2609 = vrot.slane %v2511, 3
        %v2610 = vsel %vm2542, %v2609, %v2608
        %v2611 = vrot.slane %v2512, 2
        %v2612 = vsel %vm2545, %v2611, %v2610
        %v2613 = vrot.slane %v2513, 1
        %v2614 = vsel %vm2548, %v2613, %v2612
        %v2615 = vrot.slane %v2515, 7
        %v2616 = vrot.slane %v2516, 6
        %v2617 = vsel %vm2533, %v2616, %v2615
        %v2618 = vrot.slane %v2517, 5
        %v2619 = vsel %vm2536, %v2618, %v2617
        %v2620 = vrot.slane %v2518, 4
        %v2621 = vsel %vm2539, %v2620, %v2619
        %v2622 = vrot.slane %v2519, 3
        %v2623 = vsel %vm2542, %v2622, %v2621
        %v2624 = vrot.slane %v2520, 2
        %v2625 = vsel %vm2545, %v2624, %v2623
        %v2626 = vrot.slane %v2521, 1
        %v2627 = vsel %vm2548, %v2626, %v2625
        %v2628 = vrot.slane %v2523, 7
        %v2629 = vrot.slane %v2524, 6
        %v2630 = vsel %vm2533, %v2629, %v2628
        %v2631 = vrot.slane %v2525, 5
        %v2632 = vsel %vm2536, %v2631, %v2630
        %v2633 = vrot.slane %v2526, 4
        %v2634 = vsel %vm2539, %v2633, %v2632
        %v2635 = vrot.slane %v2527, 3
        %v2636 = vsel %vm2542, %v2635, %v2634
        %v2637 = vrot.slane %v2528, 2
        %v2638 = vsel %vm2545, %v2637, %v2636
        %v2639 = vrot.slane %v2529, 1
        %v2640 = vsel %vm2548, %v2639, %v2638
        %v2641 = vpack.c.b16 %v2549, %v2549
        %v2642 = vpack.c.b16 %v2474, %v2474
        %v2643 = vpack.c.b16 %v2562, %v2562
        %v2644 = vpack.c.b16 %v2482, %v2482
        %v2645 = vpack.c.b16 %v2575, %v2575
        %v2646 = vpack.c.b16 %v2490, %v2490
        %v2647 = vpack.c.b16 %v2588, %v2588
        %v2648 = vpack.c.b16 %v2498, %v2498
        %v2649 = vpack.c.b16 %v2601, %v2601
        %v2650 = vpack.c.b16 %v2506, %v2506
        %v2651 = vpack.c.b16 %v2614, %v2614
        %v2652 = vpack.c.b16 %v2514, %v2514
        %v2653 = vpack.c.b16 %v2627, %v2627
        %v2654 = vpack.c.b16 %v2522, %v2522
        %v2655 = vpack.c.b16 %v2640, %v2640
        %v2656 = vpack.c.b16 %v2530, %v2530
        %vm2673 = vcmask 257024
        %vm2674 = vmand %vm2673, %vm2249
        %v2675 = vld [vmem:[%s2221] sm:$0xf]
        %v2676 = vsel %vm2674, %v2641, %v2675
        %2677 = vst [vmem:[%s2221] sm:$0xf] %v2676
        %v2678 = vld [vmem:[%s2221 + $0x4] sm:$0x1]
        %v2679 = vsel %vm2224, %v2642, %v2678
        %2680 = vst [vmem:[%s2221 + $0x4] sm:$0x1] %v2679
        %v2681 = vld [vmem:[%s2221 + $0x8] sm:$0xf]
        %v2682 = vsel %vm2674, %v2643, %v2681
        %2683 = vst [vmem:[%s2221 + $0x8] sm:$0xf] %v2682
        %v2684 = vld [vmem:[%s2221 + $0xc] sm:$0x1]
        %v2685 = vsel %vm2224, %v2644, %v2684
        %2686 = vst [vmem:[%s2221 + $0xc] sm:$0x1] %v2685
        %v2687 = vld [vmem:[%s2221 + $0x10] sm:$0xf]
        %v2688 = vsel %vm2674, %v2645, %v2687
        %2689 = vst [vmem:[%s2221 + $0x10] sm:$0xf] %v2688
        %v2690 = vld [vmem:[%s2221 + $0x14] sm:$0x1]
        %v2691 = vsel %vm2224, %v2646, %v2690
        %2692 = vst [vmem:[%s2221 + $0x14] sm:$0x1] %v2691
        %v2693 = vld [vmem:[%s2221 + $0x18] sm:$0xf]
        %v2694 = vsel %vm2674, %v2647, %v2693
        %2695 = vst [vmem:[%s2221 + $0x18] sm:$0xf] %v2694
        %v2696 = vld [vmem:[%s2221 + $0x1c] sm:$0x1]
        %v2697 = vsel %vm2224, %v2648, %v2696
        %2698 = vst [vmem:[%s2221 + $0x1c] sm:$0x1] %v2697
        %v2699 = vld [vmem:[%s2221 + $0x20] sm:$0xf]
        %v2700 = vsel %vm2674, %v2649, %v2699
        %2701 = vst [vmem:[%s2221 + $0x20] sm:$0xf] %v2700
        %v2702 = vld [vmem:[%s2221 + $0x24] sm:$0x1]
        %v2703 = vsel %vm2224, %v2650, %v2702
        %2704 = vst [vmem:[%s2221 + $0x24] sm:$0x1] %v2703
        %v2705 = vld [vmem:[%s2221 + $0x28] sm:$0xf]
        %v2706 = vsel %vm2674, %v2651, %v2705
        %2707 = vst [vmem:[%s2221 + $0x28] sm:$0xf] %v2706
        %v2708 = vld [vmem:[%s2221 + $0x2c] sm:$0x1]
        %v2709 = vsel %vm2224, %v2652, %v2708
        %2710 = vst [vmem:[%s2221 + $0x2c] sm:$0x1] %v2709
        %v2711 = vld [vmem:[%s2221 + $0x30] sm:$0xf]
        %v2712 = vsel %vm2674, %v2653, %v2711
        %2713 = vst [vmem:[%s2221 + $0x30] sm:$0xf] %v2712
        %v2714 = vld [vmem:[%s2221 + $0x34] sm:$0x1]
        %v2715 = vsel %vm2224, %v2654, %v2714
        %2716 = vst [vmem:[%s2221 + $0x34] sm:$0x1] %v2715
        %v2717 = vld [vmem:[%s2221 + $0x38] sm:$0xf]
        %v2718 = vsel %vm2674, %v2655, %v2717
        %2719 = vst [vmem:[%s2221 + $0x38] sm:$0xf] %v2718
        %v2720 = vld [vmem:[%s2221 + $0x3c] sm:$0x1]
        %v2721 = vsel %vm2224, %v2656, %v2720
        %2722 = vst [vmem:[%s2221 + $0x3c] sm:$0x1] %v2721
        %v2723 = vld [vmem:[#allocation2] sm:$0xf]
        %v2724 = vld [vmem:[#allocation2 + $0x8] sm:$0xf]
        %v2725 = vld [vmem:[#allocation2 + $0x10] sm:$0xf]
        %v2726 = vld [vmem:[#allocation2 + $0x18] sm:$0xf]
        %v2727 = vld [vmem:[#allocation2 + $0x20] sm:$0xf]
        %v2728 = vld [vmem:[#allocation2 + $0x28] sm:$0xf]
        %v2729 = vld [vmem:[#allocation2 + $0x30] sm:$0xf]
        %v2730 = vld [vmem:[#allocation2 + $0x38] sm:$0xf]
        %v2731 = vld [vmem:[%s2] sm:$0xf]
        %v2732 = vld [vmem:[%s2 + $0x4] sm:$0xf]
        %v2733 = vld [vmem:[%s2 + $0x8] sm:$0xf]
        %v2734 = vld [vmem:[%s2 + $0xc] sm:$0xf]
        %v2735 = vld [vmem:[#allocation2 + $0x4] sm:$0x1]
        %v2736 = vld [vmem:[#allocation2 + $0xc] sm:$0x1]
        %v2737 = vld [vmem:[#allocation2 + $0x14] sm:$0x1]
        %v2738 = vld [vmem:[#allocation2 + $0x1c] sm:$0x1]
        %v2739 = vld [vmem:[#allocation2 + $0x24] sm:$0x1]
        %v2740 = vld [vmem:[#allocation2 + $0x2c] sm:$0x1]
        %v2741 = vld [vmem:[#allocation2 + $0x34] sm:$0x1]
        %v2742 = vld [vmem:[#allocation2 + $0x3c] sm:$0x1]
        %vm2743 = vsmask.f32 3328
        %vm2744 = vsmask.f32 7440
        %vm2745 = vmor %vm2743, %vm2744
        %v2747 = vshrl.u32 %v2723, 16
        %v2749 = vrot.slane %v2747, 4
        %v2750 = vshll.u32 %v2723, 16
        %v2752 = vrot.slane %v2750, 5
        %v2753 = vor.u32 %v2749, %v2752
        %v2754 = vrot.slane %v2753, 4
        %v2756 = vshll.u32 %v2735, 16
        %v2758 = vrot.slane %v2756, 5
        %v2759 = vsel %vm2745, %v2754, %v2758
        %v2761 = vshrl.u32 %v2724, 16
        %v2763 = vrot.slane %v2761, 4
        %v2764 = vshll.u32 %v2724, 16
        %v2766 = vrot.slane %v2764, 5
        %v2767 = vor.u32 %v2763, %v2766
        %v2768 = vrot.slane %v2767, 4
        %v2770 = vshll.u32 %v2736, 16
        %v2772 = vrot.slane %v2770, 5
        %v2773 = vsel %vm2745, %v2768, %v2772
        %v2775 = vshrl.u32 %v2725, 16
        %v2777 = vrot.slane %v2775, 4
        %v2778 = vshll.u32 %v2725, 16
        %v2780 = vrot.slane %v2778, 5
        %v2781 = vor.u32 %v2777, %v2780
        %v2782 = vrot.slane %v2781, 4
        %v2784 = vshll.u32 %v2737, 16
        %v2786 = vrot.slane %v2784, 5
        %v2787 = vsel %vm2745, %v2782, %v2786
        %v2789 = vshrl.u32 %v2726, 16
        %v2791 = vrot.slane %v2789, 4
        %v2792 = vshll.u32 %v2726, 16
        %v2794 = vrot.slane %v2792, 5
        %v2795 = vor.u32 %v2791, %v2794
        %v2796 = vrot.slane %v2795, 4
        %v2798 = vshll.u32 %v2738, 16
        %v2800 = vrot.slane %v2798, 5
        %v2801 = vsel %vm2745, %v2796, %v2800
        %v2803 = vshrl.u32 %v2727, 16
        %v2805 = vrot.slane %v2803, 4
        %v2806 = vshll.u32 %v2727, 16
        %v2808 = vrot.slane %v2806, 5
        %v2809 = vor.u32 %v2805, %v2808
        %v2810 = vrot.slane %v2809, 4
        %v2812 = vshll.u32 %v2739, 16
        %v2814 = vrot.slane %v2812, 5
        %v2815 = vsel %vm2745, %v2810, %v2814
        %v2817 = vshrl.u32 %v2728, 16
        %v2819 = vrot.slane %v2817, 4
        %v2820 = vshll.u32 %v2728, 16
        %v2822 = vrot.slane %v2820, 5
        %v2823 = vor.u32 %v2819, %v2822
        %v2824 = vrot.slane %v2823, 4
        %v2826 = vshll.u32 %v2740, 16
        %v2828 = vrot.slane %v2826, 5
        %v2829 = vsel %vm2745, %v2824, %v2828
        %v2831 = vshrl.u32 %v2729, 16
        %v2833 = vrot.slane %v2831, 4
        %v2834 = vshll.u32 %v2729, 16
        %v2836 = vrot.slane %v2834, 5
        %v2837 = vor.u32 %v2833, %v2836
        %v2838 = vrot.slane %v2837, 4
        %v2840 = vshll.u32 %v2741, 16
        %v2842 = vrot.slane %v2840, 5
        %v2843 = vsel %vm2745, %v2838, %v2842
        %v2845 = vshrl.u32 %v2730, 16
        %v2847 = vrot.slane %v2845, 4
        %v2848 = vshll.u32 %v2730, 16
        %v2850 = vrot.slane %v2848, 5
        %v2851 = vor.u32 %v2847, %v2850
        %v2852 = vrot.slane %v2851, 4
        %v2854 = vshll.u32 %v2742, 16
        %v2856 = vrot.slane %v2854, 5
        %v2857 = vsel %vm2745, %v2852, %v2856
        %s2858 = scalar_lea.vmem %s2, 16
        %v2859 = vld [vmem:[%s2858] sm:$0xf]
        %v2860 = vld [vmem:[%s2858 + $0x4] sm:$0xf]
        %v2861 = vld [vmem:[%s2858 + $0x8] sm:$0xf]
        %v2862 = vld [vmem:[%s2858 + $0xc] sm:$0xf]
        %v2863 = vunpack.c.l.b16 %v2759
        %v2864 = vunpack.c.l.b16 %v2773
        %v2865 = vunpack.c.l.b16 %v2787
        %v2866 = vunpack.c.l.b16 %v2801
        %v2867 = vunpack.c.l.b16 %v2815
        %v2868 = vunpack.c.l.b16 %v2829
        %v2869 = vunpack.c.l.b16 %v2843
        %v2870 = vunpack.c.l.b16 %v2857
        %v2871 = vpack.c.b16 %v2864, %v2863
        %v2872 = vpack.c.b16 %v2866, %v2865
        %v2873 = vpack.c.b16 %v2868, %v2867
        %v2874 = vpack.c.b16 %v2870, %v2869
        %v2879 = vunpack.c.l.b16 %v2859
        %v2880 = vunpack.c.l.b16 %v2860
        %v2881 = vunpack.c.l.b16 %v2861
        %v2882 = vunpack.c.l.b16 %v2862
        %v2883 = vpack.c.b16 %v2880, %v2879
        %v2884 = vpack.c.b16 %v2882, %v2881
        %v2888 = vsel %vm628, %v2871, 0
        %v2891 = vsel %vm628, %v2872, 0
        %v2894 = vsel %vm628, %v2873, 0
        %v2897 = vsel %vm628, %v2874, 0
        %2899 = vmatprep.subr.bf16.mxu0 0
        %2900 = vmatpush1.bf16.msra.mxu0 %v2883
        %2901 = vmatprep.subr.bf16.mxu0 0
        %2902 = vmatpush1.bf16.msra.mxu0 %v2884
        %2903 = vmatprep.subr.bf16.mxu0 0
        %2904 = vmatpush1.bf16.msra.mxu0 0
        %2905 = vmatprep.subr.bf16.mxu0 0
        %2906 = vmatpush1.bf16.msra.mxu0 0
        %2907 = vmatprep.subr.bf16.mxu0 0
        %2908 = vmatpush1.bf16.msra.mxu0 0
        %2909 = vmatprep.subr.bf16.mxu0 0
        %2910 = vmatpush1.bf16.msra.mxu0 0
        %2911 = vmatprep.subr.bf16.mxu0 0
        %2912 = vmatpush1.bf16.msra.mxu0 0
        %2913 = vmatprep.subr.bf16.mxu0 0
        %2914 = vmatpush1.bf16.msra.mxu0 0
        %2915 = vmatprep.subr.bf16.mxu0 0
        %2916 = vmatpush1.bf16.msra.mxu0 0
        %2917 = vmatprep.subr.bf16.mxu0 0
        %2918 = vmatpush1.bf16.msra.mxu0 0
        %2919 = vmatprep.subr.bf16.mxu0 0
        %2920 = vmatpush1.bf16.msra.mxu0 0
        %2921 = vmatprep.subr.bf16.mxu0 0
        %2922 = vmatpush1.bf16.msra.mxu0 0
        %2923 = vmatprep.subr.bf16.mxu0 0
        %2924 = vmatpush1.bf16.msra.mxu0 0
        %2925 = vmatprep.subr.bf16.mxu0 0
        %2926 = vmatpush1.bf16.msra.mxu0 0
        %2927 = vmatprep.subr.bf16.mxu0 0
        %2928 = vmatpush1.bf16.msra.mxu0 0
        %2929 = vmatprep.subr.bf16.mxu0 0
        %2930 = vmatpush1.bf16.msra.mxu0 0
        %2931 = vmatprep.mubr.bf16.mxu0 0
        %2932 = vmatmul.mubr.bf16.gmra.mrb[0].mxu0 %v2888
        %v2933 = vpop.f32.mrb[0].mxu0
        %v2934 = vadd.f32 0.0, %v2933
        %v2935 = vpop.f32.mrb[0].mxu0
        %v2936 = vpop.f32.mrb[0].mxu0
        %v2937 = vadd.f32 0.0, %v2936
        %v2938 = vpop.f32.mrb[0].mxu0
        %2939 = vmatprep.mubr.bf16.mxu0 0
        %2940 = vmatmul.mubr.bf16.gmra.mrb[0].mxu0 %v2891
        %v2941 = vpop.f32.mrb[0].mxu0
        %v2942 = vadd.f32 0.0, %v2941
        %v2943 = vpop.f32.mrb[0].mxu0
        %v2944 = vpop.f32.mrb[0].mxu0
        %v2945 = vadd.f32 0.0, %v2944
        %v2946 = vpop.f32.mrb[0].mxu0
        %2947 = vmatprep.mubr.bf16.mxu0 0
        %2948 = vmatmul.mubr.bf16.gmra.mrb[0].mxu0 %v2894
        %v2949 = vpop.f32.mrb[0].mxu0
        %v2950 = vadd.f32 0.0, %v2949
        %v2951 = vpop.f32.mrb[0].mxu0
        %v2952 = vpop.f32.mrb[0].mxu0
        %v2953 = vadd.f32 0.0, %v2952
        %v2954 = vpop.f32.mrb[0].mxu0
        %2955 = vmatprep.mubr.bf16.mxu0 0
        %2956 = vmatmul.mubr.bf16.gmra.mrb[0].mxu0 %v2897
        %v2957 = vpop.f32.mrb[0].mxu0
        %v2958 = vadd.f32 0.0, %v2957
        %v2959 = vpop.f32.mrb[0].mxu0
        %v2960 = vpop.f32.mrb[0].mxu0
        %v2961 = vadd.f32 0.0, %v2960
        %v2962 = vpop.f32.mrb[0].mxu0
        %2963 = vdwg.mxu0
        %v2972 = vunpack.c.l.b16 %v2723
        %v2973 = vunpack.c.l.b16 %v2724
        %v2974 = vunpack.c.l.b16 %v2725
        %v2975 = vunpack.c.l.b16 %v2726
        %v2976 = vunpack.c.l.b16 %v2727
        %v2977 = vunpack.c.l.b16 %v2728
        %v2978 = vunpack.c.l.b16 %v2729
        %v2979 = vunpack.c.l.b16 %v2730
        %v2980 = vpack.c.b16 %v2973, %v2972
        %v2981 = vpack.c.b16 %v2975, %v2974
        %v2982 = vpack.c.b16 %v2977, %v2976
        %v2983 = vpack.c.b16 %v2979, %v2978
        %v2988 = vunpack.c.l.b16 %v2731
        %v2989 = vunpack.c.l.b16 %v2732
        %v2990 = vunpack.c.l.b16 %v2733
        %v2991 = vunpack.c.l.b16 %v2734
        %v2992 = vpack.c.b16 %v2989, %v2988
        %v2993 = vpack.c.b16 %v2991, %v2990
        %v2997 = vsel %vm628, %v2980, 0
        %v3000 = vsel %vm628, %v2981, 0
        %v3003 = vsel %vm628, %v2982, 0
        %v3006 = vsel %vm628, %v2983, 0
        %3008 = vmatprep.subr.bf16.mxu0 0
        %3009 = vmatpush1.bf16.msra.mxu0 %v2992
        %3010 = vmatprep.subr.bf16.mxu0 0
        %3011 = vmatpush1.bf16.msra.mxu0 %v2993
        %3012 = vmatprep.subr.bf16.mxu0 0
        %3013 = vmatpush1.bf16.msra.mxu0 0
        %3014 = vmatprep.subr.bf16.mxu0 0
        %3015 = vmatpush1.bf16.msra.mxu0 0
        %3016 = vmatprep.subr.bf16.mxu0 0
        %3017 = vmatpush1.bf16.msra.mxu0 0
        %3018 = vmatprep.subr.bf16.mxu0 0
        %3019 = vmatpush1.bf16.msra.mxu0 0
        %3020 = vmatprep.subr.bf16.mxu0 0
        %3021 = vmatpush1.bf16.msra.mxu0 0
        %3022 = vmatprep.subr.bf16.mxu0 0
        %3023 = vmatpush1.bf16.msra.mxu0 0
        %3024 = vmatprep.subr.bf16.mxu0 0
        %3025 = vmatpush1.bf16.msra.mxu0 0
        %3026 = vmatprep.subr.bf16.mxu0 0
        %3027 = vmatpush1.bf16.msra.mxu0 0
        %3028 = vmatprep.subr.bf16.mxu0 0
        %3029 = vmatpush1.bf16.msra.mxu0 0
        %3030 = vmatprep.subr.bf16.mxu0 0
        %3031 = vmatpush1.bf16.msra.mxu0 0
        %3032 = vmatprep.subr.bf16.mxu0 0
        %3033 = vmatpush1.bf16.msra.mxu0 0
        %3034 = vmatprep.subr.bf16.mxu0 0
        %3035 = vmatpush1.bf16.msra.mxu0 0
        %3036 = vmatprep.subr.bf16.mxu0 0
        %3037 = vmatpush1.bf16.msra.mxu0 0
        %3038 = vmatprep.subr.bf16.mxu0 0
        %3039 = vmatpush1.bf16.msra.mxu0 0
        %3040 = vmatprep.mubr.bf16.mxu0 0
        %3041 = vmatmul.mubr.bf16.gmra.mrb[0].mxu0 %v2997
        %v3042 = vpop.f32.mrb[0].mxu0
        %v3043 = vadd.f32 %v2934, %v3042
        %v3044 = vpop.f32.mrb[0].mxu0
        %v3045 = vpop.f32.mrb[0].mxu0
        %v3046 = vadd.f32 %v2937, %v3045
        %v3047 = vpop.f32.mrb[0].mxu0
        %3048 = vmatprep.mubr.bf16.mxu0 0
        %3049 = vmatmul.mubr.bf16.gmra.mrb[0].mxu0 %v3000
        %v3050 = vpop.f32.mrb[0].mxu0
        %v3051 = vadd.f32 %v2942, %v3050
        %v3052 = vpop.f32.mrb[0].mxu0
        %v3053 = vpop.f32.mrb[0].mxu0
        %v3054 = vadd.f32 %v2945, %v3053
        %v3055 = vpop.f32.mrb[0].mxu0
        %3056 = vmatprep.mubr.bf16.mxu0 0
        %3057 = vmatmul.mubr.bf16.gmra.mrb[0].mxu0 %v3003
        %v3058 = vpop.f32.mrb[0].mxu0
        %v3059 = vadd.f32 %v2950, %v3058
        %v3060 = vpop.f32.mrb[0].mxu0
        %v3061 = vpop.f32.mrb[0].mxu0
        %v3062 = vadd.f32 %v2953, %v3061
        %v3063 = vpop.f32.mrb[0].mxu0
        %3064 = vmatprep.mubr.bf16.mxu0 0
        %3065 = vmatmul.mubr.bf16.gmra.mrb[0].mxu0 %v3006
        %v3066 = vpop.f32.mrb[0].mxu0
        %v3067 = vadd.f32 %v2958, %v3066
        %v3068 = vpop.f32.mrb[0].mxu0
        %v3069 = vpop.f32.mrb[0].mxu0
        %v3070 = vadd.f32 %v2961, %v3069
        %v3071 = vpop.f32.mrb[0].mxu0
        %3072 = vdwg.mxu0
        %v3073 = vld [vmem:[#allocation2] sm:$0xe]
        %v3074 = vld [vmem:[#allocation2 + $0x8] sm:$0xe]
        %v3075 = vld [vmem:[#allocation2 + $0x10] sm:$0xe]
        %v3076 = vld [vmem:[#allocation2 + $0x18] sm:$0xe]
        %v3077 = vld [vmem:[#allocation2 + $0x20] sm:$0xe]
        %v3078 = vld [vmem:[#allocation2 + $0x28] sm:$0xe]
        %v3079 = vld [vmem:[#allocation2 + $0x30] sm:$0xe]
        %v3080 = vld [vmem:[#allocation2 + $0x38] sm:$0xe]
        %vm3097 = vcmask 1042432
        %vm3098 = vcmask 1046532
        %vm3099 = vmor %vm3097, %vm3098
        %v3100 = vrot.slane %v3073, 5
        %v3101 = vrot.slane %v3100, 4
        %v3102 = vrot.slane %v2735, 5
        %v3103 = vsel %vm3099, %v3101, %v3102
        %v3104 = vrot.slane %v3074, 5
        %v3105 = vrot.slane %v3104, 4
        %v3106 = vrot.slane %v2736, 5
        %v3107 = vsel %vm3099, %v3105, %v3106
        %v3108 = vrot.slane %v3075, 5
        %v3109 = vrot.slane %v3108, 4
        %v3110 = vrot.slane %v2737, 5
        %v3111 = vsel %vm3099, %v3109, %v3110
        %v3112 = vrot.slane %v3076, 5
        %v3113 = vrot.slane %v3112, 4
        %v3114 = vrot.slane %v2738, 5
        %v3115 = vsel %vm3099, %v3113, %v3114
        %v3116 = vrot.slane %v3077, 5
        %v3117 = vrot.slane %v3116, 4
        %v3118 = vrot.slane %v2739, 5
        %v3119 = vsel %vm3099, %v3117, %v3118
        %v3120 = vrot.slane %v3078, 5
        %v3121 = vrot.slane %v3120, 4
        %v3122 = vrot.slane %v2740, 5
        %v3123 = vsel %vm3099, %v3121, %v3122
        %v3124 = vrot.slane %v3079, 5
        %v3125 = vrot.slane %v3124, 4
        %v3126 = vrot.slane %v2741, 5
        %v3127 = vsel %vm3099, %v3125, %v3126
        %v3128 = vrot.slane %v3080, 5
        %v3129 = vrot.slane %v3128, 4
        %v3130 = vrot.slane %v2742, 5
        %v3131 = vsel %vm3099, %v3129, %v3130
        %s3132 = scalar_lea.vmem %s2, 32
        %v3133 = vld [vmem:[%s3132] sm:$0xf]
        %v3134 = vld [vmem:[%s3132 + $0x4] sm:$0xf]
        %v3135 = vld [vmem:[%s3132 + $0x8] sm:$0xf]
        %v3136 = vld [vmem:[%s3132 + $0xc] sm:$0xf]
        %v3137 = vunpack.c.l.b16 %v3103
        %v3138 = vunpack.c.l.b16 %v3107
        %v3139 = vunpack.c.l.b16 %v3111
        %v3140 = vunpack.c.l.b16 %v3115
        %v3141 = vunpack.c.l.b16 %v3119
        %v3142 = vunpack.c.l.b16 %v3123
        %v3143 = vunpack.c.l.b16 %v3127
        %v3144 = vunpack.c.l.b16 %v3131
        %v3145 = vpack.c.b16 %v3138, %v3137
        %v3146 = vpack.c.b16 %v3140, %v3139
        %v3147 = vpack.c.b16 %v3142, %v3141
        %v3148 = vpack.c.b16 %v3144, %v3143
        %v3153 = vunpack.c.l.b16 %v3133
        %v3154 = vunpack.c.l.b16 %v3134
        %v3155 = vunpack.c.l.b16 %v3135
        %v3156 = vunpack.c.l.b16 %v3136
        %v3157 = vpack.c.b16 %v3154, %v3153
        %v3158 = vpack.c.b16 %v3156, %v3155
        %v3162 = vsel %vm628, %v3145, 0
        %v3165 = vsel %vm628, %v3146, 0
        %v3168 = vsel %vm628, %v3147, 0
        %v3171 = vsel %vm628, %v3148, 0
        %3173 = vmatprep.subr.bf16.mxu0 0
        %3174 = vmatpush1.bf16.msra.mxu0 %v3157
        %3175 = vmatprep.subr.bf16.mxu0 0
        %3176 = vmatpush1.bf16.msra.mxu0 %v3158
        %3177 = vmatprep.subr.bf16.mxu0 0
        %3178 = vmatpush1.bf16.msra.mxu0 0
        %3179 = vmatprep.subr.bf16.mxu0 0
        %3180 = vmatpush1.bf16.msra.mxu0 0
        %3181 = vmatprep.subr.bf16.mxu0 0
        %3182 = vmatpush1.bf16.msra.mxu0 0
        %3183 = vmatprep.subr.bf16.mxu0 0
        %3184 = vmatpush1.bf16.msra.mxu0 0
        %3185 = vmatprep.subr.bf16.mxu0 0
        %3186 = vmatpush1.bf16.msra.mxu0 0
        %3187 = vmatprep.subr.bf16.mxu0 0
        %3188 = vmatpush1.bf16.msra.mxu0 0
        %3189 = vmatprep.subr.bf16.mxu0 0
        %3190 = vmatpush1.bf16.msra.mxu0 0
        %3191 = vmatprep.subr.bf16.mxu0 0
        %3192 = vmatpush1.bf16.msra.mxu0 0
        %3193 = vmatprep.subr.bf16.mxu0 0
        %3194 = vmatpush1.bf16.msra.mxu0 0
        %3195 = vmatprep.subr.bf16.mxu0 0
        %3196 = vmatpush1.bf16.msra.mxu0 0
        %3197 = vmatprep.subr.bf16.mxu0 0
        %3198 = vmatpush1.bf16.msra.mxu0 0
        %3199 = vmatprep.subr.bf16.mxu0 0
        %3200 = vmatpush1.bf16.msra.mxu0 0
        %3201 = vmatprep.subr.bf16.mxu0 0
        %3202 = vmatpush1.bf16.msra.mxu0 0
        %3203 = vmatprep.subr.bf16.mxu0 0
        %3204 = vmatpush1.bf16.msra.mxu0 0
        %3205 = vmatprep.mubr.bf16.mxu0 0
        %3206 = vmatmul.mubr.bf16.gmra.mrb[0].mxu0 %v3162
        %v3207 = vpop.f32.mrb[0].mxu0
        %v3208 = vadd.f32 0.0, %v3207
        %v3209 = vpop.f32.mrb[0].mxu0
        %v3210 = vpop.f32.mrb[0].mxu0
        %v3211 = vadd.f32 0.0, %v3210
        %v3212 = vpop.f32.mrb[0].mxu0
        %3213 = vmatprep.mubr.bf16.mxu0 0
        %3214 = vmatmul.mubr.bf16.gmra.mrb[0].mxu0 %v3165
        %v3215 = vpop.f32.mrb[0].mxu0
        %v3216 = vadd.f32 0.0, %v3215
        %v3217 = vpop.f32.mrb[0].mxu0
        %v3218 = vpop.f32.mrb[0].mxu0
        %v3219 = vadd.f32 0.0, %v3218
        %v3220 = vpop.f32.mrb[0].mxu0
        %3221 = vmatprep.mubr.bf16.mxu0 0
        %3222 = vmatmul.mubr.bf16.gmra.mrb[0].mxu0 %v3168
        %v3223 = vpop.f32.mrb[0].mxu0
        %v3224 = vadd.f32 0.0, %v3223
        %v3225 = vpop.f32.mrb[0].mxu0
        %v3226 = vpop.f32.mrb[0].mxu0
        %v3227 = vadd.f32 0.0, %v3226
        %v3228 = vpop.f32.mrb[0].mxu0
        %3229 = vmatprep.mubr.bf16.mxu0 0
        %3230 = vmatmul.mubr.bf16.gmra.mrb[0].mxu0 %v3171
        %v3231 = vpop.f32.mrb[0].mxu0
        %v3232 = vadd.f32 0.0, %v3231
        %v3233 = vpop.f32.mrb[0].mxu0
        %v3234 = vpop.f32.mrb[0].mxu0
        %v3235 = vadd.f32 0.0, %v3234
        %v3236 = vpop.f32.mrb[0].mxu0
        %3237 = vdwg.mxu0
        %v3238 = vadd.f32 %v3043, %v3208
        %v3239 = vadd.f32 %v3046, %v3211
        %v3240 = vadd.f32 %v3051, %v3216
        %v3241 = vadd.f32 %v3054, %v3219
        %v3242 = vadd.f32 %v3059, %v3224
        %v3243 = vadd.f32 %v3062, %v3227
        %v3244 = vadd.f32 %v3067, %v3232
        %v3245 = vadd.f32 %v3070, %v3235
        %v3246 = vld [vmem:[%s2221] sm:$0xf]
        %v3247 = vld [vmem:[%s2221 + $0x8] sm:$0xf]
        %v3248 = vld [vmem:[%s2221 + $0x10] sm:$0xf]
        %v3249 = vld [vmem:[%s2221 + $0x18] sm:$0xf]
        %v3250 = vld [vmem:[%s2221 + $0x20] sm:$0xf]
        %v3251 = vld [vmem:[%s2221 + $0x28] sm:$0xf]
        %v3252 = vld [vmem:[%s2221 + $0x30] sm:$0xf]
        %v3253 = vld [vmem:[%s2221 + $0x38] sm:$0xf]
        %s3254 = scalar_lea.vmem %s2, 48
        %v3255 = vld [vmem:[%s3254] sm:$0xf]
        %v3256 = vld [vmem:[%s3254 + $0x4] sm:$0xf]
        %v3257 = vld [vmem:[%s3254 + $0x8] sm:$0xf]
        %v3258 = vld [vmem:[%s3254 + $0xc] sm:$0xf]
        %v3267 = vunpack.c.l.b16 %v3246
        %v3268 = vunpack.c.l.b16 %v3247
        %v3269 = vunpack.c.l.b16 %v3248
        %v3270 = vunpack.c.l.b16 %v3249
        %v3271 = vunpack.c.l.b16 %v3250
        %v3272 = vunpack.c.l.b16 %v3251
        %v3273 = vunpack.c.l.b16 %v3252
        %v3274 = vunpack.c.l.b16 %v3253
        %v3275 = vpack.c.b16 %v3268, %v3267
        %v3276 = vpack.c.b16 %v3270, %v3269
        %v3277 = vpack.c.b16 %v3272, %v3271
        %v3278 = vpack.c.b16 %v3274, %v3273
        %v3283 = vunpack.c.l.b16 %v3255
        %v3284 = vunpack.c.l.b16 %v3256
        %v3285 = vunpack.c.l.b16 %v3257
        %v3286 = vunpack.c.l.b16 %v3258
        %v3287 = vpack.c.b16 %v3284, %v3283
        %v3288 = vpack.c.b16 %v3286, %v3285
        %v3292 = vsel %vm628, %v3275, 0
        %v3295 = vsel %vm628, %v3276, 0
        %v3298 = vsel %vm628, %v3277, 0
        %v3301 = vsel %vm628, %v3278, 0
        %3303 = vmatprep.subr.bf16.mxu0 0
        %3304 = vmatpush1.bf16.msra.mxu0 %v3287
        %3305 = vmatprep.subr.bf16.mxu0 0
        %3306 = vmatpush1.bf16.msra.mxu0 %v3288
        %3307 = vmatprep.subr.bf16.mxu0 0
        %3308 = vmatpush1.bf16.msra.mxu0 0
        %3309 = vmatprep.subr.bf16.mxu0 0
        %3310 = vmatpush1.bf16.msra.mxu0 0
        %3311 = vmatprep.subr.bf16.mxu0 0
        %3312 = vmatpush1.bf16.msra.mxu0 0
        %3313 = vmatprep.subr.bf16.mxu0 0
        %3314 = vmatpush1.bf16.msra.mxu0 0
        %3315 = vmatprep.subr.bf16.mxu0 0
        %3316 = vmatpush1.bf16.msra.mxu0 0
        %3317 = vmatprep.subr.bf16.mxu0 0
        %3318 = vmatpush1.bf16.msra.mxu0 0
        %3319 = vmatprep.subr.bf16.mxu0 0
        %3320 = vmatpush1.bf16.msra.mxu0 0
        %3321 = vmatprep.subr.bf16.mxu0 0
        %3322 = vmatpush1.bf16.msra.mxu0 0
        %3323 = vmatprep.subr.bf16.mxu0 0
        %3324 = vmatpush1.bf16.msra.mxu0 0
        %3325 = vmatprep.subr.bf16.mxu0 0
        %3326 = vmatpush1.bf16.msra.mxu0 0
        %3327 = vmatprep.subr.bf16.mxu0 0
        %3328 = vmatpush1.bf16.msra.mxu0 0
        %3329 = vmatprep.subr.bf16.mxu0 0
        %3330 = vmatpush1.bf16.msra.mxu0 0
        %3331 = vmatprep.subr.bf16.mxu0 0
        %3332 = vmatpush1.bf16.msra.mxu0 0
        %3333 = vmatprep.subr.bf16.mxu0 0
        %3334 = vmatpush1.bf16.msra.mxu0 0
        %3335 = vmatprep.mubr.bf16.mxu0 0
        %3336 = vmatmul.mubr.bf16.gmra.mrb[0].mxu0 %v3292
        %v3337 = vpop.f32.mrb[0].mxu0
        %v3338 = vadd.f32 0.0, %v3337
        %v3339 = vpop.f32.mrb[0].mxu0
        %v3340 = vpop.f32.mrb[0].mxu0
        %v3341 = vadd.f32 0.0, %v3340
        %v3342 = vpop.f32.mrb[0].mxu0
        %3343 = vmatprep.mubr.bf16.mxu0 0
        %3344 = vmatmul.mubr.bf16.gmra.mrb[0].mxu0 %v3295
        %v3345 = vpop.f32.mrb[0].mxu0
        %v3346 = vadd.f32 0.0, %v3345
        %v3347 = vpop.f32.mrb[0].mxu0
        %v3348 = vpop.f32.mrb[0].mxu0
        %v3349 = vadd.f32 0.0, %v3348
        %v3350 = vpop.f32.mrb[0].mxu0
        %3351 = vmatprep.mubr.bf16.mxu0 0
        %3352 = vmatmul.mubr.bf16.gmra.mrb[0].mxu0 %v3298
        %v3353 = vpop.f32.mrb[0].mxu0
        %v3354 = vadd.f32 0.0, %v3353
        %v3355 = vpop.f32.mrb[0].mxu0
        %v3356 = vpop.f32.mrb[0].mxu0
        %v3357 = vadd.f32 0.0, %v3356
        %v3358 = vpop.f32.mrb[0].mxu0
        %3359 = vmatprep.mubr.bf16.mxu0 0
        %3360 = vmatmul.mubr.bf16.gmra.mrb[0].mxu0 %v3301
        %v3361 = vpop.f32.mrb[0].mxu0
        %v3362 = vadd.f32 0.0, %v3361
        %v3363 = vpop.f32.mrb[0].mxu0
        %v3364 = vpop.f32.mrb[0].mxu0
        %v3365 = vadd.f32 0.0, %v3364
        %v3366 = vpop.f32.mrb[0].mxu0
        %3367 = vdwg.mxu0
        %v3368 = vadd.f32 %v3238, %v3338
        %v3369 = vadd.f32 %v3239, %v3341
        %v3370 = vadd.f32 %v3240, %v3346
        %v3371 = vadd.f32 %v3241, %v3349
        %v3372 = vadd.f32 %v3242, %v3354
        %v3373 = vadd.f32 %v3243, %v3357
        %v3374 = vadd.f32 %v3244, %v3362
        %v3375 = vadd.f32 %v3245, %v3365
        %v3376 = vld [vmem:[%s2221] sm:$0xf]
        %v3377 = vld [vmem:[%s2221 + $0x4] sm:$0x1]
        %v3378 = vld [vmem:[%s2221 + $0x8] sm:$0xf]
        %v3379 = vld [vmem:[%s2221 + $0xc] sm:$0x1]
        %v3380 = vld [vmem:[%s2221 + $0x10] sm:$0xf]
        %v3381 = vld [vmem:[%s2221 + $0x14] sm:$0x1]
        %v3382 = vld [vmem:[%s2221 + $0x18] sm:$0xf]
        %v3383 = vld [vmem:[%s2221 + $0x1c] sm:$0x1]
        %v3384 = vld [vmem:[%s2221 + $0x20] sm:$0xf]
        %v3385 = vld [vmem:[%s2221 + $0x24] sm:$0x1]
        %v3386 = vld [vmem:[%s2221 + $0x28] sm:$0xf]
        %v3387 = vld [vmem:[%s2221 + $0x2c] sm:$0x1]
        %v3388 = vld [vmem:[%s2221 + $0x30] sm:$0xf]
        %v3389 = vld [vmem:[%s2221 + $0x34] sm:$0x1]
        %v3390 = vld [vmem:[%s2221 + $0x38] sm:$0xf]
        %v3391 = vld [vmem:[%s2221 + $0x3c] sm:$0x1]
        %v3393 = vshrl.u32 %v3376, 16
        %v3395 = vrot.slane %v3393, 4
        %v3396 = vshll.u32 %v3376, 16
        %v3398 = vrot.slane %v3396, 5
        %v3399 = vor.u32 %v3395, %v3398
        %v3400 = vrot.slane %v3399, 4
        %v3402 = vshll.u32 %v3377, 16
        %v3404 = vrot.slane %v3402, 5
        %v3405 = vsel %vm2745, %v3400, %v3404
        %v3407 = vshrl.u32 %v3378, 16
        %v3409 = vrot.slane %v3407, 4
        %v3410 = vshll.u32 %v3378, 16
        %v3412 = vrot.slane %v3410, 5
        %v3413 = vor.u32 %v3409, %v3412
        %v3414 = vrot.slane %v3413, 4
        %v3416 = vshll.u32 %v3379, 16
        %v3418 = vrot.slane %v3416, 5
        %v3419 = vsel %vm2745, %v3414, %v3418
        %v3421 = vshrl.u32 %v3380, 16
        %v3423 = vrot.slane %v3421, 4
        %v3424 = vshll.u32 %v3380, 16
        %v3426 = vrot.slane %v3424, 5
        %v3427 = vor.u32 %v3423, %v3426
        %v3428 = vrot.slane %v3427, 4
        %v3430 = vshll.u32 %v3381, 16
        %v3432 = vrot.slane %v3430, 5
        %v3433 = vsel %vm2745, %v3428, %v3432
        %v3435 = vshrl.u32 %v3382, 16
        %v3437 = vrot.slane %v3435, 4
        %v3438 = vshll.u32 %v3382, 16
        %v3440 = vrot.slane %v3438, 5
        %v3441 = vor.u32 %v3437, %v3440
        %v3442 = vrot.slane %v3441, 4
        %v3444 = vshll.u32 %v3383, 16
        %v3446 = vrot.slane %v3444, 5
        %v3447 = vsel %vm2745, %v3442, %v3446
        %v3449 = vshrl.u32 %v3384, 16
        %v3451 = vrot.slane %v3449, 4
        %v3452 = vshll.u32 %v3384, 16
        %v3454 = vrot.slane %v3452, 5
        %v3455 = vor.u32 %v3451, %v3454
        %v3456 = vrot.slane %v3455, 4
        %v3458 = vshll.u32 %v3385, 16
        %v3460 = vrot.slane %v3458, 5
        %v3461 = vsel %vm2745, %v3456, %v3460
        %v3463 = vshrl.u32 %v3386, 16
        %v3465 = vrot.slane %v3463, 4
        %v3466 = vshll.u32 %v3386, 16
        %v3468 = vrot.slane %v3466, 5
        %v3469 = vor.u32 %v3465, %v3468
        %v3470 = vrot.slane %v3469, 4
        %v3472 = vshll.u32 %v3387, 16
        %v3474 = vrot.slane %v3472, 5
        %v3475 = vsel %vm2745, %v3470, %v3474
        %v3477 = vshrl.u32 %v3388, 16
        %v3479 = vrot.slane %v3477, 4
        %v3480 = vshll.u32 %v3388, 16
        %v3482 = vrot.slane %v3480, 5
        %v3483 = vor.u32 %v3479, %v3482
        %v3484 = vrot.slane %v3483, 4
        %v3486 = vshll.u32 %v3389, 16
        %v3488 = vrot.slane %v3486, 5
        %v3489 = vsel %vm2745, %v3484, %v3488
        %v3491 = vshrl.u32 %v3390, 16
        %v3493 = vrot.slane %v3491, 4
        %v3494 = vshll.u32 %v3390, 16
        %v3496 = vrot.slane %v3494, 5
        %v3497 = vor.u32 %v3493, %v3496
        %v3498 = vrot.slane %v3497, 4
        %v3500 = vshll.u32 %v3391, 16
        %v3502 = vrot.slane %v3500, 5
        %v3503 = vsel %vm2745, %v3498, %v3502
        %s3504 = scalar_lea.vmem %s2, 64
        %v3505 = vld [vmem:[%s3504] sm:$0xf]
        %v3506 = vld [vmem:[%s3504 + $0x4] sm:$0xf]
        %v3507 = vld [vmem:[%s3504 + $0x8] sm:$0xf]
        %v3508 = vld [vmem:[%s3504 + $0xc] sm:$0xf]
        %v3509 = vunpack.c.l.b16 %v3405
        %v3510 = vunpack.c.l.b16 %v3419
        %v3511 = vunpack.c.l.b16 %v3433
        %v3512 = vunpack.c.l.b16 %v3447
        %v3513 = vunpack.c.l.b16 %v3461
        %v3514 = vunpack.c.l.b16 %v3475
        %v3515 = vunpack.c.l.b16 %v3489
        %v3516 = vunpack.c.l.b16 %v3503
        %v3517 = vpack.c.b16 %v3510, %v3509
        %v3518 = vpack.c.b16 %v3512, %v3511
        %v3519 = vpack.c.b16 %v3514, %v3513
        %v3520 = vpack.c.b16 %v3516, %v3515
        %v3525 = vunpack.c.l.b16 %v3505
        %v3526 = vunpack.c.l.b16 %v3506
        %v3527 = vunpack.c.l.b16 %v3507
        %v3528 = vunpack.c.l.b16 %v3508
        %v3529 = vpack.c.b16 %v3526, %v3525
        %v3530 = vpack.c.b16 %v3528, %v3527
        %v3534 = vsel %vm628, %v3517, 0
        %v3537 = vsel %vm628, %v3518, 0
        %v3540 = vsel %vm628, %v3519, 0
        %v3543 = vsel %vm628, %v3520, 0
        %3545 = vmatprep.subr.bf16.mxu0 0
        %3546 = vmatpush1.bf16.msra.mxu0 %v3529
        %3547 = vmatprep.subr.bf16.mxu0 0
        %3548 = vmatpush1.bf16.msra.mxu0 %v3530
        %3549 = vmatprep.subr.bf16.mxu0 0
        %3550 = vmatpush1.bf16.msra.mxu0 0
        %3551 = vmatprep.subr.bf16.mxu0 0
        %3552 = vmatpush1.bf16.msra.mxu0 0
        %3553 = vmatprep.subr.bf16.mxu0 0
        %3554 = vmatpush1.bf16.msra.mxu0 0
        %3555 = vmatprep.subr.bf16.mxu0 0
        %3556 = vmatpush1.bf16.msra.mxu0 0
        %3557 = vmatprep.subr.bf16.mxu0 0
        %3558 = vmatpush1.bf16.msra.mxu0 0
        %3559 = vmatprep.subr.bf16.mxu0 0
        %3560 = vmatpush1.bf16.msra.mxu0 0
        %3561 = vmatprep.subr.bf16.mxu0 0
        %3562 = vmatpush1.bf16.msra.mxu0 0
        %3563 = vmatprep.subr.bf16.mxu0 0
        %3564 = vmatpush1.bf16.msra.mxu0 0
        %3565 = vmatprep.subr.bf16.mxu0 0
        %3566 = vmatpush1.bf16.msra.mxu0 0
        %3567 = vmatprep.subr.bf16.mxu0 0
        %3568 = vmatpush1.bf16.msra.mxu0 0
        %3569 = vmatprep.subr.bf16.mxu0 0
        %3570 = vmatpush1.bf16.msra.mxu0 0
        %3571 = vmatprep.subr.bf16.mxu0 0
        %3572 = vmatpush1.bf16.msra.mxu0 0
        %3573 = vmatprep.subr.bf16.mxu0 0
        %3574 = vmatpush1.bf16.msra.mxu0 0
        %3575 = vmatprep.subr.bf16.mxu0 0
        %3576 = vmatpush1.bf16.msra.mxu0 0
        %3577 = vmatprep.mubr.bf16.mxu0 0
        %3578 = vmatmul.mubr.bf16.gmra.mrb[0].mxu0 %v3534
        %v3579 = vpop.f32.mrb[0].mxu0
        %v3580 = vadd.f32 0.0, %v3579
        %v3581 = vpop.f32.mrb[0].mxu0
        %v3582 = vpop.f32.mrb[0].mxu0
        %v3583 = vadd.f32 0.0, %v3582
        %v3584 = vpop.f32.mrb[0].mxu0
        %3585 = vmatprep.mubr.bf16.mxu0 0
        %3586 = vmatmul.mubr.bf16.gmra.mrb[0].mxu0 %v3537
        %v3587 = vpop.f32.mrb[0].mxu0
        %v3588 = vadd.f32 0.0, %v3587
        %v3589 = vpop.f32.mrb[0].mxu0
        %v3590 = vpop.f32.mrb[0].mxu0
        %v3591 = vadd.f32 0.0, %v3590
        %v3592 = vpop.f32.mrb[0].mxu0
        %3593 = vmatprep.mubr.bf16.mxu0 0
        %3594 = vmatmul.mubr.bf16.gmra.mrb[0].mxu0 %v3540
        %v3595 = vpop.f32.mrb[0].mxu0
        %v3596 = vadd.f32 0.0, %v3595
        %v3597 = vpop.f32.mrb[0].mxu0
        %v3598 = vpop.f32.mrb[0].mxu0
        %v3599 = vadd.f32 0.0, %v3598
        %v3600 = vpop.f32.mrb[0].mxu0
        %3601 = vmatprep.mubr.bf16.mxu0 0
        %3602 = vmatmul.mubr.bf16.gmra.mrb[0].mxu0 %v3543
        %v3603 = vpop.f32.mrb[0].mxu0
        %v3604 = vadd.f32 0.0, %v3603
        %v3605 = vpop.f32.mrb[0].mxu0
        %v3606 = vpop.f32.mrb[0].mxu0
        %v3607 = vadd.f32 0.0, %v3606
        %v3608 = vpop.f32.mrb[0].mxu0
        %3609 = vdwg.mxu0
        %v3610 = vadd.f32 %v3368, %v3580
        %v3611 = vadd.f32 %v3369, %v3583
        %v3612 = vadd.f32 %v3370, %v3588
        %v3613 = vadd.f32 %v3371, %v3591
        %v3614 = vadd.f32 %v3372, %v3596
        %v3615 = vadd.f32 %v3373, %v3599
        %v3616 = vadd.f32 %v3374, %v3604
        %v3617 = vadd.f32 %v3375, %v3607
        %v3618 = vld [vmem:[%s2221] sm:$0xe]
        %v3619 = vld [vmem:[%s2221 + $0x8] sm:$0xe]
        %v3620 = vld [vmem:[%s2221 + $0x10] sm:$0xe]
        %v3621 = vld [vmem:[%s2221 + $0x18] sm:$0xe]
        %v3622 = vld [vmem:[%s2221 + $0x20] sm:$0xe]
        %v3623 = vld [vmem:[%s2221 + $0x28] sm:$0xe]
        %v3624 = vld [vmem:[%s2221 + $0x30] sm:$0xe]
        %v3625 = vld [vmem:[%s2221 + $0x38] sm:$0xe]
        %v3642 = vrot.slane %v3618, 5
        %v3643 = vrot.slane %v3642, 4
        %v3644 = vrot.slane %v3377, 5
        %v3645 = vsel %vm3099, %v3643, %v3644
        %v3646 = vrot.slane %v3619, 5
        %v3647 = vrot.slane %v3646, 4
        %v3648 = vrot.slane %v3379, 5
        %v3649 = vsel %vm3099, %v3647, %v3648
        %v3650 = vrot.slane %v3620, 5
        %v3651 = vrot.slane %v3650, 4
        %v3652 = vrot.slane %v3381, 5
        %v3653 = vsel %vm3099, %v3651, %v3652
        %v3654 = vrot.slane %v3621, 5
        %v3655 = vrot.slane %v3654, 4
        %v3656 = vrot.slane %v3383, 5
        %v3657 = vsel %vm3099, %v3655, %v3656
        %v3658 = vrot.slane %v3622, 5
        %v3659 = vrot.slane %v3658, 4
        %v3660 = vrot.slane %v3385, 5
        %v3661 = vsel %vm3099, %v3659, %v3660
        %v3662 = vrot.slane %v3623, 5
        %v3663 = vrot.slane %v3662, 4
        %v3664 = vrot.slane %v3387, 5
        %v3665 = vsel %vm3099, %v3663, %v3664
        %v3666 = vrot.slane %v3624, 5
        %v3667 = vrot.slane %v3666, 4
        %v3668 = vrot.slane %v3389, 5
        %v3669 = vsel %vm3099, %v3667, %v3668
        %v3670 = vrot.slane %v3625, 5
        %v3671 = vrot.slane %v3670, 4
        %v3672 = vrot.slane %v3391, 5
        %v3673 = vsel %vm3099, %v3671, %v3672
        %s3674 = scalar_lea.vmem %s2, 80
        %v3675 = vld [vmem:[%s3674] sm:$0xf]
        %v3676 = vld [vmem:[%s3674 + $0x4] sm:$0xf]
        %v3677 = vld [vmem:[%s3674 + $0x8] sm:$0xf]
        %v3678 = vld [vmem:[%s3674 + $0xc] sm:$0xf]
        %v3679 = vunpack.c.l.b16 %v3645
        %v3680 = vunpack.c.l.b16 %v3649
        %v3681 = vunpack.c.l.b16 %v3653
        %v3682 = vunpack.c.l.b16 %v3657
        %v3683 = vunpack.c.l.b16 %v3661
        %v3684 = vunpack.c.l.b16 %v3665
        %v3685 = vunpack.c.l.b16 %v3669
        %v3686 = vunpack.c.l.b16 %v3673
        %v3687 = vpack.c.b16 %v3680, %v3679
        %v3688 = vpack.c.b16 %v3682, %v3681
        %v3689 = vpack.c.b16 %v3684, %v3683
        %v3690 = vpack.c.b16 %v3686, %v3685
        %v3695 = vunpack.c.l.b16 %v3675
        %v3696 = vunpack.c.l.b16 %v3676
        %v3697 = vunpack.c.l.b16 %v3677
        %v3698 = vunpack.c.l.b16 %v3678
        %v3699 = vpack.c.b16 %v3696, %v3695
        %v3700 = vpack.c.b16 %v3698, %v3697
        %v3704 = vsel %vm628, %v3687, 0
        %v3707 = vsel %vm628, %v3688, 0
        %v3710 = vsel %vm628, %v3689, 0
        %v3713 = vsel %vm628, %v3690, 0
        %3715 = vmatprep.subr.bf16.mxu0 0
        %3716 = vmatpush1.bf16.msra.mxu0 %v3699
        %3717 = vmatprep.subr.bf16.mxu0 0
        %3718 = vmatpush1.bf16.msra.mxu0 %v3700
        %3719 = vmatprep.subr.bf16.mxu0 0
        %3720 = vmatpush1.bf16.msra.mxu0 0
        %3721 = vmatprep.subr.bf16.mxu0 0
        %3722 = vmatpush1.bf16.msra.mxu0 0
        %3723 = vmatprep.subr.bf16.mxu0 0
        %3724 = vmatpush1.bf16.msra.mxu0 0
        %3725 = vmatprep.subr.bf16.mxu0 0
        %3726 = vmatpush1.bf16.msra.mxu0 0
        %3727 = vmatprep.subr.bf16.mxu0 0
        %3728 = vmatpush1.bf16.msra.mxu0 0
        %3729 = vmatprep.subr.bf16.mxu0 0
        %3730 = vmatpush1.bf16.msra.mxu0 0
        %3731 = vmatprep.subr.bf16.mxu0 0
        %3732 = vmatpush1.bf16.msra.mxu0 0
        %3733 = vmatprep.subr.bf16.mxu0 0
        %3734 = vmatpush1.bf16.msra.mxu0 0
        %3735 = vmatprep.subr.bf16.mxu0 0
        %3736 = vmatpush1.bf16.msra.mxu0 0
        %3737 = vmatprep.subr.bf16.mxu0 0
        %3738 = vmatpush1.bf16.msra.mxu0 0
        %3739 = vmatprep.subr.bf16.mxu0 0
        %3740 = vmatpush1.bf16.msra.mxu0 0
        %3741 = vmatprep.subr.bf16.mxu0 0
        %3742 = vmatpush1.bf16.msra.mxu0 0
        %3743 = vmatprep.subr.bf16.mxu0 0
        %3744 = vmatpush1.bf16.msra.mxu0 0
        %3745 = vmatprep.subr.bf16.mxu0 0
        %3746 = vmatpush1.bf16.msra.mxu0 0
        %3747 = vmatprep.mubr.bf16.mxu0 0
        %3748 = vmatmul.mubr.bf16.gmra.mrb[0].mxu0 %v3704
        %v3749 = vpop.f32.mrb[0].mxu0
        %v3750 = vadd.f32 0.0, %v3749
        %v3751 = vpop.f32.mrb[0].mxu0
        %v3752 = vpop.f32.mrb[0].mxu0
        %v3753 = vadd.f32 0.0, %v3752
        %v3754 = vpop.f32.mrb[0].mxu0
        %3755 = vmatprep.mubr.bf16.mxu0 0
        %3756 = vmatmul.mubr.bf16.gmra.mrb[0].mxu0 %v3707
        %v3757 = vpop.f32.mrb[0].mxu0
        %v3758 = vadd.f32 0.0, %v3757
        %v3759 = vpop.f32.mrb[0].mxu0
        %v3760 = vpop.f32.mrb[0].mxu0
        %v3761 = vadd.f32 0.0, %v3760
        %v3762 = vpop.f32.mrb[0].mxu0
        %3763 = vmatprep.mubr.bf16.mxu0 0
        %3764 = vmatmul.mubr.bf16.gmra.mrb[0].mxu0 %v3710
        %v3765 = vpop.f32.mrb[0].mxu0
        %v3766 = vadd.f32 0.0, %v3765
        %v3767 = vpop.f32.mrb[0].mxu0
        %v3768 = vpop.f32.mrb[0].mxu0
        %v3769 = vadd.f32 0.0, %v3768
        %v3770 = vpop.f32.mrb[0].mxu0
        %3771 = vmatprep.mubr.bf16.mxu0 0
        %3772 = vmatmul.mubr.bf16.gmra.mrb[0].mxu0 %v3713
        %v3773 = vpop.f32.mrb[0].mxu0
        %v3774 = vadd.f32 0.0, %v3773
        %v3775 = vpop.f32.mrb[0].mxu0
        %v3776 = vpop.f32.mrb[0].mxu0
        %v3777 = vadd.f32 0.0, %v3776
        %v3778 = vpop.f32.mrb[0].mxu0
        %3779 = vdwg.mxu0
        %v3780 = vadd.f32 %v3610, %v3750
        %v3781 = vadd.f32 %v3611, %v3753
        %v3782 = vadd.f32 %v3612, %v3758
        %v3783 = vadd.f32 %v3613, %v3761
        %v3784 = vadd.f32 %v3614, %v3766
        %v3785 = vadd.f32 %v3615, %v3769
        %v3786 = vadd.f32 %v3616, %v3774
        %v3787 = vadd.f32 %v3617, %v3777
        %s3788 = scalar_lea.vmem [#allocation2], 16
        %v3789 = vld [vmem:[%s3788] sm:$0xf]
        %v3790 = vld [vmem:[%s3788 + $0x8] sm:$0xf]
        %v3791 = vld [vmem:[%s3788 + $0x10] sm:$0xf]
        %v3792 = vld [vmem:[%s3788 + $0x18] sm:$0xf]
        %v3793 = vld [vmem:[%s3788 + $0x20] sm:$0xf]
        %v3794 = vld [vmem:[%s3788 + $0x28] sm:$0xf]
        %v3795 = vld [vmem:[%s3788 + $0x30] sm:$0xf]
        %v3796 = vld [vmem:[%s3788 + $0x38] sm:$0xf]
        %s3797 = scalar_lea.vmem %s2, 96
        %v3798 = vld [vmem:[%s3797] sm:$0xf]
        %v3799 = vld [vmem:[%s3797 + $0x4] sm:$0xf]
        %v3800 = vld [vmem:[%s3797 + $0x8] sm:$0xf]
        %v3801 = vld [vmem:[%s3797 + $0xc] sm:$0xf]
        %v3810 = vunpack.c.l.b16 %v3789
        %v3811 = vunpack.c.l.b16 %v3790
        %v3812 = vunpack.c.l.b16 %v3791
        %v3813 = vunpack.c.l.b16 %v3792
        %v3814 = vunpack.c.l.b16 %v3793
        %v3815 = vunpack.c.l.b16 %v3794
        %v3816 = vunpack.c.l.b16 %v3795
        %v3817 = vunpack.c.l.b16 %v3796
        %v3818 = vpack.c.b16 %v3811, %v3810
        %v3819 = vpack.c.b16 %v3813, %v3812
        %v3820 = vpack.c.b16 %v3815, %v3814
        %v3821 = vpack.c.b16 %v3817, %v3816
        %v3826 = vunpack.c.l.b16 %v3798
        %v3827 = vunpack.c.l.b16 %v3799
        %v3828 = vunpack.c.l.b16 %v3800
        %v3829 = vunpack.c.l.b16 %v3801
        %v3830 = vpack.c.b16 %v3827, %v3826
        %v3831 = vpack.c.b16 %v3829, %v3828
        %v3835 = vsel %vm628, %v3818, 0
        %v3838 = vsel %vm628, %v3819, 0
        %v3841 = vsel %vm628, %v3820, 0
        %v3844 = vsel %vm628, %v3821, 0
        %3846 = vmatprep.subr.bf16.mxu0 0
        %3847 = vmatpush1.bf16.msra.mxu0 %v3830
        %3848 = vmatprep.subr.bf16.mxu0 0
        %3849 = vmatpush1.bf16.msra.mxu0 %v3831
        %3850 = vmatprep.subr.bf16.mxu0 0
        %3851 = vmatpush1.bf16.msra.mxu0 0
        %3852 = vmatprep.subr.bf16.mxu0 0
        %3853 = vmatpush1.bf16.msra.mxu0 0
        %3854 = vmatprep.subr.bf16.mxu0 0
        %3855 = vmatpush1.bf16.msra.mxu0 0
        %3856 = vmatprep.subr.bf16.mxu0 0
        %3857 = vmatpush1.bf16.msra.mxu0 0
        %3858 = vmatprep.subr.bf16.mxu0 0
        %3859 = vmatpush1.bf16.msra.mxu0 0
        %3860 = vmatprep.subr.bf16.mxu0 0
        %3861 = vmatpush1.bf16.msra.mxu0 0
        %3862 = vmatprep.subr.bf16.mxu0 0
        %3863 = vmatpush1.bf16.msra.mxu0 0
        %3864 = vmatprep.subr.bf16.mxu0 0
        %3865 = vmatpush1.bf16.msra.mxu0 0
        %3866 = vmatprep.subr.bf16.mxu0 0
        %3867 = vmatpush1.bf16.msra.mxu0 0
        %3868 = vmatprep.subr.bf16.mxu0 0
        %3869 = vmatpush1.bf16.msra.mxu0 0
        %3870 = vmatprep.subr.bf16.mxu0 0
        %3871 = vmatpush1.bf16.msra.mxu0 0
        %3872 = vmatprep.subr.bf16.mxu0 0
        %3873 = vmatpush1.bf16.msra.mxu0 0
        %3874 = vmatprep.subr.bf16.mxu0 0
        %3875 = vmatpush1.bf16.msra.mxu0 0
        %3876 = vmatprep.subr.bf16.mxu0 0
        %3877 = vmatpush1.bf16.msra.mxu0 0
        %3878 = vmatprep.mubr.bf16.mxu0 0
        %3879 = vmatmul.mubr.bf16.gmra.mrb[0].mxu0 %v3835
        %v3880 = vpop.f32.mrb[0].mxu0
        %v3881 = vadd.f32 0.0, %v3880
        %v3882 = vpop.f32.mrb[0].mxu0
        %v3883 = vpop.f32.mrb[0].mxu0
        %v3884 = vadd.f32 0.0, %v3883
        %v3885 = vpop.f32.mrb[0].mxu0
        %3886 = vmatprep.mubr.bf16.mxu0 0
        %3887 = vmatmul.mubr.bf16.gmra.mrb[0].mxu0 %v3838
        %v3888 = vpop.f32.mrb[0].mxu0
        %v3889 = vadd.f32 0.0, %v3888
        %v3890 = vpop.f32.mrb[0].mxu0
        %v3891 = vpop.f32.mrb[0].mxu0
        %v3892 = vadd.f32 0.0, %v3891
        %v3893 = vpop.f32.mrb[0].mxu0
        %3894 = vmatprep.mubr.bf16.mxu0 0
        %3895 = vmatmul.mubr.bf16.gmra.mrb[0].mxu0 %v3841
        %v3896 = vpop.f32.mrb[0].mxu0
        %v3897 = vadd.f32 0.0, %v3896
        %v3898 = vpop.f32.mrb[0].mxu0
        %v3899 = vpop.f32.mrb[0].mxu0
        %v3900 = vadd.f32 0.0, %v3899
        %v3901 = vpop.f32.mrb[0].mxu0
        %3902 = vmatprep.mubr.bf16.mxu0 0
        %3903 = vmatmul.mubr.bf16.gmra.mrb[0].mxu0 %v3844
        %v3904 = vpop.f32.mrb[0].mxu0
        %v3905 = vadd.f32 0.0, %v3904
        %v3906 = vpop.f32.mrb[0].mxu0
        %v3907 = vpop.f32.mrb[0].mxu0
        %v3908 = vadd.f32 0.0, %v3907
        %v3909 = vpop.f32.mrb[0].mxu0
        %3910 = vdwg.mxu0
        %v3911 = vadd.f32 %v3780, %v3881
        %v3912 = vadd.f32 %v3781, %v3884
        %v3913 = vadd.f32 %v3782, %v3889
        %v3914 = vadd.f32 %v3783, %v3892
        %v3915 = vadd.f32 %v3784, %v3897
        %v3916 = vadd.f32 %v3785, %v3900
        %v3917 = vadd.f32 %v3786, %v3905
        %v3918 = vadd.f32 %v3787, %v3908
        %v3919 = vld [vmem:[%s3788] sm:$0xf]
        %v3920 = vld [vmem:[%s3788 + $0x4] sm:$0x1]
        %v3921 = vld [vmem:[%s3788 + $0x8] sm:$0xf]
        %v3922 = vld [vmem:[%s3788 + $0xc] sm:$0x1]
        %v3923 = vld [vmem:[%s3788 + $0x10] sm:$0xf]
        %v3924 = vld [vmem:[%s3788 + $0x14] sm:$0x1]
        %v3925 = vld [vmem:[%s3788 + $0x18] sm:$0xf]
        %v3926 = vld [vmem:[%s3788 + $0x1c] sm:$0x1]
        %v3927 = vld [vmem:[%s3788 + $0x20] sm:$0xf]
        %v3928 = vld [vmem:[%s3788 + $0x24] sm:$0x1]
        %v3929 = vld [vmem:[%s3788 + $0x28] sm:$0xf]
        %v3930 = vld [vmem:[%s3788 + $0x2c] sm:$0x1]
        %v3931 = vld [vmem:[%s3788 + $0x30] sm:$0xf]
        %v3932 = vld [vmem:[%s3788 + $0x34] sm:$0x1]
        %v3933 = vld [vmem:[%s3788 + $0x38] sm:$0xf]
        %v3934 = vld [vmem:[%s3788 + $0x3c] sm:$0x1]
        %v3936 = vshrl.u32 %v3919, 16
        %v3938 = vrot.slane %v3936, 4
        %v3939 = vshll.u32 %v3919, 16
        %v3941 = vrot.slane %v3939, 5
        %v3942 = vor.u32 %v3938, %v3941
        %v3943 = vrot.slane %v3942, 4
        %v3945 = vshll.u32 %v3920, 16
        %v3947 = vrot.slane %v3945, 5
        %v3948 = vsel %vm2745, %v3943, %v3947
        %v3950 = vshrl.u32 %v3921, 16
        %v3952 = vrot.slane %v3950, 4
        %v3953 = vshll.u32 %v3921, 16
        %v3955 = vrot.slane %v3953, 5
        %v3956 = vor.u32 %v3952, %v3955
        %v3957 = vrot.slane %v3956, 4
        %v3959 = vshll.u32 %v3922, 16
        %v3961 = vrot.slane %v3959, 5
        %v3962 = vsel %vm2745, %v3957, %v3961
        %v3964 = vshrl.u32 %v3923, 16
        %v3966 = vrot.slane %v3964, 4
        %v3967 = vshll.u32 %v3923, 16
        %v3969 = vrot.slane %v3967, 5
        %v3970 = vor.u32 %v3966, %v3969
        %v3971 = vrot.slane %v3970, 4
        %v3973 = vshll.u32 %v3924, 16
        %v3975 = vrot.slane %v3973, 5
        %v3976 = vsel %vm2745, %v3971, %v3975
        %v3978 = vshrl.u32 %v3925, 16
        %v3980 = vrot.slane %v3978, 4
        %v3981 = vshll.u32 %v3925, 16
        %v3983 = vrot.slane %v3981, 5
        %v3984 = vor.u32 %v3980, %v3983
        %v3985 = vrot.slane %v3984, 4
        %v3987 = vshll.u32 %v3926, 16
        %v3989 = vrot.slane %v3987, 5
        %v3990 = vsel %vm2745, %v3985, %v3989
        %v3992 = vshrl.u32 %v3927, 16
        %v3994 = vrot.slane %v3992, 4
        %v3995 = vshll.u32 %v3927, 16
        %v3997 = vrot.slane %v3995, 5
        %v3998 = vor.u32 %v3994, %v3997
        %v3999 = vrot.slane %v3998, 4
        %v4001 = vshll.u32 %v3928, 16
        %v4003 = vrot.slane %v4001, 5
        %v4004 = vsel %vm2745, %v3999, %v4003
        %v4006 = vshrl.u32 %v3929, 16
        %v4008 = vrot.slane %v4006, 4
        %v4009 = vshll.u32 %v3929, 16
        %v4011 = vrot.slane %v4009, 5
        %v4012 = vor.u32 %v4008, %v4011
        %v4013 = vrot.slane %v4012, 4
        %v4015 = vshll.u32 %v3930, 16
        %v4017 = vrot.slane %v4015, 5
        %v4018 = vsel %vm2745, %v4013, %v4017
        %v4020 = vshrl.u32 %v3931, 16
        %v4022 = vrot.slane %v4020, 4
        %v4023 = vshll.u32 %v3931, 16
        %v4025 = vrot.slane %v4023, 5
        %v4026 = vor.u32 %v4022, %v4025
        %v4027 = vrot.slane %v4026, 4
        %v4029 = vshll.u32 %v3932, 16
        %v4031 = vrot.slane %v4029, 5
        %v4032 = vsel %vm2745, %v4027, %v4031
        %v4034 = vshrl.u32 %v3933, 16
        %v4036 = vrot.slane %v4034, 4
        %v4037 = vshll.u32 %v3933, 16
        %v4039 = vrot.slane %v4037, 5
        %v4040 = vor.u32 %v4036, %v4039
        %v4041 = vrot.slane %v4040, 4
        %v4043 = vshll.u32 %v3934, 16
        %v4045 = vrot.slane %v4043, 5
        %v4046 = vsel %vm2745, %v4041, %v4045
        %s4047 = scalar_lea.vmem %s2, 112
        %v4048 = vld [vmem:[%s4047] sm:$0xf]
        %v4049 = vld [vmem:[%s4047 + $0x4] sm:$0xf]
        %v4050 = vld [vmem:[%s4047 + $0x8] sm:$0xf]
        %v4051 = vld [vmem:[%s4047 + $0xc] sm:$0xf]
        %v4052 = vunpack.c.l.b16 %v3948
        %v4053 = vunpack.c.l.b16 %v3962
        %v4054 = vunpack.c.l.b16 %v3976
        %v4055 = vunpack.c.l.b16 %v3990
        %v4056 = vunpack.c.l.b16 %v4004
        %v4057 = vunpack.c.l.b16 %v4018
        %v4058 = vunpack.c.l.b16 %v4032
        %v4059 = vunpack.c.l.b16 %v4046
        %v4060 = vpack.c.b16 %v4053, %v4052
        %v4061 = vpack.c.b16 %v4055, %v4054
        %v4062 = vpack.c.b16 %v4057, %v4056
        %v4063 = vpack.c.b16 %v4059, %v4058
        %v4068 = vunpack.c.l.b16 %v4048
        %v4069 = vunpack.c.l.b16 %v4049
        %v4070 = vunpack.c.l.b16 %v4050
        %v4071 = vunpack.c.l.b16 %v4051
        %v4072 = vpack.c.b16 %v4069, %v4068
        %v4073 = vpack.c.b16 %v4071, %v4070
        %v4077 = vsel %vm628, %v4060, 0
        %v4080 = vsel %vm628, %v4061, 0
        %v4083 = vsel %vm628, %v4062, 0
        %v4086 = vsel %vm628, %v4063, 0
        %4088 = vmatprep.subr.bf16.mxu0 0
        %4089 = vmatpush1.bf16.msra.mxu0 %v4072
        %4090 = vmatprep.subr.bf16.mxu0 0
        %4091 = vmatpush1.bf16.msra.mxu0 %v4073
        %4092 = vmatprep.subr.bf16.mxu0 0
        %4093 = vmatpush1.bf16.msra.mxu0 0
        %4094 = vmatprep.subr.bf16.mxu0 0
        %4095 = vmatpush1.bf16.msra.mxu0 0
        %4096 = vmatprep.subr.bf16.mxu0 0
        %4097 = vmatpush1.bf16.msra.mxu0 0
        %4098 = vmatprep.subr.bf16.mxu0 0
        %4099 = vmatpush1.bf16.msra.mxu0 0
        %4100 = vmatprep.subr.bf16.mxu0 0
        %4101 = vmatpush1.bf16.msra.mxu0 0
        %4102 = vmatprep.subr.bf16.mxu0 0
        %4103 = vmatpush1.bf16.msra.mxu0 0
        %4104 = vmatprep.subr.bf16.mxu0 0
        %4105 = vmatpush1.bf16.msra.mxu0 0
        %4106 = vmatprep.subr.bf16.mxu0 0
        %4107 = vmatpush1.bf16.msra.mxu0 0
        %4108 = vmatprep.subr.bf16.mxu0 0
        %4109 = vmatpush1.bf16.msra.mxu0 0
        %4110 = vmatprep.subr.bf16.mxu0 0
        %4111 = vmatpush1.bf16.msra.mxu0 0
        %4112 = vmatprep.subr.bf16.mxu0 0
        %4113 = vmatpush1.bf16.msra.mxu0 0
        %4114 = vmatprep.subr.bf16.mxu0 0
        %4115 = vmatpush1.bf16.msra.mxu0 0
        %4116 = vmatprep.subr.bf16.mxu0 0
        %4117 = vmatpush1.bf16.msra.mxu0 0
        %4118 = vmatprep.subr.bf16.mxu0 0
        %4119 = vmatpush1.bf16.msra.mxu0 0
        %4120 = vmatprep.mubr.bf16.mxu0 0
        %4121 = vmatmul.mubr.bf16.gmra.mrb[0].mxu0 %v4077
        %v4122 = vpop.f32.mrb[0].mxu0
        %v4123 = vadd.f32 0.0, %v4122
        %v4124 = vpop.f32.mrb[0].mxu0
        %v4125 = vpop.f32.mrb[0].mxu0
        %v4126 = vadd.f32 0.0, %v4125
        %v4127 = vpop.f32.mrb[0].mxu0
        %4128 = vmatprep.mubr.bf16.mxu0 0
        %4129 = vmatmul.mubr.bf16.gmra.mrb[0].mxu0 %v4080
        %v4130 = vpop.f32.mrb[0].mxu0
        %v4131 = vadd.f32 0.0, %v4130
        %v4132 = vpop.f32.mrb[0].mxu0
        %v4133 = vpop.f32.mrb[0].mxu0
        %v4134 = vadd.f32 0.0, %v4133
        %v4135 = vpop.f32.mrb[0].mxu0
        %4136 = vmatprep.mubr.bf16.mxu0 0
        %4137 = vmatmul.mubr.bf16.gmra.mrb[0].mxu0 %v4083
        %v4138 = vpop.f32.mrb[0].mxu0
        %v4139 = vadd.f32 0.0, %v4138
        %v4140 = vpop.f32.mrb[0].mxu0
        %v4141 = vpop.f32.mrb[0].mxu0
        %v4142 = vadd.f32 0.0, %v4141
        %v4143 = vpop.f32.mrb[0].mxu0
        %4144 = vmatprep.mubr.bf16.mxu0 0
        %4145 = vmatmul.mubr.bf16.gmra.mrb[0].mxu0 %v4086
        %v4146 = vpop.f32.mrb[0].mxu0
        %v4147 = vadd.f32 0.0, %v4146
        %v4148 = vpop.f32.mrb[0].mxu0
        %v4149 = vpop.f32.mrb[0].mxu0
        %v4150 = vadd.f32 0.0, %v4149
        %v4151 = vpop.f32.mrb[0].mxu0
        %4152 = vdwg.mxu0
        %v4153 = vadd.f32 %v3911, %v4123
        %v4154 = vadd.f32 %v3912, %v4126
        %v4155 = vadd.f32 %v3913, %v4131
        %v4156 = vadd.f32 %v3914, %v4134
        %v4157 = vadd.f32 %v3915, %v4139
        %v4158 = vadd.f32 %v3916, %v4142
        %v4159 = vadd.f32 %v3917, %v4147
        %v4160 = vadd.f32 %v3918, %v4150
        %v4161 = vld [vmem:[%s3788] sm:$0xe]
        %v4162 = vld [vmem:[%s3788 + $0x8] sm:$0xe]
        %v4163 = vld [vmem:[%s3788 + $0x10] sm:$0xe]
        %v4164 = vld [vmem:[%s3788 + $0x18] sm:$0xe]
        %v4165 = vld [vmem:[%s3788 + $0x20] sm:$0xe]
        %v4166 = vld [vmem:[%s3788 + $0x28] sm:$0xe]
        %v4167 = vld [vmem:[%s3788 + $0x30] sm:$0xe]
        %v4168 = vld [vmem:[%s3788 + $0x38] sm:$0xe]
        %v4185 = vrot.slane %v4161, 5
        %v4186 = vrot.slane %v4185, 4
        %v4187 = vrot.slane %v3920, 5
        %v4188 = vsel %vm3099, %v4186, %v4187
        %v4189 = vrot.slane %v4162, 5
        %v4190 = vrot.slane %v4189, 4
        %v4191 = vrot.slane %v3922, 5
        %v4192 = vsel %vm3099, %v4190, %v4191
        %v4193 = vrot.slane %v4163, 5
        %v4194 = vrot.slane %v4193, 4
        %v4195 = vrot.slane %v3924, 5
        %v4196 = vsel %vm3099, %v4194, %v4195
        %v4197 = vrot.slane %v4164, 5
        %v4198 = vrot.slane %v4197, 4
        %v4199 = vrot.slane %v3926, 5
        %v4200 = vsel %vm3099, %v4198, %v4199
        %v4201 = vrot.slane %v4165, 5
        %v4202 = vrot.slane %v4201, 4
        %v4203 = vrot.slane %v3928, 5
        %v4204 = vsel %vm3099, %v4202, %v4203
        %v4205 = vrot.slane %v4166, 5
        %v4206 = vrot.slane %v4205, 4
        %v4207 = vrot.slane %v3930, 5
        %v4208 = vsel %vm3099, %v4206, %v4207
        %v4209 = vrot.slane %v4167, 5
        %v4210 = vrot.slane %v4209, 4
        %v4211 = vrot.slane %v3932, 5
        %v4212 = vsel %vm3099, %v4210, %v4211
        %v4213 = vrot.slane %v4168, 5
        %v4214 = vrot.slane %v4213, 4
        %v4215 = vrot.slane %v3934, 5
        %v4216 = vsel %vm3099, %v4214, %v4215
        %s4217 = scalar_lea.vmem %s2, 128
        %v4218 = vld [vmem:[%s4217] sm:$0xf]
        %v4219 = vld [vmem:[%s4217 + $0x4] sm:$0xf]
        %v4220 = vld [vmem:[%s4217 + $0x8] sm:$0xf]
        %v4221 = vld [vmem:[%s4217 + $0xc] sm:$0xf]
        %v4222 = vunpack.c.l.b16 %v4188
        %v4223 = vunpack.c.l.b16 %v4192
        %v4224 = vunpack.c.l.b16 %v4196
        %v4225 = vunpack.c.l.b16 %v4200
        %v4226 = vunpack.c.l.b16 %v4204
        %v4227 = vunpack.c.l.b16 %v4208
        %v4228 = vunpack.c.l.b16 %v4212
        %v4229 = vunpack.c.l.b16 %v4216
        %v4230 = vpack.c.b16 %v4223, %v4222
        %v4231 = vpack.c.b16 %v4225, %v4224
        %v4232 = vpack.c.b16 %v4227, %v4226
        %v4233 = vpack.c.b16 %v4229, %v4228
        %v4238 = vunpack.c.l.b16 %v4218
        %v4239 = vunpack.c.l.b16 %v4219
        %v4240 = vunpack.c.l.b16 %v4220
        %v4241 = vunpack.c.l.b16 %v4221
        %v4242 = vpack.c.b16 %v4239, %v4238
        %v4243 = vpack.c.b16 %v4241, %v4240
        %v4247 = vsel %vm628, %v4230, 0
        %v4250 = vsel %vm628, %v4231, 0
        %v4253 = vsel %vm628, %v4232, 0
        %v4256 = vsel %vm628, %v4233, 0
        %4258 = vmatprep.subr.bf16.mxu0 0
        %4259 = vmatpush1.bf16.msra.mxu0 %v4242
        %4260 = vmatprep.subr.bf16.mxu0 0
        %4261 = vmatpush1.bf16.msra.mxu0 %v4243
        %4262 = vmatprep.subr.bf16.mxu0 0
        %4263 = vmatpush1.bf16.msra.mxu0 0
        %4264 = vmatprep.subr.bf16.mxu0 0
        %4265 = vmatpush1.bf16.msra.mxu0 0
        %4266 = vmatprep.subr.bf16.mxu0 0
        %4267 = vmatpush1.bf16.msra.mxu0 0
        %4268 = vmatprep.subr.bf16.mxu0 0
        %4269 = vmatpush1.bf16.msra.mxu0 0
        %4270 = vmatprep.subr.bf16.mxu0 0
        %4271 = vmatpush1.bf16.msra.mxu0 0
        %4272 = vmatprep.subr.bf16.mxu0 0
        %4273 = vmatpush1.bf16.msra.mxu0 0
        %4274 = vmatprep.subr.bf16.mxu0 0
        %4275 = vmatpush1.bf16.msra.mxu0 0
        %4276 = vmatprep.subr.bf16.mxu0 0
        %4277 = vmatpush1.bf16.msra.mxu0 0
        %4278 = vmatprep.subr.bf16.mxu0 0
        %4279 = vmatpush1.bf16.msra.mxu0 0
        %4280 = vmatprep.subr.bf16.mxu0 0
        %4281 = vmatpush1.bf16.msra.mxu0 0
        %4282 = vmatprep.subr.bf16.mxu0 0
        %4283 = vmatpush1.bf16.msra.mxu0 0
        %4284 = vmatprep.subr.bf16.mxu0 0
        %4285 = vmatpush1.bf16.msra.mxu0 0
        %4286 = vmatprep.subr.bf16.mxu0 0
        %4287 = vmatpush1.bf16.msra.mxu0 0
        %4288 = vmatprep.subr.bf16.mxu0 0
        %4289 = vmatpush1.bf16.msra.mxu0 0
        %4290 = vmatprep.mubr.bf16.mxu0 0
        %4291 = vmatmul.mubr.bf16.gmra.mrb[0].mxu0 %v4247
        %v4292 = vpop.f32.mrb[0].mxu0
        %v4293 = vadd.f32 0.0, %v4292
        %v4294 = vpop.f32.mrb[0].mxu0
        %v4295 = vpop.f32.mrb[0].mxu0
        %v4296 = vadd.f32 0.0, %v4295
        %v4297 = vpop.f32.mrb[0].mxu0
        %4298 = vmatprep.mubr.bf16.mxu0 0
        %4299 = vmatmul.mubr.bf16.gmra.mrb[0].mxu0 %v4250
        %v4300 = vpop.f32.mrb[0].mxu0
        %v4301 = vadd.f32 0.0, %v4300
        %v4302 = vpop.f32.mrb[0].mxu0
        %v4303 = vpop.f32.mrb[0].mxu0
        %v4304 = vadd.f32 0.0, %v4303
        %v4305 = vpop.f32.mrb[0].mxu0
        %4306 = vmatprep.mubr.bf16.mxu0 0
        %4307 = vmatmul.mubr.bf16.gmra.mrb[0].mxu0 %v4253
        %v4308 = vpop.f32.mrb[0].mxu0
        %v4309 = vadd.f32 0.0, %v4308
        %v4310 = vpop.f32.mrb[0].mxu0
        %v4311 = vpop.f32.mrb[0].mxu0
        %v4312 = vadd.f32 0.0, %v4311
        %v4313 = vpop.f32.mrb[0].mxu0
        %4314 = vmatprep.mubr.bf16.mxu0 0
        %4315 = vmatmul.mubr.bf16.gmra.mrb[0].mxu0 %v4256
        %v4316 = vpop.f32.mrb[0].mxu0
        %v4317 = vadd.f32 0.0, %v4316
        %v4318 = vpop.f32.mrb[0].mxu0
        %v4319 = vpop.f32.mrb[0].mxu0
        %v4320 = vadd.f32 0.0, %v4319
        %v4321 = vpop.f32.mrb[0].mxu0
        %4322 = vdwg.mxu0
        %v4323 = vadd.f32 %v4153, %v4293
        %v4324 = vadd.f32 %v4154, %v4296
        %v4325 = vadd.f32 %v4155, %v4301
        %v4326 = vadd.f32 %v4156, %v4304
        %v4327 = vadd.f32 %v4157, %v4309
        %v4328 = vadd.f32 %v4158, %v4312
        %v4329 = vadd.f32 %v4159, %v4317
        %v4330 = vadd.f32 %v4160, %v4320
        %v4331 = vld [vmem:[%s8] sm:$0x1]
        %v4333 = vlaneseq
        %v4334 = vshrl.u32 %v4333, 7
        %v4335 = vsub.s32 0, %v4334
        %v4336 = vrot.slane %v4331, %v4335
        %v4338 = vadd.f32 %v4323, %v4336
        %v4339 = vadd.f32 %v4324, %v4336
        %v4340 = vadd.f32 %v4325, %v4336
        %v4341 = vadd.f32 %v4326, %v4336
        %v4342 = vadd.f32 %v4327, %v4336
        %v4343 = vadd.f32 %v4328, %v4336
        %v4344 = vadd.f32 %v4329, %v4336
        %v4345 = vadd.f32 %v4330, %v4336
        %v4346 = vmax.f32 %v4338, 0.0
        %v4347 = vmax.f32 %v4339, 0.0
        %v4348 = vmax.f32 %v4340, 0.0
        %v4349 = vmax.f32 %v4341, 0.0
        %v4350 = vmax.f32 %v4342, 0.0
        %v4351 = vmax.f32 %v4343, 0.0
        %v4352 = vmax.f32 %v4344, 0.0
        %v4353 = vmax.f32 %v4345, 0.0
        %v4362 = vcombine.high %v4346, %v4346
        %v4364 = vunpack.c.l.s4 1983009808
        %v4365 = vunpack.c.0.s8 %v4364
        %v4366 = vlaneseq
        %v4367 = vshrl.u32 %v4366, 7
        %v4368 = vsub.s32 %v4365, %v4367
        %v4369 = vrot.slane %v4346, %v4368
        %v4371 = vunpack.c.l.s4 1983009808
        %v4372 = vunpack.c.0.s8 %v4371
        %v4373 = vlaneseq
        %v4374 = vshrl.u32 %v4373, 7
        %v4375 = vsub.s32 %v4372, %v4374
        %v4376 = vrot.slane %v4362, %v4375
        %v4377 = vcombine.high %v4369, %v4369
        %v4378 = vcombine.high %v4376, %v4376
        %v4379 = vcombine.high %v4347, %v4347
        %v4381 = vunpack.c.l.s4 1983009808
        %v4382 = vunpack.c.0.s8 %v4381
        %v4383 = vlaneseq
        %v4384 = vshrl.u32 %v4383, 7
        %v4385 = vsub.s32 %v4382, %v4384
        %v4386 = vrot.slane %v4347, %v4385
        %v4388 = vunpack.c.l.s4 1983009808
        %v4389 = vunpack.c.0.s8 %v4388
        %v4390 = vlaneseq
        %v4391 = vshrl.u32 %v4390, 7
        %v4392 = vsub.s32 %v4389, %v4391
        %v4393 = vrot.slane %v4379, %v4392
        %v4394 = vcombine.high %v4386, %v4386
        %v4395 = vcombine.high %v4393, %v4393
        %v4396 = vcombine.high %v4348, %v4348
        %v4398 = vunpack.c.l.s4 1983009808
        %v4399 = vunpack.c.0.s8 %v4398
        %v4400 = vlaneseq
        %v4401 = vshrl.u32 %v4400, 7
        %v4402 = vsub.s32 %v4399, %v4401
        %v4403 = vrot.slane %v4348, %v4402
        %v4405 = vunpack.c.l.s4 1983009808
        %v4406 = vunpack.c.0.s8 %v4405
        %v4407 = vlaneseq
        %v4408 = vshrl.u32 %v4407, 7
        %v4409 = vsub.s32 %v4406, %v4408
        %v4410 = vrot.slane %v4396, %v4409
        %v4411 = vcombine.high %v4403, %v4403
        %v4412 = vcombine.high %v4410, %v4410
        %v4413 = vcombine.high %v4349, %v4349
        %v4415 = vunpack.c.l.s4 1983009808
        %v4416 = vunpack.c.0.s8 %v4415
        %v4417 = vlaneseq
        %v4418 = vshrl.u32 %v4417, 7
        %v4419 = vsub.s32 %v4416, %v4418
        %v4420 = vrot.slane %v4349, %v4419
        %v4422 = vunpack.c.l.s4 1983009808
        %v4423 = vunpack.c.0.s8 %v4422
        %v4424 = vlaneseq
        %v4425 = vshrl.u32 %v4424, 7
        %v4426 = vsub.s32 %v4423, %v4425
        %v4427 = vrot.slane %v4413, %v4426
        %v4428 = vcombine.high %v4420, %v4420
        %v4429 = vcombine.high %v4427, %v4427
        %v4430 = vcombine.high %v4350, %v4350
        %v4432 = vunpack.c.l.s4 1983009808
        %v4433 = vunpack.c.0.s8 %v4432
        %v4434 = vlaneseq
        %v4435 = vshrl.u32 %v4434, 7
        %v4436 = vsub.s32 %v4433, %v4435
        %v4437 = vrot.slane %v4350, %v4436
        %v4439 = vunpack.c.l.s4 1983009808
        %v4440 = vunpack.c.0.s8 %v4439
        %v4441 = vlaneseq
        %v4442 = vshrl.u32 %v4441, 7
        %v4443 = vsub.s32 %v4440, %v4442
        %v4444 = vrot.slane %v4430, %v4443
        %v4445 = vcombine.high %v4437, %v4437
        %v4446 = vcombine.high %v4444, %v4444
        %v4447 = vcombine.high %v4351, %v4351
        %v4449 = vunpack.c.l.s4 1983009808
        %v4450 = vunpack.c.0.s8 %v4449
        %v4451 = vlaneseq
        %v4452 = vshrl.u32 %v4451, 7
        %v4453 = vsub.s32 %v4450, %v4452
        %v4454 = vrot.slane %v4351, %v4453
        %v4456 = vunpack.c.l.s4 1983009808
        %v4457 = vunpack.c.0.s8 %v4456
        %v4458 = vlaneseq
        %v4459 = vshrl.u32 %v4458, 7
        %v4460 = vsub.s32 %v4457, %v4459
        %v4461 = vrot.slane %v4447, %v4460
        %v4462 = vcombine.high %v4454, %v4454
        %v4463 = vcombine.high %v4461, %v4461
        %v4464 = vcombine.high %v4352, %v4352
        %v4466 = vunpack.c.l.s4 1983009808
        %v4467 = vunpack.c.0.s8 %v4466
        %v4468 = vlaneseq
        %v4469 = vshrl.u32 %v4468, 7
        %v4470 = vsub.s32 %v4467, %v4469
        %v4471 = vrot.slane %v4352, %v4470
        %v4473 = vunpack.c.l.s4 1983009808
        %v4474 = vunpack.c.0.s8 %v4473
        %v4475 = vlaneseq
        %v4476 = vshrl.u32 %v4475, 7
        %v4477 = vsub.s32 %v4474, %v4476
        %v4478 = vrot.slane %v4464, %v4477
        %v4479 = vcombine.high %v4471, %v4471
        %v4480 = vcombine.high %v4478, %v4478
        %v4481 = vcombine.high %v4353, %v4353
        %v4483 = vunpack.c.l.s4 1983009808
        %v4484 = vunpack.c.0.s8 %v4483
        %v4485 = vlaneseq
        %v4486 = vshrl.u32 %v4485, 7
        %v4487 = vsub.s32 %v4484, %v4486
        %v4488 = vrot.slane %v4353, %v4487
        %v4490 = vunpack.c.l.s4 1983009808
        %v4491 = vunpack.c.0.s8 %v4490
        %v4492 = vlaneseq
        %v4493 = vshrl.u32 %v4492, 7
        %v4494 = vsub.s32 %v4491, %v4493
        %v4495 = vrot.slane %v4481, %v4494
        %v4496 = vcombine.high %v4488, %v4488
        %v4497 = vcombine.high %v4495, %v4495
        %v4530 = vrot.slane %v4369, 7
        %v4531 = vrot.slane %v4530, 2
        %v4532 = vrot.slane %v4377, 7
        %v4533 = vrot.slane %v4532, 2
        %v4534 = vrot.slane %v4376, 7
        %v4535 = vrot.slane %v4534, 2
        %v4536 = vrot.slane %v4378, 7
        %v4537 = vrot.slane %v4536, 2
        %v4538 = vrot.slane %v4386, 7
        %v4539 = vrot.slane %v4538, 2
        %v4540 = vrot.slane %v4394, 7
        %v4541 = vrot.slane %v4540, 2
        %v4542 = vrot.slane %v4393, 7
        %v4543 = vrot.slane %v4542, 2
        %v4544 = vrot.slane %v4395, 7
        %v4545 = vrot.slane %v4544, 2
        %v4546 = vrot.slane %v4403, 7
        %v4547 = vrot.slane %v4546, 2
        %v4548 = vrot.slane %v4411, 7
        %v4549 = vrot.slane %v4548, 2
        %v4550 = vrot.slane %v4410, 7
        %v4551 = vrot.slane %v4550, 2
        %v4552 = vrot.slane %v4412, 7
        %v4553 = vrot.slane %v4552, 2
        %v4554 = vrot.slane %v4420, 7
        %v4555 = vrot.slane %v4554, 2
        %v4556 = vrot.slane %v4428, 7
        %v4557 = vrot.slane %v4556, 2
        %v4558 = vrot.slane %v4427, 7
        %v4559 = vrot.slane %v4558, 2
        %v4560 = vrot.slane %v4429, 7
        %v4561 = vrot.slane %v4560, 2
        %v4562 = vrot.slane %v4437, 7
        %v4563 = vrot.slane %v4562, 2
        %v4564 = vrot.slane %v4445, 7
        %v4565 = vrot.slane %v4564, 2
        %v4566 = vrot.slane %v4444, 7
        %v4567 = vrot.slane %v4566, 2
        %v4568 = vrot.slane %v4446, 7
        %v4569 = vrot.slane %v4568, 2
        %v4570 = vrot.slane %v4454, 7
        %v4571 = vrot.slane %v4570, 2
        %v4572 = vrot.slane %v4462, 7
        %v4573 = vrot.slane %v4572, 2
        %v4574 = vrot.slane %v4461, 7
        %v4575 = vrot.slane %v4574, 2
        %v4576 = vrot.slane %v4463, 7
        %v4577 = vrot.slane %v4576, 2
        %v4578 = vrot.slane %v4471, 7
        %v4579 = vrot.slane %v4578, 2
        %v4580 = vrot.slane %v4479, 7
        %v4581 = vrot.slane %v4580, 2
        %v4582 = vrot.slane %v4478, 7
        %v4583 = vrot.slane %v4582, 2
        %v4584 = vrot.slane %v4480, 7
        %v4585 = vrot.slane %v4584, 2
        %v4586 = vrot.slane %v4488, 7
        %v4587 = vrot.slane %v4586, 2
        %v4588 = vrot.slane %v4496, 7
        %v4589 = vrot.slane %v4588, 2
        %v4590 = vrot.slane %v4495, 7
        %v4591 = vrot.slane %v4590, 2
        %v4592 = vrot.slane %v4497, 7
        %v4593 = vrot.slane %v4592, 2
        %v4626 = vmax.f32 %v4369, %v4531
        %v4627 = vmax.f32 %v4377, %v4533
        %v4628 = vmax.f32 %v4376, %v4535
        %v4629 = vmax.f32 %v4378, %v4537
        %v4630 = vmax.f32 %v4386, %v4539
        %v4631 = vmax.f32 %v4394, %v4541
        %v4632 = vmax.f32 %v4393, %v4543
        %v4633 = vmax.f32 %v4395, %v4545
        %v4634 = vmax.f32 %v4403, %v4547
        %v4635 = vmax.f32 %v4411, %v4549
        %v4636 = vmax.f32 %v4410, %v4551
        %v4637 = vmax.f32 %v4412, %v4553
        %v4638 = vmax.f32 %v4420, %v4555
        %v4639 = vmax.f32 %v4428, %v4557
        %v4640 = vmax.f32 %v4427, %v4559
        %v4641 = vmax.f32 %v4429, %v4561
        %v4642 = vmax.f32 %v4437, %v4563
        %v4643 = vmax.f32 %v4445, %v4565
        %v4644 = vmax.f32 %v4444, %v4567
        %v4645 = vmax.f32 %v4446, %v4569
        %v4646 = vmax.f32 %v4454, %v4571
        %v4647 = vmax.f32 %v4462, %v4573
        %v4648 = vmax.f32 %v4461, %v4575
        %v4649 = vmax.f32 %v4463, %v4577
        %v4650 = vmax.f32 %v4471, %v4579
        %v4651 = vmax.f32 %v4479, %v4581
        %v4652 = vmax.f32 %v4478, %v4583
        %v4653 = vmax.f32 %v4480, %v4585
        %v4654 = vmax.f32 %v4488, %v4587
        %v4655 = vmax.f32 %v4496, %v4589
        %v4656 = vmax.f32 %v4495, %v4591
        %v4657 = vmax.f32 %v4497, %v4593
        %v4658 = vmax.f32 %v4626, %v4630
        %v4659 = vmax.f32 %v4627, %v4631
        %v4660 = vmax.f32 %v4628, %v4632
        %v4661 = vmax.f32 %v4629, %v4633
        %v4662 = vmax.f32 %v4634, %v4638
        %v4663 = vmax.f32 %v4635, %v4639
        %v4664 = vmax.f32 %v4636, %v4640
        %v4665 = vmax.f32 %v4637, %v4641
        %v4666 = vmax.f32 %v4642, %v4646
        %v4667 = vmax.f32 %v4643, %v4647
        %v4668 = vmax.f32 %v4644, %v4648
        %v4669 = vmax.f32 %v4645, %v4649
        %v4670 = vmax.f32 %v4650, %v4654
        %v4671 = vmax.f32 %v4651, %v4655
        %v4672 = vmax.f32 %v4652, %v4656
        %v4673 = vmax.f32 %v4653, %v4657
        %v4674 = vpack.c.bf16 %v4658, %v4658
        %v4675 = vpack.c.bf16 %v4659, %v4659
        %v4676 = vpack.c.bf16 %v4660, %v4660
        %v4677 = vpack.c.bf16 %v4661, %v4661
        %v4678 = vpack.c.bf16 %v4662, %v4662
        %v4679 = vpack.c.bf16 %v4663, %v4663
        %v4680 = vpack.c.bf16 %v4664, %v4664
        %v4681 = vpack.c.bf16 %v4665, %v4665
        %v4682 = vpack.c.bf16 %v4666, %v4666
        %v4683 = vpack.c.bf16 %v4667, %v4667
        %v4684 = vpack.c.bf16 %v4668, %v4668
        %v4685 = vpack.c.bf16 %v4669, %v4669
        %v4686 = vpack.c.bf16 %v4670, %v4670
        %v4687 = vpack.c.bf16 %v4671, %v4671
        %v4688 = vpack.c.bf16 %v4672, %v4672
        %v4689 = vpack.c.bf16 %v4673, %v4673
        %vm4690 = vcmask 256000
        %4691 = vst.msk [vmem:[#allocation3] sm:$0x7] %vm4690, 0
        %s4692 = scalar_lea.vmem [#allocation3], 20
        %4693 = vst.msk [vmem:[%s4692] sm:$0x7] %vm4690, 0
        %s4694 = scalar_lea.vmem [#allocation3], 4
        %v4695 = vld [vmem:[%s4694] sm:$0x1]
        %v4696 = vsel %vm2224, 0, %v4695
        %4697 = vst [vmem:[%s4694] sm:$0x1] %v4696
        %v4698 = vld [vmem:[%s4694 + $0x4] sm:$0x1]
        %v4699 = vsel %vm2224, 0, %v4698
        %4700 = vst [vmem:[%s4694 + $0x4] sm:$0x1] %v4699
        %v4701 = vld [vmem:[%s4694 + $0x8] sm:$0x1]
        %v4702 = vsel %vm2224, 0, %v4701
        %4703 = vst [vmem:[%s4694 + $0x8] sm:$0x1] %v4702
        %v4704 = vld [vmem:[%s4694 + $0xc] sm:$0x1]
        %v4705 = vsel %vm2224, 0, %v4704
        %4706 = vst [vmem:[%s4694 + $0xc] sm:$0x1] %v4705
        %vm4707 = vcmask 256002
        %vm4708 = vsmask.f32 7946
        %vm4709 = vmand %vm4707, %vm4708
        %v4710 = vld [vmem:[%s4694] sm:$0x4]
        %v4711 = vsel %vm4709, 0, %v4710
        %4712 = vst [vmem:[%s4694] sm:$0x4] %v4711
        %v4713 = vld [vmem:[%s4694 + $0x4] sm:$0x4]
        %v4714 = vsel %vm4709, 0, %v4713
        %4715 = vst [vmem:[%s4694 + $0x4] sm:$0x4] %v4714
        %v4716 = vld [vmem:[%s4694 + $0x8] sm:$0x4]
        %v4717 = vsel %vm4709, 0, %v4716
        %4718 = vst [vmem:[%s4694 + $0x8] sm:$0x4] %v4717
        %v4719 = vld [vmem:[%s4694 + $0xc] sm:$0x4]
        %v4720 = vsel %vm4709, 0, %v4719
        %4721 = vst [vmem:[%s4694 + $0xc] sm:$0x4] %v4720
        %v4738 = vunpack.c.l.b16 %v4674
        %v4739 = vunpack.c.l.b16 %v4675
        %v4740 = vunpack.c.l.b16 %v4676
        %v4741 = vunpack.c.l.b16 %v4677
        %v4742 = vunpack.c.l.b16 %v4678
        %v4743 = vunpack.c.l.b16 %v4679
        %v4744 = vunpack.c.l.b16 %v4680
        %v4745 = vunpack.c.l.b16 %v4681
        %v4746 = vunpack.c.l.b16 %v4682
        %v4747 = vunpack.c.l.b16 %v4683
        %v4748 = vunpack.c.l.b16 %v4684
        %v4749 = vunpack.c.l.b16 %v4685
        %v4750 = vunpack.c.l.b16 %v4686
        %v4751 = vunpack.c.l.b16 %v4687
        %v4752 = vunpack.c.l.b16 %v4688
        %v4753 = vunpack.c.l.b16 %v4689
        %v4754 = vpack.c.b16 %v4738, %v4738
        %v4755 = vpack.c.b16 %v4739, %v4739
        %v4756 = vpack.c.b16 %v4740, %v4740
        %v4757 = vpack.c.b16 %v4741, %v4741
        %v4758 = vpack.c.b16 %v4742, %v4742
        %v4759 = vpack.c.b16 %v4743, %v4743
        %v4760 = vpack.c.b16 %v4744, %v4744
        %v4761 = vpack.c.b16 %v4745, %v4745
        %v4762 = vpack.c.b16 %v4746, %v4746
        %v4763 = vpack.c.b16 %v4747, %v4747
        %v4764 = vpack.c.b16 %v4748, %v4748
        %v4765 = vpack.c.b16 %v4749, %v4749
        %v4766 = vpack.c.b16 %v4750, %v4750
        %v4767 = vpack.c.b16 %v4751, %v4751
        %v4768 = vpack.c.b16 %v4752, %v4752
        %v4769 = vpack.c.b16 %v4753, %v4753
        %v4770 = vunpack.c.l.b16 %v4754
        %v4771 = vunpack.c.l.b16 %v4755
        %v4772 = vunpack.c.l.b16 %v4756
        %v4773 = vunpack.c.l.b16 %v4757
        %v4774 = vunpack.c.l.b16 %v4758
        %v4775 = vunpack.c.l.b16 %v4759
        %v4776 = vunpack.c.l.b16 %v4760
        %v4777 = vunpack.c.l.b16 %v4761
        %v4778 = vunpack.c.l.b16 %v4762
        %v4779 = vunpack.c.l.b16 %v4763
        %v4780 = vunpack.c.l.b16 %v4764
        %v4781 = vunpack.c.l.b16 %v4765
        %v4782 = vunpack.c.l.b16 %v4766
        %v4783 = vunpack.c.l.b16 %v4767
        %v4784 = vunpack.c.l.b16 %v4768
        %v4785 = vunpack.c.l.b16 %v4769
        %v4786 = vrot.slane %v4770, 7
        %v4787 = vrot.slane %v4771, 6
        %v4788 = vsel %vm2533, %v4787, %v4786
        %v4789 = vrot.slane %v4772, 5
        %v4790 = vsel %vm2536, %v4789, %v4788
        %v4791 = vrot.slane %v4773, 4
        %v4792 = vsel %vm2539, %v4791, %v4790
        %v4793 = vrot.slane %v4774, 7
        %v4794 = vrot.slane %v4775, 6
        %v4795 = vsel %vm2533, %v4794, %v4793
        %v4796 = vrot.slane %v4776, 5
        %v4797 = vsel %vm2536, %v4796, %v4795
        %v4798 = vrot.slane %v4777, 4
        %v4799 = vsel %vm2539, %v4798, %v4797
        %v4800 = vrot.slane %v4778, 7
        %v4801 = vrot.slane %v4779, 6
        %v4802 = vsel %vm2533, %v4801, %v4800
        %v4803 = vrot.slane %v4780, 5
        %v4804 = vsel %vm2536, %v4803, %v4802
        %v4805 = vrot.slane %v4781, 4
        %v4806 = vsel %vm2539, %v4805, %v4804
        %v4807 = vrot.slane %v4782, 7
        %v4808 = vrot.slane %v4783, 6
        %v4809 = vsel %vm2533, %v4808, %v4807
        %v4810 = vrot.slane %v4784, 5
        %v4811 = vsel %vm2536, %v4810, %v4809
        %v4812 = vrot.slane %v4785, 4
        %v4813 = vsel %vm2539, %v4812, %v4811
        %v4814 = vpack.c.b16 %v4792, %v4792
        %v4815 = vpack.c.b16 %v4799, %v4799
        %v4816 = vpack.c.b16 %v4806, %v4806
        %v4817 = vpack.c.b16 %v4813, %v4813
        %vm4822 = vcmask 256000
        %vm4823 = vsmask.f32 2306
        %vm4824 = vmand %vm4822, %vm4823
        %v4825 = vld [vmem:[%s4694] sm:$0x7]
        %v4826 = vsel %vm4824, %v4814, %v4825
        %4827 = vst [vmem:[%s4694] sm:$0x7] %v4826
        %v4828 = vld [vmem:[%s4694 + $0x4] sm:$0x7]
        %v4829 = vsel %vm4824, %v4815, %v4828
        %4830 = vst [vmem:[%s4694 + $0x4] sm:$0x7] %v4829
        %v4831 = vld [vmem:[%s4694 + $0x8] sm:$0x7]
        %v4832 = vsel %vm4824, %v4816, %v4831
        %4833 = vst [vmem:[%s4694 + $0x8] sm:$0x7] %v4832
        %v4834 = vld [vmem:[%s4694 + $0xc] sm:$0x7]
        %v4835 = vsel %vm4824, %v4817, %v4834
        %4836 = vst [vmem:[%s4694 + $0xc] sm:$0x7] %v4835
        %v4837 = vld [vmem:[#allocation3] sm:$0x3]
        %v4838 = vld [vmem:[#allocation3 + $0x4] sm:$0x3]
        %v4839 = vld [vmem:[#allocation3 + $0x8] sm:$0x3]
        %v4840 = vld [vmem:[#allocation3 + $0xc] sm:$0x3]
        %v4841 = vld [vmem:[%s3] sm:$0xf]
        %v4842 = vld [vmem:[%s3 + $0x4] sm:$0xf]
        %v4843 = vld [vmem:[%s3 + $0x8] sm:$0xf]
        %v4844 = vld [vmem:[%s3 + $0xc] sm:$0xf]
        %v4845 = vld [vmem:[#allocation3] sm:$0x7]
        %v4846 = vld [vmem:[#allocation3 + $0x4] sm:$0x7]
        %v4847 = vld [vmem:[#allocation3 + $0x8] sm:$0x7]
        %v4848 = vld [vmem:[#allocation3 + $0xc] sm:$0x7]
        %v4854 = vunpack.c.l.s4 1983009808
        %v4855 = vunpack.c.0.s8 %v4854
        %v4856 = vlaneseq
        %v4857 = vshrl.u32 %v4856, 7
        %v4858 = vsub.s32 %v4855, %v4857
        %v4859 = vrot.slane %v4845, %v4858
        %v4860 = vcombine.high %v4859, %v4859
        %v4862 = vunpack.c.l.s4 1983009808
        %v4863 = vunpack.c.0.s8 %v4862
        %v4864 = vlaneseq
        %v4865 = vshrl.u32 %v4864, 7
        %v4866 = vsub.s32 %v4863, %v4865
        %v4867 = vrot.slane %v4846, %v4866
        %v4868 = vcombine.high %v4867, %v4867
        %v4870 = vunpack.c.l.s4 1983009808
        %v4871 = vunpack.c.0.s8 %v4870
        %v4872 = vlaneseq
        %v4873 = vshrl.u32 %v4872, 7
        %v4874 = vsub.s32 %v4871, %v4873
        %v4875 = vrot.slane %v4847, %v4874
        %v4876 = vcombine.high %v4875, %v4875
        %v4878 = vunpack.c.l.s4 1983009808
        %v4879 = vunpack.c.0.s8 %v4878
        %v4880 = vlaneseq
        %v4881 = vshrl.u32 %v4880, 7
        %v4882 = vsub.s32 %v4879, %v4881
        %v4883 = vrot.slane %v4848, %v4882
        %v4884 = vcombine.high %v4883, %v4883
        %vm4885 = vsmask.f32 1280
        %vm4886 = vsmask.f32 3336
        %vm4887 = vmor %vm4885, %vm4886
        %vm4888 = vsmask.f32 5392
        %vm4889 = vmor %vm4887, %vm4888
        %vm4890 = vsmask.f32 7448
        %vm4891 = vmor %vm4889, %vm4890
        %v4893 = vshrl.u32 %v4859, 16
        %v4895 = vrot.slane %v4893, 6
        %v4896 = vshll.u32 %v4859, 16
        %v4898 = vrot.slane %v4896, 7
        %v4899 = vor.u32 %v4895, %v4898
        %v4900 = vrot.slane %v4899, 2
        %v4902 = vshll.u32 %v4860, 16
        %v4904 = vrot.slane %v4902, 7
        %v4905 = vsel %vm4891, %v4900, %v4904
        %v4907 = vshrl.u32 %v4867, 16
        %v4909 = vrot.slane %v4907, 6
        %v4910 = vshll.u32 %v4867, 16
        %v4912 = vrot.slane %v4910, 7
        %v4913 = vor.u32 %v4909, %v4912
        %v4914 = vrot.slane %v4913, 2
        %v4916 = vshll.u32 %v4868, 16
        %v4918 = vrot.slane %v4916, 7
        %v4919 = vsel %vm4891, %v4914, %v4918
        %v4921 = vshrl.u32 %v4875, 16
        %v4923 = vrot.slane %v4921, 6
        %v4924 = vshll.u32 %v4875, 16
        %v4926 = vrot.slane %v4924, 7
        %v4927 = vor.u32 %v4923, %v4926
        %v4928 = vrot.slane %v4927, 2
        %v4930 = vshll.u32 %v4876, 16
        %v4932 = vrot.slane %v4930, 7
        %v4933 = vsel %vm4891, %v4928, %v4932
        %v4935 = vshrl.u32 %v4883, 16
        %v4937 = vrot.slane %v4935, 6
        %v4938 = vshll.u32 %v4883, 16
        %v4940 = vrot.slane %v4938, 7
        %v4941 = vor.u32 %v4937, %v4940
        %v4942 = vrot.slane %v4941, 2
        %v4944 = vshll.u32 %v4884, 16
        %v4946 = vrot.slane %v4944, 7
        %v4947 = vsel %vm4891, %v4942, %v4946
        %s4948 = scalar_lea.vmem %s3, 16
        %v4949 = vld [vmem:[%s4948] sm:$0xf]
        %v4950 = vld [vmem:[%s4948 + $0x4] sm:$0xf]
        %v4951 = vld [vmem:[%s4948 + $0x8] sm:$0xf]
        %v4952 = vld [vmem:[%s4948 + $0xc] sm:$0xf]
        %v4953 = vcombine.low %v4905, %v4919
        %v4954 = vcombine.low %v4933, %v4947
        %v4956 = vunpack.c.l.s4 1983009808
        %v4957 = vunpack.c.0.s8 %v4956
        %v4958 = vlaneseq
        %v4959 = vshrl.u32 %v4958, 7
        %v4960 = vsub.s32 %v4957, %v4959
        %v4961 = vrot.slane %v4953, %v4960
        %v4963 = vunpack.c.l.s4 1983009808
        %v4964 = vunpack.c.0.s8 %v4963
        %v4965 = vlaneseq
        %v4966 = vshrl.u32 %v4965, 7
        %v4967 = vsub.s32 %v4964, %v4966
        %v4968 = vrot.slane %v4954, %v4967
        %v4969 = vcombine.low %v4961, %v4968
        %v4974 = vunpack.c.l.b16 %v4949
        %v4975 = vunpack.c.l.b16 %v4950
        %v4976 = vunpack.c.l.b16 %v4951
        %v4977 = vunpack.c.l.b16 %v4952
        %v4978 = vpack.c.b16 %v4975, %v4974
        %v4979 = vpack.c.b16 %v4977, %v4976
        %v4983 = vsel %vm628, %v4969, 0
        %4985 = vmatprep.subr.bf16.mxu0 0
        %4986 = vmatpush1.bf16.msra.mxu0 %v4978
        %4987 = vmatprep.subr.bf16.mxu0 0
        %4988 = vmatpush1.bf16.msra.mxu0 %v4979
        %4989 = vmatprep.subr.bf16.mxu0 0
        %4990 = vmatpush1.bf16.msra.mxu0 0
        %4991 = vmatprep.subr.bf16.mxu0 0
        %4992 = vmatpush1.bf16.msra.mxu0 0
        %4993 = vmatprep.subr.bf16.mxu0 0
        %4994 = vmatpush1.bf16.msra.mxu0 0
        %4995 = vmatprep.subr.bf16.mxu0 0
        %4996 = vmatpush1.bf16.msra.mxu0 0
        %4997 = vmatprep.subr.bf16.mxu0 0
        %4998 = vmatpush1.bf16.msra.mxu0 0
        %4999 = vmatprep.subr.bf16.mxu0 0
        %5000 = vmatpush1.bf16.msra.mxu0 0
        %5001 = vmatprep.subr.bf16.mxu0 0
        %5002 = vmatpush1.bf16.msra.mxu0 0
        %5003 = vmatprep.subr.bf16.mxu0 0
        %5004 = vmatpush1.bf16.msra.mxu0 0
        %5005 = vmatprep.subr.bf16.mxu0 0
        %5006 = vmatpush1.bf16.msra.mxu0 0
        %5007 = vmatprep.subr.bf16.mxu0 0
        %5008 = vmatpush1.bf16.msra.mxu0 0
        %5009 = vmatprep.subr.bf16.mxu0 0
        %5010 = vmatpush1.bf16.msra.mxu0 0
        %5011 = vmatprep.subr.bf16.mxu0 0
        %5012 = vmatpush1.bf16.msra.mxu0 0
        %5013 = vmatprep.subr.bf16.mxu0 0
        %5014 = vmatpush1.bf16.msra.mxu0 0
        %5015 = vmatprep.subr.bf16.mxu0 0
        %5016 = vmatpush1.bf16.msra.mxu0 0
        %5017 = vmatprep.mubr.bf16.mxu0 0
        %5018 = vmatmul.mubr.bf16.gmra.mrb[0].mxu0 %v4983
        %v5019 = vpop.f32.mrb[0].mxu0
        %v5020 = vadd.f32 0.0, %v5019
        %v5021 = vpop.f32.mrb[0].mxu0
        %v5022 = vpop.f32.mrb[0].mxu0
        %v5023 = vadd.f32 0.0, %v5022
        %v5024 = vpop.f32.mrb[0].mxu0
        %5025 = vdwg.mxu0
        %v5030 = vcombine.low %v4837, %v4838
        %v5031 = vcombine.low %v4839, %v4840
        %v5033 = vunpack.c.l.s4 1983009808
        %v5034 = vunpack.c.0.s8 %v5033
        %v5035 = vlaneseq
        %v5036 = vshrl.u32 %v5035, 7
        %v5037 = vsub.s32 %v5034, %v5036
        %v5038 = vrot.slane %v5030, %v5037
        %v5040 = vunpack.c.l.s4 1983009808
        %v5041 = vunpack.c.0.s8 %v5040
        %v5042 = vlaneseq
        %v5043 = vshrl.u32 %v5042, 7
        %v5044 = vsub.s32 %v5041, %v5043
        %v5045 = vrot.slane %v5031, %v5044
        %v5046 = vcombine.low %v5038, %v5045
        %v5051 = vunpack.c.l.b16 %v4841
        %v5052 = vunpack.c.l.b16 %v4842
        %v5053 = vunpack.c.l.b16 %v4843
        %v5054 = vunpack.c.l.b16 %v4844
        %v5055 = vpack.c.b16 %v5052, %v5051
        %v5056 = vpack.c.b16 %v5054, %v5053
        %v5060 = vsel %vm628, %v5046, 0
        %5062 = vmatprep.subr.bf16.mxu0 0
        %5063 = vmatpush1.bf16.msra.mxu0 %v5055
        %5064 = vmatprep.subr.bf16.mxu0 0
        %5065 = vmatpush1.bf16.msra.mxu0 %v5056
        %5066 = vmatprep.subr.bf16.mxu0 0
        %5067 = vmatpush1.bf16.msra.mxu0 0
        %5068 = vmatprep.subr.bf16.mxu0 0
        %5069 = vmatpush1.bf16.msra.mxu0 0
        %5070 = vmatprep.subr.bf16.mxu0 0
        %5071 = vmatpush1.bf16.msra.mxu0 0
        %5072 = vmatprep.subr.bf16.mxu0 0
        %5073 = vmatpush1.bf16.msra.mxu0 0
        %5074 = vmatprep.subr.bf16.mxu0 0
        %5075 = vmatpush1.bf16.msra.mxu0 0
        %5076 = vmatprep.subr.bf16.mxu0 0
        %5077 = vmatpush1.bf16.msra.mxu0 0
        %5078 = vmatprep.subr.bf16.mxu0 0
        %5079 = vmatpush1.bf16.msra.mxu0 0
        %5080 = vmatprep.subr.bf16.mxu0 0
        %5081 = vmatpush1.bf16.msra.mxu0 0
        %5082 = vmatprep.subr.bf16.mxu0 0
        %5083 = vmatpush1.bf16.msra.mxu0 0
        %5084 = vmatprep.subr.bf16.mxu0 0
        %5085 = vmatpush1.bf16.msra.mxu0 0
        %5086 = vmatprep.subr.bf16.mxu0 0
        %5087 = vmatpush1.bf16.msra.mxu0 0
        %5088 = vmatprep.subr.bf16.mxu0 0
        %5089 = vmatpush1.bf16.msra.mxu0 0
        %5090 = vmatprep.subr.bf16.mxu0 0
        %5091 = vmatpush1.bf16.msra.mxu0 0
        %5092 = vmatprep.subr.bf16.mxu0 0
        %5093 = vmatpush1.bf16.msra.mxu0 0
        %5094 = vmatprep.mubr.bf16.mxu0 0
        %5095 = vmatmul.mubr.bf16.gmra.mrb[0].mxu0 %v5060
        %v5096 = vpop.f32.mrb[0].mxu0
        %v5097 = vadd.f32 %v5020, %v5096
        %v5098 = vpop.f32.mrb[0].mxu0
        %v5099 = vpop.f32.mrb[0].mxu0
        %v5100 = vadd.f32 %v5023, %v5099
        %v5101 = vpop.f32.mrb[0].mxu0
        %5102 = vdwg.mxu0
        %v5103 = vld [vmem:[#allocation3] sm:$0x6]
        %v5104 = vld [vmem:[#allocation3 + $0x4] sm:$0x6]
        %v5105 = vld [vmem:[#allocation3 + $0x8] sm:$0x6]
        %v5106 = vld [vmem:[#allocation3 + $0xc] sm:$0x6]
        %v5112 = vunpack.c.l.s4 1983009808
        %v5113 = vunpack.c.0.s8 %v5112
        %v5114 = vlaneseq
        %v5115 = vshrl.u32 %v5114, 7
        %v5116 = vsub.s32 %v5113, %v5115
        %v5117 = vrot.slane %v5103, %v5116
        %v5118 = vcombine.high %v5117, %v5117
        %v5120 = vunpack.c.l.s4 1983009808
        %v5121 = vunpack.c.0.s8 %v5120
        %v5122 = vlaneseq
        %v5123 = vshrl.u32 %v5122, 7
        %v5124 = vsub.s32 %v5121, %v5123
        %v5125 = vrot.slane %v5104, %v5124
        %v5126 = vcombine.high %v5125, %v5125
        %v5128 = vunpack.c.l.s4 1983009808
        %v5129 = vunpack.c.0.s8 %v5128
        %v5130 = vlaneseq
        %v5131 = vshrl.u32 %v5130, 7
        %v5132 = vsub.s32 %v5129, %v5131
        %v5133 = vrot.slane %v5105, %v5132
        %v5134 = vcombine.high %v5133, %v5133
        %v5136 = vunpack.c.l.s4 1983009808
        %v5137 = vunpack.c.0.s8 %v5136
        %v5138 = vlaneseq
        %v5139 = vshrl.u32 %v5138, 7
        %v5140 = vsub.s32 %v5137, %v5139
        %v5141 = vrot.slane %v5106, %v5140
        %v5142 = vcombine.high %v5141, %v5141
        %vm5143 = vcmask 1040384
        %vm5144 = vcmask 1042434
        %vm5145 = vmor %vm5143, %vm5144
        %vm5146 = vcmask 1044484
        %vm5147 = vmor %vm5145, %vm5146
        %vm5148 = vcmask 1046534
        %vm5149 = vmor %vm5147, %vm5148
        %v5150 = vrot.slane %v5117, 7
        %v5151 = vrot.slane %v5150, 2
        %v5152 = vrot.slane %v5118, 7
        %v5153 = vsel %vm5149, %v5151, %v5152
        %v5154 = vrot.slane %v5125, 7
        %v5155 = vrot.slane %v5154, 2
        %v5156 = vrot.slane %v5126, 7
        %v5157 = vsel %vm5149, %v5155, %v5156
        %v5158 = vrot.slane %v5133, 7
        %v5159 = vrot.slane %v5158, 2
        %v5160 = vrot.slane %v5134, 7
        %v5161 = vsel %vm5149, %v5159, %v5160
        %v5162 = vrot.slane %v5141, 7
        %v5163 = vrot.slane %v5162, 2
        %v5164 = vrot.slane %v5142, 7
        %v5165 = vsel %vm5149, %v5163, %v5164
        %s5166 = scalar_lea.vmem %s3, 32
        %v5167 = vld [vmem:[%s5166] sm:$0xf]
        %v5168 = vld [vmem:[%s5166 + $0x4] sm:$0xf]
        %v5169 = vld [vmem:[%s5166 + $0x8] sm:$0xf]
        %v5170 = vld [vmem:[%s5166 + $0xc] sm:$0xf]
        %v5171 = vcombine.low %v5153, %v5157
        %v5172 = vcombine.low %v5161, %v5165
        %v5174 = vunpack.c.l.s4 1983009808
        %v5175 = vunpack.c.0.s8 %v5174
        %v5176 = vlaneseq
        %v5177 = vshrl.u32 %v5176, 7
        %v5178 = vsub.s32 %v5175, %v5177
        %v5179 = vrot.slane %v5171, %v5178
        %v5181 = vunpack.c.l.s4 1983009808
        %v5182 = vunpack.c.0.s8 %v5181
        %v5183 = vlaneseq
        %v5184 = vshrl.u32 %v5183, 7
        %v5185 = vsub.s32 %v5182, %v5184
        %v5186 = vrot.slane %v5172, %v5185
        %v5187 = vcombine.low %v5179, %v5186
        %v5192 = vunpack.c.l.b16 %v5167
        %v5193 = vunpack.c.l.b16 %v5168
        %v5194 = vunpack.c.l.b16 %v5169
        %v5195 = vunpack.c.l.b16 %v5170
        %v5196 = vpack.c.b16 %v5193, %v5192
        %v5197 = vpack.c.b16 %v5195, %v5194
        %v5201 = vsel %vm628, %v5187, 0
        %5203 = vmatprep.subr.bf16.mxu0 0
        %5204 = vmatpush1.bf16.msra.mxu0 %v5196
        %5205 = vmatprep.subr.bf16.mxu0 0
        %5206 = vmatpush1.bf16.msra.mxu0 %v5197
        %5207 = vmatprep.subr.bf16.mxu0 0
        %5208 = vmatpush1.bf16.msra.mxu0 0
        %5209 = vmatprep.subr.bf16.mxu0 0
        %5210 = vmatpush1.bf16.msra.mxu0 0
        %5211 = vmatprep.subr.bf16.mxu0 0
        %5212 = vmatpush1.bf16.msra.mxu0 0
        %5213 = vmatprep.subr.bf16.mxu0 0
        %5214 = vmatpush1.bf16.msra.mxu0 0
        %5215 = vmatprep.subr.bf16.mxu0 0
        %5216 = vmatpush1.bf16.msra.mxu0 0
        %5217 = vmatprep.subr.bf16.mxu0 0
        %5218 = vmatpush1.bf16.msra.mxu0 0
        %5219 = vmatprep.subr.bf16.mxu0 0
        %5220 = vmatpush1.bf16.msra.mxu0 0
        %5221 = vmatprep.subr.bf16.mxu0 0
        %5222 = vmatpush1.bf16.msra.mxu0 0
        %5223 = vmatprep.subr.bf16.mxu0 0
        %5224 = vmatpush1.bf16.msra.mxu0 0
        %5225 = vmatprep.subr.bf16.mxu0 0
        %5226 = vmatpush1.bf16.msra.mxu0 0
        %5227 = vmatprep.subr.bf16.mxu0 0
        %5228 = vmatpush1.bf16.msra.mxu0 0
        %5229 = vmatprep.subr.bf16.mxu0 0
        %5230 = vmatpush1.bf16.msra.mxu0 0
        %5231 = vmatprep.subr.bf16.mxu0 0
        %5232 = vmatpush1.bf16.msra.mxu0 0
        %5233 = vmatprep.subr.bf16.mxu0 0
        %5234 = vmatpush1.bf16.msra.mxu0 0
        %5235 = vmatprep.mubr.bf16.mxu0 0
        %5236 = vmatmul.mubr.bf16.gmra.mrb[0].mxu0 %v5201
        %v5237 = vpop.f32.mrb[0].mxu0
        %v5238 = vadd.f32 0.0, %v5237
        %v5239 = vpop.f32.mrb[0].mxu0
        %v5240 = vpop.f32.mrb[0].mxu0
        %v5241 = vadd.f32 0.0, %v5240
        %v5242 = vpop.f32.mrb[0].mxu0
        %5243 = vdwg.mxu0
        %v5244 = vadd.f32 %v5097, %v5238
        %v5245 = vadd.f32 %v5100, %v5241
        %v5246 = vld [vmem:[%s4694] sm:$0x3]
        %v5247 = vld [vmem:[%s4694 + $0x4] sm:$0x3]
        %v5248 = vld [vmem:[%s4694 + $0x8] sm:$0x3]
        %v5249 = vld [vmem:[%s4694 + $0xc] sm:$0x3]
        %s5250 = scalar_lea.vmem %s3, 48
        %v5251 = vld [vmem:[%s5250] sm:$0xf]
        %v5252 = vld [vmem:[%s5250 + $0x4] sm:$0xf]
        %v5253 = vld [vmem:[%s5250 + $0x8] sm:$0xf]
        %v5254 = vld [vmem:[%s5250 + $0xc] sm:$0xf]
        %v5259 = vcombine.low %v5246, %v5247
        %v5260 = vcombine.low %v5248, %v5249
        %v5262 = vunpack.c.l.s4 1983009808
        %v5263 = vunpack.c.0.s8 %v5262
        %v5264 = vlaneseq
        %v5265 = vshrl.u32 %v5264, 7
        %v5266 = vsub.s32 %v5263, %v5265
        %v5267 = vrot.slane %v5259, %v5266
        %v5269 = vunpack.c.l.s4 1983009808
        %v5270 = vunpack.c.0.s8 %v5269
        %v5271 = vlaneseq
        %v5272 = vshrl.u32 %v5271, 7
        %v5273 = vsub.s32 %v5270, %v5272
        %v5274 = vrot.slane %v5260, %v5273
        %v5275 = vcombine.low %v5267, %v5274
        %v5280 = vunpack.c.l.b16 %v5251
        %v5281 = vunpack.c.l.b16 %v5252
        %v5282 = vunpack.c.l.b16 %v5253
        %v5283 = vunpack.c.l.b16 %v5254
        %v5284 = vpack.c.b16 %v5281, %v5280
        %v5285 = vpack.c.b16 %v5283, %v5282
        %v5289 = vsel %vm628, %v5275, 0
        %5291 = vmatprep.subr.bf16.mxu0 0
        %5292 = vmatpush1.bf16.msra.mxu0 %v5284
        %5293 = vmatprep.subr.bf16.mxu0 0
        %5294 = vmatpush1.bf16.msra.mxu0 %v5285
        %5295 = vmatprep.subr.bf16.mxu0 0
        %5296 = vmatpush1.bf16.msra.mxu0 0
        %5297 = vmatprep.subr.bf16.mxu0 0
        %5298 = vmatpush1.bf16.msra.mxu0 0
        %5299 = vmatprep.subr.bf16.mxu0 0
        %5300 = vmatpush1.bf16.msra.mxu0 0
        %5301 = vmatprep.subr.bf16.mxu0 0
        %5302 = vmatpush1.bf16.msra.mxu0 0
        %5303 = vmatprep.subr.bf16.mxu0 0
        %5304 = vmatpush1.bf16.msra.mxu0 0
        %5305 = vmatprep.subr.bf16.mxu0 0
        %5306 = vmatpush1.bf16.msra.mxu0 0
        %5307 = vmatprep.subr.bf16.mxu0 0
        %5308 = vmatpush1.bf16.msra.mxu0 0
        %5309 = vmatprep.subr.bf16.mxu0 0
        %5310 = vmatpush1.bf16.msra.mxu0 0
        %5311 = vmatprep.subr.bf16.mxu0 0
        %5312 = vmatpush1.bf16.msra.mxu0 0
        %5313 = vmatprep.subr.bf16.mxu0 0
        %5314 = vmatpush1.bf16.msra.mxu0 0
        %5315 = vmatprep.subr.bf16.mxu0 0
        %5316 = vmatpush1.bf16.msra.mxu0 0
        %5317 = vmatprep.subr.bf16.mxu0 0
        %5318 = vmatpush1.bf16.msra.mxu0 0
        %5319 = vmatprep.subr.bf16.mxu0 0
        %5320 = vmatpush1.bf16.msra.mxu0 0
        %5321 = vmatprep.subr.bf16.mxu0 0
        %5322 = vmatpush1.bf16.msra.mxu0 0
        %5323 = vmatprep.mubr.bf16.mxu0 0
        %5324 = vmatmul.mubr.bf16.gmra.mrb[0].mxu0 %v5289
        %v5325 = vpop.f32.mrb[0].mxu0
        %v5326 = vadd.f32 0.0, %v5325
        %v5327 = vpop.f32.mrb[0].mxu0
        %v5328 = vpop.f32.mrb[0].mxu0
        %v5329 = vadd.f32 0.0, %v5328
        %v5330 = vpop.f32.mrb[0].mxu0
        %5331 = vdwg.mxu0
        %v5332 = vadd.f32 %v5244, %v5326
        %v5333 = vadd.f32 %v5245, %v5329
        %v5334 = vld [vmem:[%s4694] sm:$0x7]
        %v5335 = vld [vmem:[%s4694 + $0x4] sm:$0x7]
        %v5336 = vld [vmem:[%s4694 + $0x8] sm:$0x7]
        %v5337 = vld [vmem:[%s4694 + $0xc] sm:$0x7]
        %v5343 = vunpack.c.l.s4 1983009808
        %v5344 = vunpack.c.0.s8 %v5343
        %v5345 = vlaneseq
        %v5346 = vshrl.u32 %v5345, 7
        %v5347 = vsub.s32 %v5344, %v5346
        %v5348 = vrot.slane %v5334, %v5347
        %v5349 = vcombine.high %v5348, %v5348
        %v5351 = vunpack.c.l.s4 1983009808
        %v5352 = vunpack.c.0.s8 %v5351
        %v5353 = vlaneseq
        %v5354 = vshrl.u32 %v5353, 7
        %v5355 = vsub.s32 %v5352, %v5354
        %v5356 = vrot.slane %v5335, %v5355
        %v5357 = vcombine.high %v5356, %v5356
        %v5359 = vunpack.c.l.s4 1983009808
        %v5360 = vunpack.c.0.s8 %v5359
        %v5361 = vlaneseq
        %v5362 = vshrl.u32 %v5361, 7
        %v5363 = vsub.s32 %v5360, %v5362
        %v5364 = vrot.slane %v5336, %v5363
        %v5365 = vcombine.high %v5364, %v5364
        %v5367 = vunpack.c.l.s4 1983009808
        %v5368 = vunpack.c.0.s8 %v5367
        %v5369 = vlaneseq
        %v5370 = vshrl.u32 %v5369, 7
        %v5371 = vsub.s32 %v5368, %v5370
        %v5372 = vrot.slane %v5337, %v5371
        %v5373 = vcombine.high %v5372, %v5372
        %v5375 = vshrl.u32 %v5348, 16
        %v5377 = vrot.slane %v5375, 6
        %v5378 = vshll.u32 %v5348, 16
        %v5380 = vrot.slane %v5378, 7
        %v5381 = vor.u32 %v5377, %v5380
        %v5382 = vrot.slane %v5381, 2
        %v5384 = vshll.u32 %v5349, 16
        %v5386 = vrot.slane %v5384, 7
        %v5387 = vsel %vm4891, %v5382, %v5386
        %v5389 = vshrl.u32 %v5356, 16
        %v5391 = vrot.slane %v5389, 6
        %v5392 = vshll.u32 %v5356, 16
        %v5394 = vrot.slane %v5392, 7
        %v5395 = vor.u32 %v5391, %v5394
        %v5396 = vrot.slane %v5395, 2
        %v5398 = vshll.u32 %v5357, 16
        %v5400 = vrot.slane %v5398, 7
        %v5401 = vsel %vm4891, %v5396, %v5400
        %v5403 = vshrl.u32 %v5364, 16
        %v5405 = vrot.slane %v5403, 6
        %v5406 = vshll.u32 %v5364, 16
        %v5408 = vrot.slane %v5406, 7
        %v5409 = vor.u32 %v5405, %v5408
        %v5410 = vrot.slane %v5409, 2
        %v5412 = vshll.u32 %v5365, 16
        %v5414 = vrot.slane %v5412, 7
        %v5415 = vsel %vm4891, %v5410, %v5414
        %v5417 = vshrl.u32 %v5372, 16
        %v5419 = vrot.slane %v5417, 6
        %v5420 = vshll.u32 %v5372, 16
        %v5422 = vrot.slane %v5420, 7
        %v5423 = vor.u32 %v5419, %v5422
        %v5424 = vrot.slane %v5423, 2
        %v5426 = vshll.u32 %v5373, 16
        %v5428 = vrot.slane %v5426, 7
        %v5429 = vsel %vm4891, %v5424, %v5428
        %s5430 = scalar_lea.vmem %s3, 64
        %v5431 = vld [vmem:[%s5430] sm:$0xf]
        %v5432 = vld [vmem:[%s5430 + $0x4] sm:$0xf]
        %v5433 = vld [vmem:[%s5430 + $0x8] sm:$0xf]
        %v5434 = vld [vmem:[%s5430 + $0xc] sm:$0xf]
        %v5435 = vcombine.low %v5387, %v5401
        %v5436 = vcombine.low %v5415, %v5429
        %v5438 = vunpack.c.l.s4 1983009808
        %v5439 = vunpack.c.0.s8 %v5438
        %v5440 = vlaneseq
        %v5441 = vshrl.u32 %v5440, 7
        %v5442 = vsub.s32 %v5439, %v5441
        %v5443 = vrot.slane %v5435, %v5442
        %v5445 = vunpack.c.l.s4 1983009808
        %v5446 = vunpack.c.0.s8 %v5445
        %v5447 = vlaneseq
        %v5448 = vshrl.u32 %v5447, 7
        %v5449 = vsub.s32 %v5446, %v5448
        %v5450 = vrot.slane %v5436, %v5449
        %v5451 = vcombine.low %v5443, %v5450
        %v5456 = vunpack.c.l.b16 %v5431
        %v5457 = vunpack.c.l.b16 %v5432
        %v5458 = vunpack.c.l.b16 %v5433
        %v5459 = vunpack.c.l.b16 %v5434
        %v5460 = vpack.c.b16 %v5457, %v5456
        %v5461 = vpack.c.b16 %v5459, %v5458
        %v5465 = vsel %vm628, %v5451, 0
        %5467 = vmatprep.subr.bf16.mxu0 0
        %5468 = vmatpush1.bf16.msra.mxu0 %v5460
        %5469 = vmatprep.subr.bf16.mxu0 0
        %5470 = vmatpush1.bf16.msra.mxu0 %v5461
        %5471 = vmatprep.subr.bf16.mxu0 0
        %5472 = vmatpush1.bf16.msra.mxu0 0
        %5473 = vmatprep.subr.bf16.mxu0 0
        %5474 = vmatpush1.bf16.msra.mxu0 0
        %5475 = vmatprep.subr.bf16.mxu0 0
        %5476 = vmatpush1.bf16.msra.mxu0 0
        %5477 = vmatprep.subr.bf16.mxu0 0
        %5478 = vmatpush1.bf16.msra.mxu0 0
        %5479 = vmatprep.subr.bf16.mxu0 0
        %5480 = vmatpush1.bf16.msra.mxu0 0
        %5481 = vmatprep.subr.bf16.mxu0 0
        %5482 = vmatpush1.bf16.msra.mxu0 0
        %5483 = vmatprep.subr.bf16.mxu0 0
        %5484 = vmatpush1.bf16.msra.mxu0 0
        %5485 = vmatprep.subr.bf16.mxu0 0
        %5486 = vmatpush1.bf16.msra.mxu0 0
        %5487 = vmatprep.subr.bf16.mxu0 0
        %5488 = vmatpush1.bf16.msra.mxu0 0
        %5489 = vmatprep.subr.bf16.mxu0 0
        %5490 = vmatpush1.bf16.msra.mxu0 0
        %5491 = vmatprep.subr.bf16.mxu0 0
        %5492 = vmatpush1.bf16.msra.mxu0 0
        %5493 = vmatprep.subr.bf16.mxu0 0
        %5494 = vmatpush1.bf16.msra.mxu0 0
        %5495 = vmatprep.subr.bf16.mxu0 0
        %5496 = vmatpush1.bf16.msra.mxu0 0
        %5497 = vmatprep.subr.bf16.mxu0 0
        %5498 = vmatpush1.bf16.msra.mxu0 0
        %5499 = vmatprep.mubr.bf16.mxu0 0
        %5500 = vmatmul.mubr.bf16.gmra.mrb[0].mxu0 %v5465
        %v5501 = vpop.f32.mrb[0].mxu0
        %v5502 = vadd.f32 0.0, %v5501
        %v5503 = vpop.f32.mrb[0].mxu0
        %v5504 = vpop.f32.mrb[0].mxu0
        %v5505 = vadd.f32 0.0, %v5504
        %v5506 = vpop.f32.mrb[0].mxu0
        %5507 = vdwg.mxu0
        %v5508 = vadd.f32 %v5332, %v5502
        %v5509 = vadd.f32 %v5333, %v5505
        %v5510 = vld [vmem:[%s4694] sm:$0x6]
        %v5511 = vld [vmem:[%s4694 + $0x4] sm:$0x6]
        %v5512 = vld [vmem:[%s4694 + $0x8] sm:$0x6]
        %v5513 = vld [vmem:[%s4694 + $0xc] sm:$0x6]
        %v5519 = vunpack.c.l.s4 1983009808
        %v5520 = vunpack.c.0.s8 %v5519
        %v5521 = vlaneseq
        %v5522 = vshrl.u32 %v5521, 7
        %v5523 = vsub.s32 %v5520, %v5522
        %v5524 = vrot.slane %v5510, %v5523
        %v5525 = vcombine.high %v5524, %v5524
        %v5527 = vunpack.c.l.s4 1983009808
        %v5528 = vunpack.c.0.s8 %v5527
        %v5529 = vlaneseq
        %v5530 = vshrl.u32 %v5529, 7
        %v5531 = vsub.s32 %v5528, %v5530
        %v5532 = vrot.slane %v5511, %v5531
        %v5533 = vcombine.high %v5532, %v5532
        %v5535 = vunpack.c.l.s4 1983009808
        %v5536 = vunpack.c.0.s8 %v5535
        %v5537 = vlaneseq
        %v5538 = vshrl.u32 %v5537, 7
        %v5539 = vsub.s32 %v5536, %v5538
        %v5540 = vrot.slane %v5512, %v5539
        %v5541 = vcombine.high %v5540, %v5540
        %v5543 = vunpack.c.l.s4 1983009808
        %v5544 = vunpack.c.0.s8 %v5543
        %v5545 = vlaneseq
        %v5546 = vshrl.u32 %v5545, 7
        %v5547 = vsub.s32 %v5544, %v5546
        %v5548 = vrot.slane %v5513, %v5547
        %v5549 = vcombine.high %v5548, %v5548
        %v5550 = vrot.slane %v5524, 7
        %v5551 = vrot.slane %v5550, 2
        %v5552 = vrot.slane %v5525, 7
        %v5553 = vsel %vm5149, %v5551, %v5552
        %v5554 = vrot.slane %v5532, 7
        %v5555 = vrot.slane %v5554, 2
        %v5556 = vrot.slane %v5533, 7
        %v5557 = vsel %vm5149, %v5555, %v5556
        %v5558 = vrot.slane %v5540, 7
        %v5559 = vrot.slane %v5558, 2
        %v5560 = vrot.slane %v5541, 7
        %v5561 = vsel %vm5149, %v5559, %v5560
        %v5562 = vrot.slane %v5548, 7
        %v5563 = vrot.slane %v5562, 2
        %v5564 = vrot.slane %v5549, 7
        %v5565 = vsel %vm5149, %v5563, %v5564
        %s5566 = scalar_lea.vmem %s3, 80
        %v5567 = vld [vmem:[%s5566] sm:$0xf]
        %v5568 = vld [vmem:[%s5566 + $0x4] sm:$0xf]
        %v5569 = vld [vmem:[%s5566 + $0x8] sm:$0xf]
        %v5570 = vld [vmem:[%s5566 + $0xc] sm:$0xf]
        %v5571 = vcombine.low %v5553, %v5557
        %v5572 = vcombine.low %v5561, %v5565
        %v5574 = vunpack.c.l.s4 1983009808
        %v5575 = vunpack.c.0.s8 %v5574
        %v5576 = vlaneseq
        %v5577 = vshrl.u32 %v5576, 7
        %v5578 = vsub.s32 %v5575, %v5577
        %v5579 = vrot.slane %v5571, %v5578
        %v5581 = vunpack.c.l.s4 1983009808
        %v5582 = vunpack.c.0.s8 %v5581
        %v5583 = vlaneseq
        %v5584 = vshrl.u32 %v5583, 7
        %v5585 = vsub.s32 %v5582, %v5584
        %v5586 = vrot.slane %v5572, %v5585
        %v5587 = vcombine.low %v5579, %v5586
        %v5592 = vunpack.c.l.b16 %v5567
        %v5593 = vunpack.c.l.b16 %v5568
        %v5594 = vunpack.c.l.b16 %v5569
        %v5595 = vunpack.c.l.b16 %v5570
        %v5596 = vpack.c.b16 %v5593, %v5592
        %v5597 = vpack.c.b16 %v5595, %v5594
        %v5601 = vsel %vm628, %v5587, 0
        %5603 = vmatprep.subr.bf16.mxu0 0
        %5604 = vmatpush1.bf16.msra.mxu0 %v5596
        %5605 = vmatprep.subr.bf16.mxu0 0
        %5606 = vmatpush1.bf16.msra.mxu0 %v5597
        %5607 = vmatprep.subr.bf16.mxu0 0
        %5608 = vmatpush1.bf16.msra.mxu0 0
        %5609 = vmatprep.subr.bf16.mxu0 0
        %5610 = vmatpush1.bf16.msra.mxu0 0
        %5611 = vmatprep.subr.bf16.mxu0 0
        %5612 = vmatpush1.bf16.msra.mxu0 0
        %5613 = vmatprep.subr.bf16.mxu0 0
        %5614 = vmatpush1.bf16.msra.mxu0 0
        %5615 = vmatprep.subr.bf16.mxu0 0
        %5616 = vmatpush1.bf16.msra.mxu0 0
        %5617 = vmatprep.subr.bf16.mxu0 0
        %5618 = vmatpush1.bf16.msra.mxu0 0
        %5619 = vmatprep.subr.bf16.mxu0 0
        %5620 = vmatpush1.bf16.msra.mxu0 0
        %5621 = vmatprep.subr.bf16.mxu0 0
        %5622 = vmatpush1.bf16.msra.mxu0 0
        %5623 = vmatprep.subr.bf16.mxu0 0
        %5624 = vmatpush1.bf16.msra.mxu0 0
        %5625 = vmatprep.subr.bf16.mxu0 0
        %5626 = vmatpush1.bf16.msra.mxu0 0
        %5627 = vmatprep.subr.bf16.mxu0 0
        %5628 = vmatpush1.bf16.msra.mxu0 0
        %5629 = vmatprep.subr.bf16.mxu0 0
        %5630 = vmatpush1.bf16.msra.mxu0 0
        %5631 = vmatprep.subr.bf16.mxu0 0
        %5632 = vmatpush1.bf16.msra.mxu0 0
        %5633 = vmatprep.subr.bf16.mxu0 0
        %5634 = vmatpush1.bf16.msra.mxu0 0
        %5635 = vmatprep.mubr.bf16.mxu0 0
        %5636 = vmatmul.mubr.bf16.gmra.mrb[0].mxu0 %v5601
        %v5637 = vpop.f32.mrb[0].mxu0
        %v5638 = vadd.f32 0.0, %v5637
        %v5639 = vpop.f32.mrb[0].mxu0
        %v5640 = vpop.f32.mrb[0].mxu0
        %v5641 = vadd.f32 0.0, %v5640
        %v5642 = vpop.f32.mrb[0].mxu0
        %5643 = vdwg.mxu0
        %v5644 = vadd.f32 %v5508, %v5638
        %v5645 = vadd.f32 %v5509, %v5641
        %s5646 = scalar_lea.vmem [#allocation3], 8
        %v5647 = vld [vmem:[%s5646] sm:$0x3]
        %v5648 = vld [vmem:[%s5646 + $0x4] sm:$0x3]
        %v5649 = vld [vmem:[%s5646 + $0x8] sm:$0x3]
        %v5650 = vld [vmem:[%s5646 + $0xc] sm:$0x3]
        %s5651 = scalar_lea.vmem %s3, 96
        %v5652 = vld [vmem:[%s5651] sm:$0xf]
        %v5653 = vld [vmem:[%s5651 + $0x4] sm:$0xf]
        %v5654 = vld [vmem:[%s5651 + $0x8] sm:$0xf]
        %v5655 = vld [vmem:[%s5651 + $0xc] sm:$0xf]
        %v5660 = vcombine.low %v5647, %v5648
        %v5661 = vcombine.low %v5649, %v5650
        %v5663 = vunpack.c.l.s4 1983009808
        %v5664 = vunpack.c.0.s8 %v5663
        %v5665 = vlaneseq
        %v5666 = vshrl.u32 %v5665, 7
        %v5667 = vsub.s32 %v5664, %v5666
        %v5668 = vrot.slane %v5660, %v5667
        %v5670 = vunpack.c.l.s4 1983009808
        %v5671 = vunpack.c.0.s8 %v5670
        %v5672 = vlaneseq
        %v5673 = vshrl.u32 %v5672, 7
        %v5674 = vsub.s32 %v5671, %v5673
        %v5675 = vrot.slane %v5661, %v5674
        %v5676 = vcombine.low %v5668, %v5675
        %v5681 = vunpack.c.l.b16 %v5652
        %v5682 = vunpack.c.l.b16 %v5653
        %v5683 = vunpack.c.l.b16 %v5654
        %v5684 = vunpack.c.l.b16 %v5655
        %v5685 = vpack.c.b16 %v5682, %v5681
        %v5686 = vpack.c.b16 %v5684, %v5683
        %v5690 = vsel %vm628, %v5676, 0
        %5692 = vmatprep.subr.bf16.mxu0 0
        %5693 = vmatpush1.bf16.msra.mxu0 %v5685
        %5694 = vmatprep.subr.bf16.mxu0 0
        %5695 = vmatpush1.bf16.msra.mxu0 %v5686
        %5696 = vmatprep.subr.bf16.mxu0 0
        %5697 = vmatpush1.bf16.msra.mxu0 0
        %5698 = vmatprep.subr.bf16.mxu0 0
        %5699 = vmatpush1.bf16.msra.mxu0 0
        %5700 = vmatprep.subr.bf16.mxu0 0
        %5701 = vmatpush1.bf16.msra.mxu0 0
        %5702 = vmatprep.subr.bf16.mxu0 0
        %5703 = vmatpush1.bf16.msra.mxu0 0
        %5704 = vmatprep.subr.bf16.mxu0 0
        %5705 = vmatpush1.bf16.msra.mxu0 0
        %5706 = vmatprep.subr.bf16.mxu0 0
        %5707 = vmatpush1.bf16.msra.mxu0 0
        %5708 = vmatprep.subr.bf16.mxu0 0
        %5709 = vmatpush1.bf16.msra.mxu0 0
        %5710 = vmatprep.subr.bf16.mxu0 0
        %5711 = vmatpush1.bf16.msra.mxu0 0
        %5712 = vmatprep.subr.bf16.mxu0 0
        %5713 = vmatpush1.bf16.msra.mxu0 0
        %5714 = vmatprep.subr.bf16.mxu0 0
        %5715 = vmatpush1.bf16.msra.mxu0 0
        %5716 = vmatprep.subr.bf16.mxu0 0
        %5717 = vmatpush1.bf16.msra.mxu0 0
        %5718 = vmatprep.subr.bf16.mxu0 0
        %5719 = vmatpush1.bf16.msra.mxu0 0
        %5720 = vmatprep.subr.bf16.mxu0 0
        %5721 = vmatpush1.bf16.msra.mxu0 0
        %5722 = vmatprep.subr.bf16.mxu0 0
        %5723 = vmatpush1.bf16.msra.mxu0 0
        %5724 = vmatprep.mubr.bf16.mxu0 0
        %5725 = vmatmul.mubr.bf16.gmra.mrb[0].mxu0 %v5690
        %v5726 = vpop.f32.mrb[0].mxu0
        %v5727 = vadd.f32 0.0, %v5726
        %v5728 = vpop.f32.mrb[0].mxu0
        %v5729 = vpop.f32.mrb[0].mxu0
        %v5730 = vadd.f32 0.0, %v5729
        %v5731 = vpop.f32.mrb[0].mxu0
        %5732 = vdwg.mxu0
        %v5733 = vadd.f32 %v5644, %v5727
        %v5734 = vadd.f32 %v5645, %v5730
        %v5735 = vld [vmem:[%s5646] sm:$0x7]
        %v5736 = vld [vmem:[%s5646 + $0x4] sm:$0x7]
        %v5737 = vld [vmem:[%s5646 + $0x8] sm:$0x7]
        %v5738 = vld [vmem:[%s5646 + $0xc] sm:$0x7]
        %v5744 = vunpack.c.l.s4 1983009808
        %v5745 = vunpack.c.0.s8 %v5744
        %v5746 = vlaneseq
        %v5747 = vshrl.u32 %v5746, 7
        %v5748 = vsub.s32 %v5745, %v5747
        %v5749 = vrot.slane %v5735, %v5748
        %v5750 = vcombine.high %v5749, %v5749
        %v5752 = vunpack.c.l.s4 1983009808
        %v5753 = vunpack.c.0.s8 %v5752
        %v5754 = vlaneseq
        %v5755 = vshrl.u32 %v5754, 7
        %v5756 = vsub.s32 %v5753, %v5755
        %v5757 = vrot.slane %v5736, %v5756
        %v5758 = vcombine.high %v5757, %v5757
        %v5760 = vunpack.c.l.s4 1983009808
        %v5761 = vunpack.c.0.s8 %v5760
        %v5762 = vlaneseq
        %v5763 = vshrl.u32 %v5762, 7
        %v5764 = vsub.s32 %v5761, %v5763
        %v5765 = vrot.slane %v5737, %v5764
        %v5766 = vcombine.high %v5765, %v5765
        %v5768 = vunpack.c.l.s4 1983009808
        %v5769 = vunpack.c.0.s8 %v5768
        %v5770 = vlaneseq
        %v5771 = vshrl.u32 %v5770, 7
        %v5772 = vsub.s32 %v5769, %v5771
        %v5773 = vrot.slane %v5738, %v5772
        %v5774 = vcombine.high %v5773, %v5773
        %v5776 = vshrl.u32 %v5749, 16
        %v5778 = vrot.slane %v5776, 6
        %v5779 = vshll.u32 %v5749, 16
        %v5781 = vrot.slane %v5779, 7
        %v5782 = vor.u32 %v5778, %v5781
        %v5783 = vrot.slane %v5782, 2
        %v5785 = vshll.u32 %v5750, 16
        %v5787 = vrot.slane %v5785, 7
        %v5788 = vsel %vm4891, %v5783, %v5787
        %v5790 = vshrl.u32 %v5757, 16
        %v5792 = vrot.slane %v5790, 6
        %v5793 = vshll.u32 %v5757, 16
        %v5795 = vrot.slane %v5793, 7
        %v5796 = vor.u32 %v5792, %v5795
        %v5797 = vrot.slane %v5796, 2
        %v5799 = vshll.u32 %v5758, 16
        %v5801 = vrot.slane %v5799, 7
        %v5802 = vsel %vm4891, %v5797, %v5801
        %v5804 = vshrl.u32 %v5765, 16
        %v5806 = vrot.slane %v5804, 6
        %v5807 = vshll.u32 %v5765, 16
        %v5809 = vrot.slane %v5807, 7
        %v5810 = vor.u32 %v5806, %v5809
        %v5811 = vrot.slane %v5810, 2
        %v5813 = vshll.u32 %v5766, 16
        %v5815 = vrot.slane %v5813, 7
        %v5816 = vsel %vm4891, %v5811, %v5815
        %v5818 = vshrl.u32 %v5773, 16
        %v5820 = vrot.slane %v5818, 6
        %v5821 = vshll.u32 %v5773, 16
        %v5823 = vrot.slane %v5821, 7
        %v5824 = vor.u32 %v5820, %v5823
        %v5825 = vrot.slane %v5824, 2
        %v5827 = vshll.u32 %v5774, 16
        %v5829 = vrot.slane %v5827, 7
        %v5830 = vsel %vm4891, %v5825, %v5829
        %s5831 = scalar_lea.vmem %s3, 112
        %v5832 = vld [vmem:[%s5831] sm:$0xf]
        %v5833 = vld [vmem:[%s5831 + $0x4] sm:$0xf]
        %v5834 = vld [vmem:[%s5831 + $0x8] sm:$0xf]
        %v5835 = vld [vmem:[%s5831 + $0xc] sm:$0xf]
        %v5836 = vcombine.low %v5788, %v5802
        %v5837 = vcombine.low %v5816, %v5830
        %v5839 = vunpack.c.l.s4 1983009808
        %v5840 = vunpack.c.0.s8 %v5839
        %v5841 = vlaneseq
        %v5842 = vshrl.u32 %v5841, 7
        %v5843 = vsub.s32 %v5840, %v5842
        %v5844 = vrot.slane %v5836, %v5843
        %v5846 = vunpack.c.l.s4 1983009808
        %v5847 = vunpack.c.0.s8 %v5846
        %v5848 = vlaneseq
        %v5849 = vshrl.u32 %v5848, 7
        %v5850 = vsub.s32 %v5847, %v5849
        %v5851 = vrot.slane %v5837, %v5850
        %v5852 = vcombine.low %v5844, %v5851
        %v5857 = vunpack.c.l.b16 %v5832
        %v5858 = vunpack.c.l.b16 %v5833
        %v5859 = vunpack.c.l.b16 %v5834
        %v5860 = vunpack.c.l.b16 %v5835
        %v5861 = vpack.c.b16 %v5858, %v5857
        %v5862 = vpack.c.b16 %v5860, %v5859
        %v5866 = vsel %vm628, %v5852, 0
        %5868 = vmatprep.subr.bf16.mxu0 0
        %5869 = vmatpush1.bf16.msra.mxu0 %v5861
        %5870 = vmatprep.subr.bf16.mxu0 0
        %5871 = vmatpush1.bf16.msra.mxu0 %v5862
        %5872 = vmatprep.subr.bf16.mxu0 0
        %5873 = vmatpush1.bf16.msra.mxu0 0
        %5874 = vmatprep.subr.bf16.mxu0 0
        %5875 = vmatpush1.bf16.msra.mxu0 0
        %5876 = vmatprep.subr.bf16.mxu0 0
        %5877 = vmatpush1.bf16.msra.mxu0 0
        %5878 = vmatprep.subr.bf16.mxu0 0
        %5879 = vmatpush1.bf16.msra.mxu0 0
        %5880 = vmatprep.subr.bf16.mxu0 0
        %5881 = vmatpush1.bf16.msra.mxu0 0
        %5882 = vmatprep.subr.bf16.mxu0 0
        %5883 = vmatpush1.bf16.msra.mxu0 0
        %5884 = vmatprep.subr.bf16.mxu0 0
        %5885 = vmatpush1.bf16.msra.mxu0 0
        %5886 = vmatprep.subr.bf16.mxu0 0
        %5887 = vmatpush1.bf16.msra.mxu0 0
        %5888 = vmatprep.subr.bf16.mxu0 0
        %5889 = vmatpush1.bf16.msra.mxu0 0
        %5890 = vmatprep.subr.bf16.mxu0 0
        %5891 = vmatpush1.bf16.msra.mxu0 0
        %5892 = vmatprep.subr.bf16.mxu0 0
        %5893 = vmatpush1.bf16.msra.mxu0 0
        %5894 = vmatprep.subr.bf16.mxu0 0
        %5895 = vmatpush1.bf16.msra.mxu0 0
        %5896 = vmatprep.subr.bf16.mxu0 0
        %5897 = vmatpush1.bf16.msra.mxu0 0
        %5898 = vmatprep.subr.bf16.mxu0 0
        %5899 = vmatpush1.bf16.msra.mxu0 0
        %5900 = vmatprep.mubr.bf16.mxu0 0
        %5901 = vmatmul.mubr.bf16.gmra.mrb[0].mxu0 %v5866
        %v5902 = vpop.f32.mrb[0].mxu0
        %v5903 = vadd.f32 0.0, %v5902
        %v5904 = vpop.f32.mrb[0].mxu0
        %v5905 = vpop.f32.mrb[0].mxu0
        %v5906 = vadd.f32 0.0, %v5905
        %v5907 = vpop.f32.mrb[0].mxu0
        %5908 = vdwg.mxu0
        %v5909 = vadd.f32 %v5733, %v5903
        %v5910 = vadd.f32 %v5734, %v5906
        %v5911 = vld [vmem:[%s5646] sm:$0x6]
        %v5912 = vld [vmem:[%s5646 + $0x4] sm:$0x6]
        %v5913 = vld [vmem:[%s5646 + $0x8] sm:$0x6]
        %v5914 = vld [vmem:[%s5646 + $0xc] sm:$0x6]
        %v5920 = vunpack.c.l.s4 1983009808
        %v5921 = vunpack.c.0.s8 %v5920
        %v5922 = vlaneseq
        %v5923 = vshrl.u32 %v5922, 7
        %v5924 = vsub.s32 %v5921, %v5923
        %v5925 = vrot.slane %v5911, %v5924
        %v5926 = vcombine.high %v5925, %v5925
        %v5928 = vunpack.c.l.s4 1983009808
        %v5929 = vunpack.c.0.s8 %v5928
        %v5930 = vlaneseq
        %v5931 = vshrl.u32 %v5930, 7
        %v5932 = vsub.s32 %v5929, %v5931
        %v5933 = vrot.slane %v5912, %v5932
        %v5934 = vcombine.high %v5933, %v5933
        %v5936 = vunpack.c.l.s4 1983009808
        %v5937 = vunpack.c.0.s8 %v5936
        %v5938 = vlaneseq
        %v5939 = vshrl.u32 %v5938, 7
        %v5940 = vsub.s32 %v5937, %v5939
        %v5941 = vrot.slane %v5913, %v5940
        %v5942 = vcombine.high %v5941, %v5941
        %v5944 = vunpack.c.l.s4 1983009808
        %v5945 = vunpack.c.0.s8 %v5944
        %v5946 = vlaneseq
        %v5947 = vshrl.u32 %v5946, 7
        %v5948 = vsub.s32 %v5945, %v5947
        %v5949 = vrot.slane %v5914, %v5948
        %v5950 = vcombine.high %v5949, %v5949
        %v5951 = vrot.slane %v5925, 7
        %v5952 = vrot.slane %v5951, 2
        %v5953 = vrot.slane %v5926, 7
        %v5954 = vsel %vm5149, %v5952, %v5953
        %v5955 = vrot.slane %v5933, 7
        %v5956 = vrot.slane %v5955, 2
        %v5957 = vrot.slane %v5934, 7
        %v5958 = vsel %vm5149, %v5956, %v5957
        %v5959 = vrot.slane %v5941, 7
        %v5960 = vrot.slane %v5959, 2
        %v5961 = vrot.slane %v5942, 7
        %v5962 = vsel %vm5149, %v5960, %v5961
        %v5963 = vrot.slane %v5949, 7
        %v5964 = vrot.slane %v5963, 2
        %v5965 = vrot.slane %v5950, 7
        %v5966 = vsel %vm5149, %v5964, %v5965
        %s5967 = scalar_lea.vmem %s3, 128
        %v5968 = vld [vmem:[%s5967] sm:$0xf]
        %v5969 = vld [vmem:[%s5967 + $0x4] sm:$0xf]
        %v5970 = vld [vmem:[%s5967 + $0x8] sm:$0xf]
        %v5971 = vld [vmem:[%s5967 + $0xc] sm:$0xf]
        %v5972 = vcombine.low %v5954, %v5958
        %v5973 = vcombine.low %v5962, %v5966
        %v5975 = vunpack.c.l.s4 1983009808
        %v5976 = vunpack.c.0.s8 %v5975
        %v5977 = vlaneseq
        %v5978 = vshrl.u32 %v5977, 7
        %v5979 = vsub.s32 %v5976, %v5978
        %v5980 = vrot.slane %v5972, %v5979
        %v5982 = vunpack.c.l.s4 1983009808
        %v5983 = vunpack.c.0.s8 %v5982
        %v5984 = vlaneseq
        %v5985 = vshrl.u32 %v5984, 7
        %v5986 = vsub.s32 %v5983, %v5985
        %v5987 = vrot.slane %v5973, %v5986
        %v5988 = vcombine.low %v5980, %v5987
        %v5993 = vunpack.c.l.b16 %v5968
        %v5994 = vunpack.c.l.b16 %v5969
        %v5995 = vunpack.c.l.b16 %v5970
        %v5996 = vunpack.c.l.b16 %v5971
        %v5997 = vpack.c.b16 %v5994, %v5993
        %v5998 = vpack.c.b16 %v5996, %v5995
        %v6002 = vsel %vm628, %v5988, 0
        %6004 = vmatprep.subr.bf16.mxu0 0
        %6005 = vmatpush1.bf16.msra.mxu0 %v5997
        %6006 = vmatprep.subr.bf16.mxu0 0
        %6007 = vmatpush1.bf16.msra.mxu0 %v5998
        %6008 = vmatprep.subr.bf16.mxu0 0
        %6009 = vmatpush1.bf16.msra.mxu0 0
        %6010 = vmatprep.subr.bf16.mxu0 0
        %6011 = vmatpush1.bf16.msra.mxu0 0
        %6012 = vmatprep.subr.bf16.mxu0 0
        %6013 = vmatpush1.bf16.msra.mxu0 0
        %6014 = vmatprep.subr.bf16.mxu0 0
        %6015 = vmatpush1.bf16.msra.mxu0 0
        %6016 = vmatprep.subr.bf16.mxu0 0
        %6017 = vmatpush1.bf16.msra.mxu0 0
        %6018 = vmatprep.subr.bf16.mxu0 0
        %6019 = vmatpush1.bf16.msra.mxu0 0
        %6020 = vmatprep.subr.bf16.mxu0 0
        %6021 = vmatpush1.bf16.msra.mxu0 0
        %6022 = vmatprep.subr.bf16.mxu0 0
        %6023 = vmatpush1.bf16.msra.mxu0 0
        %6024 = vmatprep.subr.bf16.mxu0 0
        %6025 = vmatpush1.bf16.msra.mxu0 0
        %6026 = vmatprep.subr.bf16.mxu0 0
        %6027 = vmatpush1.bf16.msra.mxu0 0
        %6028 = vmatprep.subr.bf16.mxu0 0
        %6029 = vmatpush1.bf16.msra.mxu0 0
        %6030 = vmatprep.subr.bf16.mxu0 0
        %6031 = vmatpush1.bf16.msra.mxu0 0
        %6032 = vmatprep.subr.bf16.mxu0 0
        %6033 = vmatpush1.bf16.msra.mxu0 0
        %6034 = vmatprep.subr.bf16.mxu0 0
        %6035 = vmatpush1.bf16.msra.mxu0 0
        %6036 = vmatprep.mubr.bf16.mxu0 0
        %6037 = vmatmul.mubr.bf16.gmra.mrb[0].mxu0 %v6002
        %v6038 = vpop.f32.mrb[0].mxu0
        %v6039 = vadd.f32 0.0, %v6038
        %v6040 = vpop.f32.mrb[0].mxu0
        %v6041 = vpop.f32.mrb[0].mxu0
        %v6042 = vadd.f32 0.0, %v6041
        %v6043 = vpop.f32.mrb[0].mxu0
        %6044 = vdwg.mxu0
        %v6045 = vadd.f32 %v5909, %v6039
        %v6046 = vadd.f32 %v5910, %v6042
        %v6047 = vld [vmem:[%s9] sm:$0x1]
        %v6049 = vlaneseq
        %v6050 = vshrl.u32 %v6049, 7
        %v6051 = vsub.s32 0, %v6050
        %v6052 = vrot.slane %v6047, %v6051
        %v6054 = vadd.f32 %v6045, %v6052
        %v6055 = vadd.f32 %v6046, %v6052
        %v6056 = vmax.f32 %v6054, 0.0
        %v6057 = vmax.f32 %v6055, 0.0
        %v6060 = vcombine.high %v6056, %v6056
        %v6061 = vcombine.high %v6057, %v6057
        %v6064 = vpack.c.bf16 %v6056, %v6056
        %v6065 = vpack.c.bf16 %v6060, %v6060
        %v6066 = vpack.c.bf16 %v6057, %v6057
        %v6067 = vpack.c.bf16 %v6061, %v6061
        %vm6068 = vcmask 518144
        %6069 = vst.msk [vmem:[#allocation4] sm:$0x7] %vm6068, 0
        %s6070 = scalar_lea.vmem [#allocation4], 20
        %6071 = vst.msk [vmem:[%s6070] sm:$0x7] %vm6068, 0
        %s6072 = scalar_lea.vmem [#allocation4], 4
        %vm6073 = vcmask 516096
        %vm6074 = vmand %vm6073, %vm2223
        %v6075 = vld [vmem:[%s6072] sm:$0x1]
        %v6076 = vsel %vm6074, 0, %v6075
        %6077 = vst [vmem:[%s6072] sm:$0x1] %v6076
        %v6078 = vld [vmem:[%s6072 + $0x4] sm:$0x1]
        %v6079 = vsel %vm6074, 0, %v6078
        %6080 = vst [vmem:[%s6072 + $0x4] sm:$0x1] %v6079
        %v6081 = vld [vmem:[%s6072 + $0x8] sm:$0x1]
        %v6082 = vsel %vm6074, 0, %v6081
        %6083 = vst [vmem:[%s6072 + $0x8] sm:$0x1] %v6082
        %v6084 = vld [vmem:[%s6072 + $0xc] sm:$0x1]
        %v6085 = vsel %vm6074, 0, %v6084
        %6086 = vst [vmem:[%s6072 + $0xc] sm:$0x1] %v6085
        %vm6087 = vcmask 518146
        %vm6088 = vmand %vm6087, %vm4708
        %v6089 = vld [vmem:[%s6072] sm:$0x4]
        %v6090 = vsel %vm6088, 0, %v6089
        %6091 = vst [vmem:[%s6072] sm:$0x4] %v6090
        %v6092 = vld [vmem:[%s6072 + $0x4] sm:$0x4]
        %v6093 = vsel %vm6088, 0, %v6092
        %6094 = vst [vmem:[%s6072 + $0x4] sm:$0x4] %v6093
        %v6095 = vld [vmem:[%s6072 + $0x8] sm:$0x4]
        %v6096 = vsel %vm6088, 0, %v6095
        %6097 = vst [vmem:[%s6072 + $0x8] sm:$0x4] %v6096
        %v6098 = vld [vmem:[%s6072 + $0xc] sm:$0x4]
        %v6099 = vsel %vm6088, 0, %v6098
        %6100 = vst [vmem:[%s6072 + $0xc] sm:$0x4] %v6099
        %v6105 = vunpack.c.l.b16 %v6064
        %v6106 = vunpack.c.l.b16 %v6065
        %v6107 = vunpack.c.l.b16 %v6066
        %v6108 = vunpack.c.l.b16 %v6067
        %v6109 = vpack.c.b16 %v6105, %v6105
        %v6110 = vpack.c.b16 %v6106, %v6106
        %v6111 = vpack.c.b16 %v6107, %v6107
        %v6112 = vpack.c.b16 %v6108, %v6108
        %v6114 = vshrl.u32 %v6109, 16
        %v6116 = vrot.slane %v6114, 7
        %v6117 = vshll.u32 %v6109, 16
        %v6119 = vor.u32 %v6116, %v6117
        %v6121 = vshrl.u32 %v6110, 16
        %v6123 = vrot.slane %v6121, 7
        %v6124 = vshll.u32 %v6110, 16
        %v6126 = vor.u32 %v6123, %v6124
        %v6128 = vshrl.u32 %v6111, 16
        %v6130 = vrot.slane %v6128, 7
        %v6131 = vshll.u32 %v6111, 16
        %v6133 = vor.u32 %v6130, %v6131
        %v6135 = vshrl.u32 %v6112, 16
        %v6137 = vrot.slane %v6135, 7
        %v6138 = vshll.u32 %v6112, 16
        %v6140 = vor.u32 %v6137, %v6138
        %vm6145 = vcmask 518144
        %vm6146 = vmand %vm6145, %vm4823
        %v6147 = vld [vmem:[%s6072] sm:$0x7]
        %v6148 = vsel %vm6146, %v6119, %v6147
        %6149 = vst [vmem:[%s6072] sm:$0x7] %v6148
        %v6150 = vld [vmem:[%s6072 + $0x4] sm:$0x7]
        %v6151 = vsel %vm6146, %v6126, %v6150
        %6152 = vst [vmem:[%s6072 + $0x4] sm:$0x7] %v6151
        %v6153 = vld [vmem:[%s6072 + $0x8] sm:$0x7]
        %v6154 = vsel %vm6146, %v6133, %v6153
        %6155 = vst [vmem:[%s6072 + $0x8] sm:$0x7] %v6154
        %v6156 = vld [vmem:[%s6072 + $0xc] sm:$0x7]
        %v6157 = vsel %vm6146, %v6140, %v6156
        %6158 = vst [vmem:[%s6072 + $0xc] sm:$0x7] %v6157
        %v6159 = vld [vmem:[#allocation4] sm:$0x3]
        %v6160 = vld [vmem:[#allocation4 + $0x4] sm:$0x3]
        %v6161 = vld [vmem:[#allocation4 + $0x8] sm:$0x3]
        %v6162 = vld [vmem:[#allocation4 + $0xc] sm:$0x3]
        %v6163 = vld [vmem:[%s4] sm:$0xf]
        %v6164 = vld [vmem:[%s4 + $0x4] sm:$0xf]
        %v6165 = vld [vmem:[%s4 + $0x8] sm:$0xf]
        %v6166 = vld [vmem:[%s4 + $0xc] sm:$0xf]
        %v6167 = vld [vmem:[%s4 + $0x10] sm:$0xf]
        %v6168 = vld [vmem:[%s4 + $0x14] sm:$0xf]
        %v6169 = vld [vmem:[%s4 + $0x18] sm:$0xf]
        %v6170 = vld [vmem:[%s4 + $0x1c] sm:$0xf]
        %v6171 = vld [vmem:[#allocation4] sm:$0x7]
        %v6172 = vld [vmem:[#allocation4 + $0x4] sm:$0x7]
        %v6173 = vld [vmem:[#allocation4 + $0x8] sm:$0x7]
        %v6174 = vld [vmem:[#allocation4 + $0xc] sm:$0x7]
        %v6180 = vunpack.c.l.s4 1983009808
        %v6181 = vunpack.c.0.s8 %v6180
        %v6182 = vlaneseq
        %v6183 = vshrl.u32 %v6182, 7
        %v6184 = vsub.s32 %v6181, %v6183
        %v6185 = vrot.slane %v6171, %v6184
        %v6186 = vcombine.high %v6185, %v6185
        %v6188 = vunpack.c.l.s4 1983009808
        %v6189 = vunpack.c.0.s8 %v6188
        %v6190 = vlaneseq
        %v6191 = vshrl.u32 %v6190, 7
        %v6192 = vsub.s32 %v6189, %v6191
        %v6193 = vrot.slane %v6172, %v6192
        %v6194 = vcombine.high %v6193, %v6193
        %v6196 = vunpack.c.l.s4 1983009808
        %v6197 = vunpack.c.0.s8 %v6196
        %v6198 = vlaneseq
        %v6199 = vshrl.u32 %v6198, 7
        %v6200 = vsub.s32 %v6197, %v6199
        %v6201 = vrot.slane %v6173, %v6200
        %v6202 = vcombine.high %v6201, %v6201
        %v6204 = vunpack.c.l.s4 1983009808
        %v6205 = vunpack.c.0.s8 %v6204
        %v6206 = vlaneseq
        %v6207 = vshrl.u32 %v6206, 7
        %v6208 = vsub.s32 %v6205, %v6207
        %v6209 = vrot.slane %v6174, %v6208
        %v6210 = vcombine.high %v6209, %v6209
        %v6212 = vshrl.u32 %v6185, 16
        %v6214 = vrot.slane %v6212, 6
        %v6215 = vshll.u32 %v6185, 16
        %v6217 = vrot.slane %v6215, 7
        %v6218 = vor.u32 %v6214, %v6217
        %v6219 = vrot.slane %v6218, 2
        %v6221 = vshll.u32 %v6186, 16
        %v6223 = vrot.slane %v6221, 7
        %v6224 = vsel %vm4891, %v6219, %v6223
        %v6226 = vshrl.u32 %v6193, 16
        %v6228 = vrot.slane %v6226, 6
        %v6229 = vshll.u32 %v6193, 16
        %v6231 = vrot.slane %v6229, 7
        %v6232 = vor.u32 %v6228, %v6231
        %v6233 = vrot.slane %v6232, 2
        %v6235 = vshll.u32 %v6194, 16
        %v6237 = vrot.slane %v6235, 7
        %v6238 = vsel %vm4891, %v6233, %v6237
        %v6240 = vshrl.u32 %v6201, 16
        %v6242 = vrot.slane %v6240, 6
        %v6243 = vshll.u32 %v6201, 16
        %v6245 = vrot.slane %v6243, 7
        %v6246 = vor.u32 %v6242, %v6245
        %v6247 = vrot.slane %v6246, 2
        %v6249 = vshll.u32 %v6202, 16
        %v6251 = vrot.slane %v6249, 7
        %v6252 = vsel %vm4891, %v6247, %v6251
        %v6254 = vshrl.u32 %v6209, 16
        %v6256 = vrot.slane %v6254, 6
        %v6257 = vshll.u32 %v6209, 16
        %v6259 = vrot.slane %v6257, 7
        %v6260 = vor.u32 %v6256, %v6259
        %v6261 = vrot.slane %v6260, 2
        %v6263 = vshll.u32 %v6210, 16
        %v6265 = vrot.slane %v6263, 7
        %v6266 = vsel %vm4891, %v6261, %v6265
        %s6267 = scalar_lea.vmem %s4, 32
        %v6268 = vld [vmem:[%s6267] sm:$0xf]
        %v6269 = vld [vmem:[%s6267 + $0x4] sm:$0xf]
        %v6270 = vld [vmem:[%s6267 + $0x8] sm:$0xf]
        %v6271 = vld [vmem:[%s6267 + $0xc] sm:$0xf]
        %v6272 = vld [vmem:[%s6267 + $0x10] sm:$0xf]
        %v6273 = vld [vmem:[%s6267 + $0x14] sm:$0xf]
        %v6274 = vld [vmem:[%s6267 + $0x18] sm:$0xf]
        %v6275 = vld [vmem:[%s6267 + $0x1c] sm:$0xf]
        %v6276 = vcombine.low %v6224, %v6238
        %v6277 = vcombine.low %v6252, %v6266
        %v6279 = vunpack.c.l.s4 1983009808
        %v6280 = vunpack.c.0.s8 %v6279
        %v6281 = vlaneseq
        %v6282 = vshrl.u32 %v6281, 7
        %v6283 = vsub.s32 %v6280, %v6282
        %v6284 = vrot.slane %v6276, %v6283
        %v6286 = vunpack.c.l.s4 1983009808
        %v6287 = vunpack.c.0.s8 %v6286
        %v6288 = vlaneseq
        %v6289 = vshrl.u32 %v6288, 7
        %v6290 = vsub.s32 %v6287, %v6289
        %v6291 = vrot.slane %v6277, %v6290
        %v6292 = vcombine.low %v6284, %v6291
        %v6301 = vunpack.c.l.b16 %v6268
        %v6302 = vunpack.c.l.b16 %v6269
        %v6303 = vunpack.c.l.b16 %v6270
        %v6304 = vunpack.c.l.b16 %v6271
        %v6305 = vunpack.c.l.b16 %v6272
        %v6306 = vunpack.c.l.b16 %v6273
        %v6307 = vunpack.c.l.b16 %v6274
        %v6308 = vunpack.c.l.b16 %v6275
        %v6309 = vpack.c.b16 %v6302, %v6301
        %v6310 = vpack.c.b16 %v6304, %v6303
        %v6311 = vpack.c.b16 %v6306, %v6305
        %v6312 = vpack.c.b16 %v6308, %v6307
        %vm6317 = vcmask 523264
        %v6319 = vsel %vm6317, %v6292, 0
        %6321 = vmatprep.subr.bf16.mxu0 0
        %6322 = vmatpush1.bf16.msra.mxu0 %v6309
        %6323 = vmatprep.subr.bf16.mxu0 0
        %6324 = vmatpush1.bf16.msra.mxu0 %v6310
        %6325 = vmatprep.subr.bf16.mxu0 0
        %6326 = vmatpush1.bf16.msra.mxu0 %v6311
        %6327 = vmatprep.subr.bf16.mxu0 0
        %6328 = vmatpush1.bf16.msra.mxu0 %v6312
        %6329 = vmatprep.subr.bf16.mxu0 0
        %6330 = vmatpush1.bf16.msra.mxu0 0
        %6331 = vmatprep.subr.bf16.mxu0 0
        %6332 = vmatpush1.bf16.msra.mxu0 0
        %6333 = vmatprep.subr.bf16.mxu0 0
        %6334 = vmatpush1.bf16.msra.mxu0 0
        %6335 = vmatprep.subr.bf16.mxu0 0
        %6336 = vmatpush1.bf16.msra.mxu0 0
        %6337 = vmatprep.subr.bf16.mxu0 0
        %6338 = vmatpush1.bf16.msra.mxu0 0
        %6339 = vmatprep.subr.bf16.mxu0 0
        %6340 = vmatpush1.bf16.msra.mxu0 0
        %6341 = vmatprep.subr.bf16.mxu0 0
        %6342 = vmatpush1.bf16.msra.mxu0 0
        %6343 = vmatprep.subr.bf16.mxu0 0
        %6344 = vmatpush1.bf16.msra.mxu0 0
        %6345 = vmatprep.subr.bf16.mxu0 0
        %6346 = vmatpush1.bf16.msra.mxu0 0
        %6347 = vmatprep.subr.bf16.mxu0 0
        %6348 = vmatpush1.bf16.msra.mxu0 0
        %6349 = vmatprep.subr.bf16.mxu0 0
        %6350 = vmatpush1.bf16.msra.mxu0 0
        %6351 = vmatprep.subr.bf16.mxu0 0
        %6352 = vmatpush1.bf16.msra.mxu0 0
        %6353 = vmatprep.mubr.bf16.mxu0 0
        %6354 = vmatmul.mubr.bf16.gmra.mrb[0].mxu0 %v6319
        %v6355 = vpop.f32.mrb[0].mxu0
        %v6356 = vadd.f32 0.0, %v6355
        %v6357 = vpop.f32.mrb[0].mxu0
        %v6358 = vpop.f32.mrb[0].mxu0
        %v6359 = vadd.f32 0.0, %v6358
        %v6360 = vpop.f32.mrb[0].mxu0
        %6361 = vdwg.mxu0
        %v6366 = vcombine.low %v6159, %v6160
        %v6367 = vcombine.low %v6161, %v6162
        %v6369 = vunpack.c.l.s4 1983009808
        %v6370 = vunpack.c.0.s8 %v6369
        %v6371 = vlaneseq
        %v6372 = vshrl.u32 %v6371, 7
        %v6373 = vsub.s32 %v6370, %v6372
        %v6374 = vrot.slane %v6366, %v6373
        %v6376 = vunpack.c.l.s4 1983009808
        %v6377 = vunpack.c.0.s8 %v6376
        %v6378 = vlaneseq
        %v6379 = vshrl.u32 %v6378, 7
        %v6380 = vsub.s32 %v6377, %v6379
        %v6381 = vrot.slane %v6367, %v6380
        %v6382 = vcombine.low %v6374, %v6381
        %v6391 = vunpack.c.l.b16 %v6163
        %v6392 = vunpack.c.l.b16 %v6164
        %v6393 = vunpack.c.l.b16 %v6165
        %v6394 = vunpack.c.l.b16 %v6166
        %v6395 = vunpack.c.l.b16 %v6167
        %v6396 = vunpack.c.l.b16 %v6168
        %v6397 = vunpack.c.l.b16 %v6169
        %v6398 = vunpack.c.l.b16 %v6170
        %v6399 = vpack.c.b16 %v6392, %v6391
        %v6400 = vpack.c.b16 %v6394, %v6393
        %v6401 = vpack.c.b16 %v6396, %v6395
        %v6402 = vpack.c.b16 %v6398, %v6397
        %v6408 = vsel %vm6317, %v6382, 0
        %6410 = vmatprep.subr.bf16.mxu0 0
        %6411 = vmatpush1.bf16.msra.mxu0 %v6399
        %6412 = vmatprep.subr.bf16.mxu0 0
        %6413 = vmatpush1.bf16.msra.mxu0 %v6400
        %6414 = vmatprep.subr.bf16.mxu0 0
        %6415 = vmatpush1.bf16.msra.mxu0 %v6401
        %6416 = vmatprep.subr.bf16.mxu0 0
        %6417 = vmatpush1.bf16.msra.mxu0 %v6402
        %6418 = vmatprep.subr.bf16.mxu0 0
        %6419 = vmatpush1.bf16.msra.mxu0 0
        %6420 = vmatprep.subr.bf16.mxu0 0
        %6421 = vmatpush1.bf16.msra.mxu0 0
        %6422 = vmatprep.subr.bf16.mxu0 0
        %6423 = vmatpush1.bf16.msra.mxu0 0
        %6424 = vmatprep.subr.bf16.mxu0 0
        %6425 = vmatpush1.bf16.msra.mxu0 0
        %6426 = vmatprep.subr.bf16.mxu0 0
        %6427 = vmatpush1.bf16.msra.mxu0 0
        %6428 = vmatprep.subr.bf16.mxu0 0
        %6429 = vmatpush1.bf16.msra.mxu0 0
        %6430 = vmatprep.subr.bf16.mxu0 0
        %6431 = vmatpush1.bf16.msra.mxu0 0
        %6432 = vmatprep.subr.bf16.mxu0 0
        %6433 = vmatpush1.bf16.msra.mxu0 0
        %6434 = vmatprep.subr.bf16.mxu0 0
        %6435 = vmatpush1.bf16.msra.mxu0 0
        %6436 = vmatprep.subr.bf16.mxu0 0
        %6437 = vmatpush1.bf16.msra.mxu0 0
        %6438 = vmatprep.subr.bf16.mxu0 0
        %6439 = vmatpush1.bf16.msra.mxu0 0
        %6440 = vmatprep.subr.bf16.mxu0 0
        %6441 = vmatpush1.bf16.msra.mxu0 0
        %6442 = vmatprep.mubr.bf16.mxu0 0
        %6443 = vmatmul.mubr.bf16.gmra.mrb[0].mxu0 %v6408
        %v6444 = vpop.f32.mrb[0].mxu0
        %v6445 = vadd.f32 %v6356, %v6444
        %v6446 = vpop.f32.mrb[0].mxu0
        %v6447 = vpop.f32.mrb[0].mxu0
        %v6448 = vadd.f32 %v6359, %v6447
        %v6449 = vpop.f32.mrb[0].mxu0
        %6450 = vdwg.mxu0
        %v6451 = vld [vmem:[#allocation4] sm:$0x6]
        %v6452 = vld [vmem:[#allocation4 + $0x4] sm:$0x6]
        %v6453 = vld [vmem:[#allocation4 + $0x8] sm:$0x6]
        %v6454 = vld [vmem:[#allocation4 + $0xc] sm:$0x6]
        %v6460 = vunpack.c.l.s4 1983009808
        %v6461 = vunpack.c.0.s8 %v6460
        %v6462 = vlaneseq
        %v6463 = vshrl.u32 %v6462, 7
        %v6464 = vsub.s32 %v6461, %v6463
        %v6465 = vrot.slane %v6451, %v6464
        %v6466 = vcombine.high %v6465, %v6465
        %v6468 = vunpack.c.l.s4 1983009808
        %v6469 = vunpack.c.0.s8 %v6468
        %v6470 = vlaneseq
        %v6471 = vshrl.u32 %v6470, 7
        %v6472 = vsub.s32 %v6469, %v6471
        %v6473 = vrot.slane %v6452, %v6472
        %v6474 = vcombine.high %v6473, %v6473
        %v6476 = vunpack.c.l.s4 1983009808
        %v6477 = vunpack.c.0.s8 %v6476
        %v6478 = vlaneseq
        %v6479 = vshrl.u32 %v6478, 7
        %v6480 = vsub.s32 %v6477, %v6479
        %v6481 = vrot.slane %v6453, %v6480
        %v6482 = vcombine.high %v6481, %v6481
        %v6484 = vunpack.c.l.s4 1983009808
        %v6485 = vunpack.c.0.s8 %v6484
        %v6486 = vlaneseq
        %v6487 = vshrl.u32 %v6486, 7
        %v6488 = vsub.s32 %v6485, %v6487
        %v6489 = vrot.slane %v6454, %v6488
        %v6490 = vcombine.high %v6489, %v6489
        %v6491 = vrot.slane %v6465, 7
        %v6492 = vrot.slane %v6491, 2
        %v6493 = vrot.slane %v6466, 7
        %v6494 = vsel %vm5149, %v6492, %v6493
        %v6495 = vrot.slane %v6473, 7
        %v6496 = vrot.slane %v6495, 2
        %v6497 = vrot.slane %v6474, 7
        %v6498 = vsel %vm5149, %v6496, %v6497
        %v6499 = vrot.slane %v6481, 7
        %v6500 = vrot.slane %v6499, 2
        %v6501 = vrot.slane %v6482, 7
        %v6502 = vsel %vm5149, %v6500, %v6501
        %v6503 = vrot.slane %v6489, 7
        %v6504 = vrot.slane %v6503, 2
        %v6505 = vrot.slane %v6490, 7
        %v6506 = vsel %vm5149, %v6504, %v6505
        %s6507 = scalar_lea.vmem %s4, 64
        %v6508 = vld [vmem:[%s6507] sm:$0xf]
        %v6509 = vld [vmem:[%s6507 + $0x4] sm:$0xf]
        %v6510 = vld [vmem:[%s6507 + $0x8] sm:$0xf]
        %v6511 = vld [vmem:[%s6507 + $0xc] sm:$0xf]
        %v6512 = vld [vmem:[%s6507 + $0x10] sm:$0xf]
        %v6513 = vld [vmem:[%s6507 + $0x14] sm:$0xf]
        %v6514 = vld [vmem:[%s6507 + $0x18] sm:$0xf]
        %v6515 = vld [vmem:[%s6507 + $0x1c] sm:$0xf]
        %v6516 = vcombine.low %v6494, %v6498
        %v6517 = vcombine.low %v6502, %v6506
        %v6519 = vunpack.c.l.s4 1983009808
        %v6520 = vunpack.c.0.s8 %v6519
        %v6521 = vlaneseq
        %v6522 = vshrl.u32 %v6521, 7
        %v6523 = vsub.s32 %v6520, %v6522
        %v6524 = vrot.slane %v6516, %v6523
        %v6526 = vunpack.c.l.s4 1983009808
        %v6527 = vunpack.c.0.s8 %v6526
        %v6528 = vlaneseq
        %v6529 = vshrl.u32 %v6528, 7
        %v6530 = vsub.s32 %v6527, %v6529
        %v6531 = vrot.slane %v6517, %v6530
        %v6532 = vcombine.low %v6524, %v6531
        %v6541 = vunpack.c.l.b16 %v6508
        %v6542 = vunpack.c.l.b16 %v6509
        %v6543 = vunpack.c.l.b16 %v6510
        %v6544 = vunpack.c.l.b16 %v6511
        %v6545 = vunpack.c.l.b16 %v6512
        %v6546 = vunpack.c.l.b16 %v6513
        %v6547 = vunpack.c.l.b16 %v6514
        %v6548 = vunpack.c.l.b16 %v6515
        %v6549 = vpack.c.b16 %v6542, %v6541
        %v6550 = vpack.c.b16 %v6544, %v6543
        %v6551 = vpack.c.b16 %v6546, %v6545
        %v6552 = vpack.c.b16 %v6548, %v6547
        %v6558 = vsel %vm6317, %v6532, 0
        %6560 = vmatprep.subr.bf16.mxu0 0
        %6561 = vmatpush1.bf16.msra.mxu0 %v6549
        %6562 = vmatprep.subr.bf16.mxu0 0
        %6563 = vmatpush1.bf16.msra.mxu0 %v6550
        %6564 = vmatprep.subr.bf16.mxu0 0
        %6565 = vmatpush1.bf16.msra.mxu0 %v6551
        %6566 = vmatprep.subr.bf16.mxu0 0
        %6567 = vmatpush1.bf16.msra.mxu0 %v6552
        %6568 = vmatprep.subr.bf16.mxu0 0
        %6569 = vmatpush1.bf16.msra.mxu0 0
        %6570 = vmatprep.subr.bf16.mxu0 0
        %6571 = vmatpush1.bf16.msra.mxu0 0
        %6572 = vmatprep.subr.bf16.mxu0 0
        %6573 = vmatpush1.bf16.msra.mxu0 0
        %6574 = vmatprep.subr.bf16.mxu0 0
        %6575 = vmatpush1.bf16.msra.mxu0 0
        %6576 = vmatprep.subr.bf16.mxu0 0
        %6577 = vmatpush1.bf16.msra.mxu0 0
        %6578 = vmatprep.subr.bf16.mxu0 0
        %6579 = vmatpush1.bf16.msra.mxu0 0
        %6580 = vmatprep.subr.bf16.mxu0 0
        %6581 = vmatpush1.bf16.msra.mxu0 0
        %6582 = vmatprep.subr.bf16.mxu0 0
        %6583 = vmatpush1.bf16.msra.mxu0 0
        %6584 = vmatprep.subr.bf16.mxu0 0
        %6585 = vmatpush1.bf16.msra.mxu0 0
        %6586 = vmatprep.subr.bf16.mxu0 0
        %6587 = vmatpush1.bf16.msra.mxu0 0
        %6588 = vmatprep.subr.bf16.mxu0 0
        %6589 = vmatpush1.bf16.msra.mxu0 0
        %6590 = vmatprep.subr.bf16.mxu0 0
        %6591 = vmatpush1.bf16.msra.mxu0 0
        %6592 = vmatprep.mubr.bf16.mxu0 0
        %6593 = vmatmul.mubr.bf16.gmra.mrb[0].mxu0 %v6558
        %v6594 = vpop.f32.mrb[0].mxu0
        %v6595 = vadd.f32 0.0, %v6594
        %v6596 = vpop.f32.mrb[0].mxu0
        %v6597 = vpop.f32.mrb[0].mxu0
        %v6598 = vadd.f32 0.0, %v6597
        %v6599 = vpop.f32.mrb[0].mxu0
        %6600 = vdwg.mxu0
        %v6601 = vadd.f32 %v6445, %v6595
        %v6602 = vadd.f32 %v6448, %v6598
        %v6603 = vld [vmem:[%s6072] sm:$0x3]
        %v6604 = vld [vmem:[%s6072 + $0x4] sm:$0x3]
        %v6605 = vld [vmem:[%s6072 + $0x8] sm:$0x3]
        %v6606 = vld [vmem:[%s6072 + $0xc] sm:$0x3]
        %s6607 = scalar_lea.vmem %s4, 96
        %v6608 = vld [vmem:[%s6607] sm:$0xf]
        %v6609 = vld [vmem:[%s6607 + $0x4] sm:$0xf]
        %v6610 = vld [vmem:[%s6607 + $0x8] sm:$0xf]
        %v6611 = vld [vmem:[%s6607 + $0xc] sm:$0xf]
        %v6612 = vld [vmem:[%s6607 + $0x10] sm:$0xf]
        %v6613 = vld [vmem:[%s6607 + $0x14] sm:$0xf]
        %v6614 = vld [vmem:[%s6607 + $0x18] sm:$0xf]
        %v6615 = vld [vmem:[%s6607 + $0x1c] sm:$0xf]
        %v6620 = vcombine.low %v6603, %v6604
        %v6621 = vcombine.low %v6605, %v6606
        %v6623 = vunpack.c.l.s4 1983009808
        %v6624 = vunpack.c.0.s8 %v6623
        %v6625 = vlaneseq
        %v6626 = vshrl.u32 %v6625, 7
        %v6627 = vsub.s32 %v6624, %v6626
        %v6628 = vrot.slane %v6620, %v6627
        %v6630 = vunpack.c.l.s4 1983009808
        %v6631 = vunpack.c.0.s8 %v6630
        %v6632 = vlaneseq
        %v6633 = vshrl.u32 %v6632, 7
        %v6634 = vsub.s32 %v6631, %v6633
        %v6635 = vrot.slane %v6621, %v6634
        %v6636 = vcombine.low %v6628, %v6635
        %v6645 = vunpack.c.l.b16 %v6608
        %v6646 = vunpack.c.l.b16 %v6609
        %v6647 = vunpack.c.l.b16 %v6610
        %v6648 = vunpack.c.l.b16 %v6611
        %v6649 = vunpack.c.l.b16 %v6612
        %v6650 = vunpack.c.l.b16 %v6613
        %v6651 = vunpack.c.l.b16 %v6614
        %v6652 = vunpack.c.l.b16 %v6615
        %v6653 = vpack.c.b16 %v6646, %v6645
        %v6654 = vpack.c.b16 %v6648, %v6647
        %v6655 = vpack.c.b16 %v6650, %v6649
        %v6656 = vpack.c.b16 %v6652, %v6651
        %v6662 = vsel %vm6317, %v6636, 0
        %6664 = vmatprep.subr.bf16.mxu0 0
        %6665 = vmatpush1.bf16.msra.mxu0 %v6653
        %6666 = vmatprep.subr.bf16.mxu0 0
        %6667 = vmatpush1.bf16.msra.mxu0 %v6654
        %6668 = vmatprep.subr.bf16.mxu0 0
        %6669 = vmatpush1.bf16.msra.mxu0 %v6655
        %6670 = vmatprep.subr.bf16.mxu0 0
        %6671 = vmatpush1.bf16.msra.mxu0 %v6656
        %6672 = vmatprep.subr.bf16.mxu0 0
        %6673 = vmatpush1.bf16.msra.mxu0 0
        %6674 = vmatprep.subr.bf16.mxu0 0
        %6675 = vmatpush1.bf16.msra.mxu0 0
        %6676 = vmatprep.subr.bf16.mxu0 0
        %6677 = vmatpush1.bf16.msra.mxu0 0
        %6678 = vmatprep.subr.bf16.mxu0 0
        %6679 = vmatpush1.bf16.msra.mxu0 0
        %6680 = vmatprep.subr.bf16.mxu0 0
        %6681 = vmatpush1.bf16.msra.mxu0 0
        %6682 = vmatprep.subr.bf16.mxu0 0
        %6683 = vmatpush1.bf16.msra.mxu0 0
        %6684 = vmatprep.subr.bf16.mxu0 0
        %6685 = vmatpush1.bf16.msra.mxu0 0
        %6686 = vmatprep.subr.bf16.mxu0 0
        %6687 = vmatpush1.bf16.msra.mxu0 0
        %6688 = vmatprep.subr.bf16.mxu0 0
        %6689 = vmatpush1.bf16.msra.mxu0 0
        %6690 = vmatprep.subr.bf16.mxu0 0
        %6691 = vmatpush1.bf16.msra.mxu0 0
        %6692 = vmatprep.subr.bf16.mxu0 0
        %6693 = vmatpush1.bf16.msra.mxu0 0
        %6694 = vmatprep.subr.bf16.mxu0 0
        %6695 = vmatpush1.bf16.msra.mxu0 0
        %6696 = vmatprep.mubr.bf16.mxu0 0
        %6697 = vmatmul.mubr.bf16.gmra.mrb[0].mxu0 %v6662
        %v6698 = vpop.f32.mrb[0].mxu0
        %v6699 = vadd.f32 0.0, %v6698
        %v6700 = vpop.f32.mrb[0].mxu0
        %v6701 = vpop.f32.mrb[0].mxu0
        %v6702 = vadd.f32 0.0, %v6701
        %v6703 = vpop.f32.mrb[0].mxu0
        %6704 = vdwg.mxu0
        %v6705 = vadd.f32 %v6601, %v6699
        %v6706 = vadd.f32 %v6602, %v6702
        %v6707 = vld [vmem:[%s6072] sm:$0x7]
        %v6708 = vld [vmem:[%s6072 + $0x4] sm:$0x7]
        %v6709 = vld [vmem:[%s6072 + $0x8] sm:$0x7]
        %v6710 = vld [vmem:[%s6072 + $0xc] sm:$0x7]
        %v6716 = vunpack.c.l.s4 1983009808
        %v6717 = vunpack.c.0.s8 %v6716
        %v6718 = vlaneseq
        %v6719 = vshrl.u32 %v6718, 7
        %v6720 = vsub.s32 %v6717, %v6719
        %v6721 = vrot.slane %v6707, %v6720
        %v6722 = vcombine.high %v6721, %v6721
        %v6724 = vunpack.c.l.s4 1983009808
        %v6725 = vunpack.c.0.s8 %v6724
        %v6726 = vlaneseq
        %v6727 = vshrl.u32 %v6726, 7
        %v6728 = vsub.s32 %v6725, %v6727
        %v6729 = vrot.slane %v6708, %v6728
        %v6730 = vcombine.high %v6729, %v6729
        %v6732 = vunpack.c.l.s4 1983009808
        %v6733 = vunpack.c.0.s8 %v6732
        %v6734 = vlaneseq
        %v6735 = vshrl.u32 %v6734, 7
        %v6736 = vsub.s32 %v6733, %v6735
        %v6737 = vrot.slane %v6709, %v6736
        %v6738 = vcombine.high %v6737, %v6737
        %v6740 = vunpack.c.l.s4 1983009808
        %v6741 = vunpack.c.0.s8 %v6740
        %v6742 = vlaneseq
        %v6743 = vshrl.u32 %v6742, 7
        %v6744 = vsub.s32 %v6741, %v6743
        %v6745 = vrot.slane %v6710, %v6744
        %v6746 = vcombine.high %v6745, %v6745
        %v6748 = vshrl.u32 %v6721, 16
        %v6750 = vrot.slane %v6748, 6
        %v6751 = vshll.u32 %v6721, 16
        %v6753 = vrot.slane %v6751, 7
        %v6754 = vor.u32 %v6750, %v6753
        %v6755 = vrot.slane %v6754, 2
        %v6757 = vshll.u32 %v6722, 16
        %v6759 = vrot.slane %v6757, 7
        %v6760 = vsel %vm4891, %v6755, %v6759
        %v6762 = vshrl.u32 %v6729, 16
        %v6764 = vrot.slane %v6762, 6
        %v6765 = vshll.u32 %v6729, 16
        %v6767 = vrot.slane %v6765, 7
        %v6768 = vor.u32 %v6764, %v6767
        %v6769 = vrot.slane %v6768, 2
        %v6771 = vshll.u32 %v6730, 16
        %v6773 = vrot.slane %v6771, 7
        %v6774 = vsel %vm4891, %v6769, %v6773
        %v6776 = vshrl.u32 %v6737, 16
        %v6778 = vrot.slane %v6776, 6
        %v6779 = vshll.u32 %v6737, 16
        %v6781 = vrot.slane %v6779, 7
        %v6782 = vor.u32 %v6778, %v6781
        %v6783 = vrot.slane %v6782, 2
        %v6785 = vshll.u32 %v6738, 16
        %v6787 = vrot.slane %v6785, 7
        %v6788 = vsel %vm4891, %v6783, %v6787
        %v6790 = vshrl.u32 %v6745, 16
        %v6792 = vrot.slane %v6790, 6
        %v6793 = vshll.u32 %v6745, 16
        %v6795 = vrot.slane %v6793, 7
        %v6796 = vor.u32 %v6792, %v6795
        %v6797 = vrot.slane %v6796, 2
        %v6799 = vshll.u32 %v6746, 16
        %v6801 = vrot.slane %v6799, 7
        %v6802 = vsel %vm4891, %v6797, %v6801
        %s6803 = scalar_lea.vmem %s4, 128
        %v6804 = vld [vmem:[%s6803] sm:$0xf]
        %v6805 = vld [vmem:[%s6803 + $0x4] sm:$0xf]
        %v6806 = vld [vmem:[%s6803 + $0x8] sm:$0xf]
        %v6807 = vld [vmem:[%s6803 + $0xc] sm:$0xf]
        %v6808 = vld [vmem:[%s6803 + $0x10] sm:$0xf]
        %v6809 = vld [vmem:[%s6803 + $0x14] sm:$0xf]
        %v6810 = vld [vmem:[%s6803 + $0x18] sm:$0xf]
        %v6811 = vld [vmem:[%s6803 + $0x1c] sm:$0xf]
        %v6812 = vcombine.low %v6760, %v6774
        %v6813 = vcombine.low %v6788, %v6802
        %v6815 = vunpack.c.l.s4 1983009808
        %v6816 = vunpack.c.0.s8 %v6815
        %v6817 = vlaneseq
        %v6818 = vshrl.u32 %v6817, 7
        %v6819 = vsub.s32 %v6816, %v6818
        %v6820 = vrot.slane %v6812, %v6819
        %v6822 = vunpack.c.l.s4 1983009808
        %v6823 = vunpack.c.0.s8 %v6822
        %v6824 = vlaneseq
        %v6825 = vshrl.u32 %v6824, 7
        %v6826 = vsub.s32 %v6823, %v6825
        %v6827 = vrot.slane %v6813, %v6826
        %v6828 = vcombine.low %v6820, %v6827
        %v6837 = vunpack.c.l.b16 %v6804
        %v6838 = vunpack.c.l.b16 %v6805
        %v6839 = vunpack.c.l.b16 %v6806
        %v6840 = vunpack.c.l.b16 %v6807
        %v6841 = vunpack.c.l.b16 %v6808
        %v6842 = vunpack.c.l.b16 %v6809
        %v6843 = vunpack.c.l.b16 %v6810
        %v6844 = vunpack.c.l.b16 %v6811
        %v6845 = vpack.c.b16 %v6838, %v6837
        %v6846 = vpack.c.b16 %v6840, %v6839
        %v6847 = vpack.c.b16 %v6842, %v6841
        %v6848 = vpack.c.b16 %v6844, %v6843
        %v6854 = vsel %vm6317, %v6828, 0
        %6856 = vmatprep.subr.bf16.mxu0 0
        %6857 = vmatpush1.bf16.msra.mxu0 %v6845
        %6858 = vmatprep.subr.bf16.mxu0 0
        %6859 = vmatpush1.bf16.msra.mxu0 %v6846
        %6860 = vmatprep.subr.bf16.mxu0 0
        %6861 = vmatpush1.bf16.msra.mxu0 %v6847
        %6862 = vmatprep.subr.bf16.mxu0 0
        %6863 = vmatpush1.bf16.msra.mxu0 %v6848
        %6864 = vmatprep.subr.bf16.mxu0 0
        %6865 = vmatpush1.bf16.msra.mxu0 0
        %6866 = vmatprep.subr.bf16.mxu0 0
        %6867 = vmatpush1.bf16.msra.mxu0 0
        %6868 = vmatprep.subr.bf16.mxu0 0
        %6869 = vmatpush1.bf16.msra.mxu0 0
        %6870 = vmatprep.subr.bf16.mxu0 0
        %6871 = vmatpush1.bf16.msra.mxu0 0
        %6872 = vmatprep.subr.bf16.mxu0 0
        %6873 = vmatpush1.bf16.msra.mxu0 0
        %6874 = vmatprep.subr.bf16.mxu0 0
        %6875 = vmatpush1.bf16.msra.mxu0 0
        %6876 = vmatprep.subr.bf16.mxu0 0
        %6877 = vmatpush1.bf16.msra.mxu0 0
        %6878 = vmatprep.subr.bf16.mxu0 0
        %6879 = vmatpush1.bf16.msra.mxu0 0
        %6880 = vmatprep.subr.bf16.mxu0 0
        %6881 = vmatpush1.bf16.msra.mxu0 0
        %6882 = vmatprep.subr.bf16.mxu0 0
        %6883 = vmatpush1.bf16.msra.mxu0 0
        %6884 = vmatprep.subr.bf16.mxu0 0
        %6885 = vmatpush1.bf16.msra.mxu0 0
        %6886 = vmatprep.subr.bf16.mxu0 0
        %6887 = vmatpush1.bf16.msra.mxu0 0
        %6888 = vmatprep.mubr.bf16.mxu0 0
        %6889 = vmatmul.mubr.bf16.gmra.mrb[0].mxu0 %v6854
        %v6890 = vpop.f32.mrb[0].mxu0
        %v6891 = vadd.f32 0.0, %v6890
        %v6892 = vpop.f32.mrb[0].mxu0
        %v6893 = vpop.f32.mrb[0].mxu0
        %v6894 = vadd.f32 0.0, %v6893
        %v6895 = vpop.f32.mrb[0].mxu0
        %6896 = vdwg.mxu0
        %v6897 = vadd.f32 %v6705, %v6891
        %v6898 = vadd.f32 %v6706, %v6894
        %v6899 = vld [vmem:[%s6072] sm:$0x6]
        %v6900 = vld [vmem:[%s6072 + $0x4] sm:$0x6]
        %v6901 = vld [vmem:[%s6072 + $0x8] sm:$0x6]
        %v6902 = vld [vmem:[%s6072 + $0xc] sm:$0x6]
        %v6908 = vunpack.c.l.s4 1983009808
        %v6909 = vunpack.c.0.s8 %v6908
        %v6910 = vlaneseq
        %v6911 = vshrl.u32 %v6910, 7
        %v6912 = vsub.s32 %v6909, %v6911
        %v6913 = vrot.slane %v6899, %v6912
        %v6914 = vcombine.high %v6913, %v6913
        %v6916 = vunpack.c.l.s4 1983009808
        %v6917 = vunpack.c.0.s8 %v6916
        %v6918 = vlaneseq
        %v6919 = vshrl.u32 %v6918, 7
        %v6920 = vsub.s32 %v6917, %v6919
        %v6921 = vrot.slane %v6900, %v6920
        %v6922 = vcombine.high %v6921, %v6921
        %v6924 = vunpack.c.l.s4 1983009808
        %v6925 = vunpack.c.0.s8 %v6924
        %v6926 = vlaneseq
        %v6927 = vshrl.u32 %v6926, 7
        %v6928 = vsub.s32 %v6925, %v6927
        %v6929 = vrot.slane %v6901, %v6928
        %v6930 = vcombine.high %v6929, %v6929
        %v6932 = vunpack.c.l.s4 1983009808
        %v6933 = vunpack.c.0.s8 %v6932
        %v6934 = vlaneseq
        %v6935 = vshrl.u32 %v6934, 7
        %v6936 = vsub.s32 %v6933, %v6935
        %v6937 = vrot.slane %v6902, %v6936
        %v6938 = vcombine.high %v6937, %v6937
        %v6939 = vrot.slane %v6913, 7
        %v6940 = vrot.slane %v6939, 2
        %v6941 = vrot.slane %v6914, 7
        %v6942 = vsel %vm5149, %v6940, %v6941
        %v6943 = vrot.slane %v6921, 7
        %v6944 = vrot.slane %v6943, 2
        %v6945 = vrot.slane %v6922, 7
        %v6946 = vsel %vm5149, %v6944, %v6945
        %v6947 = vrot.slane %v6929, 7
        %v6948 = vrot.slane %v6947, 2
        %v6949 = vrot.slane %v6930, 7
        %v6950 = vsel %vm5149, %v6948, %v6949
        %v6951 = vrot.slane %v6937, 7
        %v6952 = vrot.slane %v6951, 2
        %v6953 = vrot.slane %v6938, 7
        %v6954 = vsel %vm5149, %v6952, %v6953
        %s6955 = scalar_lea.vmem %s4, 160
        %v6956 = vld [vmem:[%s6955] sm:$0xf]
        %v6957 = vld [vmem:[%s6955 + $0x4] sm:$0xf]
        %v6958 = vld [vmem:[%s6955 + $0x8] sm:$0xf]
        %v6959 = vld [vmem:[%s6955 + $0xc] sm:$0xf]
        %v6960 = vld [vmem:[%s6955 + $0x10] sm:$0xf]
        %v6961 = vld [vmem:[%s6955 + $0x14] sm:$0xf]
        %v6962 = vld [vmem:[%s6955 + $0x18] sm:$0xf]
        %v6963 = vld [vmem:[%s6955 + $0x1c] sm:$0xf]
        %v6964 = vcombine.low %v6942, %v6946
        %v6965 = vcombine.low %v6950, %v6954
        %v6967 = vunpack.c.l.s4 1983009808
        %v6968 = vunpack.c.0.s8 %v6967
        %v6969 = vlaneseq
        %v6970 = vshrl.u32 %v6969, 7
        %v6971 = vsub.s32 %v6968, %v6970
        %v6972 = vrot.slane %v6964, %v6971
        %v6974 = vunpack.c.l.s4 1983009808
        %v6975 = vunpack.c.0.s8 %v6974
        %v6976 = vlaneseq
        %v6977 = vshrl.u32 %v6976, 7
        %v6978 = vsub.s32 %v6975, %v6977
        %v6979 = vrot.slane %v6965, %v6978
        %v6980 = vcombine.low %v6972, %v6979
        %v6989 = vunpack.c.l.b16 %v6956
        %v6990 = vunpack.c.l.b16 %v6957
        %v6991 = vunpack.c.l.b16 %v6958
        %v6992 = vunpack.c.l.b16 %v6959
        %v6993 = vunpack.c.l.b16 %v6960
        %v6994 = vunpack.c.l.b16 %v6961
        %v6995 = vunpack.c.l.b16 %v6962
        %v6996 = vunpack.c.l.b16 %v6963
        %v6997 = vpack.c.b16 %v6990, %v6989
        %v6998 = vpack.c.b16 %v6992, %v6991
        %v6999 = vpack.c.b16 %v6994, %v6993
        %v7000 = vpack.c.b16 %v6996, %v6995
        %v7006 = vsel %vm6317, %v6980, 0
        %7008 = vmatprep.subr.bf16.mxu0 0
        %7009 = vmatpush1.bf16.msra.mxu0 %v6997
        %7010 = vmatprep.subr.bf16.mxu0 0
        %7011 = vmatpush1.bf16.msra.mxu0 %v6998
        %7012 = vmatprep.subr.bf16.mxu0 0
        %7013 = vmatpush1.bf16.msra.mxu0 %v6999
        %7014 = vmatprep.subr.bf16.mxu0 0
        %7015 = vmatpush1.bf16.msra.mxu0 %v7000
        %7016 = vmatprep.subr.bf16.mxu0 0
        %7017 = vmatpush1.bf16.msra.mxu0 0
        %7018 = vmatprep.subr.bf16.mxu0 0
        %7019 = vmatpush1.bf16.msra.mxu0 0
        %7020 = vmatprep.subr.bf16.mxu0 0
        %7021 = vmatpush1.bf16.msra.mxu0 0
        %7022 = vmatprep.subr.bf16.mxu0 0
        %7023 = vmatpush1.bf16.msra.mxu0 0
        %7024 = vmatprep.subr.bf16.mxu0 0
        %7025 = vmatpush1.bf16.msra.mxu0 0
        %7026 = vmatprep.subr.bf16.mxu0 0
        %7027 = vmatpush1.bf16.msra.mxu0 0
        %7028 = vmatprep.subr.bf16.mxu0 0
        %7029 = vmatpush1.bf16.msra.mxu0 0
        %7030 = vmatprep.subr.bf16.mxu0 0
        %7031 = vmatpush1.bf16.msra.mxu0 0
        %7032 = vmatprep.subr.bf16.mxu0 0
        %7033 = vmatpush1.bf16.msra.mxu0 0
        %7034 = vmatprep.subr.bf16.mxu0 0
        %7035 = vmatpush1.bf16.msra.mxu0 0
        %7036 = vmatprep.subr.bf16.mxu0 0
        %7037 = vmatpush1.bf16.msra.mxu0 0
        %7038 = vmatprep.subr.bf16.mxu0 0
        %7039 = vmatpush1.bf16.msra.mxu0 0
        %7040 = vmatprep.mubr.bf16.mxu0 0
        %7041 = vmatmul.mubr.bf16.gmra.mrb[0].mxu0 %v7006
        %v7042 = vpop.f32.mrb[0].mxu0
        %v7043 = vadd.f32 0.0, %v7042
        %v7044 = vpop.f32.mrb[0].mxu0
        %v7045 = vpop.f32.mrb[0].mxu0
        %v7046 = vadd.f32 0.0, %v7045
        %v7047 = vpop.f32.mrb[0].mxu0
        %7048 = vdwg.mxu0
        %v7049 = vadd.f32 %v6897, %v7043
        %v7050 = vadd.f32 %v6898, %v7046
        %s7051 = scalar_lea.vmem [#allocation4], 8
        %v7052 = vld [vmem:[%s7051] sm:$0x3]
        %v7053 = vld [vmem:[%s7051 + $0x4] sm:$0x3]
        %v7054 = vld [vmem:[%s7051 + $0x8] sm:$0x3]
        %v7055 = vld [vmem:[%s7051 + $0xc] sm:$0x3]
        %s7056 = scalar_lea.vmem %s4, 192
        %v7057 = vld [vmem:[%s7056] sm:$0xf]
        %v7058 = vld [vmem:[%s7056 + $0x4] sm:$0xf]
        %v7059 = vld [vmem:[%s7056 + $0x8] sm:$0xf]
        %v7060 = vld [vmem:[%s7056 + $0xc] sm:$0xf]
        %v7061 = vld [vmem:[%s7056 + $0x10] sm:$0xf]
        %v7062 = vld [vmem:[%s7056 + $0x14] sm:$0xf]
        %v7063 = vld [vmem:[%s7056 + $0x18] sm:$0xf]
        %v7064 = vld [vmem:[%s7056 + $0x1c] sm:$0xf]
        %v7069 = vcombine.low %v7052, %v7053
        %v7070 = vcombine.low %v7054, %v7055
        %v7072 = vunpack.c.l.s4 1983009808
        %v7073 = vunpack.c.0.s8 %v7072
        %v7074 = vlaneseq
        %v7075 = vshrl.u32 %v7074, 7
        %v7076 = vsub.s32 %v7073, %v7075
        %v7077 = vrot.slane %v7069, %v7076
        %v7079 = vunpack.c.l.s4 1983009808
        %v7080 = vunpack.c.0.s8 %v7079
        %v7081 = vlaneseq
        %v7082 = vshrl.u32 %v7081, 7
        %v7083 = vsub.s32 %v7080, %v7082
        %v7084 = vrot.slane %v7070, %v7083
        %v7085 = vcombine.low %v7077, %v7084
        %v7094 = vunpack.c.l.b16 %v7057
        %v7095 = vunpack.c.l.b16 %v7058
        %v7096 = vunpack.c.l.b16 %v7059
        %v7097 = vunpack.c.l.b16 %v7060
        %v7098 = vunpack.c.l.b16 %v7061
        %v7099 = vunpack.c.l.b16 %v7062
        %v7100 = vunpack.c.l.b16 %v7063
        %v7101 = vunpack.c.l.b16 %v7064
        %v7102 = vpack.c.b16 %v7095, %v7094
        %v7103 = vpack.c.b16 %v7097, %v7096
        %v7104 = vpack.c.b16 %v7099, %v7098
        %v7105 = vpack.c.b16 %v7101, %v7100
        %v7111 = vsel %vm6317, %v7085, 0
        %7113 = vmatprep.subr.bf16.mxu0 0
        %7114 = vmatpush1.bf16.msra.mxu0 %v7102
        %7115 = vmatprep.subr.bf16.mxu0 0
        %7116 = vmatpush1.bf16.msra.mxu0 %v7103
        %7117 = vmatprep.subr.bf16.mxu0 0
        %7118 = vmatpush1.bf16.msra.mxu0 %v7104
        %7119 = vmatprep.subr.bf16.mxu0 0
        %7120 = vmatpush1.bf16.msra.mxu0 %v7105
        %7121 = vmatprep.subr.bf16.mxu0 0
        %7122 = vmatpush1.bf16.msra.mxu0 0
        %7123 = vmatprep.subr.bf16.mxu0 0
        %7124 = vmatpush1.bf16.msra.mxu0 0
        %7125 = vmatprep.subr.bf16.mxu0 0
        %7126 = vmatpush1.bf16.msra.mxu0 0
        %7127 = vmatprep.subr.bf16.mxu0 0
        %7128 = vmatpush1.bf16.msra.mxu0 0
        %7129 = vmatprep.subr.bf16.mxu0 0
        %7130 = vmatpush1.bf16.msra.mxu0 0
        %7131 = vmatprep.subr.bf16.mxu0 0
        %7132 = vmatpush1.bf16.msra.mxu0 0
        %7133 = vmatprep.subr.bf16.mxu0 0
        %7134 = vmatpush1.bf16.msra.mxu0 0
        %7135 = vmatprep.subr.bf16.mxu0 0
        %7136 = vmatpush1.bf16.msra.mxu0 0
        %7137 = vmatprep.subr.bf16.mxu0 0
        %7138 = vmatpush1.bf16.msra.mxu0 0
        %7139 = vmatprep.subr.bf16.mxu0 0
        %7140 = vmatpush1.bf16.msra.mxu0 0
        %7141 = vmatprep.subr.bf16.mxu0 0
        %7142 = vmatpush1.bf16.msra.mxu0 0
        %7143 = vmatprep.subr.bf16.mxu0 0
        %7144 = vmatpush1.bf16.msra.mxu0 0
        %7145 = vmatprep.mubr.bf16.mxu0 0
        %7146 = vmatmul.mubr.bf16.gmra.mrb[0].mxu0 %v7111
        %v7147 = vpop.f32.mrb[0].mxu0
        %v7148 = vadd.f32 0.0, %v7147
        %v7149 = vpop.f32.mrb[0].mxu0
        %v7150 = vpop.f32.mrb[0].mxu0
        %v7151 = vadd.f32 0.0, %v7150
        %v7152 = vpop.f32.mrb[0].mxu0
        %7153 = vdwg.mxu0
        %v7154 = vadd.f32 %v7049, %v7148
        %v7155 = vadd.f32 %v7050, %v7151
        %v7156 = vld [vmem:[%s7051] sm:$0x7]
        %v7157 = vld [vmem:[%s7051 + $0x4] sm:$0x7]
        %v7158 = vld [vmem:[%s7051 + $0x8] sm:$0x7]
        %v7159 = vld [vmem:[%s7051 + $0xc] sm:$0x7]
        %v7165 = vunpack.c.l.s4 1983009808
        %v7166 = vunpack.c.0.s8 %v7165
        %v7167 = vlaneseq
        %v7168 = vshrl.u32 %v7167, 7
        %v7169 = vsub.s32 %v7166, %v7168
        %v7170 = vrot.slane %v7156, %v7169
        %v7171 = vcombine.high %v7170, %v7170
        %v7173 = vunpack.c.l.s4 1983009808
        %v7174 = vunpack.c.0.s8 %v7173
        %v7175 = vlaneseq
        %v7176 = vshrl.u32 %v7175, 7
        %v7177 = vsub.s32 %v7174, %v7176
        %v7178 = vrot.slane %v7157, %v7177
        %v7179 = vcombine.high %v7178, %v7178
        %v7181 = vunpack.c.l.s4 1983009808
        %v7182 = vunpack.c.0.s8 %v7181
        %v7183 = vlaneseq
        %v7184 = vshrl.u32 %v7183, 7
        %v7185 = vsub.s32 %v7182, %v7184
        %v7186 = vrot.slane %v7158, %v7185
        %v7187 = vcombine.high %v7186, %v7186
        %v7189 = vunpack.c.l.s4 1983009808
        %v7190 = vunpack.c.0.s8 %v7189
        %v7191 = vlaneseq
        %v7192 = vshrl.u32 %v7191, 7
        %v7193 = vsub.s32 %v7190, %v7192
        %v7194 = vrot.slane %v7159, %v7193
        %v7195 = vcombine.high %v7194, %v7194
        %v7197 = vshrl.u32 %v7170, 16
        %v7199 = vrot.slane %v7197, 6
        %v7200 = vshll.u32 %v7170, 16
        %v7202 = vrot.slane %v7200, 7
        %v7203 = vor.u32 %v7199, %v7202
        %v7204 = vrot.slane %v7203, 2
        %v7206 = vshll.u32 %v7171, 16
        %v7208 = vrot.slane %v7206, 7
        %v7209 = vsel %vm4891, %v7204, %v7208
        %v7211 = vshrl.u32 %v7178, 16
        %v7213 = vrot.slane %v7211, 6
        %v7214 = vshll.u32 %v7178, 16
        %v7216 = vrot.slane %v7214, 7
        %v7217 = vor.u32 %v7213, %v7216
        %v7218 = vrot.slane %v7217, 2
        %v7220 = vshll.u32 %v7179, 16
        %v7222 = vrot.slane %v7220, 7
        %v7223 = vsel %vm4891, %v7218, %v7222
        %v7225 = vshrl.u32 %v7186, 16
        %v7227 = vrot.slane %v7225, 6
        %v7228 = vshll.u32 %v7186, 16
        %v7230 = vrot.slane %v7228, 7
        %v7231 = vor.u32 %v7227, %v7230
        %v7232 = vrot.slane %v7231, 2
        %v7234 = vshll.u32 %v7187, 16
        %v7236 = vrot.slane %v7234, 7
        %v7237 = vsel %vm4891, %v7232, %v7236
        %v7239 = vshrl.u32 %v7194, 16
        %v7241 = vrot.slane %v7239, 6
        %v7242 = vshll.u32 %v7194, 16
        %v7244 = vrot.slane %v7242, 7
        %v7245 = vor.u32 %v7241, %v7244
        %v7246 = vrot.slane %v7245, 2
        %v7248 = vshll.u32 %v7195, 16
        %v7250 = vrot.slane %v7248, 7
        %v7251 = vsel %vm4891, %v7246, %v7250
        %s7252 = scalar_lea.vmem %s4, 224
        %v7253 = vld [vmem:[%s7252] sm:$0xf]
        %v7254 = vld [vmem:[%s7252 + $0x4] sm:$0xf]
        %v7255 = vld [vmem:[%s7252 + $0x8] sm:$0xf]
        %v7256 = vld [vmem:[%s7252 + $0xc] sm:$0xf]
        %v7257 = vld [vmem:[%s7252 + $0x10] sm:$0xf]
        %v7258 = vld [vmem:[%s7252 + $0x14] sm:$0xf]
        %v7259 = vld [vmem:[%s7252 + $0x18] sm:$0xf]
        %v7260 = vld [vmem:[%s7252 + $0x1c] sm:$0xf]
        %v7261 = vcombine.low %v7209, %v7223
        %v7262 = vcombine.low %v7237, %v7251
        %v7264 = vunpack.c.l.s4 1983009808
        %v7265 = vunpack.c.0.s8 %v7264
        %v7266 = vlaneseq
        %v7267 = vshrl.u32 %v7266, 7
        %v7268 = vsub.s32 %v7265, %v7267
        %v7269 = vrot.slane %v7261, %v7268
        %v7271 = vunpack.c.l.s4 1983009808
        %v7272 = vunpack.c.0.s8 %v7271
        %v7273 = vlaneseq
        %v7274 = vshrl.u32 %v7273, 7
        %v7275 = vsub.s32 %v7272, %v7274
        %v7276 = vrot.slane %v7262, %v7275
        %v7277 = vcombine.low %v7269, %v7276
        %v7286 = vunpack.c.l.b16 %v7253
        %v7287 = vunpack.c.l.b16 %v7254
        %v7288 = vunpack.c.l.b16 %v7255
        %v7289 = vunpack.c.l.b16 %v7256
        %v7290 = vunpack.c.l.b16 %v7257
        %v7291 = vunpack.c.l.b16 %v7258
        %v7292 = vunpack.c.l.b16 %v7259
        %v7293 = vunpack.c.l.b16 %v7260
        %v7294 = vpack.c.b16 %v7287, %v7286
        %v7295 = vpack.c.b16 %v7289, %v7288
        %v7296 = vpack.c.b16 %v7291, %v7290
        %v7297 = vpack.c.b16 %v7293, %v7292
        %v7303 = vsel %vm6317, %v7277, 0
        %7305 = vmatprep.subr.bf16.mxu0 0
        %7306 = vmatpush1.bf16.msra.mxu0 %v7294
        %7307 = vmatprep.subr.bf16.mxu0 0
        %7308 = vmatpush1.bf16.msra.mxu0 %v7295
        %7309 = vmatprep.subr.bf16.mxu0 0
        %7310 = vmatpush1.bf16.msra.mxu0 %v7296
        %7311 = vmatprep.subr.bf16.mxu0 0
        %7312 = vmatpush1.bf16.msra.mxu0 %v7297
        %7313 = vmatprep.subr.bf16.mxu0 0
        %7314 = vmatpush1.bf16.msra.mxu0 0
        %7315 = vmatprep.subr.bf16.mxu0 0
        %7316 = vmatpush1.bf16.msra.mxu0 0
        %7317 = vmatprep.subr.bf16.mxu0 0
        %7318 = vmatpush1.bf16.msra.mxu0 0
        %7319 = vmatprep.subr.bf16.mxu0 0
        %7320 = vmatpush1.bf16.msra.mxu0 0
        %7321 = vmatprep.subr.bf16.mxu0 0
        %7322 = vmatpush1.bf16.msra.mxu0 0
        %7323 = vmatprep.subr.bf16.mxu0 0
        %7324 = vmatpush1.bf16.msra.mxu0 0
        %7325 = vmatprep.subr.bf16.mxu0 0
        %7326 = vmatpush1.bf16.msra.mxu0 0
        %7327 = vmatprep.subr.bf16.mxu0 0
        %7328 = vmatpush1.bf16.msra.mxu0 0
        %7329 = vmatprep.subr.bf16.mxu0 0
        %7330 = vmatpush1.bf16.msra.mxu0 0
        %7331 = vmatprep.subr.bf16.mxu0 0
        %7332 = vmatpush1.bf16.msra.mxu0 0
        %7333 = vmatprep.subr.bf16.mxu0 0
        %7334 = vmatpush1.bf16.msra.mxu0 0
        %7335 = vmatprep.subr.bf16.mxu0 0
        %7336 = vmatpush1.bf16.msra.mxu0 0
        %7337 = vmatprep.mubr.bf16.mxu0 0
        %7338 = vmatmul.mubr.bf16.gmra.mrb[0].mxu0 %v7303
        %v7339 = vpop.f32.mrb[0].mxu0
        %v7340 = vadd.f32 0.0, %v7339
        %v7341 = vpop.f32.mrb[0].mxu0
        %v7342 = vpop.f32.mrb[0].mxu0
        %v7343 = vadd.f32 0.0, %v7342
        %v7344 = vpop.f32.mrb[0].mxu0
        %7345 = vdwg.mxu0
        %v7346 = vadd.f32 %v7154, %v7340
        %v7347 = vadd.f32 %v7155, %v7343
        %v7348 = vld [vmem:[%s7051] sm:$0x6]
        %v7349 = vld [vmem:[%s7051 + $0x4] sm:$0x6]
        %v7350 = vld [vmem:[%s7051 + $0x8] sm:$0x6]
        %v7351 = vld [vmem:[%s7051 + $0xc] sm:$0x6]
        %v7357 = vunpack.c.l.s4 1983009808
        %v7358 = vunpack.c.0.s8 %v7357
        %v7359 = vlaneseq
        %v7360 = vshrl.u32 %v7359, 7
        %v7361 = vsub.s32 %v7358, %v7360
        %v7362 = vrot.slane %v7348, %v7361
        %v7363 = vcombine.high %v7362, %v7362
        %v7365 = vunpack.c.l.s4 1983009808
        %v7366 = vunpack.c.0.s8 %v7365
        %v7367 = vlaneseq
        %v7368 = vshrl.u32 %v7367, 7
        %v7369 = vsub.s32 %v7366, %v7368
        %v7370 = vrot.slane %v7349, %v7369
        %v7371 = vcombine.high %v7370, %v7370
        %v7373 = vunpack.c.l.s4 1983009808
        %v7374 = vunpack.c.0.s8 %v7373
        %v7375 = vlaneseq
        %v7376 = vshrl.u32 %v7375, 7
        %v7377 = vsub.s32 %v7374, %v7376
        %v7378 = vrot.slane %v7350, %v7377
        %v7379 = vcombine.high %v7378, %v7378
        %v7381 = vunpack.c.l.s4 1983009808
        %v7382 = vunpack.c.0.s8 %v7381
        %v7383 = vlaneseq
        %v7384 = vshrl.u32 %v7383, 7
        %v7385 = vsub.s32 %v7382, %v7384
        %v7386 = vrot.slane %v7351, %v7385
        %v7387 = vcombine.high %v7386, %v7386
        %v7388 = vrot.slane %v7362, 7
        %v7389 = vrot.slane %v7388, 2
        %v7390 = vrot.slane %v7363, 7
        %v7391 = vsel %vm5149, %v7389, %v7390
        %v7392 = vrot.slane %v7370, 7
        %v7393 = vrot.slane %v7392, 2
        %v7394 = vrot.slane %v7371, 7
        %v7395 = vsel %vm5149, %v7393, %v7394
        %v7396 = vrot.slane %v7378, 7
        %v7397 = vrot.slane %v7396, 2
        %v7398 = vrot.slane %v7379, 7
        %v7399 = vsel %vm5149, %v7397, %v7398
        %v7400 = vrot.slane %v7386, 7
        %v7401 = vrot.slane %v7400, 2
        %v7402 = vrot.slane %v7387, 7
        %v7403 = vsel %vm5149, %v7401, %v7402
        %s7404 = scalar_lea.vmem %s4, 256
        %v7405 = vld [vmem:[%s7404] sm:$0xf]
        %v7406 = vld [vmem:[%s7404 + $0x4] sm:$0xf]
        %v7407 = vld [vmem:[%s7404 + $0x8] sm:$0xf]
        %v7408 = vld [vmem:[%s7404 + $0xc] sm:$0xf]
        %v7409 = vld [vmem:[%s7404 + $0x10] sm:$0xf]
        %v7410 = vld [vmem:[%s7404 + $0x14] sm:$0xf]
        %v7411 = vld [vmem:[%s7404 + $0x18] sm:$0xf]
        %v7412 = vld [vmem:[%s7404 + $0x1c] sm:$0xf]
        %v7413 = vcombine.low %v7391, %v7395
        %v7414 = vcombine.low %v7399, %v7403
        %v7416 = vunpack.c.l.s4 1983009808
        %v7417 = vunpack.c.0.s8 %v7416
        %v7418 = vlaneseq
        %v7419 = vshrl.u32 %v7418, 7
        %v7420 = vsub.s32 %v7417, %v7419
        %v7421 = vrot.slane %v7413, %v7420
        %v7423 = vunpack.c.l.s4 1983009808
        %v7424 = vunpack.c.0.s8 %v7423
        %v7425 = vlaneseq
        %v7426 = vshrl.u32 %v7425, 7
        %v7427 = vsub.s32 %v7424, %v7426
        %v7428 = vrot.slane %v7414, %v7427
        %v7429 = vcombine.low %v7421, %v7428
        %v7438 = vunpack.c.l.b16 %v7405
        %v7439 = vunpack.c.l.b16 %v7406
        %v7440 = vunpack.c.l.b16 %v7407
        %v7441 = vunpack.c.l.b16 %v7408
        %v7442 = vunpack.c.l.b16 %v7409
        %v7443 = vunpack.c.l.b16 %v7410
        %v7444 = vunpack.c.l.b16 %v7411
        %v7445 = vunpack.c.l.b16 %v7412
        %v7446 = vpack.c.b16 %v7439, %v7438
        %v7447 = vpack.c.b16 %v7441, %v7440
        %v7448 = vpack.c.b16 %v7443, %v7442
        %v7449 = vpack.c.b16 %v7445, %v7444
        %v7455 = vsel %vm6317, %v7429, 0
        %7457 = vmatprep.subr.bf16.mxu0 0
        %7458 = vmatpush1.bf16.msra.mxu0 %v7446
        %7459 = vmatprep.subr.bf16.mxu0 0
        %7460 = vmatpush1.bf16.msra.mxu0 %v7447
        %7461 = vmatprep.subr.bf16.mxu0 0
        %7462 = vmatpush1.bf16.msra.mxu0 %v7448
        %7463 = vmatprep.subr.bf16.mxu0 0
        %7464 = vmatpush1.bf16.msra.mxu0 %v7449
        %7465 = vmatprep.subr.bf16.mxu0 0
        %7466 = vmatpush1.bf16.msra.mxu0 0
        %7467 = vmatprep.subr.bf16.mxu0 0
        %7468 = vmatpush1.bf16.msra.mxu0 0
        %7469 = vmatprep.subr.bf16.mxu0 0
        %7470 = vmatpush1.bf16.msra.mxu0 0
        %7471 = vmatprep.subr.bf16.mxu0 0
        %7472 = vmatpush1.bf16.msra.mxu0 0
        %7473 = vmatprep.subr.bf16.mxu0 0
        %7474 = vmatpush1.bf16.msra.mxu0 0
        %7475 = vmatprep.subr.bf16.mxu0 0
        %7476 = vmatpush1.bf16.msra.mxu0 0
        %7477 = vmatprep.subr.bf16.mxu0 0
        %7478 = vmatpush1.bf16.msra.mxu0 0
        %7479 = vmatprep.subr.bf16.mxu0 0
        %7480 = vmatpush1.bf16.msra.mxu0 0
        %7481 = vmatprep.subr.bf16.mxu0 0
        %7482 = vmatpush1.bf16.msra.mxu0 0
        %7483 = vmatprep.subr.bf16.mxu0 0
        %7484 = vmatpush1.bf16.msra.mxu0 0
        %7485 = vmatprep.subr.bf16.mxu0 0
        %7486 = vmatpush1.bf16.msra.mxu0 0
        %7487 = vmatprep.subr.bf16.mxu0 0
        %7488 = vmatpush1.bf16.msra.mxu0 0
        %7489 = vmatprep.mubr.bf16.mxu0 0
        %7490 = vmatmul.mubr.bf16.gmra.mrb[0].mxu0 %v7455
        %v7491 = vpop.f32.mrb[0].mxu0
        %v7492 = vadd.f32 0.0, %v7491
        %v7493 = vpop.f32.mrb[0].mxu0
        %v7494 = vpop.f32.mrb[0].mxu0
        %v7495 = vadd.f32 0.0, %v7494
        %v7496 = vpop.f32.mrb[0].mxu0
        %7497 = vdwg.mxu0
        %v7498 = vadd.f32 %v7346, %v7492
        %v7499 = vadd.f32 %v7347, %v7495
        %v7500 = vld [vmem:[%s10] sm:$0x1]
        %v7502 = vlaneseq
        %v7503 = vshrl.u32 %v7502, 7
        %v7504 = vsub.s32 0, %v7503
        %v7505 = vrot.slane %v7500, %v7504
        %v7507 = vadd.f32 %v7498, %v7505
        %v7508 = vadd.f32 %v7499, %v7505
        %v7509 = vmax.f32 %v7507, 0.0
        %v7510 = vmax.f32 %v7508, 0.0
        %v7513 = vcombine.high %v7509, %v7509
        %v7514 = vcombine.high %v7510, %v7510
        %v7517 = vpack.c.bf16 %v7509, %v7509
        %v7518 = vpack.c.bf16 %v7513, %v7513
        %v7519 = vpack.c.bf16 %v7510, %v7510
        %v7520 = vpack.c.bf16 %v7514, %v7514
        %7521 = vst.msk [vmem:[#allocation5] sm:$0x7] %vm6068, 0
        %s7522 = scalar_lea.vmem [#allocation5], 20
        %7523 = vst.msk [vmem:[%s7522] sm:$0x7] %vm6068, 0
        %s7524 = scalar_lea.vmem [#allocation5], 4
        %v7525 = vld [vmem:[%s7524] sm:$0x1]
        %v7526 = vsel %vm6074, 0, %v7525
        %7527 = vst [vmem:[%s7524] sm:$0x1] %v7526
        %v7528 = vld [vmem:[%s7524 + $0x4] sm:$0x1]
        %v7529 = vsel %vm6074, 0, %v7528
        %7530 = vst [vmem:[%s7524 + $0x4] sm:$0x1] %v7529
        %v7531 = vld [vmem:[%s7524 + $0x8] sm:$0x1]
        %v7532 = vsel %vm6074, 0, %v7531
        %7533 = vst [vmem:[%s7524 + $0x8] sm:$0x1] %v7532
        %v7534 = vld [vmem:[%s7524 + $0xc] sm:$0x1]
        %v7535 = vsel %vm6074, 0, %v7534
        %7536 = vst [vmem:[%s7524 + $0xc] sm:$0x1] %v7535
        %v7537 = vld [vmem:[%s7524] sm:$0x4]
        %v7538 = vsel %vm6088, 0, %v7537
        %7539 = vst [vmem:[%s7524] sm:$0x4] %v7538
        %v7540 = vld [vmem:[%s7524 + $0x4] sm:$0x4]
        %v7541 = vsel %vm6088, 0, %v7540
        %7542 = vst [vmem:[%s7524 + $0x4] sm:$0x4] %v7541
        %v7543 = vld [vmem:[%s7524 + $0x8] sm:$0x4]
        %v7544 = vsel %vm6088, 0, %v7543
        %7545 = vst [vmem:[%s7524 + $0x8] sm:$0x4] %v7544
        %v7546 = vld [vmem:[%s7524 + $0xc] sm:$0x4]
        %v7547 = vsel %vm6088, 0, %v7546
        %7548 = vst [vmem:[%s7524 + $0xc] sm:$0x4] %v7547
        %v7553 = vunpack.c.l.b16 %v7517
        %v7554 = vunpack.c.l.b16 %v7518
        %v7555 = vunpack.c.l.b16 %v7519
        %v7556 = vunpack.c.l.b16 %v7520
        %v7557 = vpack.c.b16 %v7553, %v7553
        %v7558 = vpack.c.b16 %v7554, %v7554
        %v7559 = vpack.c.b16 %v7555, %v7555
        %v7560 = vpack.c.b16 %v7556, %v7556
        %v7562 = vshrl.u32 %v7557, 16
        %v7564 = vrot.slane %v7562, 7
        %v7565 = vshll.u32 %v7557, 16
        %v7567 = vor.u32 %v7564, %v7565
        %v7569 = vshrl.u32 %v7558, 16
        %v7571 = vrot.slane %v7569, 7
        %v7572 = vshll.u32 %v7558, 16
        %v7574 = vor.u32 %v7571, %v7572
        %v7576 = vshrl.u32 %v7559, 16
        %v7578 = vrot.slane %v7576, 7
        %v7579 = vshll.u32 %v7559, 16
        %v7581 = vor.u32 %v7578, %v7579
        %v7583 = vshrl.u32 %v7560, 16
        %v7585 = vrot.slane %v7583, 7
        %v7586 = vshll.u32 %v7560, 16
        %v7588 = vor.u32 %v7585, %v7586
        %v7593 = vld [vmem:[%s7524] sm:$0x7]
        %v7594 = vsel %vm6146, %v7567, %v7593
        %7595 = vst [vmem:[%s7524] sm:$0x7] %v7594
        %v7596 = vld [vmem:[%s7524 + $0x4] sm:$0x7]
        %v7597 = vsel %vm6146, %v7574, %v7596
        %7598 = vst [vmem:[%s7524 + $0x4] sm:$0x7] %v7597
        %v7599 = vld [vmem:[%s7524 + $0x8] sm:$0x7]
        %v7600 = vsel %vm6146, %v7581, %v7599
        %7601 = vst [vmem:[%s7524 + $0x8] sm:$0x7] %v7600
        %v7602 = vld [vmem:[%s7524 + $0xc] sm:$0x7]
        %v7603 = vsel %vm6146, %v7588, %v7602
        %7604 = vst [vmem:[%s7524 + $0xc] sm:$0x7] %v7603
        %v7605 = vld [vmem:[#allocation5] sm:$0x3]
        %v7606 = vld [vmem:[#allocation5 + $0x4] sm:$0x3]
        %v7607 = vld [vmem:[#allocation5 + $0x8] sm:$0x3]
        %v7608 = vld [vmem:[#allocation5 + $0xc] sm:$0x3]
        %v7609 = vld [vmem:[%s5] sm:$0xf]
        %v7610 = vld [vmem:[%s5 + $0x4] sm:$0xf]
        %v7611 = vld [vmem:[%s5 + $0x8] sm:$0xf]
        %v7612 = vld [vmem:[%s5 + $0xc] sm:$0xf]
        %v7613 = vld [vmem:[%s5 + $0x10] sm:$0xf]
        %v7614 = vld [vmem:[%s5 + $0x14] sm:$0xf]
        %v7615 = vld [vmem:[%s5 + $0x18] sm:$0xf]
        %v7616 = vld [vmem:[%s5 + $0x1c] sm:$0xf]
        %v7617 = vld [vmem:[#allocation5] sm:$0x7]
        %v7618 = vld [vmem:[#allocation5 + $0x4] sm:$0x7]
        %v7619 = vld [vmem:[#allocation5 + $0x8] sm:$0x7]
        %v7620 = vld [vmem:[#allocation5 + $0xc] sm:$0x7]
        %v7626 = vunpack.c.l.s4 1983009808
        %v7627 = vunpack.c.0.s8 %v7626
        %v7628 = vlaneseq
        %v7629 = vshrl.u32 %v7628, 7
        %v7630 = vsub.s32 %v7627, %v7629
        %v7631 = vrot.slane %v7617, %v7630
        %v7632 = vcombine.high %v7631, %v7631
        %v7634 = vunpack.c.l.s4 1983009808
        %v7635 = vunpack.c.0.s8 %v7634
        %v7636 = vlaneseq
        %v7637 = vshrl.u32 %v7636, 7
        %v7638 = vsub.s32 %v7635, %v7637
        %v7639 = vrot.slane %v7618, %v7638
        %v7640 = vcombine.high %v7639, %v7639
        %v7642 = vunpack.c.l.s4 1983009808
        %v7643 = vunpack.c.0.s8 %v7642
        %v7644 = vlaneseq
        %v7645 = vshrl.u32 %v7644, 7
        %v7646 = vsub.s32 %v7643, %v7645
        %v7647 = vrot.slane %v7619, %v7646
        %v7648 = vcombine.high %v7647, %v7647
        %v7650 = vunpack.c.l.s4 1983009808
        %v7651 = vunpack.c.0.s8 %v7650
        %v7652 = vlaneseq
        %v7653 = vshrl.u32 %v7652, 7
        %v7654 = vsub.s32 %v7651, %v7653
        %v7655 = vrot.slane %v7620, %v7654
        %v7656 = vcombine.high %v7655, %v7655
        %v7658 = vshrl.u32 %v7631, 16
        %v7660 = vrot.slane %v7658, 6
        %v7661 = vshll.u32 %v7631, 16
        %v7663 = vrot.slane %v7661, 7
        %v7664 = vor.u32 %v7660, %v7663
        %v7665 = vrot.slane %v7664, 2
        %v7667 = vshll.u32 %v7632, 16
        %v7669 = vrot.slane %v7667, 7
        %v7670 = vsel %vm4891, %v7665, %v7669
        %v7672 = vshrl.u32 %v7639, 16
        %v7674 = vrot.slane %v7672, 6
        %v7675 = vshll.u32 %v7639, 16
        %v7677 = vrot.slane %v7675, 7
        %v7678 = vor.u32 %v7674, %v7677
        %v7679 = vrot.slane %v7678, 2
        %v7681 = vshll.u32 %v7640, 16
        %v7683 = vrot.slane %v7681, 7
        %v7684 = vsel %vm4891, %v7679, %v7683
        %v7686 = vshrl.u32 %v7647, 16
        %v7688 = vrot.slane %v7686, 6
        %v7689 = vshll.u32 %v7647, 16
        %v7691 = vrot.slane %v7689, 7
        %v7692 = vor.u32 %v7688, %v7691
        %v7693 = vrot.slane %v7692, 2
        %v7695 = vshll.u32 %v7648, 16
        %v7697 = vrot.slane %v7695, 7
        %v7698 = vsel %vm4891, %v7693, %v7697
        %v7700 = vshrl.u32 %v7655, 16
        %v7702 = vrot.slane %v7700, 6
        %v7703 = vshll.u32 %v7655, 16
        %v7705 = vrot.slane %v7703, 7
        %v7706 = vor.u32 %v7702, %v7705
        %v7707 = vrot.slane %v7706, 2
        %v7709 = vshll.u32 %v7656, 16
        %v7711 = vrot.slane %v7709, 7
        %v7712 = vsel %vm4891, %v7707, %v7711
        %s7713 = scalar_lea.vmem %s5, 32
        %v7714 = vld [vmem:[%s7713] sm:$0xf]
        %v7715 = vld [vmem:[%s7713 + $0x4] sm:$0xf]
        %v7716 = vld [vmem:[%s7713 + $0x8] sm:$0xf]
        %v7717 = vld [vmem:[%s7713 + $0xc] sm:$0xf]
        %v7718 = vld [vmem:[%s7713 + $0x10] sm:$0xf]
        %v7719 = vld [vmem:[%s7713 + $0x14] sm:$0xf]
        %v7720 = vld [vmem:[%s7713 + $0x18] sm:$0xf]
        %v7721 = vld [vmem:[%s7713 + $0x1c] sm:$0xf]
        %v7722 = vcombine.low %v7670, %v7684
        %v7723 = vcombine.low %v7698, %v7712
        %v7725 = vunpack.c.l.s4 1983009808
        %v7726 = vunpack.c.0.s8 %v7725
        %v7727 = vlaneseq
        %v7728 = vshrl.u32 %v7727, 7
        %v7729 = vsub.s32 %v7726, %v7728
        %v7730 = vrot.slane %v7722, %v7729
        %v7732 = vunpack.c.l.s4 1983009808
        %v7733 = vunpack.c.0.s8 %v7732
        %v7734 = vlaneseq
        %v7735 = vshrl.u32 %v7734, 7
        %v7736 = vsub.s32 %v7733, %v7735
        %v7737 = vrot.slane %v7723, %v7736
        %v7738 = vcombine.low %v7730, %v7737
        %v7747 = vunpack.c.l.b16 %v7714
        %v7748 = vunpack.c.l.b16 %v7715
        %v7749 = vunpack.c.l.b16 %v7716
        %v7750 = vunpack.c.l.b16 %v7717
        %v7751 = vunpack.c.l.b16 %v7718
        %v7752 = vunpack.c.l.b16 %v7719
        %v7753 = vunpack.c.l.b16 %v7720
        %v7754 = vunpack.c.l.b16 %v7721
        %v7755 = vpack.c.b16 %v7748, %v7747
        %v7756 = vpack.c.b16 %v7750, %v7749
        %v7757 = vpack.c.b16 %v7752, %v7751
        %v7758 = vpack.c.b16 %v7754, %v7753
        %v7764 = vsel %vm6317, %v7738, 0
        %7766 = vmatprep.subr.bf16.mxu0 0
        %7767 = vmatpush1.bf16.msra.mxu0 %v7755
        %7768 = vmatprep.subr.bf16.mxu0 0
        %7769 = vmatpush1.bf16.msra.mxu0 %v7756
        %7770 = vmatprep.subr.bf16.mxu0 0
        %7771 = vmatpush1.bf16.msra.mxu0 %v7757
        %7772 = vmatprep.subr.bf16.mxu0 0
        %7773 = vmatpush1.bf16.msra.mxu0 %v7758
        %7774 = vmatprep.subr.bf16.mxu0 0
        %7775 = vmatpush1.bf16.msra.mxu0 0
        %7776 = vmatprep.subr.bf16.mxu0 0
        %7777 = vmatpush1.bf16.msra.mxu0 0
        %7778 = vmatprep.subr.bf16.mxu0 0
        %7779 = vmatpush1.bf16.msra.mxu0 0
        %7780 = vmatprep.subr.bf16.mxu0 0
        %7781 = vmatpush1.bf16.msra.mxu0 0
        %7782 = vmatprep.subr.bf16.mxu0 0
        %7783 = vmatpush1.bf16.msra.mxu0 0
        %7784 = vmatprep.subr.bf16.mxu0 0
        %7785 = vmatpush1.bf16.msra.mxu0 0
        %7786 = vmatprep.subr.bf16.mxu0 0
        %7787 = vmatpush1.bf16.msra.mxu0 0
        %7788 = vmatprep.subr.bf16.mxu0 0
        %7789 = vmatpush1.bf16.msra.mxu0 0
        %7790 = vmatprep.subr.bf16.mxu0 0
        %7791 = vmatpush1.bf16.msra.mxu0 0
        %7792 = vmatprep.subr.bf16.mxu0 0
        %7793 = vmatpush1.bf16.msra.mxu0 0
        %7794 = vmatprep.subr.bf16.mxu0 0
        %7795 = vmatpush1.bf16.msra.mxu0 0
        %7796 = vmatprep.subr.bf16.mxu0 0
        %7797 = vmatpush1.bf16.msra.mxu0 0
        %7798 = vmatprep.mubr.bf16.mxu0 0
        %7799 = vmatmul.mubr.bf16.gmra.mrb[0].mxu0 %v7764
        %v7800 = vpop.f32.mrb[0].mxu0
        %v7801 = vadd.f32 0.0, %v7800
        %v7802 = vpop.f32.mrb[0].mxu0
        %v7803 = vpop.f32.mrb[0].mxu0
        %v7804 = vadd.f32 0.0, %v7803
        %v7805 = vpop.f32.mrb[0].mxu0
        %7806 = vdwg.mxu0
        %v7811 = vcombine.low %v7605, %v7606
        %v7812 = vcombine.low %v7607, %v7608
        %v7814 = vunpack.c.l.s4 1983009808
        %v7815 = vunpack.c.0.s8 %v7814
        %v7816 = vlaneseq
        %v7817 = vshrl.u32 %v7816, 7
        %v7818 = vsub.s32 %v7815, %v7817
        %v7819 = vrot.slane %v7811, %v7818
        %v7821 = vunpack.c.l.s4 1983009808
        %v7822 = vunpack.c.0.s8 %v7821
        %v7823 = vlaneseq
        %v7824 = vshrl.u32 %v7823, 7
        %v7825 = vsub.s32 %v7822, %v7824
        %v7826 = vrot.slane %v7812, %v7825
        %v7827 = vcombine.low %v7819, %v7826
        %v7836 = vunpack.c.l.b16 %v7609
        %v7837 = vunpack.c.l.b16 %v7610
        %v7838 = vunpack.c.l.b16 %v7611
        %v7839 = vunpack.c.l.b16 %v7612
        %v7840 = vunpack.c.l.b16 %v7613
        %v7841 = vunpack.c.l.b16 %v7614
        %v7842 = vunpack.c.l.b16 %v7615
        %v7843 = vunpack.c.l.b16 %v7616
        %v7844 = vpack.c.b16 %v7837, %v7836
        %v7845 = vpack.c.b16 %v7839, %v7838
        %v7846 = vpack.c.b16 %v7841, %v7840
        %v7847 = vpack.c.b16 %v7843, %v7842
        %v7853 = vsel %vm6317, %v7827, 0
        %7855 = vmatprep.subr.bf16.mxu0 0
        %7856 = vmatpush1.bf16.msra.mxu0 %v7844
        %7857 = vmatprep.subr.bf16.mxu0 0
        %7858 = vmatpush1.bf16.msra.mxu0 %v7845
        %7859 = vmatprep.subr.bf16.mxu0 0
        %7860 = vmatpush1.bf16.msra.mxu0 %v7846
        %7861 = vmatprep.subr.bf16.mxu0 0
        %7862 = vmatpush1.bf16.msra.mxu0 %v7847
        %7863 = vmatprep.subr.bf16.mxu0 0
        %7864 = vmatpush1.bf16.msra.mxu0 0
        %7865 = vmatprep.subr.bf16.mxu0 0
        %7866 = vmatpush1.bf16.msra.mxu0 0
        %7867 = vmatprep.subr.bf16.mxu0 0
        %7868 = vmatpush1.bf16.msra.mxu0 0
        %7869 = vmatprep.subr.bf16.mxu0 0
        %7870 = vmatpush1.bf16.msra.mxu0 0
        %7871 = vmatprep.subr.bf16.mxu0 0
        %7872 = vmatpush1.bf16.msra.mxu0 0
        %7873 = vmatprep.subr.bf16.mxu0 0
        %7874 = vmatpush1.bf16.msra.mxu0 0
        %7875 = vmatprep.subr.bf16.mxu0 0
        %7876 = vmatpush1.bf16.msra.mxu0 0
        %7877 = vmatprep.subr.bf16.mxu0 0
        %7878 = vmatpush1.bf16.msra.mxu0 0
        %7879 = vmatprep.subr.bf16.mxu0 0
        %7880 = vmatpush1.bf16.msra.mxu0 0
        %7881 = vmatprep.subr.bf16.mxu0 0
        %7882 = vmatpush1.bf16.msra.mxu0 0
        %7883 = vmatprep.subr.bf16.mxu0 0
        %7884 = vmatpush1.bf16.msra.mxu0 0
        %7885 = vmatprep.subr.bf16.mxu0 0
        %7886 = vmatpush1.bf16.msra.mxu0 0
        %7887 = vmatprep.mubr.bf16.mxu0 0
        %7888 = vmatmul.mubr.bf16.gmra.mrb[0].mxu0 %v7853
        %v7889 = vpop.f32.mrb[0].mxu0
        %v7890 = vadd.f32 %v7801, %v7889
        %v7891 = vpop.f32.mrb[0].mxu0
        %v7892 = vpop.f32.mrb[0].mxu0
        %v7893 = vadd.f32 %v7804, %v7892
        %v7894 = vpop.f32.mrb[0].mxu0
        %7895 = vdwg.mxu0
        %v7896 = vld [vmem:[#allocation5] sm:$0x6]
        %v7897 = vld [vmem:[#allocation5 + $0x4] sm:$0x6]
        %v7898 = vld [vmem:[#allocation5 + $0x8] sm:$0x6]
        %v7899 = vld [vmem:[#allocation5 + $0xc] sm:$0x6]
        %v7905 = vunpack.c.l.s4 1983009808
        %v7906 = vunpack.c.0.s8 %v7905
        %v7907 = vlaneseq
        %v7908 = vshrl.u32 %v7907, 7
        %v7909 = vsub.s32 %v7906, %v7908
        %v7910 = vrot.slane %v7896, %v7909
        %v7911 = vcombine.high %v7910, %v7910
        %v7913 = vunpack.c.l.s4 1983009808
        %v7914 = vunpack.c.0.s8 %v7913
        %v7915 = vlaneseq
        %v7916 = vshrl.u32 %v7915, 7
        %v7917 = vsub.s32 %v7914, %v7916
        %v7918 = vrot.slane %v7897, %v7917
        %v7919 = vcombine.high %v7918, %v7918
        %v7921 = vunpack.c.l.s4 1983009808
        %v7922 = vunpack.c.0.s8 %v7921
        %v7923 = vlaneseq
        %v7924 = vshrl.u32 %v7923, 7
        %v7925 = vsub.s32 %v7922, %v7924
        %v7926 = vrot.slane %v7898, %v7925
        %v7927 = vcombine.high %v7926, %v7926
        %v7929 = vunpack.c.l.s4 1983009808
        %v7930 = vunpack.c.0.s8 %v7929
        %v7931 = vlaneseq
        %v7932 = vshrl.u32 %v7931, 7
        %v7933 = vsub.s32 %v7930, %v7932
        %v7934 = vrot.slane %v7899, %v7933
        %v7935 = vcombine.high %v7934, %v7934
        %v7936 = vrot.slane %v7910, 7
        %v7937 = vrot.slane %v7936, 2
        %v7938 = vrot.slane %v7911, 7
        %v7939 = vsel %vm5149, %v7937, %v7938
        %v7940 = vrot.slane %v7918, 7
        %v7941 = vrot.slane %v7940, 2
        %v7942 = vrot.slane %v7919, 7
        %v7943 = vsel %vm5149, %v7941, %v7942
        %v7944 = vrot.slane %v7926, 7
        %v7945 = vrot.slane %v7944, 2
        %v7946 = vrot.slane %v7927, 7
        %v7947 = vsel %vm5149, %v7945, %v7946
        %v7948 = vrot.slane %v7934, 7
        %v7949 = vrot.slane %v7948, 2
        %v7950 = vrot.slane %v7935, 7
        %v7951 = vsel %vm5149, %v7949, %v7950
        %s7952 = scalar_lea.vmem %s5, 64
        %v7953 = vld [vmem:[%s7952] sm:$0xf]
        %v7954 = vld [vmem:[%s7952 + $0x4] sm:$0xf]
        %v7955 = vld [vmem:[%s7952 + $0x8] sm:$0xf]
        %v7956 = vld [vmem:[%s7952 + $0xc] sm:$0xf]
        %v7957 = vld [vmem:[%s7952 + $0x10] sm:$0xf]
        %v7958 = vld [vmem:[%s7952 + $0x14] sm:$0xf]
        %v7959 = vld [vmem:[%s7952 + $0x18] sm:$0xf]
        %v7960 = vld [vmem:[%s7952 + $0x1c] sm:$0xf]
        %v7961 = vcombine.low %v7939, %v7943
        %v7962 = vcombine.low %v7947, %v7951
        %v7964 = vunpack.c.l.s4 1983009808
        %v7965 = vunpack.c.0.s8 %v7964
        %v7966 = vlaneseq
        %v7967 = vshrl.u32 %v7966, 7
        %v7968 = vsub.s32 %v7965, %v7967
        %v7969 = vrot.slane %v7961, %v7968
        %v7971 = vunpack.c.l.s4 1983009808
        %v7972 = vunpack.c.0.s8 %v7971
        %v7973 = vlaneseq
        %v7974 = vshrl.u32 %v7973, 7
        %v7975 = vsub.s32 %v7972, %v7974
        %v7976 = vrot.slane %v7962, %v7975
        %v7977 = vcombine.low %v7969, %v7976
        %v7986 = vunpack.c.l.b16 %v7953
        %v7987 = vunpack.c.l.b16 %v7954
        %v7988 = vunpack.c.l.b16 %v7955
        %v7989 = vunpack.c.l.b16 %v7956
        %v7990 = vunpack.c.l.b16 %v7957
        %v7991 = vunpack.c.l.b16 %v7958
        %v7992 = vunpack.c.l.b16 %v7959
        %v7993 = vunpack.c.l.b16 %v7960
        %v7994 = vpack.c.b16 %v7987, %v7986
        %v7995 = vpack.c.b16 %v7989, %v7988
        %v7996 = vpack.c.b16 %v7991, %v7990
        %v7997 = vpack.c.b16 %v7993, %v7992
        %v8003 = vsel %vm6317, %v7977, 0
        %8005 = vmatprep.subr.bf16.mxu0 0
        %8006 = vmatpush1.bf16.msra.mxu0 %v7994
        %8007 = vmatprep.subr.bf16.mxu0 0
        %8008 = vmatpush1.bf16.msra.mxu0 %v7995
        %8009 = vmatprep.subr.bf16.mxu0 0
        %8010 = vmatpush1.bf16.msra.mxu0 %v7996
        %8011 = vmatprep.subr.bf16.mxu0 0
        %8012 = vmatpush1.bf16.msra.mxu0 %v7997
        %8013 = vmatprep.subr.bf16.mxu0 0
        %8014 = vmatpush1.bf16.msra.mxu0 0
        %8015 = vmatprep.subr.bf16.mxu0 0
        %8016 = vmatpush1.bf16.msra.mxu0 0
        %8017 = vmatprep.subr.bf16.mxu0 0
        %8018 = vmatpush1.bf16.msra.mxu0 0
        %8019 = vmatprep.subr.bf16.mxu0 0
        %8020 = vmatpush1.bf16.msra.mxu0 0
        %8021 = vmatprep.subr.bf16.mxu0 0
        %8022 = vmatpush1.bf16.msra.mxu0 0
        %8023 = vmatprep.subr.bf16.mxu0 0
        %8024 = vmatpush1.bf16.msra.mxu0 0
        %8025 = vmatprep.subr.bf16.mxu0 0
        %8026 = vmatpush1.bf16.msra.mxu0 0
        %8027 = vmatprep.subr.bf16.mxu0 0
        %8028 = vmatpush1.bf16.msra.mxu0 0
        %8029 = vmatprep.subr.bf16.mxu0 0
        %8030 = vmatpush1.bf16.msra.mxu0 0
        %8031 = vmatprep.subr.bf16.mxu0 0
        %8032 = vmatpush1.bf16.msra.mxu0 0
        %8033 = vmatprep.subr.bf16.mxu0 0
        %8034 = vmatpush1.bf16.msra.mxu0 0
        %8035 = vmatprep.subr.bf16.mxu0 0
        %8036 = vmatpush1.bf16.msra.mxu0 0
        %8037 = vmatprep.mubr.bf16.mxu0 0
        %8038 = vmatmul.mubr.bf16.gmra.mrb[0].mxu0 %v8003
        %v8039 = vpop.f32.mrb[0].mxu0
        %v8040 = vadd.f32 0.0, %v8039
        %v8041 = vpop.f32.mrb[0].mxu0
        %v8042 = vpop.f32.mrb[0].mxu0
        %v8043 = vadd.f32 0.0, %v8042
        %v8044 = vpop.f32.mrb[0].mxu0
        %8045 = vdwg.mxu0
        %v8046 = vadd.f32 %v7890, %v8040
        %v8047 = vadd.f32 %v7893, %v8043
        %v8048 = vld [vmem:[%s7524] sm:$0x3]
        %v8049 = vld [vmem:[%s7524 + $0x4] sm:$0x3]
        %v8050 = vld [vmem:[%s7524 + $0x8] sm:$0x3]
        %v8051 = vld [vmem:[%s7524 + $0xc] sm:$0x3]
        %s8052 = scalar_lea.vmem %s5, 96
        %v8053 = vld [vmem:[%s8052] sm:$0xf]
        %v8054 = vld [vmem:[%s8052 + $0x4] sm:$0xf]
        %v8055 = vld [vmem:[%s8052 + $0x8] sm:$0xf]
        %v8056 = vld [vmem:[%s8052 + $0xc] sm:$0xf]
        %v8057 = vld [vmem:[%s8052 + $0x10] sm:$0xf]
        %v8058 = vld [vmem:[%s8052 + $0x14] sm:$0xf]
        %v8059 = vld [vmem:[%s8052 + $0x18] sm:$0xf]
        %v8060 = vld [vmem:[%s8052 + $0x1c] sm:$0xf]
        %v8065 = vcombine.low %v8048, %v8049
        %v8066 = vcombine.low %v8050, %v8051
        %v8068 = vunpack.c.l.s4 1983009808
        %v8069 = vunpack.c.0.s8 %v8068
        %v8070 = vlaneseq
        %v8071 = vshrl.u32 %v8070, 7
        %v8072 = vsub.s32 %v8069, %v8071
        %v8073 = vrot.slane %v8065, %v8072
        %v8075 = vunpack.c.l.s4 1983009808
        %v8076 = vunpack.c.0.s8 %v8075
        %v8077 = vlaneseq
        %v8078 = vshrl.u32 %v8077, 7
        %v8079 = vsub.s32 %v8076, %v8078
        %v8080 = vrot.slane %v8066, %v8079
        %v8081 = vcombine.low %v8073, %v8080
        %v8090 = vunpack.c.l.b16 %v8053
        %v8091 = vunpack.c.l.b16 %v8054
        %v8092 = vunpack.c.l.b16 %v8055
        %v8093 = vunpack.c.l.b16 %v8056
        %v8094 = vunpack.c.l.b16 %v8057
        %v8095 = vunpack.c.l.b16 %v8058
        %v8096 = vunpack.c.l.b16 %v8059
        %v8097 = vunpack.c.l.b16 %v8060
        %v8098 = vpack.c.b16 %v8091, %v8090
        %v8099 = vpack.c.b16 %v8093, %v8092
        %v8100 = vpack.c.b16 %v8095, %v8094
        %v8101 = vpack.c.b16 %v8097, %v8096
        %v8107 = vsel %vm6317, %v8081, 0
        %8109 = vmatprep.subr.bf16.mxu0 0
        %8110 = vmatpush1.bf16.msra.mxu0 %v8098
        %8111 = vmatprep.subr.bf16.mxu0 0
        %8112 = vmatpush1.bf16.msra.mxu0 %v8099
        %8113 = vmatprep.subr.bf16.mxu0 0
        %8114 = vmatpush1.bf16.msra.mxu0 %v8100
        %8115 = vmatprep.subr.bf16.mxu0 0
        %8116 = vmatpush1.bf16.msra.mxu0 %v8101
        %8117 = vmatprep.subr.bf16.mxu0 0
        %8118 = vmatpush1.bf16.msra.mxu0 0
        %8119 = vmatprep.subr.bf16.mxu0 0
        %8120 = vmatpush1.bf16.msra.mxu0 0
        %8121 = vmatprep.subr.bf16.mxu0 0
        %8122 = vmatpush1.bf16.msra.mxu0 0
        %8123 = vmatprep.subr.bf16.mxu0 0
        %8124 = vmatpush1.bf16.msra.mxu0 0
        %8125 = vmatprep.subr.bf16.mxu0 0
        %8126 = vmatpush1.bf16.msra.mxu0 0
        %8127 = vmatprep.subr.bf16.mxu0 0
        %8128 = vmatpush1.bf16.msra.mxu0 0
        %8129 = vmatprep.subr.bf16.mxu0 0
        %8130 = vmatpush1.bf16.msra.mxu0 0
        %8131 = vmatprep.subr.bf16.mxu0 0
        %8132 = vmatpush1.bf16.msra.mxu0 0
        %8133 = vmatprep.subr.bf16.mxu0 0
        %8134 = vmatpush1.bf16.msra.mxu0 0
        %8135 = vmatprep.subr.bf16.mxu0 0
        %8136 = vmatpush1.bf16.msra.mxu0 0
        %8137 = vmatprep.subr.bf16.mxu0 0
        %8138 = vmatpush1.bf16.msra.mxu0 0
        %8139 = vmatprep.subr.bf16.mxu0 0
        %8140 = vmatpush1.bf16.msra.mxu0 0
        %8141 = vmatprep.mubr.bf16.mxu0 0
        %8142 = vmatmul.mubr.bf16.gmra.mrb[0].mxu0 %v8107
        %v8143 = vpop.f32.mrb[0].mxu0
        %v8144 = vadd.f32 0.0, %v8143
        %v8145 = vpop.f32.mrb[0].mxu0
        %v8146 = vpop.f32.mrb[0].mxu0
        %v8147 = vadd.f32 0.0, %v8146
        %v8148 = vpop.f32.mrb[0].mxu0
        %8149 = vdwg.mxu0
        %v8150 = vadd.f32 %v8046, %v8144
        %v8151 = vadd.f32 %v8047, %v8147
        %v8152 = vld [vmem:[%s7524] sm:$0x7]
        %v8153 = vld [vmem:[%s7524 + $0x4] sm:$0x7]
        %v8154 = vld [vmem:[%s7524 + $0x8] sm:$0x7]
        %v8155 = vld [vmem:[%s7524 + $0xc] sm:$0x7]
        %v8161 = vunpack.c.l.s4 1983009808
        %v8162 = vunpack.c.0.s8 %v8161
        %v8163 = vlaneseq
        %v8164 = vshrl.u32 %v8163, 7
        %v8165 = vsub.s32 %v8162, %v8164
        %v8166 = vrot.slane %v8152, %v8165
        %v8167 = vcombine.high %v8166, %v8166
        %v8169 = vunpack.c.l.s4 1983009808
        %v8170 = vunpack.c.0.s8 %v8169
        %v8171 = vlaneseq
        %v8172 = vshrl.u32 %v8171, 7
        %v8173 = vsub.s32 %v8170, %v8172
        %v8174 = vrot.slane %v8153, %v8173
        %v8175 = vcombine.high %v8174, %v8174
        %v8177 = vunpack.c.l.s4 1983009808
        %v8178 = vunpack.c.0.s8 %v8177
        %v8179 = vlaneseq
        %v8180 = vshrl.u32 %v8179, 7
        %v8181 = vsub.s32 %v8178, %v8180
        %v8182 = vrot.slane %v8154, %v8181
        %v8183 = vcombine.high %v8182, %v8182
        %v8185 = vunpack.c.l.s4 1983009808
        %v8186 = vunpack.c.0.s8 %v8185
        %v8187 = vlaneseq
        %v8188 = vshrl.u32 %v8187, 7
        %v8189 = vsub.s32 %v8186, %v8188
        %v8190 = vrot.slane %v8155, %v8189
        %v8191 = vcombine.high %v8190, %v8190
        %v8193 = vshrl.u32 %v8166, 16
        %v8195 = vrot.slane %v8193, 6
        %v8196 = vshll.u32 %v8166, 16
        %v8198 = vrot.slane %v8196, 7
        %v8199 = vor.u32 %v8195, %v8198
        %v8200 = vrot.slane %v8199, 2
        %v8202 = vshll.u32 %v8167, 16
        %v8204 = vrot.slane %v8202, 7
        %v8205 = vsel %vm4891, %v8200, %v8204
        %v8207 = vshrl.u32 %v8174, 16
        %v8209 = vrot.slane %v8207, 6
        %v8210 = vshll.u32 %v8174, 16
        %v8212 = vrot.slane %v8210, 7
        %v8213 = vor.u32 %v8209, %v8212
        %v8214 = vrot.slane %v8213, 2
        %v8216 = vshll.u32 %v8175, 16
        %v8218 = vrot.slane %v8216, 7
        %v8219 = vsel %vm4891, %v8214, %v8218
        %v8221 = vshrl.u32 %v8182, 16
        %v8223 = vrot.slane %v8221, 6
        %v8224 = vshll.u32 %v8182, 16
        %v8226 = vrot.slane %v8224, 7
        %v8227 = vor.u32 %v8223, %v8226
        %v8228 = vrot.slane %v8227, 2
        %v8230 = vshll.u32 %v8183, 16
        %v8232 = vrot.slane %v8230, 7
        %v8233 = vsel %vm4891, %v8228, %v8232
        %v8235 = vshrl.u32 %v8190, 16
        %v8237 = vrot.slane %v8235, 6
        %v8238 = vshll.u32 %v8190, 16
        %v8240 = vrot.slane %v8238, 7
        %v8241 = vor.u32 %v8237, %v8240
        %v8242 = vrot.slane %v8241, 2
        %v8244 = vshll.u32 %v8191, 16
        %v8246 = vrot.slane %v8244, 7
        %v8247 = vsel %vm4891, %v8242, %v8246
        %s8248 = scalar_lea.vmem %s5, 128
        %v8249 = vld [vmem:[%s8248] sm:$0xf]
        %v8250 = vld [vmem:[%s8248 + $0x4] sm:$0xf]
        %v8251 = vld [vmem:[%s8248 + $0x8] sm:$0xf]
        %v8252 = vld [vmem:[%s8248 + $0xc] sm:$0xf]
        %v8253 = vld [vmem:[%s8248 + $0x10] sm:$0xf]
        %v8254 = vld [vmem:[%s8248 + $0x14] sm:$0xf]
        %v8255 = vld [vmem:[%s8248 + $0x18] sm:$0xf]
        %v8256 = vld [vmem:[%s8248 + $0x1c] sm:$0xf]
        %v8257 = vcombine.low %v8205, %v8219
        %v8258 = vcombine.low %v8233, %v8247
        %v8260 = vunpack.c.l.s4 1983009808
        %v8261 = vunpack.c.0.s8 %v8260
        %v8262 = vlaneseq
        %v8263 = vshrl.u32 %v8262, 7
        %v8264 = vsub.s32 %v8261, %v8263
        %v8265 = vrot.slane %v8257, %v8264
        %v8267 = vunpack.c.l.s4 1983009808
        %v8268 = vunpack.c.0.s8 %v8267
        %v8269 = vlaneseq
        %v8270 = vshrl.u32 %v8269, 7
        %v8271 = vsub.s32 %v8268, %v8270
        %v8272 = vrot.slane %v8258, %v8271
        %v8273 = vcombine.low %v8265, %v8272
        %v8282 = vunpack.c.l.b16 %v8249
        %v8283 = vunpack.c.l.b16 %v8250
        %v8284 = vunpack.c.l.b16 %v8251
        %v8285 = vunpack.c.l.b16 %v8252
        %v8286 = vunpack.c.l.b16 %v8253
        %v8287 = vunpack.c.l.b16 %v8254
        %v8288 = vunpack.c.l.b16 %v8255
        %v8289 = vunpack.c.l.b16 %v8256
        %v8290 = vpack.c.b16 %v8283, %v8282
        %v8291 = vpack.c.b16 %v8285, %v8284
        %v8292 = vpack.c.b16 %v8287, %v8286
        %v8293 = vpack.c.b16 %v8289, %v8288
        %v8299 = vsel %vm6317, %v8273, 0
        %8301 = vmatprep.subr.bf16.mxu0 0
        %8302 = vmatpush1.bf16.msra.mxu0 %v8290
        %8303 = vmatprep.subr.bf16.mxu0 0
        %8304 = vmatpush1.bf16.msra.mxu0 %v8291
        %8305 = vmatprep.subr.bf16.mxu0 0
        %8306 = vmatpush1.bf16.msra.mxu0 %v8292
        %8307 = vmatprep.subr.bf16.mxu0 0
        %8308 = vmatpush1.bf16.msra.mxu0 %v8293
        %8309 = vmatprep.subr.bf16.mxu0 0
        %8310 = vmatpush1.bf16.msra.mxu0 0
        %8311 = vmatprep.subr.bf16.mxu0 0
        %8312 = vmatpush1.bf16.msra.mxu0 0
        %8313 = vmatprep.subr.bf16.mxu0 0
        %8314 = vmatpush1.bf16.msra.mxu0 0
        %8315 = vmatprep.subr.bf16.mxu0 0
        %8316 = vmatpush1.bf16.msra.mxu0 0
        %8317 = vmatprep.subr.bf16.mxu0 0
        %8318 = vmatpush1.bf16.msra.mxu0 0
        %8319 = vmatprep.subr.bf16.mxu0 0
        %8320 = vmatpush1.bf16.msra.mxu0 0
        %8321 = vmatprep.subr.bf16.mxu0 0
        %8322 = vmatpush1.bf16.msra.mxu0 0
        %8323 = vmatprep.subr.bf16.mxu0 0
        %8324 = vmatpush1.bf16.msra.mxu0 0
        %8325 = vmatprep.subr.bf16.mxu0 0
        %8326 = vmatpush1.bf16.msra.mxu0 0
        %8327 = vmatprep.subr.bf16.mxu0 0
        %8328 = vmatpush1.bf16.msra.mxu0 0
        %8329 = vmatprep.subr.bf16.mxu0 0
        %8330 = vmatpush1.bf16.msra.mxu0 0
        %8331 = vmatprep.subr.bf16.mxu0 0
        %8332 = vmatpush1.bf16.msra.mxu0 0
        %8333 = vmatprep.mubr.bf16.mxu0 0
        %8334 = vmatmul.mubr.bf16.gmra.mrb[0].mxu0 %v8299
        %v8335 = vpop.f32.mrb[0].mxu0
        %v8336 = vadd.f32 0.0, %v8335
        %v8337 = vpop.f32.mrb[0].mxu0
        %v8338 = vpop.f32.mrb[0].mxu0
        %v8339 = vadd.f32 0.0, %v8338
        %v8340 = vpop.f32.mrb[0].mxu0
        %8341 = vdwg.mxu0
        %v8342 = vadd.f32 %v8150, %v8336
        %v8343 = vadd.f32 %v8151, %v8339
        %v8344 = vld [vmem:[%s7524] sm:$0x6]
        %v8345 = vld [vmem:[%s7524 + $0x4] sm:$0x6]
        %v8346 = vld [vmem:[%s7524 + $0x8] sm:$0x6]
        %v8347 = vld [vmem:[%s7524 + $0xc] sm:$0x6]
        %v8353 = vunpack.c.l.s4 1983009808
        %v8354 = vunpack.c.0.s8 %v8353
        %v8355 = vlaneseq
        %v8356 = vshrl.u32 %v8355, 7
        %v8357 = vsub.s32 %v8354, %v8356
        %v8358 = vrot.slane %v8344, %v8357
        %v8359 = vcombine.high %v8358, %v8358
        %v8361 = vunpack.c.l.s4 1983009808
        %v8362 = vunpack.c.0.s8 %v8361
        %v8363 = vlaneseq
        %v8364 = vshrl.u32 %v8363, 7
        %v8365 = vsub.s32 %v8362, %v8364
        %v8366 = vrot.slane %v8345, %v8365
        %v8367 = vcombine.high %v8366, %v8366
        %v8369 = vunpack.c.l.s4 1983009808
        %v8370 = vunpack.c.0.s8 %v8369
        %v8371 = vlaneseq
        %v8372 = vshrl.u32 %v8371, 7
        %v8373 = vsub.s32 %v8370, %v8372
        %v8374 = vrot.slane %v8346, %v8373
        %v8375 = vcombine.high %v8374, %v8374
        %v8377 = vunpack.c.l.s4 1983009808
        %v8378 = vunpack.c.0.s8 %v8377
        %v8379 = vlaneseq
        %v8380 = vshrl.u32 %v8379, 7
        %v8381 = vsub.s32 %v8378, %v8380
        %v8382 = vrot.slane %v8347, %v8381
        %v8383 = vcombine.high %v8382, %v8382
        %v8384 = vrot.slane %v8358, 7
        %v8385 = vrot.slane %v8384, 2
        %v8386 = vrot.slane %v8359, 7
        %v8387 = vsel %vm5149, %v8385, %v8386
        %v8388 = vrot.slane %v8366, 7
        %v8389 = vrot.slane %v8388, 2
        %v8390 = vrot.slane %v8367, 7
        %v8391 = vsel %vm5149, %v8389, %v8390
        %v8392 = vrot.slane %v8374, 7
        %v8393 = vrot.slane %v8392, 2
        %v8394 = vrot.slane %v8375, 7
        %v8395 = vsel %vm5149, %v8393, %v8394
        %v8396 = vrot.slane %v8382, 7
        %v8397 = vrot.slane %v8396, 2
        %v8398 = vrot.slane %v8383, 7
        %v8399 = vsel %vm5149, %v8397, %v8398
        %s8400 = scalar_lea.vmem %s5, 160
        %v8401 = vld [vmem:[%s8400] sm:$0xf]
        %v8402 = vld [vmem:[%s8400 + $0x4] sm:$0xf]
        %v8403 = vld [vmem:[%s8400 + $0x8] sm:$0xf]
        %v8404 = vld [vmem:[%s8400 + $0xc] sm:$0xf]
        %v8405 = vld [vmem:[%s8400 + $0x10] sm:$0xf]
        %v8406 = vld [vmem:[%s8400 + $0x14] sm:$0xf]
        %v8407 = vld [vmem:[%s8400 + $0x18] sm:$0xf]
        %v8408 = vld [vmem:[%s8400 + $0x1c] sm:$0xf]
        %v8409 = vcombine.low %v8387, %v8391
        %v8410 = vcombine.low %v8395, %v8399
        %v8412 = vunpack.c.l.s4 1983009808
        %v8413 = vunpack.c.0.s8 %v8412
        %v8414 = vlaneseq
        %v8415 = vshrl.u32 %v8414, 7
        %v8416 = vsub.s32 %v8413, %v8415
        %v8417 = vrot.slane %v8409, %v8416
        %v8419 = vunpack.c.l.s4 1983009808
        %v8420 = vunpack.c.0.s8 %v8419
        %v8421 = vlaneseq
        %v8422 = vshrl.u32 %v8421, 7
        %v8423 = vsub.s32 %v8420, %v8422
        %v8424 = vrot.slane %v8410, %v8423
        %v8425 = vcombine.low %v8417, %v8424
        %v8434 = vunpack.c.l.b16 %v8401
        %v8435 = vunpack.c.l.b16 %v8402
        %v8436 = vunpack.c.l.b16 %v8403
        %v8437 = vunpack.c.l.b16 %v8404
        %v8438 = vunpack.c.l.b16 %v8405
        %v8439 = vunpack.c.l.b16 %v8406
        %v8440 = vunpack.c.l.b16 %v8407
        %v8441 = vunpack.c.l.b16 %v8408
        %v8442 = vpack.c.b16 %v8435, %v8434
        %v8443 = vpack.c.b16 %v8437, %v8436
        %v8444 = vpack.c.b16 %v8439, %v8438
        %v8445 = vpack.c.b16 %v8441, %v8440
        %v8451 = vsel %vm6317, %v8425, 0
        %8453 = vmatprep.subr.bf16.mxu0 0
        %8454 = vmatpush1.bf16.msra.mxu0 %v8442
        %8455 = vmatprep.subr.bf16.mxu0 0
        %8456 = vmatpush1.bf16.msra.mxu0 %v8443
        %8457 = vmatprep.subr.bf16.mxu0 0
        %8458 = vmatpush1.bf16.msra.mxu0 %v8444
        %8459 = vmatprep.subr.bf16.mxu0 0
        %8460 = vmatpush1.bf16.msra.mxu0 %v8445
        %8461 = vmatprep.subr.bf16.mxu0 0
        %8462 = vmatpush1.bf16.msra.mxu0 0
        %8463 = vmatprep.subr.bf16.mxu0 0
        %8464 = vmatpush1.bf16.msra.mxu0 0
        %8465 = vmatprep.subr.bf16.mxu0 0
        %8466 = vmatpush1.bf16.msra.mxu0 0
        %8467 = vmatprep.subr.bf16.mxu0 0
        %8468 = vmatpush1.bf16.msra.mxu0 0
        %8469 = vmatprep.subr.bf16.mxu0 0
        %8470 = vmatpush1.bf16.msra.mxu0 0
        %8471 = vmatprep.subr.bf16.mxu0 0
        %8472 = vmatpush1.bf16.msra.mxu0 0
        %8473 = vmatprep.subr.bf16.mxu0 0
        %8474 = vmatpush1.bf16.msra.mxu0 0
        %8475 = vmatprep.subr.bf16.mxu0 0
        %8476 = vmatpush1.bf16.msra.mxu0 0
        %8477 = vmatprep.subr.bf16.mxu0 0
        %8478 = vmatpush1.bf16.msra.mxu0 0
        %8479 = vmatprep.subr.bf16.mxu0 0
        %8480 = vmatpush1.bf16.msra.mxu0 0
        %8481 = vmatprep.subr.bf16.mxu0 0
        %8482 = vmatpush1.bf16.msra.mxu0 0
        %8483 = vmatprep.subr.bf16.mxu0 0
        %8484 = vmatpush1.bf16.msra.mxu0 0
        %8485 = vmatprep.mubr.bf16.mxu0 0
        %8486 = vmatmul.mubr.bf16.gmra.mrb[0].mxu0 %v8451
        %v8487 = vpop.f32.mrb[0].mxu0
        %v8488 = vadd.f32 0.0, %v8487
        %v8489 = vpop.f32.mrb[0].mxu0
        %v8490 = vpop.f32.mrb[0].mxu0
        %v8491 = vadd.f32 0.0, %v8490
        %v8492 = vpop.f32.mrb[0].mxu0
        %8493 = vdwg.mxu0
        %v8494 = vadd.f32 %v8342, %v8488
        %v8495 = vadd.f32 %v8343, %v8491
        %s8496 = scalar_lea.vmem [#allocation5], 8
        %v8497 = vld [vmem:[%s8496] sm:$0x3]
        %v8498 = vld [vmem:[%s8496 + $0x4] sm:$0x3]
        %v8499 = vld [vmem:[%s8496 + $0x8] sm:$0x3]
        %v8500 = vld [vmem:[%s8496 + $0xc] sm:$0x3]
        %s8501 = scalar_lea.vmem %s5, 192
        %v8502 = vld [vmem:[%s8501] sm:$0xf]
        %v8503 = vld [vmem:[%s8501 + $0x4] sm:$0xf]
        %v8504 = vld [vmem:[%s8501 + $0x8] sm:$0xf]
        %v8505 = vld [vmem:[%s8501 + $0xc] sm:$0xf]
        %v8506 = vld [vmem:[%s8501 + $0x10] sm:$0xf]
        %v8507 = vld [vmem:[%s8501 + $0x14] sm:$0xf]
        %v8508 = vld [vmem:[%s8501 + $0x18] sm:$0xf]
        %v8509 = vld [vmem:[%s8501 + $0x1c] sm:$0xf]
        %v8514 = vcombine.low %v8497, %v8498
        %v8515 = vcombine.low %v8499, %v8500
        %v8517 = vunpack.c.l.s4 1983009808
        %v8518 = vunpack.c.0.s8 %v8517
        %v8519 = vlaneseq
        %v8520 = vshrl.u32 %v8519, 7
        %v8521 = vsub.s32 %v8518, %v8520
        %v8522 = vrot.slane %v8514, %v8521
        %v8524 = vunpack.c.l.s4 1983009808
        %v8525 = vunpack.c.0.s8 %v8524
        %v8526 = vlaneseq
        %v8527 = vshrl.u32 %v8526, 7
        %v8528 = vsub.s32 %v8525, %v8527
        %v8529 = vrot.slane %v8515, %v8528
        %v8530 = vcombine.low %v8522, %v8529
        %v8539 = vunpack.c.l.b16 %v8502
        %v8540 = vunpack.c.l.b16 %v8503
        %v8541 = vunpack.c.l.b16 %v8504
        %v8542 = vunpack.c.l.b16 %v8505
        %v8543 = vunpack.c.l.b16 %v8506
        %v8544 = vunpack.c.l.b16 %v8507
        %v8545 = vunpack.c.l.b16 %v8508
        %v8546 = vunpack.c.l.b16 %v8509
        %v8547 = vpack.c.b16 %v8540, %v8539
        %v8548 = vpack.c.b16 %v8542, %v8541
        %v8549 = vpack.c.b16 %v8544, %v8543
        %v8550 = vpack.c.b16 %v8546, %v8545
        %v8556 = vsel %vm6317, %v8530, 0
        %8558 = vmatprep.subr.bf16.mxu0 0
        %8559 = vmatpush1.bf16.msra.mxu0 %v8547
        %8560 = vmatprep.subr.bf16.mxu0 0
        %8561 = vmatpush1.bf16.msra.mxu0 %v8548
        %8562 = vmatprep.subr.bf16.mxu0 0
        %8563 = vmatpush1.bf16.msra.mxu0 %v8549
        %8564 = vmatprep.subr.bf16.mxu0 0
        %8565 = vmatpush1.bf16.msra.mxu0 %v8550
        %8566 = vmatprep.subr.bf16.mxu0 0
        %8567 = vmatpush1.bf16.msra.mxu0 0
        %8568 = vmatprep.subr.bf16.mxu0 0
        %8569 = vmatpush1.bf16.msra.mxu0 0
        %8570 = vmatprep.subr.bf16.mxu0 0
        %8571 = vmatpush1.bf16.msra.mxu0 0
        %8572 = vmatprep.subr.bf16.mxu0 0
        %8573 = vmatpush1.bf16.msra.mxu0 0
        %8574 = vmatprep.subr.bf16.mxu0 0
        %8575 = vmatpush1.bf16.msra.mxu0 0
        %8576 = vmatprep.subr.bf16.mxu0 0
        %8577 = vmatpush1.bf16.msra.mxu0 0
        %8578 = vmatprep.subr.bf16.mxu0 0
        %8579 = vmatpush1.bf16.msra.mxu0 0
        %8580 = vmatprep.subr.bf16.mxu0 0
        %8581 = vmatpush1.bf16.msra.mxu0 0
        %8582 = vmatprep.subr.bf16.mxu0 0
        %8583 = vmatpush1.bf16.msra.mxu0 0
        %8584 = vmatprep.subr.bf16.mxu0 0
        %8585 = vmatpush1.bf16.msra.mxu0 0
        %8586 = vmatprep.subr.bf16.mxu0 0
        %8587 = vmatpush1.bf16.msra.mxu0 0
        %8588 = vmatprep.subr.bf16.mxu0 0
        %8589 = vmatpush1.bf16.msra.mxu0 0
        %8590 = vmatprep.mubr.bf16.mxu0 0
        %8591 = vmatmul.mubr.bf16.gmra.mrb[0].mxu0 %v8556
        %v8592 = vpop.f32.mrb[0].mxu0
        %v8593 = vadd.f32 0.0, %v8592
        %v8594 = vpop.f32.mrb[0].mxu0
        %v8595 = vpop.f32.mrb[0].mxu0
        %v8596 = vadd.f32 0.0, %v8595
        %v8597 = vpop.f32.mrb[0].mxu0
        %8598 = vdwg.mxu0
        %v8599 = vadd.f32 %v8494, %v8593
        %v8600 = vadd.f32 %v8495, %v8596
        %v8601 = vld [vmem:[%s8496] sm:$0x7]
        %v8602 = vld [vmem:[%s8496 + $0x4] sm:$0x7]
        %v8603 = vld [vmem:[%s8496 + $0x8] sm:$0x7]
        %v8604 = vld [vmem:[%s8496 + $0xc] sm:$0x7]
        %v8610 = vunpack.c.l.s4 1983009808
        %v8611 = vunpack.c.0.s8 %v8610
        %v8612 = vlaneseq
        %v8613 = vshrl.u32 %v8612, 7
        %v8614 = vsub.s32 %v8611, %v8613
        %v8615 = vrot.slane %v8601, %v8614
        %v8616 = vcombine.high %v8615, %v8615
        %v8618 = vunpack.c.l.s4 1983009808
        %v8619 = vunpack.c.0.s8 %v8618
        %v8620 = vlaneseq
        %v8621 = vshrl.u32 %v8620, 7
        %v8622 = vsub.s32 %v8619, %v8621
        %v8623 = vrot.slane %v8602, %v8622
        %v8624 = vcombine.high %v8623, %v8623
        %v8626 = vunpack.c.l.s4 1983009808
        %v8627 = vunpack.c.0.s8 %v8626
        %v8628 = vlaneseq
        %v8629 = vshrl.u32 %v8628, 7
        %v8630 = vsub.s32 %v8627, %v8629
        %v8631 = vrot.slane %v8603, %v8630
        %v8632 = vcombine.high %v8631, %v8631
        %v8634 = vunpack.c.l.s4 1983009808
        %v8635 = vunpack.c.0.s8 %v8634
        %v8636 = vlaneseq
        %v8637 = vshrl.u32 %v8636, 7
        %v8638 = vsub.s32 %v8635, %v8637
        %v8639 = vrot.slane %v8604, %v8638
        %v8640 = vcombine.high %v8639, %v8639
        %v8642 = vshrl.u32 %v8615, 16
        %v8644 = vrot.slane %v8642, 6
        %v8645 = vshll.u32 %v8615, 16
        %v8647 = vrot.slane %v8645, 7
        %v8648 = vor.u32 %v8644, %v8647
        %v8649 = vrot.slane %v8648, 2
        %v8651 = vshll.u32 %v8616, 16
        %v8653 = vrot.slane %v8651, 7
        %v8654 = vsel %vm4891, %v8649, %v8653
        %v8656 = vshrl.u32 %v8623, 16
        %v8658 = vrot.slane %v8656, 6
        %v8659 = vshll.u32 %v8623, 16
        %v8661 = vrot.slane %v8659, 7
        %v8662 = vor.u32 %v8658, %v8661
        %v8663 = vrot.slane %v8662, 2
        %v8665 = vshll.u32 %v8624, 16
        %v8667 = vrot.slane %v8665, 7
        %v8668 = vsel %vm4891, %v8663, %v8667
        %v8670 = vshrl.u32 %v8631, 16
        %v8672 = vrot.slane %v8670, 6
        %v8673 = vshll.u32 %v8631, 16
        %v8675 = vrot.slane %v8673, 7
        %v8676 = vor.u32 %v8672, %v8675
        %v8677 = vrot.slane %v8676, 2
        %v8679 = vshll.u32 %v8632, 16
        %v8681 = vrot.slane %v8679, 7
        %v8682 = vsel %vm4891, %v8677, %v8681
        %v8684 = vshrl.u32 %v8639, 16
        %v8686 = vrot.slane %v8684, 6
        %v8687 = vshll.u32 %v8639, 16
        %v8689 = vrot.slane %v8687, 7
        %v8690 = vor.u32 %v8686, %v8689
        %v8691 = vrot.slane %v8690, 2
        %v8693 = vshll.u32 %v8640, 16
        %v8695 = vrot.slane %v8693, 7
        %v8696 = vsel %vm4891, %v8691, %v8695
        %s8697 = scalar_lea.vmem %s5, 224
        %v8698 = vld [vmem:[%s8697] sm:$0xf]
        %v8699 = vld [vmem:[%s8697 + $0x4] sm:$0xf]
        %v8700 = vld [vmem:[%s8697 + $0x8] sm:$0xf]
        %v8701 = vld [vmem:[%s8697 + $0xc] sm:$0xf]
        %v8702 = vld [vmem:[%s8697 + $0x10] sm:$0xf]
        %v8703 = vld [vmem:[%s8697 + $0x14] sm:$0xf]
        %v8704 = vld [vmem:[%s8697 + $0x18] sm:$0xf]
        %v8705 = vld [vmem:[%s8697 + $0x1c] sm:$0xf]
        %v8706 = vcombine.low %v8654, %v8668
        %v8707 = vcombine.low %v8682, %v8696
        %v8709 = vunpack.c.l.s4 1983009808
        %v8710 = vunpack.c.0.s8 %v8709
        %v8711 = vlaneseq
        %v8712 = vshrl.u32 %v8711, 7
        %v8713 = vsub.s32 %v8710, %v8712
        %v8714 = vrot.slane %v8706, %v8713
        %v8716 = vunpack.c.l.s4 1983009808
        %v8717 = vunpack.c.0.s8 %v8716
        %v8718 = vlaneseq
        %v8719 = vshrl.u32 %v8718, 7
        %v8720 = vsub.s32 %v8717, %v8719
        %v8721 = vrot.slane %v8707, %v8720
        %v8722 = vcombine.low %v8714, %v8721
        %v8731 = vunpack.c.l.b16 %v8698
        %v8732 = vunpack.c.l.b16 %v8699
        %v8733 = vunpack.c.l.b16 %v8700
        %v8734 = vunpack.c.l.b16 %v8701
        %v8735 = vunpack.c.l.b16 %v8702
        %v8736 = vunpack.c.l.b16 %v8703
        %v8737 = vunpack.c.l.b16 %v8704
        %v8738 = vunpack.c.l.b16 %v8705
        %v8739 = vpack.c.b16 %v8732, %v8731
        %v8740 = vpack.c.b16 %v8734, %v8733
        %v8741 = vpack.c.b16 %v8736, %v8735
        %v8742 = vpack.c.b16 %v8738, %v8737
        %v8748 = vsel %vm6317, %v8722, 0
        %8750 = vmatprep.subr.bf16.mxu0 0
        %8751 = vmatpush1.bf16.msra.mxu0 %v8739
        %8752 = vmatprep.subr.bf16.mxu0 0
        %8753 = vmatpush1.bf16.msra.mxu0 %v8740
        %8754 = vmatprep.subr.bf16.mxu0 0
        %8755 = vmatpush1.bf16.msra.mxu0 %v8741
        %8756 = vmatprep.subr.bf16.mxu0 0
        %8757 = vmatpush1.bf16.msra.mxu0 %v8742
        %8758 = vmatprep.subr.bf16.mxu0 0
        %8759 = vmatpush1.bf16.msra.mxu0 0
        %8760 = vmatprep.subr.bf16.mxu0 0
        %8761 = vmatpush1.bf16.msra.mxu0 0
        %8762 = vmatprep.subr.bf16.mxu0 0
        %8763 = vmatpush1.bf16.msra.mxu0 0
        %8764 = vmatprep.subr.bf16.mxu0 0
        %8765 = vmatpush1.bf16.msra.mxu0 0
        %8766 = vmatprep.subr.bf16.mxu0 0
        %8767 = vmatpush1.bf16.msra.mxu0 0
        %8768 = vmatprep.subr.bf16.mxu0 0
        %8769 = vmatpush1.bf16.msra.mxu0 0
        %8770 = vmatprep.subr.bf16.mxu0 0
        %8771 = vmatpush1.bf16.msra.mxu0 0
        %8772 = vmatprep.subr.bf16.mxu0 0
        %8773 = vmatpush1.bf16.msra.mxu0 0
        %8774 = vmatprep.subr.bf16.mxu0 0
        %8775 = vmatpush1.bf16.msra.mxu0 0
        %8776 = vmatprep.subr.bf16.mxu0 0
        %8777 = vmatpush1.bf16.msra.mxu0 0
        %8778 = vmatprep.subr.bf16.mxu0 0
        %8779 = vmatpush1.bf16.msra.mxu0 0
        %8780 = vmatprep.subr.bf16.mxu0 0
        %8781 = vmatpush1.bf16.msra.mxu0 0
        %8782 = vmatprep.mubr.bf16.mxu0 0
        %8783 = vmatmul.mubr.bf16.gmra.mrb[0].mxu0 %v8748
        %v8784 = vpop.f32.mrb[0].mxu0
        %v8785 = vadd.f32 0.0, %v8784
        %v8786 = vpop.f32.mrb[0].mxu0
        %v8787 = vpop.f32.mrb[0].mxu0
        %v8788 = vadd.f32 0.0, %v8787
        %v8789 = vpop.f32.mrb[0].mxu0
        %8790 = vdwg.mxu0
        %v8791 = vadd.f32 %v8599, %v8785
        %v8792 = vadd.f32 %v8600, %v8788
        %v8793 = vld [vmem:[%s8496] sm:$0x6]
        %v8794 = vld [vmem:[%s8496 + $0x4] sm:$0x6]
        %v8795 = vld [vmem:[%s8496 + $0x8] sm:$0x6]
        %v8796 = vld [vmem:[%s8496 + $0xc] sm:$0x6]
        %v8802 = vunpack.c.l.s4 1983009808
        %v8803 = vunpack.c.0.s8 %v8802
        %v8804 = vlaneseq
        %v8805 = vshrl.u32 %v8804, 7
        %v8806 = vsub.s32 %v8803, %v8805
        %v8807 = vrot.slane %v8793, %v8806
        %v8808 = vcombine.high %v8807, %v8807
        %v8810 = vunpack.c.l.s4 1983009808
        %v8811 = vunpack.c.0.s8 %v8810
        %v8812 = vlaneseq
        %v8813 = vshrl.u32 %v8812, 7
        %v8814 = vsub.s32 %v8811, %v8813
        %v8815 = vrot.slane %v8794, %v8814
        %v8816 = vcombine.high %v8815, %v8815
        %v8818 = vunpack.c.l.s4 1983009808
        %v8819 = vunpack.c.0.s8 %v8818
        %v8820 = vlaneseq
        %v8821 = vshrl.u32 %v8820, 7
        %v8822 = vsub.s32 %v8819, %v8821
        %v8823 = vrot.slane %v8795, %v8822
        %v8824 = vcombine.high %v8823, %v8823
        %v8826 = vunpack.c.l.s4 1983009808
        %v8827 = vunpack.c.0.s8 %v8826
        %v8828 = vlaneseq
        %v8829 = vshrl.u32 %v8828, 7
        %v8830 = vsub.s32 %v8827, %v8829
        %v8831 = vrot.slane %v8796, %v8830
        %v8832 = vcombine.high %v8831, %v8831
        %v8833 = vrot.slane %v8807, 7
        %v8834 = vrot.slane %v8833, 2
        %v8835 = vrot.slane %v8808, 7
        %v8836 = vsel %vm5149, %v8834, %v8835
        %v8837 = vrot.slane %v8815, 7
        %v8838 = vrot.slane %v8837, 2
        %v8839 = vrot.slane %v8816, 7
        %v8840 = vsel %vm5149, %v8838, %v8839
        %v8841 = vrot.slane %v8823, 7
        %v8842 = vrot.slane %v8841, 2
        %v8843 = vrot.slane %v8824, 7
        %v8844 = vsel %vm5149, %v8842, %v8843
        %v8845 = vrot.slane %v8831, 7
        %v8846 = vrot.slane %v8845, 2
        %v8847 = vrot.slane %v8832, 7
        %v8848 = vsel %vm5149, %v8846, %v8847
        %s8849 = scalar_lea.vmem %s5, 256
        %v8850 = vld [vmem:[%s8849] sm:$0xf]
        %v8851 = vld [vmem:[%s8849 + $0x4] sm:$0xf]
        %v8852 = vld [vmem:[%s8849 + $0x8] sm:$0xf]
        %v8853 = vld [vmem:[%s8849 + $0xc] sm:$0xf]
        %v8854 = vld [vmem:[%s8849 + $0x10] sm:$0xf]
        %v8855 = vld [vmem:[%s8849 + $0x14] sm:$0xf]
        %v8856 = vld [vmem:[%s8849 + $0x18] sm:$0xf]
        %v8857 = vld [vmem:[%s8849 + $0x1c] sm:$0xf]
        %v8858 = vcombine.low %v8836, %v8840
        %v8859 = vcombine.low %v8844, %v8848
        %v8861 = vunpack.c.l.s4 1983009808
        %v8862 = vunpack.c.0.s8 %v8861
        %v8863 = vlaneseq
        %v8864 = vshrl.u32 %v8863, 7
        %v8865 = vsub.s32 %v8862, %v8864
        %v8866 = vrot.slane %v8858, %v8865
        %v8868 = vunpack.c.l.s4 1983009808
        %v8869 = vunpack.c.0.s8 %v8868
        %v8870 = vlaneseq
        %v8871 = vshrl.u32 %v8870, 7
        %v8872 = vsub.s32 %v8869, %v8871
        %v8873 = vrot.slane %v8859, %v8872
        %v8874 = vcombine.low %v8866, %v8873
        %v8883 = vunpack.c.l.b16 %v8850
        %v8884 = vunpack.c.l.b16 %v8851
        %v8885 = vunpack.c.l.b16 %v8852
        %v8886 = vunpack.c.l.b16 %v8853
        %v8887 = vunpack.c.l.b16 %v8854
        %v8888 = vunpack.c.l.b16 %v8855
        %v8889 = vunpack.c.l.b16 %v8856
        %v8890 = vunpack.c.l.b16 %v8857
        %v8891 = vpack.c.b16 %v8884, %v8883
        %v8892 = vpack.c.b16 %v8886, %v8885
        %v8893 = vpack.c.b16 %v8888, %v8887
        %v8894 = vpack.c.b16 %v8890, %v8889
        %v8900 = vsel %vm6317, %v8874, 0
        %8902 = vmatprep.subr.bf16.mxu0 0
        %8903 = vmatpush1.bf16.msra.mxu0 %v8891
        %8904 = vmatprep.subr.bf16.mxu0 0
        %8905 = vmatpush1.bf16.msra.mxu0 %v8892
        %8906 = vmatprep.subr.bf16.mxu0 0
        %8907 = vmatpush1.bf16.msra.mxu0 %v8893
        %8908 = vmatprep.subr.bf16.mxu0 0
        %8909 = vmatpush1.bf16.msra.mxu0 %v8894
        %8910 = vmatprep.subr.bf16.mxu0 0
        %8911 = vmatpush1.bf16.msra.mxu0 0
        %8912 = vmatprep.subr.bf16.mxu0 0
        %8913 = vmatpush1.bf16.msra.mxu0 0
        %8914 = vmatprep.subr.bf16.mxu0 0
        %8915 = vmatpush1.bf16.msra.mxu0 0
        %8916 = vmatprep.subr.bf16.mxu0 0
        %8917 = vmatpush1.bf16.msra.mxu0 0
        %8918 = vmatprep.subr.bf16.mxu0 0
        %8919 = vmatpush1.bf16.msra.mxu0 0
        %8920 = vmatprep.subr.bf16.mxu0 0
        %8921 = vmatpush1.bf16.msra.mxu0 0
        %8922 = vmatprep.subr.bf16.mxu0 0
        %8923 = vmatpush1.bf16.msra.mxu0 0
        %8924 = vmatprep.subr.bf16.mxu0 0
        %8925 = vmatpush1.bf16.msra.mxu0 0
        %8926 = vmatprep.subr.bf16.mxu0 0
        %8927 = vmatpush1.bf16.msra.mxu0 0
        %8928 = vmatprep.subr.bf16.mxu0 0
        %8929 = vmatpush1.bf16.msra.mxu0 0
        %8930 = vmatprep.subr.bf16.mxu0 0
        %8931 = vmatpush1.bf16.msra.mxu0 0
        %8932 = vmatprep.subr.bf16.mxu0 0
        %8933 = vmatpush1.bf16.msra.mxu0 0
        %8934 = vmatprep.mubr.bf16.mxu0 0
        %8935 = vmatmul.mubr.bf16.gmra.mrb[0].mxu0 %v8900
        %v8936 = vpop.f32.mrb[0].mxu0
        %v8937 = vadd.f32 0.0, %v8936
        %v8938 = vpop.f32.mrb[0].mxu0
        %v8939 = vpop.f32.mrb[0].mxu0
        %v8940 = vadd.f32 0.0, %v8939
        %v8941 = vpop.f32.mrb[0].mxu0
        %8942 = vdwg.mxu0
        %v8943 = vadd.f32 %v8791, %v8937
        %v8944 = vadd.f32 %v8792, %v8940
        %v8945 = vld [vmem:[%s11] sm:$0x1]
        %v8947 = vlaneseq
        %v8948 = vshrl.u32 %v8947, 7
        %v8949 = vsub.s32 0, %v8948
        %v8950 = vrot.slane %v8945, %v8949
        %v8952 = vadd.f32 %v8943, %v8950
        %v8953 = vadd.f32 %v8944, %v8950
        %v8954 = vmax.f32 %v8952, 0.0
        %v8955 = vmax.f32 %v8953, 0.0
        %v8958 = vcombine.high %v8954, %v8954
        %v8959 = vcombine.high %v8955, %v8955
        %v8962 = vpack.c.bf16 %v8954, %v8954
        %v8963 = vpack.c.bf16 %v8958, %v8958
        %v8964 = vpack.c.bf16 %v8955, %v8955
        %v8965 = vpack.c.bf16 %v8959, %v8959
        %8966 = vst [vmem:[#allocation6] sm:$0x7] 0
        %s8967 = scalar_lea.vmem [#allocation6], 20
        %8968 = vst [vmem:[%s8967] sm:$0x7] 0
        %s8969 = scalar_lea.vmem [#allocation6], 4
        %vm8970 = vmand %vm5143, %vm2223
        %v8971 = vld [vmem:[%s8969] sm:$0x1]
        %v8972 = vsel %vm8970, 0, %v8971
        %8973 = vst [vmem:[%s8969] sm:$0x1] %v8972
        %v8974 = vld [vmem:[%s8969 + $0x4] sm:$0x1]
        %v8975 = vsel %vm8970, 0, %v8974
        %8976 = vst [vmem:[%s8969 + $0x4] sm:$0x1] %v8975
        %v8977 = vld [vmem:[%s8969 + $0x8] sm:$0x1]
        %v8978 = vsel %vm8970, 0, %v8977
        %8979 = vst [vmem:[%s8969 + $0x8] sm:$0x1] %v8978
        %v8980 = vld [vmem:[%s8969 + $0xc] sm:$0x1]
        %v8981 = vsel %vm8970, 0, %v8980
        %8982 = vst [vmem:[%s8969 + $0xc] sm:$0x1] %v8981
        %vm8983 = vmand %vm5144, %vm4708
        %v8984 = vld [vmem:[%s8969] sm:$0x4]
        %v8985 = vsel %vm8983, 0, %v8984
        %8986 = vst [vmem:[%s8969] sm:$0x4] %v8985
        %v8987 = vld [vmem:[%s8969 + $0x4] sm:$0x4]
        %v8988 = vsel %vm8983, 0, %v8987
        %8989 = vst [vmem:[%s8969 + $0x4] sm:$0x4] %v8988
        %v8990 = vld [vmem:[%s8969 + $0x8] sm:$0x4]
        %v8991 = vsel %vm8983, 0, %v8990
        %8992 = vst [vmem:[%s8969 + $0x8] sm:$0x4] %v8991
        %v8993 = vld [vmem:[%s8969 + $0xc] sm:$0x4]
        %v8994 = vsel %vm8983, 0, %v8993
        %8995 = vst [vmem:[%s8969 + $0xc] sm:$0x4] %v8994
        %v9000 = vunpack.c.l.b16 %v8962
        %v9001 = vunpack.c.l.b16 %v8963
        %v9002 = vunpack.c.l.b16 %v8964
        %v9003 = vunpack.c.l.b16 %v8965
        %v9004 = vpack.c.b16 %v9000, %v9000
        %v9005 = vpack.c.b16 %v9001, %v9001
        %v9006 = vpack.c.b16 %v9002, %v9002
        %v9007 = vpack.c.b16 %v9003, %v9003
        %v9009 = vshrl.u32 %v9004, 16
        %v9011 = vrot.slane %v9009, 7
        %v9012 = vshll.u32 %v9004, 16
        %v9014 = vor.u32 %v9011, %v9012
        %v9016 = vshrl.u32 %v9005, 16
        %v9018 = vrot.slane %v9016, 7
        %v9019 = vshll.u32 %v9005, 16
        %v9021 = vor.u32 %v9018, %v9019
        %v9023 = vshrl.u32 %v9006, 16
        %v9025 = vrot.slane %v9023, 7
        %v9026 = vshll.u32 %v9006, 16
        %v9028 = vor.u32 %v9025, %v9026
        %v9030 = vshrl.u32 %v9007, 16
        %v9032 = vrot.slane %v9030, 7
        %v9033 = vshll.u32 %v9007, 16
        %v9035 = vor.u32 %v9032, %v9033
        %vm9040 = vmand %vm3097, %vm4823
        %v9041 = vld [vmem:[%s8969] sm:$0x7]
        %v9042 = vsel %vm9040, %v9014, %v9041
        %9043 = vst [vmem:[%s8969] sm:$0x7] %v9042
        %v9044 = vld [vmem:[%s8969 + $0x4] sm:$0x7]
        %v9045 = vsel %vm9040, %v9021, %v9044
        %9046 = vst [vmem:[%s8969 + $0x4] sm:$0x7] %v9045
        %v9047 = vld [vmem:[%s8969 + $0x8] sm:$0x7]
        %v9048 = vsel %vm9040, %v9028, %v9047
        %9049 = vst [vmem:[%s8969 + $0x8] sm:$0x7] %v9048
        %v9050 = vld [vmem:[%s8969 + $0xc] sm:$0x7]
        %v9051 = vsel %vm9040, %v9035, %v9050
        %9052 = vst [vmem:[%s8969 + $0xc] sm:$0x7] %v9051
        %v9053 = vld [vmem:[#allocation6] sm:$0x3]
        %v9054 = vld [vmem:[#allocation6 + $0x4] sm:$0x3]
        %v9055 = vld [vmem:[#allocation6 + $0x8] sm:$0x3]
        %v9056 = vld [vmem:[#allocation6 + $0xc] sm:$0x3]
        %v9057 = vld [vmem:[%s6] sm:$0xf]
        %v9058 = vld [vmem:[%s6 + $0x4] sm:$0xf]
        %v9059 = vld [vmem:[%s6 + $0x8] sm:$0xf]
        %v9060 = vld [vmem:[%s6 + $0xc] sm:$0xf]
        %v9061 = vld [vmem:[%s6 + $0x10] sm:$0xf]
        %v9062 = vld [vmem:[%s6 + $0x14] sm:$0xf]
        %v9063 = vld [vmem:[%s6 + $0x18] sm:$0xf]
        %v9064 = vld [vmem:[%s6 + $0x1c] sm:$0xf]
        %v9065 = vld [vmem:[%s6 + $0x20] sm:$0xf]
        %v9066 = vld [vmem:[%s6 + $0x24] sm:$0xf]
        %v9067 = vld [vmem:[%s6 + $0x28] sm:$0xf]
        %v9068 = vld [vmem:[%s6 + $0x2c] sm:$0xf]
        %v9069 = vld [vmem:[%s6 + $0x30] sm:$0xf]
        %v9070 = vld [vmem:[%s6 + $0x34] sm:$0xf]
        %v9071 = vld [vmem:[%s6 + $0x38] sm:$0xf]
        %v9072 = vld [vmem:[%s6 + $0x3c] sm:$0xf]
        %v9073 = vld [vmem:[#allocation6] sm:$0x7]
        %v9074 = vld [vmem:[#allocation6 + $0x4] sm:$0x7]
        %v9075 = vld [vmem:[#allocation6 + $0x8] sm:$0x7]
        %v9076 = vld [vmem:[#allocation6 + $0xc] sm:$0x7]
        %v9082 = vunpack.c.l.s4 1983009808
        %v9083 = vunpack.c.0.s8 %v9082
        %v9084 = vlaneseq
        %v9085 = vshrl.u32 %v9084, 7
        %v9086 = vsub.s32 %v9083, %v9085
        %v9087 = vrot.slane %v9073, %v9086
        %v9088 = vcombine.high %v9087, %v9087
        %v9090 = vunpack.c.l.s4 1983009808
        %v9091 = vunpack.c.0.s8 %v9090
        %v9092 = vlaneseq
        %v9093 = vshrl.u32 %v9092, 7
        %v9094 = vsub.s32 %v9091, %v9093
        %v9095 = vrot.slane %v9074, %v9094
        %v9096 = vcombine.high %v9095, %v9095
        %v9098 = vunpack.c.l.s4 1983009808
        %v9099 = vunpack.c.0.s8 %v9098
        %v9100 = vlaneseq
        %v9101 = vshrl.u32 %v9100, 7
        %v9102 = vsub.s32 %v9099, %v9101
        %v9103 = vrot.slane %v9075, %v9102
        %v9104 = vcombine.high %v9103, %v9103
        %v9106 = vunpack.c.l.s4 1983009808
        %v9107 = vunpack.c.0.s8 %v9106
        %v9108 = vlaneseq
        %v9109 = vshrl.u32 %v9108, 7
        %v9110 = vsub.s32 %v9107, %v9109
        %v9111 = vrot.slane %v9076, %v9110
        %v9112 = vcombine.high %v9111, %v9111
        %v9114 = vshrl.u32 %v9087, 16
        %v9116 = vrot.slane %v9114, 6
        %v9117 = vshll.u32 %v9087, 16
        %v9119 = vrot.slane %v9117, 7
        %v9120 = vor.u32 %v9116, %v9119
        %v9121 = vrot.slane %v9120, 2
        %v9123 = vshll.u32 %v9088, 16
        %v9125 = vrot.slane %v9123, 7
        %v9126 = vsel %vm4891, %v9121, %v9125
        %v9128 = vshrl.u32 %v9095, 16
        %v9130 = vrot.slane %v9128, 6
        %v9131 = vshll.u32 %v9095, 16
        %v9133 = vrot.slane %v9131, 7
        %v9134 = vor.u32 %v9130, %v9133
        %v9135 = vrot.slane %v9134, 2
        %v9137 = vshll.u32 %v9096, 16
        %v9139 = vrot.slane %v9137, 7
        %v9140 = vsel %vm4891, %v9135, %v9139
        %v9142 = vshrl.u32 %v9103, 16
        %v9144 = vrot.slane %v9142, 6
        %v9145 = vshll.u32 %v9103, 16
        %v9147 = vrot.slane %v9145, 7
        %v9148 = vor.u32 %v9144, %v9147
        %v9149 = vrot.slane %v9148, 2
        %v9151 = vshll.u32 %v9104, 16
        %v9153 = vrot.slane %v9151, 7
        %v9154 = vsel %vm4891, %v9149, %v9153
        %v9156 = vshrl.u32 %v9111, 16
        %v9158 = vrot.slane %v9156, 6
        %v9159 = vshll.u32 %v9111, 16
        %v9161 = vrot.slane %v9159, 7
        %v9162 = vor.u32 %v9158, %v9161
        %v9163 = vrot.slane %v9162, 2
        %v9165 = vshll.u32 %v9112, 16
        %v9167 = vrot.slane %v9165, 7
        %v9168 = vsel %vm4891, %v9163, %v9167
        %s9169 = scalar_lea.vmem %s6, 64
        %v9170 = vld [vmem:[%s9169] sm:$0xf]
        %v9171 = vld [vmem:[%s9169 + $0x4] sm:$0xf]
        %v9172 = vld [vmem:[%s9169 + $0x8] sm:$0xf]
        %v9173 = vld [vmem:[%s9169 + $0xc] sm:$0xf]
        %v9174 = vld [vmem:[%s9169 + $0x10] sm:$0xf]
        %v9175 = vld [vmem:[%s9169 + $0x14] sm:$0xf]
        %v9176 = vld [vmem:[%s9169 + $0x18] sm:$0xf]
        %v9177 = vld [vmem:[%s9169 + $0x1c] sm:$0xf]
        %v9178 = vld [vmem:[%s9169 + $0x20] sm:$0xf]
        %v9179 = vld [vmem:[%s9169 + $0x24] sm:$0xf]
        %v9180 = vld [vmem:[%s9169 + $0x28] sm:$0xf]
        %v9181 = vld [vmem:[%s9169 + $0x2c] sm:$0xf]
        %v9182 = vld [vmem:[%s9169 + $0x30] sm:$0xf]
        %v9183 = vld [vmem:[%s9169 + $0x34] sm:$0xf]
        %v9184 = vld [vmem:[%s9169 + $0x38] sm:$0xf]
        %v9185 = vld [vmem:[%s9169 + $0x3c] sm:$0xf]
        %v9186 = vcombine.low %v9126, %v9140
        %v9187 = vcombine.low %v9154, %v9168
        %v9189 = vunpack.c.l.s4 1983009808
        %v9190 = vunpack.c.0.s8 %v9189
        %v9191 = vlaneseq
        %v9192 = vshrl.u32 %v9191, 7
        %v9193 = vsub.s32 %v9190, %v9192
        %v9194 = vrot.slane %v9186, %v9193
        %v9196 = vunpack.c.l.s4 1983009808
        %v9197 = vunpack.c.0.s8 %v9196
        %v9198 = vlaneseq
        %v9199 = vshrl.u32 %v9198, 7
        %v9200 = vsub.s32 %v9197, %v9199
        %v9201 = vrot.slane %v9187, %v9200
        %v9202 = vcombine.low %v9194, %v9201
        %v9220 = vunpack.c.l.b16 %v9170
        %v9221 = vunpack.c.l.b16 %v9171
        %v9222 = vunpack.c.l.b16 %v9172
        %v9223 = vunpack.c.l.b16 %v9173
        %v9224 = vunpack.c.l.b16 %v9174
        %v9225 = vunpack.c.l.b16 %v9175
        %v9226 = vunpack.c.l.b16 %v9176
        %v9227 = vunpack.c.l.b16 %v9177
        %v9228 = vunpack.c.l.b16 %v9178
        %v9229 = vunpack.c.l.b16 %v9179
        %v9230 = vunpack.c.l.b16 %v9180
        %v9231 = vunpack.c.l.b16 %v9181
        %v9232 = vunpack.c.l.b16 %v9182
        %v9233 = vunpack.c.l.b16 %v9183
        %v9234 = vunpack.c.l.b16 %v9184
        %v9235 = vunpack.c.l.b16 %v9185
        %v9236 = vpack.c.b16 %v9221, %v9220
        %v9237 = vpack.c.b16 %v9223, %v9222
        %v9238 = vpack.c.b16 %v9225, %v9224
        %v9239 = vpack.c.b16 %v9227, %v9226
        %v9240 = vpack.c.b16 %v9229, %v9228
        %v9241 = vpack.c.b16 %v9231, %v9230
        %v9242 = vpack.c.b16 %v9233, %v9232
        %v9243 = vpack.c.b16 %v9235, %v9234
        %9252 = vmatprep.subr.bf16.mxu0 0
        %9253 = vmatpush1.bf16.msra.mxu0 %v9236
        %9254 = vmatprep.subr.bf16.mxu0 0
        %9255 = vmatpush1.bf16.msra.mxu0 %v9237
        %9256 = vmatprep.subr.bf16.mxu0 0
        %9257 = vmatpush1.bf16.msra.mxu0 %v9238
        %9258 = vmatprep.subr.bf16.mxu0 0
        %9259 = vmatpush1.bf16.msra.mxu0 %v9239
        %9260 = vmatprep.subr.bf16.mxu0 0
        %9261 = vmatpush1.bf16.msra.mxu0 %v9240
        %9262 = vmatprep.subr.bf16.mxu0 0
        %9263 = vmatpush1.bf16.msra.mxu0 %v9241
        %9264 = vmatprep.subr.bf16.mxu0 0
        %9265 = vmatpush1.bf16.msra.mxu0 %v9242
        %9266 = vmatprep.subr.bf16.mxu0 0
        %9267 = vmatpush1.bf16.msra.mxu0 %v9243
        %9268 = vmatprep.subr.bf16.mxu0 0
        %9269 = vmatpush1.bf16.msra.mxu0 0
        %9270 = vmatprep.subr.bf16.mxu0 0
        %9271 = vmatpush1.bf16.msra.mxu0 0
        %9272 = vmatprep.subr.bf16.mxu0 0
        %9273 = vmatpush1.bf16.msra.mxu0 0
        %9274 = vmatprep.subr.bf16.mxu0 0
        %9275 = vmatpush1.bf16.msra.mxu0 0
        %9276 = vmatprep.subr.bf16.mxu0 0
        %9277 = vmatpush1.bf16.msra.mxu0 0
        %9278 = vmatprep.subr.bf16.mxu0 0
        %9279 = vmatpush1.bf16.msra.mxu0 0
        %9280 = vmatprep.subr.bf16.mxu0 0
        %9281 = vmatpush1.bf16.msra.mxu0 0
        %9282 = vmatprep.subr.bf16.mxu0 0
        %9283 = vmatpush1.bf16.msra.mxu0 0
        %9284 = vmatprep.mubr.bf16.mxu0 0
        %9285 = vmatmul.mubr.bf16.gmra.mrb[0].mxu0 %v9202
        %v9286 = vpop.f32.mrb[0].mxu0
        %v9287 = vadd.f32 0.0, %v9286
        %v9288 = vpop.f32.mrb[0].mxu0
        %v9289 = vpop.f32.mrb[0].mxu0
        %v9290 = vadd.f32 0.0, %v9289
        %v9291 = vpop.f32.mrb[0].mxu0
        %9292 = vdwg.mxu0
        %v9297 = vcombine.low %v9053, %v9054
        %v9298 = vcombine.low %v9055, %v9056
        %v9300 = vunpack.c.l.s4 1983009808
        %v9301 = vunpack.c.0.s8 %v9300
        %v9302 = vlaneseq
        %v9303 = vshrl.u32 %v9302, 7
        %v9304 = vsub.s32 %v9301, %v9303
        %v9305 = vrot.slane %v9297, %v9304
        %v9307 = vunpack.c.l.s4 1983009808
        %v9308 = vunpack.c.0.s8 %v9307
        %v9309 = vlaneseq
        %v9310 = vshrl.u32 %v9309, 7
        %v9311 = vsub.s32 %v9308, %v9310
        %v9312 = vrot.slane %v9298, %v9311
        %v9313 = vcombine.low %v9305, %v9312
        %v9331 = vunpack.c.l.b16 %v9057
        %v9332 = vunpack.c.l.b16 %v9058
        %v9333 = vunpack.c.l.b16 %v9059
        %v9334 = vunpack.c.l.b16 %v9060
        %v9335 = vunpack.c.l.b16 %v9061
        %v9336 = vunpack.c.l.b16 %v9062
        %v9337 = vunpack.c.l.b16 %v9063
        %v9338 = vunpack.c.l.b16 %v9064
        %v9339 = vunpack.c.l.b16 %v9065
        %v9340 = vunpack.c.l.b16 %v9066
        %v9341 = vunpack.c.l.b16 %v9067
        %v9342 = vunpack.c.l.b16 %v9068
        %v9343 = vunpack.c.l.b16 %v9069
        %v9344 = vunpack.c.l.b16 %v9070
        %v9345 = vunpack.c.l.b16 %v9071
        %v9346 = vunpack.c.l.b16 %v9072
        %v9347 = vpack.c.b16 %v9332, %v9331
        %v9348 = vpack.c.b16 %v9334, %v9333
        %v9349 = vpack.c.b16 %v9336, %v9335
        %v9350 = vpack.c.b16 %v9338, %v9337
        %v9351 = vpack.c.b16 %v9340, %v9339
        %v9352 = vpack.c.b16 %v9342, %v9341
        %v9353 = vpack.c.b16 %v9344, %v9343
        %v9354 = vpack.c.b16 %v9346, %v9345
        %9363 = vmatprep.subr.bf16.mxu0 0
        %9364 = vmatpush1.bf16.msra.mxu0 %v9347
        %9365 = vmatprep.subr.bf16.mxu0 0
        %9366 = vmatpush1.bf16.msra.mxu0 %v9348
        %9367 = vmatprep.subr.bf16.mxu0 0
        %9368 = vmatpush1.bf16.msra.mxu0 %v9349
        %9369 = vmatprep.subr.bf16.mxu0 0
        %9370 = vmatpush1.bf16.msra.mxu0 %v9350
        %9371 = vmatprep.subr.bf16.mxu0 0
        %9372 = vmatpush1.bf16.msra.mxu0 %v9351
        %9373 = vmatprep.subr.bf16.mxu0 0
        %9374 = vmatpush1.bf16.msra.mxu0 %v9352
        %9375 = vmatprep.subr.bf16.mxu0 0
        %9376 = vmatpush1.bf16.msra.mxu0 %v9353
        %9377 = vmatprep.subr.bf16.mxu0 0
        %9378 = vmatpush1.bf16.msra.mxu0 %v9354
        %9379 = vmatprep.subr.bf16.mxu0 0
        %9380 = vmatpush1.bf16.msra.mxu0 0
        %9381 = vmatprep.subr.bf16.mxu0 0
        %9382 = vmatpush1.bf16.msra.mxu0 0
        %9383 = vmatprep.subr.bf16.mxu0 0
        %9384 = vmatpush1.bf16.msra.mxu0 0
        %9385 = vmatprep.subr.bf16.mxu0 0
        %9386 = vmatpush1.bf16.msra.mxu0 0
        %9387 = vmatprep.subr.bf16.mxu0 0
        %9388 = vmatpush1.bf16.msra.mxu0 0
        %9389 = vmatprep.subr.bf16.mxu0 0
        %9390 = vmatpush1.bf16.msra.mxu0 0
        %9391 = vmatprep.subr.bf16.mxu0 0
        %9392 = vmatpush1.bf16.msra.mxu0 0
        %9393 = vmatprep.subr.bf16.mxu0 0
        %9394 = vmatpush1.bf16.msra.mxu0 0
        %9395 = vmatprep.mubr.bf16.mxu0 0
        %9396 = vmatmul.mubr.bf16.gmra.mrb[0].mxu0 %v9313
        %v9397 = vpop.f32.mrb[0].mxu0
        %v9398 = vadd.f32 %v9287, %v9397
        %v9399 = vpop.f32.mrb[0].mxu0
        %v9400 = vpop.f32.mrb[0].mxu0
        %v9401 = vadd.f32 %v9290, %v9400
        %v9402 = vpop.f32.mrb[0].mxu0
        %9403 = vdwg.mxu0
        %v9404 = vld [vmem:[#allocation6] sm:$0x6]
        %v9405 = vld [vmem:[#allocation6 + $0x4] sm:$0x6]
        %v9406 = vld [vmem:[#allocation6 + $0x8] sm:$0x6]
        %v9407 = vld [vmem:[#allocation6 + $0xc] sm:$0x6]
        %v9413 = vunpack.c.l.s4 1983009808
        %v9414 = vunpack.c.0.s8 %v9413
        %v9415 = vlaneseq
        %v9416 = vshrl.u32 %v9415, 7
        %v9417 = vsub.s32 %v9414, %v9416
        %v9418 = vrot.slane %v9404, %v9417
        %v9419 = vcombine.high %v9418, %v9418
        %v9421 = vunpack.c.l.s4 1983009808
        %v9422 = vunpack.c.0.s8 %v9421
        %v9423 = vlaneseq
        %v9424 = vshrl.u32 %v9423, 7
        %v9425 = vsub.s32 %v9422, %v9424
        %v9426 = vrot.slane %v9405, %v9425
        %v9427 = vcombine.high %v9426, %v9426
        %v9429 = vunpack.c.l.s4 1983009808
        %v9430 = vunpack.c.0.s8 %v9429
        %v9431 = vlaneseq
        %v9432 = vshrl.u32 %v9431, 7
        %v9433 = vsub.s32 %v9430, %v9432
        %v9434 = vrot.slane %v9406, %v9433
        %v9435 = vcombine.high %v9434, %v9434
        %v9437 = vunpack.c.l.s4 1983009808
        %v9438 = vunpack.c.0.s8 %v9437
        %v9439 = vlaneseq
        %v9440 = vshrl.u32 %v9439, 7
        %v9441 = vsub.s32 %v9438, %v9440
        %v9442 = vrot.slane %v9407, %v9441
        %v9443 = vcombine.high %v9442, %v9442
        %v9444 = vrot.slane %v9418, 7
        %v9445 = vrot.slane %v9444, 2
        %v9446 = vrot.slane %v9419, 7
        %v9447 = vsel %vm5149, %v9445, %v9446
        %v9448 = vrot.slane %v9426, 7
        %v9449 = vrot.slane %v9448, 2
        %v9450 = vrot.slane %v9427, 7
        %v9451 = vsel %vm5149, %v9449, %v9450
        %v9452 = vrot.slane %v9434, 7
        %v9453 = vrot.slane %v9452, 2
        %v9454 = vrot.slane %v9435, 7
        %v9455 = vsel %vm5149, %v9453, %v9454
        %v9456 = vrot.slane %v9442, 7
        %v9457 = vrot.slane %v9456, 2
        %v9458 = vrot.slane %v9443, 7
        %v9459 = vsel %vm5149, %v9457, %v9458
        %s9460 = scalar_lea.vmem %s6, 128
        %v9461 = vld [vmem:[%s9460] sm:$0xf]
        %v9462 = vld [vmem:[%s9460 + $0x4] sm:$0xf]
        %v9463 = vld [vmem:[%s9460 + $0x8] sm:$0xf]
        %v9464 = vld [vmem:[%s9460 + $0xc] sm:$0xf]
        %v9465 = vld [vmem:[%s9460 + $0x10] sm:$0xf]
        %v9466 = vld [vmem:[%s9460 + $0x14] sm:$0xf]
        %v9467 = vld [vmem:[%s9460 + $0x18] sm:$0xf]
        %v9468 = vld [vmem:[%s9460 + $0x1c] sm:$0xf]
        %v9469 = vld [vmem:[%s9460 + $0x20] sm:$0xf]
        %v9470 = vld [vmem:[%s9460 + $0x24] sm:$0xf]
        %v9471 = vld [vmem:[%s9460 + $0x28] sm:$0xf]
        %v9472 = vld [vmem:[%s9460 + $0x2c] sm:$0xf]
        %v9473 = vld [vmem:[%s9460 + $0x30] sm:$0xf]
        %v9474 = vld [vmem:[%s9460 + $0x34] sm:$0xf]
        %v9475 = vld [vmem:[%s9460 + $0x38] sm:$0xf]
        %v9476 = vld [vmem:[%s9460 + $0x3c] sm:$0xf]
        %v9477 = vcombine.low %v9447, %v9451
        %v9478 = vcombine.low %v9455, %v9459
        %v9480 = vunpack.c.l.s4 1983009808
        %v9481 = vunpack.c.0.s8 %v9480
        %v9482 = vlaneseq
        %v9483 = vshrl.u32 %v9482, 7
        %v9484 = vsub.s32 %v9481, %v9483
        %v9485 = vrot.slane %v9477, %v9484
        %v9487 = vunpack.c.l.s4 1983009808
        %v9488 = vunpack.c.0.s8 %v9487
        %v9489 = vlaneseq
        %v9490 = vshrl.u32 %v9489, 7
        %v9491 = vsub.s32 %v9488, %v9490
        %v9492 = vrot.slane %v9478, %v9491
        %v9493 = vcombine.low %v9485, %v9492
        %v9511 = vunpack.c.l.b16 %v9461
        %v9512 = vunpack.c.l.b16 %v9462
        %v9513 = vunpack.c.l.b16 %v9463
        %v9514 = vunpack.c.l.b16 %v9464
        %v9515 = vunpack.c.l.b16 %v9465
        %v9516 = vunpack.c.l.b16 %v9466
        %v9517 = vunpack.c.l.b16 %v9467
        %v9518 = vunpack.c.l.b16 %v9468
        %v9519 = vunpack.c.l.b16 %v9469
        %v9520 = vunpack.c.l.b16 %v9470
        %v9521 = vunpack.c.l.b16 %v9471
        %v9522 = vunpack.c.l.b16 %v9472
        %v9523 = vunpack.c.l.b16 %v9473
        %v9524 = vunpack.c.l.b16 %v9474
        %v9525 = vunpack.c.l.b16 %v9475
        %v9526 = vunpack.c.l.b16 %v9476
        %v9527 = vpack.c.b16 %v9512, %v9511
        %v9528 = vpack.c.b16 %v9514, %v9513
        %v9529 = vpack.c.b16 %v9516, %v9515
        %v9530 = vpack.c.b16 %v9518, %v9517
        %v9531 = vpack.c.b16 %v9520, %v9519
        %v9532 = vpack.c.b16 %v9522, %v9521
        %v9533 = vpack.c.b16 %v9524, %v9523
        %v9534 = vpack.c.b16 %v9526, %v9525
        %9543 = vmatprep.subr.bf16.mxu0 0
        %9544 = vmatpush1.bf16.msra.mxu0 %v9527
        %9545 = vmatprep.subr.bf16.mxu0 0
        %9546 = vmatpush1.bf16.msra.mxu0 %v9528
        %9547 = vmatprep.subr.bf16.mxu0 0
        %9548 = vmatpush1.bf16.msra.mxu0 %v9529
        %9549 = vmatprep.subr.bf16.mxu0 0
        %9550 = vmatpush1.bf16.msra.mxu0 %v9530
        %9551 = vmatprep.subr.bf16.mxu0 0
        %9552 = vmatpush1.bf16.msra.mxu0 %v9531
        %9553 = vmatprep.subr.bf16.mxu0 0
        %9554 = vmatpush1.bf16.msra.mxu0 %v9532
        %9555 = vmatprep.subr.bf16.mxu0 0
        %9556 = vmatpush1.bf16.msra.mxu0 %v9533
        %9557 = vmatprep.subr.bf16.mxu0 0
        %9558 = vmatpush1.bf16.msra.mxu0 %v9534
        %9559 = vmatprep.subr.bf16.mxu0 0
        %9560 = vmatpush1.bf16.msra.mxu0 0
        %9561 = vmatprep.subr.bf16.mxu0 0
        %9562 = vmatpush1.bf16.msra.mxu0 0
        %9563 = vmatprep.subr.bf16.mxu0 0
        %9564 = vmatpush1.bf16.msra.mxu0 0
        %9565 = vmatprep.subr.bf16.mxu0 0
        %9566 = vmatpush1.bf16.msra.mxu0 0
        %9567 = vmatprep.subr.bf16.mxu0 0
        %9568 = vmatpush1.bf16.msra.mxu0 0
        %9569 = vmatprep.subr.bf16.mxu0 0
        %9570 = vmatpush1.bf16.msra.mxu0 0
        %9571 = vmatprep.subr.bf16.mxu0 0
        %9572 = vmatpush1.bf16.msra.mxu0 0
        %9573 = vmatprep.subr.bf16.mxu0 0
        %9574 = vmatpush1.bf16.msra.mxu0 0
        %9575 = vmatprep.mubr.bf16.mxu0 0
        %9576 = vmatmul.mubr.bf16.gmra.mrb[0].mxu0 %v9493
        %v9577 = vpop.f32.mrb[0].mxu0
        %v9578 = vadd.f32 0.0, %v9577
        %v9579 = vpop.f32.mrb[0].mxu0
        %v9580 = vpop.f32.mrb[0].mxu0
        %v9581 = vadd.f32 0.0, %v9580
        %v9582 = vpop.f32.mrb[0].mxu0
        %9583 = vdwg.mxu0
        %v9584 = vadd.f32 %v9398, %v9578
        %v9585 = vadd.f32 %v9401, %v9581
        %v9586 = vld [vmem:[%s8969] sm:$0x3]
        %v9587 = vld [vmem:[%s8969 + $0x4] sm:$0x3]
        %v9588 = vld [vmem:[%s8969 + $0x8] sm:$0x3]
        %v9589 = vld [vmem:[%s8969 + $0xc] sm:$0x3]
        %s9590 = scalar_lea.vmem %s6, 192
        %v9591 = vld [vmem:[%s9590] sm:$0xf]
        %v9592 = vld [vmem:[%s9590 + $0x4] sm:$0xf]
        %v9593 = vld [vmem:[%s9590 + $0x8] sm:$0xf]
        %v9594 = vld [vmem:[%s9590 + $0xc] sm:$0xf]
        %v9595 = vld [vmem:[%s9590 + $0x10] sm:$0xf]
        %v9596 = vld [vmem:[%s9590 + $0x14] sm:$0xf]
        %v9597 = vld [vmem:[%s9590 + $0x18] sm:$0xf]
        %v9598 = vld [vmem:[%s9590 + $0x1c] sm:$0xf]
        %v9599 = vld [vmem:[%s9590 + $0x20] sm:$0xf]
        %v9600 = vld [vmem:[%s9590 + $0x24] sm:$0xf]
        %v9601 = vld [vmem:[%s9590 + $0x28] sm:$0xf]
        %v9602 = vld [vmem:[%s9590 + $0x2c] sm:$0xf]
        %v9603 = vld [vmem:[%s9590 + $0x30] sm:$0xf]
        %v9604 = vld [vmem:[%s9590 + $0x34] sm:$0xf]
        %v9605 = vld [vmem:[%s9590 + $0x38] sm:$0xf]
        %v9606 = vld [vmem:[%s9590 + $0x3c] sm:$0xf]
        %v9611 = vcombine.low %v9586, %v9587
        %v9612 = vcombine.low %v9588, %v9589
        %v9614 = vunpack.c.l.s4 1983009808
        %v9615 = vunpack.c.0.s8 %v9614
        %v9616 = vlaneseq
        %v9617 = vshrl.u32 %v9616, 7
        %v9618 = vsub.s32 %v9615, %v9617
        %v9619 = vrot.slane %v9611, %v9618
        %v9621 = vunpack.c.l.s4 1983009808
        %v9622 = vunpack.c.0.s8 %v9621
        %v9623 = vlaneseq
        %v9624 = vshrl.u32 %v9623, 7
        %v9625 = vsub.s32 %v9622, %v9624
        %v9626 = vrot.slane %v9612, %v9625
        %v9627 = vcombine.low %v9619, %v9626
        %v9645 = vunpack.c.l.b16 %v9591
        %v9646 = vunpack.c.l.b16 %v9592
        %v9647 = vunpack.c.l.b16 %v9593
        %v9648 = vunpack.c.l.b16 %v9594
        %v9649 = vunpack.c.l.b16 %v9595
        %v9650 = vunpack.c.l.b16 %v9596
        %v9651 = vunpack.c.l.b16 %v9597
        %v9652 = vunpack.c.l.b16 %v9598
        %v9653 = vunpack.c.l.b16 %v9599
        %v9654 = vunpack.c.l.b16 %v9600
        %v9655 = vunpack.c.l.b16 %v9601
        %v9656 = vunpack.c.l.b16 %v9602
        %v9657 = vunpack.c.l.b16 %v9603
        %v9658 = vunpack.c.l.b16 %v9604
        %v9659 = vunpack.c.l.b16 %v9605
        %v9660 = vunpack.c.l.b16 %v9606
        %v9661 = vpack.c.b16 %v9646, %v9645
        %v9662 = vpack.c.b16 %v9648, %v9647
        %v9663 = vpack.c.b16 %v9650, %v9649
        %v9664 = vpack.c.b16 %v9652, %v9651
        %v9665 = vpack.c.b16 %v9654, %v9653
        %v9666 = vpack.c.b16 %v9656, %v9655
        %v9667 = vpack.c.b16 %v9658, %v9657
        %v9668 = vpack.c.b16 %v9660, %v9659
        %9677 = vmatprep.subr.bf16.mxu0 0
        %9678 = vmatpush1.bf16.msra.mxu0 %v9661
        %9679 = vmatprep.subr.bf16.mxu0 0
        %9680 = vmatpush1.bf16.msra.mxu0 %v9662
        %9681 = vmatprep.subr.bf16.mxu0 0
        %9682 = vmatpush1.bf16.msra.mxu0 %v9663
        %9683 = vmatprep.subr.bf16.mxu0 0
        %9684 = vmatpush1.bf16.msra.mxu0 %v9664
        %9685 = vmatprep.subr.bf16.mxu0 0
        %9686 = vmatpush1.bf16.msra.mxu0 %v9665
        %9687 = vmatprep.subr.bf16.mxu0 0
        %9688 = vmatpush1.bf16.msra.mxu0 %v9666
        %9689 = vmatprep.subr.bf16.mxu0 0
        %9690 = vmatpush1.bf16.msra.mxu0 %v9667
        %9691 = vmatprep.subr.bf16.mxu0 0
        %9692 = vmatpush1.bf16.msra.mxu0 %v9668
        %9693 = vmatprep.subr.bf16.mxu0 0
        %9694 = vmatpush1.bf16.msra.mxu0 0
        %9695 = vmatprep.subr.bf16.mxu0 0
        %9696 = vmatpush1.bf16.msra.mxu0 0
        %9697 = vmatprep.subr.bf16.mxu0 0
        %9698 = vmatpush1.bf16.msra.mxu0 0
        %9699 = vmatprep.subr.bf16.mxu0 0
        %9700 = vmatpush1.bf16.msra.mxu0 0
        %9701 = vmatprep.subr.bf16.mxu0 0
        %9702 = vmatpush1.bf16.msra.mxu0 0
        %9703 = vmatprep.subr.bf16.mxu0 0
        %9704 = vmatpush1.bf16.msra.mxu0 0
        %9705 = vmatprep.subr.bf16.mxu0 0
        %9706 = vmatpush1.bf16.msra.mxu0 0
        %9707 = vmatprep.subr.bf16.mxu0 0
        %9708 = vmatpush1.bf16.msra.mxu0 0
        %9709 = vmatprep.mubr.bf16.mxu0 0
        %9710 = vmatmul.mubr.bf16.gmra.mrb[0].mxu0 %v9627
        %v9711 = vpop.f32.mrb[0].mxu0
        %v9712 = vadd.f32 0.0, %v9711
        %v9713 = vpop.f32.mrb[0].mxu0
        %v9714 = vpop.f32.mrb[0].mxu0
        %v9715 = vadd.f32 0.0, %v9714
        %v9716 = vpop.f32.mrb[0].mxu0
        %9717 = vdwg.mxu0
        %v9718 = vadd.f32 %v9584, %v9712
        %v9719 = vadd.f32 %v9585, %v9715
        %v9720 = vld [vmem:[%s8969] sm:$0x7]
        %v9721 = vld [vmem:[%s8969 + $0x4] sm:$0x7]
        %v9722 = vld [vmem:[%s8969 + $0x8] sm:$0x7]
        %v9723 = vld [vmem:[%s8969 + $0xc] sm:$0x7]
        %v9729 = vunpack.c.l.s4 1983009808
        %v9730 = vunpack.c.0.s8 %v9729
        %v9731 = vlaneseq
        %v9732 = vshrl.u32 %v9731, 7
        %v9733 = vsub.s32 %v9730, %v9732
        %v9734 = vrot.slane %v9720, %v9733
        %v9735 = vcombine.high %v9734, %v9734
        %v9737 = vunpack.c.l.s4 1983009808
        %v9738 = vunpack.c.0.s8 %v9737
        %v9739 = vlaneseq
        %v9740 = vshrl.u32 %v9739, 7
        %v9741 = vsub.s32 %v9738, %v9740
        %v9742 = vrot.slane %v9721, %v9741
        %v9743 = vcombine.high %v9742, %v9742
        %v9745 = vunpack.c.l.s4 1983009808
        %v9746 = vunpack.c.0.s8 %v9745
        %v9747 = vlaneseq
        %v9748 = vshrl.u32 %v9747, 7
        %v9749 = vsub.s32 %v9746, %v9748
        %v9750 = vrot.slane %v9722, %v9749
        %v9751 = vcombine.high %v9750, %v9750
        %v9753 = vunpack.c.l.s4 1983009808
        %v9754 = vunpack.c.0.s8 %v9753
        %v9755 = vlaneseq
        %v9756 = vshrl.u32 %v9755, 7
        %v9757 = vsub.s32 %v9754, %v9756
        %v9758 = vrot.slane %v9723, %v9757
        %v9759 = vcombine.high %v9758, %v9758
        %v9761 = vshrl.u32 %v9734, 16
        %v9763 = vrot.slane %v9761, 6
        %v9764 = vshll.u32 %v9734, 16
        %v9766 = vrot.slane %v9764, 7
        %v9767 = vor.u32 %v9763, %v9766
        %v9768 = vrot.slane %v9767, 2
        %v9770 = vshll.u32 %v9735, 16
        %v9772 = vrot.slane %v9770, 7
        %v9773 = vsel %vm4891, %v9768, %v9772
        %v9775 = vshrl.u32 %v9742, 16
        %v9777 = vrot.slane %v9775, 6
        %v9778 = vshll.u32 %v9742, 16
        %v9780 = vrot.slane %v9778, 7
        %v9781 = vor.u32 %v9777, %v9780
        %v9782 = vrot.slane %v9781, 2
        %v9784 = vshll.u32 %v9743, 16
        %v9786 = vrot.slane %v9784, 7
        %v9787 = vsel %vm4891, %v9782, %v9786
        %v9789 = vshrl.u32 %v9750, 16
        %v9791 = vrot.slane %v9789, 6
        %v9792 = vshll.u32 %v9750, 16
        %v9794 = vrot.slane %v9792, 7
        %v9795 = vor.u32 %v9791, %v9794
        %v9796 = vrot.slane %v9795, 2
        %v9798 = vshll.u32 %v9751, 16
        %v9800 = vrot.slane %v9798, 7
        %v9801 = vsel %vm4891, %v9796, %v9800
        %v9803 = vshrl.u32 %v9758, 16
        %v9805 = vrot.slane %v9803, 6
        %v9806 = vshll.u32 %v9758, 16
        %v9808 = vrot.slane %v9806, 7
        %v9809 = vor.u32 %v9805, %v9808
        %v9810 = vrot.slane %v9809, 2
        %v9812 = vshll.u32 %v9759, 16
        %v9814 = vrot.slane %v9812, 7
        %v9815 = vsel %vm4891, %v9810, %v9814
        %s9816 = scalar_lea.vmem %s6, 256
        %v9817 = vld [vmem:[%s9816] sm:$0xf]
        %v9818 = vld [vmem:[%s9816 + $0x4] sm:$0xf]
        %v9819 = vld [vmem:[%s9816 + $0x8] sm:$0xf]
        %v9820 = vld [vmem:[%s9816 + $0xc] sm:$0xf]
        %v9821 = vld [vmem:[%s9816 + $0x10] sm:$0xf]
        %v9822 = vld [vmem:[%s9816 + $0x14] sm:$0xf]
        %v9823 = vld [vmem:[%s9816 + $0x18] sm:$0xf]
        %v9824 = vld [vmem:[%s9816 + $0x1c] sm:$0xf]
        %v9825 = vld [vmem:[%s9816 + $0x20] sm:$0xf]
        %v9826 = vld [vmem:[%s9816 + $0x24] sm:$0xf]
        %v9827 = vld [vmem:[%s9816 + $0x28] sm:$0xf]
        %v9828 = vld [vmem:[%s9816 + $0x2c] sm:$0xf]
        %v9829 = vld [vmem:[%s9816 + $0x30] sm:$0xf]
        %v9830 = vld [vmem:[%s9816 + $0x34] sm:$0xf]
        %v9831 = vld [vmem:[%s9816 + $0x38] sm:$0xf]
        %v9832 = vld [vmem:[%s9816 + $0x3c] sm:$0xf]
        %v9833 = vcombine.low %v9773, %v9787
        %v9834 = vcombine.low %v9801, %v9815
        %v9836 = vunpack.c.l.s4 1983009808
        %v9837 = vunpack.c.0.s8 %v9836
        %v9838 = vlaneseq
        %v9839 = vshrl.u32 %v9838, 7
        %v9840 = vsub.s32 %v9837, %v9839
        %v9841 = vrot.slane %v9833, %v9840
        %v9843 = vunpack.c.l.s4 1983009808
        %v9844 = vunpack.c.0.s8 %v9843
        %v9845 = vlaneseq
        %v9846 = vshrl.u32 %v9845, 7
        %v9847 = vsub.s32 %v9844, %v9846
        %v9848 = vrot.slane %v9834, %v9847
        %v9849 = vcombine.low %v9841, %v9848
        %v9867 = vunpack.c.l.b16 %v9817
        %v9868 = vunpack.c.l.b16 %v9818
        %v9869 = vunpack.c.l.b16 %v9819
        %v9870 = vunpack.c.l.b16 %v9820
        %v9871 = vunpack.c.l.b16 %v9821
        %v9872 = vunpack.c.l.b16 %v9822
        %v9873 = vunpack.c.l.b16 %v9823
        %v9874 = vunpack.c.l.b16 %v9824
        %v9875 = vunpack.c.l.b16 %v9825
        %v9876 = vunpack.c.l.b16 %v9826
        %v9877 = vunpack.c.l.b16 %v9827
        %v9878 = vunpack.c.l.b16 %v9828
        %v9879 = vunpack.c.l.b16 %v9829
        %v9880 = vunpack.c.l.b16 %v9830
        %v9881 = vunpack.c.l.b16 %v9831
        %v9882 = vunpack.c.l.b16 %v9832
        %v9883 = vpack.c.b16 %v9868, %v9867
        %v9884 = vpack.c.b16 %v9870, %v9869
        %v9885 = vpack.c.b16 %v9872, %v9871
        %v9886 = vpack.c.b16 %v9874, %v9873
        %v9887 = vpack.c.b16 %v9876, %v9875
        %v9888 = vpack.c.b16 %v9878, %v9877
        %v9889 = vpack.c.b16 %v9880, %v9879
        %v9890 = vpack.c.b16 %v9882, %v9881
        %9899 = vmatprep.subr.bf16.mxu0 0
        %9900 = vmatpush1.bf16.msra.mxu0 %v9883
        %9901 = vmatprep.subr.bf16.mxu0 0
        %9902 = vmatpush1.bf16.msra.mxu0 %v9884
        %9903 = vmatprep.subr.bf16.mxu0 0
        %9904 = vmatpush1.bf16.msra.mxu0 %v9885
        %9905 = vmatprep.subr.bf16.mxu0 0
        %9906 = vmatpush1.bf16.msra.mxu0 %v9886
        %9907 = vmatprep.subr.bf16.mxu0 0
        %9908 = vmatpush1.bf16.msra.mxu0 %v9887
        %9909 = vmatprep.subr.bf16.mxu0 0
        %9910 = vmatpush1.bf16.msra.mxu0 %v9888
        %9911 = vmatprep.subr.bf16.mxu0 0
        %9912 = vmatpush1.bf16.msra.mxu0 %v9889
        %9913 = vmatprep.subr.bf16.mxu0 0
        %9914 = vmatpush1.bf16.msra.mxu0 %v9890
        %9915 = vmatprep.subr.bf16.mxu0 0
        %9916 = vmatpush1.bf16.msra.mxu0 0
        %9917 = vmatprep.subr.bf16.mxu0 0
        %9918 = vmatpush1.bf16.msra.mxu0 0
        %9919 = vmatprep.subr.bf16.mxu0 0
        %9920 = vmatpush1.bf16.msra.mxu0 0
        %9921 = vmatprep.subr.bf16.mxu0 0
        %9922 = vmatpush1.bf16.msra.mxu0 0
        %9923 = vmatprep.subr.bf16.mxu0 0
        %9924 = vmatpush1.bf16.msra.mxu0 0
        %9925 = vmatprep.subr.bf16.mxu0 0
        %9926 = vmatpush1.bf16.msra.mxu0 0
        %9927 = vmatprep.subr.bf16.mxu0 0
        %9928 = vmatpush1.bf16.msra.mxu0 0
        %9929 = vmatprep.subr.bf16.mxu0 0
        %9930 = vmatpush1.bf16.msra.mxu0 0
        %9931 = vmatprep.mubr.bf16.mxu0 0
        %9932 = vmatmul.mubr.bf16.gmra.mrb[0].mxu0 %v9849
        %v9933 = vpop.f32.mrb[0].mxu0
        %v9934 = vadd.f32 0.0, %v9933
        %v9935 = vpop.f32.mrb[0].mxu0
        %v9936 = vpop.f32.mrb[0].mxu0
        %v9937 = vadd.f32 0.0, %v9936
        %v9938 = vpop.f32.mrb[0].mxu0
        %9939 = vdwg.mxu0
        %v9940 = vadd.f32 %v9718, %v9934
        %v9941 = vadd.f32 %v9719, %v9937
        %v9942 = vld [vmem:[%s8969] sm:$0x6]
        %v9943 = vld [vmem:[%s8969 + $0x4] sm:$0x6]
        %v9944 = vld [vmem:[%s8969 + $0x8] sm:$0x6]
        %v9945 = vld [vmem:[%s8969 + $0xc] sm:$0x6]
        %v9951 = vunpack.c.l.s4 1983009808
        %v9952 = vunpack.c.0.s8 %v9951
        %v9953 = vlaneseq
        %v9954 = vshrl.u32 %v9953, 7
        %v9955 = vsub.s32 %v9952, %v9954
        %v9956 = vrot.slane %v9942, %v9955
        %v9957 = vcombine.high %v9956, %v9956
        %v9959 = vunpack.c.l.s4 1983009808
        %v9960 = vunpack.c.0.s8 %v9959
        %v9961 = vlaneseq
        %v9962 = vshrl.u32 %v9961, 7
        %v9963 = vsub.s32 %v9960, %v9962
        %v9964 = vrot.slane %v9943, %v9963
        %v9965 = vcombine.high %v9964, %v9964
        %v9967 = vunpack.c.l.s4 1983009808
        %v9968 = vunpack.c.0.s8 %v9967
        %v9969 = vlaneseq
        %v9970 = vshrl.u32 %v9969, 7
        %v9971 = vsub.s32 %v9968, %v9970
        %v9972 = vrot.slane %v9944, %v9971
        %v9973 = vcombine.high %v9972, %v9972
        %v9975 = vunpack.c.l.s4 1983009808
        %v9976 = vunpack.c.0.s8 %v9975
        %v9977 = vlaneseq
        %v9978 = vshrl.u32 %v9977, 7
        %v9979 = vsub.s32 %v9976, %v9978
        %v9980 = vrot.slane %v9945, %v9979
        %v9981 = vcombine.high %v9980, %v9980
        %v9982 = vrot.slane %v9956, 7
        %v9983 = vrot.slane %v9982, 2
        %v9984 = vrot.slane %v9957, 7
        %v9985 = vsel %vm5149, %v9983, %v9984
        %v9986 = vrot.slane %v9964, 7
        %v9987 = vrot.slane %v9986, 2
        %v9988 = vrot.slane %v9965, 7
        %v9989 = vsel %vm5149, %v9987, %v9988
        %v9990 = vrot.slane %v9972, 7
        %v9991 = vrot.slane %v9990, 2
        %v9992 = vrot.slane %v9973, 7
        %v9993 = vsel %vm5149, %v9991, %v9992
        %v9994 = vrot.slane %v9980, 7
        %v9995 = vrot.slane %v9994, 2
        %v9996 = vrot.slane %v9981, 7
        %v9997 = vsel %vm5149, %v9995, %v9996
        %s9998 = scalar_lea.vmem %s6, 320
        %v9999 = vld [vmem:[%s9998] sm:$0xf]
        %v10000 = vld [vmem:[%s9998 + $0x4] sm:$0xf]
        %v10001 = vld [vmem:[%s9998 + $0x8] sm:$0xf]
        %v10002 = vld [vmem:[%s9998 + $0xc] sm:$0xf]
        %v10003 = vld [vmem:[%s9998 + $0x10] sm:$0xf]
        %v10004 = vld [vmem:[%s9998 + $0x14] sm:$0xf]
        %v10005 = vld [vmem:[%s9998 + $0x18] sm:$0xf]
        %v10006 = vld [vmem:[%s9998 + $0x1c] sm:$0xf]
        %v10007 = vld [vmem:[%s9998 + $0x20] sm:$0xf]
        %v10008 = vld [vmem:[%s9998 + $0x24] sm:$0xf]
        %v10009 = vld [vmem:[%s9998 + $0x28] sm:$0xf]
        %v10010 = vld [vmem:[%s9998 + $0x2c] sm:$0xf]
        %v10011 = vld [vmem:[%s9998 + $0x30] sm:$0xf]
        %v10012 = vld [vmem:[%s9998 + $0x34] sm:$0xf]
        %v10013 = vld [vmem:[%s9998 + $0x38] sm:$0xf]
        %v10014 = vld [vmem:[%s9998 + $0x3c] sm:$0xf]
        %v10015 = vcombine.low %v9985, %v9989
        %v10016 = vcombine.low %v9993, %v9997
        %v10018 = vunpack.c.l.s4 1983009808
        %v10019 = vunpack.c.0.s8 %v10018
        %v10020 = vlaneseq
        %v10021 = vshrl.u32 %v10020, 7
        %v10022 = vsub.s32 %v10019, %v10021
        %v10023 = vrot.slane %v10015, %v10022
        %v10025 = vunpack.c.l.s4 1983009808
        %v10026 = vunpack.c.0.s8 %v10025
        %v10027 = vlaneseq
        %v10028 = vshrl.u32 %v10027, 7
        %v10029 = vsub.s32 %v10026, %v10028
        %v10030 = vrot.slane %v10016, %v10029
        %v10031 = vcombine.low %v10023, %v10030
        %v10049 = vunpack.c.l.b16 %v9999
        %v10050 = vunpack.c.l.b16 %v10000
        %v10051 = vunpack.c.l.b16 %v10001
        %v10052 = vunpack.c.l.b16 %v10002
        %v10053 = vunpack.c.l.b16 %v10003
        %v10054 = vunpack.c.l.b16 %v10004
        %v10055 = vunpack.c.l.b16 %v10005
        %v10056 = vunpack.c.l.b16 %v10006
        %v10057 = vunpack.c.l.b16 %v10007
        %v10058 = vunpack.c.l.b16 %v10008
        %v10059 = vunpack.c.l.b16 %v10009
        %v10060 = vunpack.c.l.b16 %v10010
        %v10061 = vunpack.c.l.b16 %v10011
        %v10062 = vunpack.c.l.b16 %v10012
        %v10063 = vunpack.c.l.b16 %v10013
        %v10064 = vunpack.c.l.b16 %v10014
        %v10065 = vpack.c.b16 %v10050, %v10049
        %v10066 = vpack.c.b16 %v10052, %v10051
        %v10067 = vpack.c.b16 %v10054, %v10053
        %v10068 = vpack.c.b16 %v10056, %v10055
        %v10069 = vpack.c.b16 %v10058, %v10057
        %v10070 = vpack.c.b16 %v10060, %v10059
        %v10071 = vpack.c.b16 %v10062, %v10061
        %v10072 = vpack.c.b16 %v10064, %v10063
        %10081 = vmatprep.subr.bf16.mxu0 0
        %10082 = vmatpush1.bf16.msra.mxu0 %v10065
        %10083 = vmatprep.subr.bf16.mxu0 0
        %10084 = vmatpush1.bf16.msra.mxu0 %v10066
        %10085 = vmatprep.subr.bf16.mxu0 0
        %10086 = vmatpush1.bf16.msra.mxu0 %v10067
        %10087 = vmatprep.subr.bf16.mxu0 0
        %10088 = vmatpush1.bf16.msra.mxu0 %v10068
        %10089 = vmatprep.subr.bf16.mxu0 0
        %10090 = vmatpush1.bf16.msra.mxu0 %v10069
        %10091 = vmatprep.subr.bf16.mxu0 0
        %10092 = vmatpush1.bf16.msra.mxu0 %v10070
        %10093 = vmatprep.subr.bf16.mxu0 0
        %10094 = vmatpush1.bf16.msra.mxu0 %v10071
        %10095 = vmatprep.subr.bf16.mxu0 0
        %10096 = vmatpush1.bf16.msra.mxu0 %v10072
        %10097 = vmatprep.subr.bf16.mxu0 0
        %10098 = vmatpush1.bf16.msra.mxu0 0
        %10099 = vmatprep.subr.bf16.mxu0 0
        %10100 = vmatpush1.bf16.msra.mxu0 0
        %10101 = vmatprep.subr.bf16.mxu0 0
        %10102 = vmatpush1.bf16.msra.mxu0 0
        %10103 = vmatprep.subr.bf16.mxu0 0
        %10104 = vmatpush1.bf16.msra.mxu0 0
        %10105 = vmatprep.subr.bf16.mxu0 0
        %10106 = vmatpush1.bf16.msra.mxu0 0
        %10107 = vmatprep.subr.bf16.mxu0 0
        %10108 = vmatpush1.bf16.msra.mxu0 0
        %10109 = vmatprep.subr.bf16.mxu0 0
        %10110 = vmatpush1.bf16.msra.mxu0 0
        %10111 = vmatprep.subr.bf16.mxu0 0
        %10112 = vmatpush1.bf16.msra.mxu0 0
        %10113 = vmatprep.mubr.bf16.mxu0 0
        %10114 = vmatmul.mubr.bf16.gmra.mrb[0].mxu0 %v10031
        %v10115 = vpop.f32.mrb[0].mxu0
        %v10116 = vadd.f32 0.0, %v10115
        %v10117 = vpop.f32.mrb[0].mxu0
        %v10118 = vpop.f32.mrb[0].mxu0
        %v10119 = vadd.f32 0.0, %v10118
        %v10120 = vpop.f32.mrb[0].mxu0
        %10121 = vdwg.mxu0
        %v10122 = vadd.f32 %v9940, %v10116
        %v10123 = vadd.f32 %v9941, %v10119
        %s10124 = scalar_lea.vmem [#allocation6], 8
        %v10125 = vld [vmem:[%s10124] sm:$0x3]
        %v10126 = vld [vmem:[%s10124 + $0x4] sm:$0x3]
        %v10127 = vld [vmem:[%s10124 + $0x8] sm:$0x3]
        %v10128 = vld [vmem:[%s10124 + $0xc] sm:$0x3]
        %s10129 = scalar_lea.vmem %s6, 384
        %v10130 = vld [vmem:[%s10129] sm:$0xf]
        %v10131 = vld [vmem:[%s10129 + $0x4] sm:$0xf]
        %v10132 = vld [vmem:[%s10129 + $0x8] sm:$0xf]
        %v10133 = vld [vmem:[%s10129 + $0xc] sm:$0xf]
        %v10134 = vld [vmem:[%s10129 + $0x10] sm:$0xf]
        %v10135 = vld [vmem:[%s10129 + $0x14] sm:$0xf]
        %v10136 = vld [vmem:[%s10129 + $0x18] sm:$0xf]
        %v10137 = vld [vmem:[%s10129 + $0x1c] sm:$0xf]
        %v10138 = vld [vmem:[%s10129 + $0x20] sm:$0xf]
        %v10139 = vld [vmem:[%s10129 + $0x24] sm:$0xf]
        %v10140 = vld [vmem:[%s10129 + $0x28] sm:$0xf]
        %v10141 = vld [vmem:[%s10129 + $0x2c] sm:$0xf]
        %v10142 = vld [vmem:[%s10129 + $0x30] sm:$0xf]
        %v10143 = vld [vmem:[%s10129 + $0x34] sm:$0xf]
        %v10144 = vld [vmem:[%s10129 + $0x38] sm:$0xf]
        %v10145 = vld [vmem:[%s10129 + $0x3c] sm:$0xf]
        %v10150 = vcombine.low %v10125, %v10126
        %v10151 = vcombine.low %v10127, %v10128
        %v10153 = vunpack.c.l.s4 1983009808
        %v10154 = vunpack.c.0.s8 %v10153
        %v10155 = vlaneseq
        %v10156 = vshrl.u32 %v10155, 7
        %v10157 = vsub.s32 %v10154, %v10156
        %v10158 = vrot.slane %v10150, %v10157
        %v10160 = vunpack.c.l.s4 1983009808
        %v10161 = vunpack.c.0.s8 %v10160
        %v10162 = vlaneseq
        %v10163 = vshrl.u32 %v10162, 7
        %v10164 = vsub.s32 %v10161, %v10163
        %v10165 = vrot.slane %v10151, %v10164
        %v10166 = vcombine.low %v10158, %v10165
        %v10184 = vunpack.c.l.b16 %v10130
        %v10185 = vunpack.c.l.b16 %v10131
        %v10186 = vunpack.c.l.b16 %v10132
        %v10187 = vunpack.c.l.b16 %v10133
        %v10188 = vunpack.c.l.b16 %v10134
        %v10189 = vunpack.c.l.b16 %v10135
        %v10190 = vunpack.c.l.b16 %v10136
        %v10191 = vunpack.c.l.b16 %v10137
        %v10192 = vunpack.c.l.b16 %v10138
        %v10193 = vunpack.c.l.b16 %v10139
        %v10194 = vunpack.c.l.b16 %v10140
        %v10195 = vunpack.c.l.b16 %v10141
        %v10196 = vunpack.c.l.b16 %v10142
        %v10197 = vunpack.c.l.b16 %v10143
        %v10198 = vunpack.c.l.b16 %v10144
        %v10199 = vunpack.c.l.b16 %v10145
        %v10200 = vpack.c.b16 %v10185, %v10184
        %v10201 = vpack.c.b16 %v10187, %v10186
        %v10202 = vpack.c.b16 %v10189, %v10188
        %v10203 = vpack.c.b16 %v10191, %v10190
        %v10204 = vpack.c.b16 %v10193, %v10192
        %v10205 = vpack.c.b16 %v10195, %v10194
        %v10206 = vpack.c.b16 %v10197, %v10196
        %v10207 = vpack.c.b16 %v10199, %v10198
        %10216 = vmatprep.subr.bf16.mxu0 0
        %10217 = vmatpush1.bf16.msra.mxu0 %v10200
        %10218 = vmatprep.subr.bf16.mxu0 0
        %10219 = vmatpush1.bf16.msra.mxu0 %v10201
        %10220 = vmatprep.subr.bf16.mxu0 0
        %10221 = vmatpush1.bf16.msra.mxu0 %v10202
        %10222 = vmatprep.subr.bf16.mxu0 0
        %10223 = vmatpush1.bf16.msra.mxu0 %v10203
        %10224 = vmatprep.subr.bf16.mxu0 0
        %10225 = vmatpush1.bf16.msra.mxu0 %v10204
        %10226 = vmatprep.subr.bf16.mxu0 0
        %10227 = vmatpush1.bf16.msra.mxu0 %v10205
        %10228 = vmatprep.subr.bf16.mxu0 0
        %10229 = vmatpush1.bf16.msra.mxu0 %v10206
        %10230 = vmatprep.subr.bf16.mxu0 0
        %10231 = vmatpush1.bf16.msra.mxu0 %v10207
        %10232 = vmatprep.subr.bf16.mxu0 0
        %10233 = vmatpush1.bf16.msra.mxu0 0
        %10234 = vmatprep.subr.bf16.mxu0 0
        %10235 = vmatpush1.bf16.msra.mxu0 0
        %10236 = vmatprep.subr.bf16.mxu0 0
        %10237 = vmatpush1.bf16.msra.mxu0 0
        %10238 = vmatprep.subr.bf16.mxu0 0
        %10239 = vmatpush1.bf16.msra.mxu0 0
        %10240 = vmatprep.subr.bf16.mxu0 0
        %10241 = vmatpush1.bf16.msra.mxu0 0
        %10242 = vmatprep.subr.bf16.mxu0 0
        %10243 = vmatpush1.bf16.msra.mxu0 0
        %10244 = vmatprep.subr.bf16.mxu0 0
        %10245 = vmatpush1.bf16.msra.mxu0 0
        %10246 = vmatprep.subr.bf16.mxu0 0
        %10247 = vmatpush1.bf16.msra.mxu0 0
        %10248 = vmatprep.mubr.bf16.mxu0 0
        %10249 = vmatmul.mubr.bf16.gmra.mrb[0].mxu0 %v10166
        %v10250 = vpop.f32.mrb[0].mxu0
        %v10251 = vadd.f32 0.0, %v10250
        %v10252 = vpop.f32.mrb[0].mxu0
        %v10253 = vpop.f32.mrb[0].mxu0
        %v10254 = vadd.f32 0.0, %v10253
        %v10255 = vpop.f32.mrb[0].mxu0
        %10256 = vdwg.mxu0
        %v10257 = vadd.f32 %v10122, %v10251
        %v10258 = vadd.f32 %v10123, %v10254
        %v10259 = vld [vmem:[%s10124] sm:$0x7]
        %v10260 = vld [vmem:[%s10124 + $0x4] sm:$0x7]
        %v10261 = vld [vmem:[%s10124 + $0x8] sm:$0x7]
        %v10262 = vld [vmem:[%s10124 + $0xc] sm:$0x7]
        %v10268 = vunpack.c.l.s4 1983009808
        %v10269 = vunpack.c.0.s8 %v10268
        %v10270 = vlaneseq
        %v10271 = vshrl.u32 %v10270, 7
        %v10272 = vsub.s32 %v10269, %v10271
        %v10273 = vrot.slane %v10259, %v10272
        %v10274 = vcombine.high %v10273, %v10273
        %v10276 = vunpack.c.l.s4 1983009808
        %v10277 = vunpack.c.0.s8 %v10276
        %v10278 = vlaneseq
        %v10279 = vshrl.u32 %v10278, 7
        %v10280 = vsub.s32 %v10277, %v10279
        %v10281 = vrot.slane %v10260, %v10280
        %v10282 = vcombine.high %v10281, %v10281
        %v10284 = vunpack.c.l.s4 1983009808
        %v10285 = vunpack.c.0.s8 %v10284
        %v10286 = vlaneseq
        %v10287 = vshrl.u32 %v10286, 7
        %v10288 = vsub.s32 %v10285, %v10287
        %v10289 = vrot.slane %v10261, %v10288
        %v10290 = vcombine.high %v10289, %v10289
        %v10292 = vunpack.c.l.s4 1983009808
        %v10293 = vunpack.c.0.s8 %v10292
        %v10294 = vlaneseq
        %v10295 = vshrl.u32 %v10294, 7
        %v10296 = vsub.s32 %v10293, %v10295
        %v10297 = vrot.slane %v10262, %v10296
        %v10298 = vcombine.high %v10297, %v10297
        %v10300 = vshrl.u32 %v10273, 16
        %v10302 = vrot.slane %v10300, 6
        %v10303 = vshll.u32 %v10273, 16
        %v10305 = vrot.slane %v10303, 7
        %v10306 = vor.u32 %v10302, %v10305
        %v10307 = vrot.slane %v10306, 2
        %v10309 = vshll.u32 %v10274, 16
        %v10311 = vrot.slane %v10309, 7
        %v10312 = vsel %vm4891, %v10307, %v10311
        %v10314 = vshrl.u32 %v10281, 16
        %v10316 = vrot.slane %v10314, 6
        %v10317 = vshll.u32 %v10281, 16
        %v10319 = vrot.slane %v10317, 7
        %v10320 = vor.u32 %v10316, %v10319
        %v10321 = vrot.slane %v10320, 2
        %v10323 = vshll.u32 %v10282, 16
        %v10325 = vrot.slane %v10323, 7
        %v10326 = vsel %vm4891, %v10321, %v10325
        %v10328 = vshrl.u32 %v10289, 16
        %v10330 = vrot.slane %v10328, 6
        %v10331 = vshll.u32 %v10289, 16
        %v10333 = vrot.slane %v10331, 7
        %v10334 = vor.u32 %v10330, %v10333
        %v10335 = vrot.slane %v10334, 2
        %v10337 = vshll.u32 %v10290, 16
        %v10339 = vrot.slane %v10337, 7
        %v10340 = vsel %vm4891, %v10335, %v10339
        %v10342 = vshrl.u32 %v10297, 16
        %v10344 = vrot.slane %v10342, 6
        %v10345 = vshll.u32 %v10297, 16
        %v10347 = vrot.slane %v10345, 7
        %v10348 = vor.u32 %v10344, %v10347
        %v10349 = vrot.slane %v10348, 2
        %v10351 = vshll.u32 %v10298, 16
        %v10353 = vrot.slane %v10351, 7
        %v10354 = vsel %vm4891, %v10349, %v10353
        %s10355 = scalar_lea.vmem %s6, 448
        %v10356 = vld [vmem:[%s10355] sm:$0xf]
        %v10357 = vld [vmem:[%s10355 + $0x4] sm:$0xf]
        %v10358 = vld [vmem:[%s10355 + $0x8] sm:$0xf]
        %v10359 = vld [vmem:[%s10355 + $0xc] sm:$0xf]
        %v10360 = vld [vmem:[%s10355 + $0x10] sm:$0xf]
        %v10361 = vld [vmem:[%s10355 + $0x14] sm:$0xf]
        %v10362 = vld [vmem:[%s10355 + $0x18] sm:$0xf]
        %v10363 = vld [vmem:[%s10355 + $0x1c] sm:$0xf]
        %v10364 = vld [vmem:[%s10355 + $0x20] sm:$0xf]
        %v10365 = vld [vmem:[%s10355 + $0x24] sm:$0xf]
        %v10366 = vld [vmem:[%s10355 + $0x28] sm:$0xf]
        %v10367 = vld [vmem:[%s10355 + $0x2c] sm:$0xf]
        %v10368 = vld [vmem:[%s10355 + $0x30] sm:$0xf]
        %v10369 = vld [vmem:[%s10355 + $0x34] sm:$0xf]
        %v10370 = vld [vmem:[%s10355 + $0x38] sm:$0xf]
        %v10371 = vld [vmem:[%s10355 + $0x3c] sm:$0xf]
        %v10372 = vcombine.low %v10312, %v10326
        %v10373 = vcombine.low %v10340, %v10354
        %v10375 = vunpack.c.l.s4 1983009808
        %v10376 = vunpack.c.0.s8 %v10375
        %v10377 = vlaneseq
        %v10378 = vshrl.u32 %v10377, 7
        %v10379 = vsub.s32 %v10376, %v10378
        %v10380 = vrot.slane %v10372, %v10379
        %v10382 = vunpack.c.l.s4 1983009808
        %v10383 = vunpack.c.0.s8 %v10382
        %v10384 = vlaneseq
        %v10385 = vshrl.u32 %v10384, 7
        %v10386 = vsub.s32 %v10383, %v10385
        %v10387 = vrot.slane %v10373, %v10386
        %v10388 = vcombine.low %v10380, %v10387
        %v10406 = vunpack.c.l.b16 %v10356
        %v10407 = vunpack.c.l.b16 %v10357
        %v10408 = vunpack.c.l.b16 %v10358
        %v10409 = vunpack.c.l.b16 %v10359
        %v10410 = vunpack.c.l.b16 %v10360
        %v10411 = vunpack.c.l.b16 %v10361
        %v10412 = vunpack.c.l.b16 %v10362
        %v10413 = vunpack.c.l.b16 %v10363
        %v10414 = vunpack.c.l.b16 %v10364
        %v10415 = vunpack.c.l.b16 %v10365
        %v10416 = vunpack.c.l.b16 %v10366
        %v10417 = vunpack.c.l.b16 %v10367
        %v10418 = vunpack.c.l.b16 %v10368
        %v10419 = vunpack.c.l.b16 %v10369
        %v10420 = vunpack.c.l.b16 %v10370
        %v10421 = vunpack.c.l.b16 %v10371
        %v10422 = vpack.c.b16 %v10407, %v10406
        %v10423 = vpack.c.b16 %v10409, %v10408
        %v10424 = vpack.c.b16 %v10411, %v10410
        %v10425 = vpack.c.b16 %v10413, %v10412
        %v10426 = vpack.c.b16 %v10415, %v10414
        %v10427 = vpack.c.b16 %v10417, %v10416
        %v10428 = vpack.c.b16 %v10419, %v10418
        %v10429 = vpack.c.b16 %v10421, %v10420
        %10438 = vmatprep.subr.bf16.mxu0 0
        %10439 = vmatpush1.bf16.msra.mxu0 %v10422
        %10440 = vmatprep.subr.bf16.mxu0 0
        %10441 = vmatpush1.bf16.msra.mxu0 %v10423
        %10442 = vmatprep.subr.bf16.mxu0 0
        %10443 = vmatpush1.bf16.msra.mxu0 %v10424
        %10444 = vmatprep.subr.bf16.mxu0 0
        %10445 = vmatpush1.bf16.msra.mxu0 %v10425
        %10446 = vmatprep.subr.bf16.mxu0 0
        %10447 = vmatpush1.bf16.msra.mxu0 %v10426
        %10448 = vmatprep.subr.bf16.mxu0 0
        %10449 = vmatpush1.bf16.msra.mxu0 %v10427
        %10450 = vmatprep.subr.bf16.mxu0 0
        %10451 = vmatpush1.bf16.msra.mxu0 %v10428
        %10452 = vmatprep.subr.bf16.mxu0 0
        %10453 = vmatpush1.bf16.msra.mxu0 %v10429
        %10454 = vmatprep.subr.bf16.mxu0 0
        %10455 = vmatpush1.bf16.msra.mxu0 0
        %10456 = vmatprep.subr.bf16.mxu0 0
        %10457 = vmatpush1.bf16.msra.mxu0 0
        %10458 = vmatprep.subr.bf16.mxu0 0
        %10459 = vmatpush1.bf16.msra.mxu0 0
        %10460 = vmatprep.subr.bf16.mxu0 0
        %10461 = vmatpush1.bf16.msra.mxu0 0
        %10462 = vmatprep.subr.bf16.mxu0 0
        %10463 = vmatpush1.bf16.msra.mxu0 0
        %10464 = vmatprep.subr.bf16.mxu0 0
        %10465 = vmatpush1.bf16.msra.mxu0 0
        %10466 = vmatprep.subr.bf16.mxu0 0
        %10467 = vmatpush1.bf16.msra.mxu0 0
        %10468 = vmatprep.subr.bf16.mxu0 0
        %10469 = vmatpush1.bf16.msra.mxu0 0
        %10470 = vmatprep.mubr.bf16.mxu0 0
        %10471 = vmatmul.mubr.bf16.gmra.mrb[0].mxu0 %v10388
        %v10472 = vpop.f32.mrb[0].mxu0
        %v10473 = vadd.f32 0.0, %v10472
        %v10474 = vpop.f32.mrb[0].mxu0
        %v10475 = vpop.f32.mrb[0].mxu0
        %v10476 = vadd.f32 0.0, %v10475
        %v10477 = vpop.f32.mrb[0].mxu0
        %10478 = vdwg.mxu0
        %v10479 = vadd.f32 %v10257, %v10473
        %v10480 = vadd.f32 %v10258, %v10476
        %v10481 = vld [vmem:[%s10124] sm:$0x6]
        %v10482 = vld [vmem:[%s10124 + $0x4] sm:$0x6]
        %v10483 = vld [vmem:[%s10124 + $0x8] sm:$0x6]
        %v10484 = vld [vmem:[%s10124 + $0xc] sm:$0x6]
        %v10490 = vunpack.c.l.s4 1983009808
        %v10491 = vunpack.c.0.s8 %v10490
        %v10492 = vlaneseq
        %v10493 = vshrl.u32 %v10492, 7
        %v10494 = vsub.s32 %v10491, %v10493
        %v10495 = vrot.slane %v10481, %v10494
        %v10496 = vcombine.high %v10495, %v10495
        %v10498 = vunpack.c.l.s4 1983009808
        %v10499 = vunpack.c.0.s8 %v10498
        %v10500 = vlaneseq
        %v10501 = vshrl.u32 %v10500, 7
        %v10502 = vsub.s32 %v10499, %v10501
        %v10503 = vrot.slane %v10482, %v10502
        %v10504 = vcombine.high %v10503, %v10503
        %v10506 = vunpack.c.l.s4 1983009808
        %v10507 = vunpack.c.0.s8 %v10506
        %v10508 = vlaneseq
        %v10509 = vshrl.u32 %v10508, 7
        %v10510 = vsub.s32 %v10507, %v10509
        %v10511 = vrot.slane %v10483, %v10510
        %v10512 = vcombine.high %v10511, %v10511
        %v10514 = vunpack.c.l.s4 1983009808
        %v10515 = vunpack.c.0.s8 %v10514
        %v10516 = vlaneseq
        %v10517 = vshrl.u32 %v10516, 7
        %v10518 = vsub.s32 %v10515, %v10517
        %v10519 = vrot.slane %v10484, %v10518
        %v10520 = vcombine.high %v10519, %v10519
        %v10521 = vrot.slane %v10495, 7
        %v10522 = vrot.slane %v10521, 2
        %v10523 = vrot.slane %v10496, 7
        %v10524 = vsel %vm5149, %v10522, %v10523
        %v10525 = vrot.slane %v10503, 7
        %v10526 = vrot.slane %v10525, 2
        %v10527 = vrot.slane %v10504, 7
        %v10528 = vsel %vm5149, %v10526, %v10527
        %v10529 = vrot.slane %v10511, 7
        %v10530 = vrot.slane %v10529, 2
        %v10531 = vrot.slane %v10512, 7
        %v10532 = vsel %vm5149, %v10530, %v10531
        %v10533 = vrot.slane %v10519, 7
        %v10534 = vrot.slane %v10533, 2
        %v10535 = vrot.slane %v10520, 7
        %v10536 = vsel %vm5149, %v10534, %v10535
        %s10537 = scalar_lea.vmem %s6, 512
        %v10538 = vld [vmem:[%s10537] sm:$0xf]
        %v10539 = vld [vmem:[%s10537 + $0x4] sm:$0xf]
        %v10540 = vld [vmem:[%s10537 + $0x8] sm:$0xf]
        %v10541 = vld [vmem:[%s10537 + $0xc] sm:$0xf]
        %v10542 = vld [vmem:[%s10537 + $0x10] sm:$0xf]
        %v10543 = vld [vmem:[%s10537 + $0x14] sm:$0xf]
        %v10544 = vld [vmem:[%s10537 + $0x18] sm:$0xf]
        %v10545 = vld [vmem:[%s10537 + $0x1c] sm:$0xf]
        %v10546 = vld [vmem:[%s10537 + $0x20] sm:$0xf]
        %v10547 = vld [vmem:[%s10537 + $0x24] sm:$0xf]
        %v10548 = vld [vmem:[%s10537 + $0x28] sm:$0xf]
        %v10549 = vld [vmem:[%s10537 + $0x2c] sm:$0xf]
        %v10550 = vld [vmem:[%s10537 + $0x30] sm:$0xf]
        %v10551 = vld [vmem:[%s10537 + $0x34] sm:$0xf]
        %v10552 = vld [vmem:[%s10537 + $0x38] sm:$0xf]
        %v10553 = vld [vmem:[%s10537 + $0x3c] sm:$0xf]
        %v10554 = vcombine.low %v10524, %v10528
        %v10555 = vcombine.low %v10532, %v10536
        %v10557 = vunpack.c.l.s4 1983009808
        %v10558 = vunpack.c.0.s8 %v10557
        %v10559 = vlaneseq
        %v10560 = vshrl.u32 %v10559, 7
        %v10561 = vsub.s32 %v10558, %v10560
        %v10562 = vrot.slane %v10554, %v10561
        %v10564 = vunpack.c.l.s4 1983009808
        %v10565 = vunpack.c.0.s8 %v10564
        %v10566 = vlaneseq
        %v10567 = vshrl.u32 %v10566, 7
        %v10568 = vsub.s32 %v10565, %v10567
        %v10569 = vrot.slane %v10555, %v10568
        %v10570 = vcombine.low %v10562, %v10569
        %v10588 = vunpack.c.l.b16 %v10538
        %v10589 = vunpack.c.l.b16 %v10539
        %v10590 = vunpack.c.l.b16 %v10540
        %v10591 = vunpack.c.l.b16 %v10541
        %v10592 = vunpack.c.l.b16 %v10542
        %v10593 = vunpack.c.l.b16 %v10543
        %v10594 = vunpack.c.l.b16 %v10544
        %v10595 = vunpack.c.l.b16 %v10545
        %v10596 = vunpack.c.l.b16 %v10546
        %v10597 = vunpack.c.l.b16 %v10547
        %v10598 = vunpack.c.l.b16 %v10548
        %v10599 = vunpack.c.l.b16 %v10549
        %v10600 = vunpack.c.l.b16 %v10550
        %v10601 = vunpack.c.l.b16 %v10551
        %v10602 = vunpack.c.l.b16 %v10552
        %v10603 = vunpack.c.l.b16 %v10553
        %v10604 = vpack.c.b16 %v10589, %v10588
        %v10605 = vpack.c.b16 %v10591, %v10590
        %v10606 = vpack.c.b16 %v10593, %v10592
        %v10607 = vpack.c.b16 %v10595, %v10594
        %v10608 = vpack.c.b16 %v10597, %v10596
        %v10609 = vpack.c.b16 %v10599, %v10598
        %v10610 = vpack.c.b16 %v10601, %v10600
        %v10611 = vpack.c.b16 %v10603, %v10602
        %10620 = vmatprep.subr.bf16.mxu0 0
        %10621 = vmatpush1.bf16.msra.mxu0 %v10604
        %10622 = vmatprep.subr.bf16.mxu0 0
        %10623 = vmatpush1.bf16.msra.mxu0 %v10605
        %10624 = vmatprep.subr.bf16.mxu0 0
        %10625 = vmatpush1.bf16.msra.mxu0 %v10606
        %10626 = vmatprep.subr.bf16.mxu0 0
        %10627 = vmatpush1.bf16.msra.mxu0 %v10607
        %10628 = vmatprep.subr.bf16.mxu0 0
        %10629 = vmatpush1.bf16.msra.mxu0 %v10608
        %10630 = vmatprep.subr.bf16.mxu0 0
        %10631 = vmatpush1.bf16.msra.mxu0 %v10609
        %10632 = vmatprep.subr.bf16.mxu0 0
        %10633 = vmatpush1.bf16.msra.mxu0 %v10610
        %10634 = vmatprep.subr.bf16.mxu0 0
        %10635 = vmatpush1.bf16.msra.mxu0 %v10611
        %10636 = vmatprep.subr.bf16.mxu0 0
        %10637 = vmatpush1.bf16.msra.mxu0 0
        %10638 = vmatprep.subr.bf16.mxu0 0
        %10639 = vmatpush1.bf16.msra.mxu0 0
        %10640 = vmatprep.subr.bf16.mxu0 0
        %10641 = vmatpush1.bf16.msra.mxu0 0
        %10642 = vmatprep.subr.bf16.mxu0 0
        %10643 = vmatpush1.bf16.msra.mxu0 0
        %10644 = vmatprep.subr.bf16.mxu0 0
        %10645 = vmatpush1.bf16.msra.mxu0 0
        %10646 = vmatprep.subr.bf16.mxu0 0
        %10647 = vmatpush1.bf16.msra.mxu0 0
        %10648 = vmatprep.subr.bf16.mxu0 0
        %10649 = vmatpush1.bf16.msra.mxu0 0
        %10650 = vmatprep.subr.bf16.mxu0 0
        %10651 = vmatpush1.bf16.msra.mxu0 0
        %10652 = vmatprep.mubr.bf16.mxu0 0
        %10653 = vmatmul.mubr.bf16.gmra.mrb[0].mxu0 %v10570
        %v10654 = vpop.f32.mrb[0].mxu0
        %v10655 = vadd.f32 0.0, %v10654
        %v10656 = vpop.f32.mrb[0].mxu0
        %v10657 = vpop.f32.mrb[0].mxu0
        %v10658 = vadd.f32 0.0, %v10657
        %v10659 = vpop.f32.mrb[0].mxu0
        %10660 = vdwg.mxu0
        %v10661 = vadd.f32 %v10479, %v10655
        %v10662 = vadd.f32 %v10480, %v10658
        %v10663 = vld [vmem:[%s12] sm:$0x1]
        %v10665 = vlaneseq
        %v10666 = vshrl.u32 %v10665, 7
        %v10667 = vsub.s32 0, %v10666
        %v10668 = vrot.slane %v10663, %v10667
        %v10670 = vadd.f32 %v10661, %v10668
        %v10671 = vadd.f32 %v10662, %v10668
        %v10672 = vmax.f32 %v10670, 0.0
        %v10673 = vmax.f32 %v10671, 0.0
        %v10674 = vadd.f32 %v10672, %v10673
        %v10675 = vrot.slane %v10674, 4
        %v10676 = vadd.f32 %v10674, %v10675
        %v10677 = vrot.slane %v10676, 2
        %v10678 = vadd.f32 %v10676, %v10677
        %v10679 = vrot.slane %v10678, 1
        %v10680 = vadd.f32 %v10678, %v10679
        %v10681 = vrcp.pop 16.0
        %v10682 = vmul.f32 %v10680, %v10681
        %v10683 = vld [vmem:[%s13] sm:$0xff]
        %v10684 = vld [vmem:[%s13 + $0x8] sm:$0xff]
        %v10685 = vld [vmem:[%s13 + $0x10] sm:$0xff]
        %v10686 = vld [vmem:[%s13 + $0x18] sm:$0xff]
        %v10687 = vld [vmem:[%s13 + $0x20] sm:$0xff]
        %v10688 = vld [vmem:[%s13 + $0x28] sm:$0xff]
        %v10689 = vld [vmem:[%s13 + $0x30] sm:$0xff]
        %v10690 = vld [vmem:[%s13 + $0x38] sm:$0xff]
        %v10691 = vld [vmem:[%s13 + $0x40] sm:$0xff]
        %v10692 = vld [vmem:[%s13 + $0x48] sm:$0xff]
        %v10693 = vld [vmem:[%s13 + $0x50] sm:$0xff]
        %v10694 = vld [vmem:[%s13 + $0x58] sm:$0xff]
        %v10695 = vld [vmem:[%s13 + $0x60] sm:$0xff]
        %v10696 = vld [vmem:[%s13 + $0x68] sm:$0xff]
        %v10697 = vld [vmem:[%s13 + $0x70] sm:$0xff]
        %v10698 = vld [vmem:[%s13 + $0x78] sm:$0xff]
        %v10699 = vld [vmem:[%s14] sm:$0x1]
        %10700 = vmatprep.subr.mxu0 0.0
        %10701 = vmatpush1.msra.mxu0 %v10683
        %10702 = vmatprep.subr.mxu0 0.0
        %10703 = vmatpush1.msra.mxu0 %v10684
        %10704 = vmatprep.subr.mxu0 0.0
        %10705 = vmatpush1.msra.mxu0 %v10685
        %10706 = vmatprep.subr.mxu0 0.0
        %10707 = vmatpush1.msra.mxu0 %v10686
        %10708 = vmatprep.subr.mxu0 0.0
        %10709 = vmatpush1.msra.mxu0 %v10687
        %10710 = vmatprep.subr.mxu0 0.0
        %10711 = vmatpush1.msra.mxu0 %v10688
        %10712 = vmatprep.subr.mxu0 0.0
        %10713 = vmatpush1.msra.mxu0 %v10689
        %10714 = vmatprep.subr.mxu0 0.0
        %10715 = vmatpush1.msra.mxu0 %v10690
        %10716 = vmatprep.subr.mxu0 0.0
        %10717 = vmatpush1.msra.mxu0 %v10691
        %10718 = vmatprep.subr.mxu0 0.0
        %10719 = vmatpush1.msra.mxu0 %v10692
        %10720 = vmatprep.subr.mxu0 0.0
        %10721 = vmatpush1.msra.mxu0 %v10693
        %10722 = vmatprep.subr.mxu0 0.0
        %10723 = vmatpush1.msra.mxu0 %v10694
        %10724 = vmatprep.subr.mxu0 0.0
        %10725 = vmatpush1.msra.mxu0 %v10695
        %10726 = vmatprep.subr.mxu0 0.0
        %10727 = vmatpush1.msra.mxu0 %v10696
        %10728 = vmatprep.subr.mxu0 0.0
        %10729 = vmatpush1.msra.mxu0 %v10697
        %10730 = vmatprep.subr.mxu0 0.0
        %10731 = vmatpush1.msra.mxu0 %v10698
        %10732 = vmatprep.subr.mxu0 0.0
        %10733 = vmatpush1.msra.mxu0 0.0
        %10734 = vmatprep.subr.mxu0 0.0
        %10735 = vmatpush1.msra.mxu0 0.0
        %10736 = vmatprep.subr.mxu0 0.0
        %10737 = vmatpush1.msra.mxu0 0.0
        %10738 = vmatprep.subr.mxu0 0.0
        %10739 = vmatpush1.msra.mxu0 0.0
        %10740 = vmatprep.subr.mxu0 0.0
        %10741 = vmatpush1.msra.mxu0 0.0
        %10742 = vmatprep.subr.mxu0 0.0
        %10743 = vmatpush1.msra.mxu0 0.0
        %10744 = vmatprep.subr.mxu0 0.0
        %10745 = vmatpush1.msra.mxu0 0.0
        %10746 = vmatprep.subr.mxu0 0.0
        %10747 = vmatpush1.msra.mxu0 0.0
        %10748 = vmatprep.subr.mxu0 0.0
        %10749 = vmatpush1.msra.mxu0 0.0
        %10750 = vmatprep.subr.mxu0 0.0
        %10751 = vmatpush1.msra.mxu0 0.0
        %10752 = vmatprep.subr.mxu0 0.0
        %10753 = vmatpush1.msra.mxu0 0.0
        %10754 = vmatprep.subr.mxu0 0.0
        %10755 = vmatpush1.msra.mxu0 0.0
        %10756 = vmatprep.subr.mxu0 0.0
        %10757 = vmatpush1.msra.mxu0 0.0
        %10758 = vmatprep.subr.mxu0 0.0
        %10759 = vmatpush1.msra.mxu0 0.0
        %10760 = vmatprep.subr.mxu0 0.0
        %10761 = vmatpush1.msra.mxu0 0.0
        %10762 = vmatprep.subr.mxu0 0.0
        %10763 = vmatpush1.msra.mxu0 0.0
        %10764 = vmatprep.mubr.f32.mxu0 0.0
        %10765 = vmatmul.mubr.f32.gmra.mrb[0].mxu0 %v10682
        %v10766 = vpop.f32.mrb[0].mxu0
        %v10767 = vadd.f32 %v10699, %v10766
        %v10768 = vpop.f32.mrb[0].mxu0
        %10769 = vdwg.mxu0
        %vm10770 = vcmask 73728
        %10771 = vst.msk [vmem:[%s486] sm:$0x1] %vm10770, %v10767
        %s10772 = sand.u32 %s357, 1
        %s10773 = scalar_lea.sflag [#allocation8], %s10772
        %s10774 = sand.u32 %s357, 1
        %s10775 = scalar_lea.vmem [#allocation7], %s10774
        // Predicated region
        $region81: #{deepcnn_forward.1} parent=79 // pred_check
          %p10776 = pneg %p367
        $region82: #{deepcnn_forward.1} parent=79 // pred_check_branch
          %10778 = sbr.rel (%p10776) target = $region84
        $region83: #{deepcnn_forward.1} parent=79 // pred_region
          %s10780 = ssub.s32 16, 16
          %10781 = vsyncadd %s10773, %s10780
          %s10782 = smul.addr %s29, 16
          %s10783 = scalar_lea.hbm %s15, %s10782
          %s10785 = sshll.u32 %s10775, 4
          %s10786 = int_to_ptr.vmem [resolvable:$true] %s10785
          %10788 = dma.vmem_to_hbm [thread:$0]  %s10786, 16, %s10783, %s10773
        $region84: #{deepcnn_forward.1} parent=79 // pred_fallthru
          _
      $region80: #{deepcnn_forward.1} parent=5 // pred_fallthru
        _
      %p10789 = scmp.le.s32.totalorder 2, %s24
      // Predicated region
      $region85: #{deepcnn_forward.1} parent=5 // pred_check
        %p10790 = pneg %p10789
      $region86: #{deepcnn_forward.1} parent=5 // pred_check_branch
        %10792 = sbr.rel (%p10790) target = $region88
      $region87: #{deepcnn_forward.1} parent=5 // pred_region
        %s10793 = ssub.s32 %s24, 2
        // Predicated region
        $region89: #{deepcnn_forward.1} parent=87 // pred_check
          %p10794 = pneg %p373
        $region90: #{deepcnn_forward.1} parent=87 // pred_check_branch
          %10796 = sbr.rel (%p10794) target = $region92
        $region91: #{deepcnn_forward.1} parent=87 // pred_region
          %s10797 = sand.u32 %s358, 1
          %s10798 = scalar_lea.sflag [#allocation8], %s10797
          %s10799 = sand.u32 %s358, 1
          %s10800 = scalar_lea.vmem [#allocation7], %s10799
          %10801 = dma.done %s10798, 16
        $region92: #{deepcnn_forward.1} parent=87 // pred_fallthru
          _
      $region88: #{deepcnn_forward.1} parent=5 // pred_fallthru
        _
    $region6: #{deepcnn_forward.1} parent=1 // loop_footer
      %s28 = sadd.s32 1, %s24
    $region7: #{deepcnn_forward.1} parent=1 // loop_footer_branch
      %23 = sbr.rel target = $region3
    $region8: #{deepcnn_forward.1} parent=1 // loop_exit
      _
    %10802 = vsyncpa [#allocation8], 1
    %s10803 = scalar_lea.sflag [#allocation8], 1
    %10804 = vsyncpa %s10803, 1

</llo_original>
